<compile_context>
chip_gen: v7x
topology: tpu7x:2x2x1
jax: 0.10.0
libtpu: 0.0.40
codegen_flags: <defaults>
</compile_context>

<pallas_src>
import functools

import jax
import jax.numpy as jnp
from jax import lax
from jax.experimental import pallas as pl
from jax.experimental.pallas import tpu as pltpu

EPS = 1e-5
LANE = 128


def _chip_budget():
    """Pick row-tile target and scoped-VMEM limit from the chip's VMEM size."""
    try:
        info = pltpu.get_tpu_info()
        vmem = int(getattr(info, "vmem_capacity_bytes", 0) or 0)
    except Exception:
        vmem = 0
    if vmem >= 100 * 1024 * 1024:          # v5e / v6e: 128 MiB physical VMEM
        return 1024, 96 * 1024 * 1024
    return 512, 48 * 1024 * 1024           # v7x (64 MiB) or unknown: conservative


_ROW_TARGET, _VMEM_LIMIT = _chip_budget()

_COMPILER_PARAMS = pltpu.CompilerParams(
    dimension_semantics=("parallel",), vmem_limit_bytes=_VMEM_LIMIT)
_COMPILER_PARAMS_CONV2 = pltpu.CompilerParams(
    dimension_semantics=("parallel", "arbitrary"), vmem_limit_bytes=_VMEM_LIMIT)


def _ceil_to(x, m):
    return (x + m - 1) // m * m


def _pick_tile(m, target):
    """Largest multiple-of-8 divisor of m that is <= target (else the full m)."""
    target = max(8, min(target, m))
    start = target - (target % 8)
    for t in range(start, 7, -8):
        if m % t == 0:
            return t
    return m


def _row_target(m):
    # cap at m//2 so small test shapes still exercise the multi-tile
    # (cross-tile BN stats) path.
    return min(_ROW_TARGET, max(8, m // 2))


def _pick_row_block(ho, wo):
    """Output-row block for conv2: divides ho, ~<=1024 output pixels, >=2 blocks."""
    cap = min(max(1, ho // 2), max(1, 1024 // wo))
    cap = max(1, cap)
    for r in range(cap, 0, -1):
        if ho % r == 0:
            return r
    return 1


# --------------------------------- kernels ------------------------------------

def _store_stats(st2_ref, y):
    """st2_ref: (2, C) view of the stats output block; row 0 = sum, row 1 = sumsq."""
    st2_ref[0:1, :] = jnp.sum(y, axis=0, keepdims=True)
    st2_ref[1:2, :] = jnp.sum(y * y, axis=0, keepdims=True)


def _mm_stats_kernel(x_ref, w_ref, y_ref, st_ref):
    """conv1: y = x @ w (bf16 MXU, f32 acc) + partial BN stats for this M tile."""
    y = jnp.dot(x_ref[...], w_ref[...], preferred_element_type=jnp.float32)
    y_ref[...] = y.astype(y_ref.dtype)
    _store_stats(st_ref.at[0], y)


def _bn_mm_stats_kernel(x_ref, sc_ref, sh_ref, w_ref, y_ref, st_ref):
    """conv3 (identity residual): fused BN(prev)+ReLU prologue, matmul, stats."""
    u = jnp.maximum(x_ref[...].astype(jnp.float32) * sc_ref[...] + sh_ref[...], 0.0)
    y = jnp.dot(u.astype(jnp.bfloat16), w_ref[...], preferred_element_type=jnp.float32)
    y_ref[...] = y.astype(y_ref.dtype)
    _store_stats(st_ref.at[0], y)


def _bn_mm_ds_stats_kernel(x_ref, sc_ref, sh_ref, w_ref, xs_ref, wd_ref,
                           y_ref, r_ref, st_ref, std_ref):
    """conv3 + fused downsample 1x1 conv sharing the same M tiling/pipeline."""
    u = jnp.maximum(x_ref[...].astype(jnp.float32) * sc_ref[...] + sh_ref[...], 0.0)
    y = jnp.dot(u.astype(jnp.bfloat16), w_ref[...], preferred_element_type=jnp.float32)
    y_ref[...] = y.astype(y_ref.dtype)
    _store_stats(st_ref.at[0], y)
    r = jnp.dot(xs_ref[...], wd_ref[...], preferred_element_type=jnp.float32)
    r_ref[...] = r.astype(r_ref.dtype)
    _store_stats(std_ref.at[0], r)


def _conv3x3_kernel(y1_ref, sc_ref, sh_ref, w2_ref, y2_ref, st_ref, tpad,
                    *, H, W, stride, rb):
    """One (image, output-row-block) step of the 3x3 conv.

    On the first row block of each image the spatially padded, BN1+ReLU'd plane is
    built once in a bf16 VMEM scratch (border strips zeroed explicitly; no HBM pad,
    no full-plane where-mask).  Each row block then accumulates 3 wide-K matmuls
    (the 3 kw taps folded into K = 3*cp) into a block-local f32 accumulator and
    stores its (rb, wo, cp) output tile exactly once.
    """
    cp = y1_ref.shape[-1]
    wo = (W - 1) // stride + 1

    @pl.when(pl.program_id(1) == 0)
    def _():
        zrow = jnp.zeros((1, W + 2, cp), jnp.bfloat16)
        tpad[0:1, :, :] = zrow
        tpad[H + 1:H + 2, :, :] = zrow
        zcol = jnp.zeros((H, 1, cp), jnp.bfloat16)
        tpad[1:H + 1, 0:1, :] = zcol
        tpad[1:H + 1, W + 1:W + 2, :] = zcol
        # Fill the interior in small row chunks to bound the live f32 temp.
        for r0 in range(0, H, 8):
            rr = min(8, H - r0)
            t = jnp.maximum(
                y1_ref[0, r0:r0 + rr, :, :].astype(jnp.float32) * sc_ref[...]
                + sh_ref[...], 0.0)
            tpad[1 + r0:1 + r0 + rr, 1:W + 1, :] = t.astype(jnp.bfloat16)

    base = pl.program_id(1) * (rb * stride)
    if (rb * stride) % 8 == 0:
        base = pl.multiple_of(base, 8)

    acc = jnp.zeros((rb * wo, cp), jnp.float32)
    for kh in range(3):
        if stride == 1:
            rows = tpad[pl.ds(base + kh, rb), :, :]              # (rb, W+2, cp)
            taps = [rows[:, kw:kw + wo, :] for kw in range(3)]
        else:
            span = (rb - 1) * stride + 1
            rows = tpad[pl.ds(base + kh, span), :, :][::stride]  # (rb, W+2, cp)
            # subsample columns once per parity, not once per kw
            even = rows[:, 0::2, :]                              # (rb, wo+1, cp)
            odd = rows[:, 1::2, :]                               # (rb, wo,   cp)
            taps = [even[:, 0:wo, :], odd[:, 0:wo, :], even[:, 1:wo + 1, :]]
        lhs = jnp.concatenate(taps, axis=-1).reshape(rb * wo, 3 * cp)
        acc = acc + jnp.dot(lhs, w2_ref[kh], preferred_element_type=jnp.float32)

    y2_ref[0] = acc.reshape(rb, wo, cp).astype(y2_ref.dtype)
    _store_stats(st_ref.at[0, 0], acc)


def _bn_add_relu_kernel(y3_ref, r_ref, sc3_ref, sh3_ref, scd_ref, shd_ref, o_ref):
    """out = relu(bn3(y3_raw) + bn_d(res_raw)), BN folded to scale/shift FMAs."""
    a = y3_ref[...].astype(jnp.float32) * sc3_ref[...] + sh3_ref[...]
    b = r_ref[...].astype(jnp.float32) * scd_ref[...] + shd_ref[...]
    o_ref[...] = jnp.maximum(a + b, 0.0).astype(o_ref.dtype)


def _bn_add_relu_id_kernel(y3_ref, r_ref, sc3_ref, sh3_ref, o_ref):
    """Identity residual: out = relu(bn3(y3_raw) + x), no dummy affine on x."""
    a = y3_ref[...].astype(jnp.float32) * sc3_ref[...] + sh3_ref[...]
    o_ref[...] = jnp.maximum(a + r_ref[...].astype(jnp.float32), 0.0).astype(o_ref.dtype)


# --------------------------- pallas_call wrappers ------------------------------

def _matmul_stats(x2d, w):
    m, k = x2d.shape
    cout = w.shape[1]
    tm = _pick_tile(m, _row_target(m))
    nt = m // tm
    return pl.pallas_call(
        _mm_stats_kernel,
        out_shape=(jax.ShapeDtypeStruct((m, cout), jnp.bfloat16),
                   jax.ShapeDtypeStruct((nt, 2, cout), jnp.float32)),
        grid=(nt,),
        in_specs=[pl.BlockSpec((tm, k), lambda i: (i, 0)),
                  pl.BlockSpec((k, cout), lambda i: (0, 0))],
        out_specs=(pl.BlockSpec((tm, cout), lambda i: (i, 0)),
                   pl.BlockSpec((1, 2, cout), lambda i: (i, 0, 0))),
        compiler_params=_COMPILER_PARAMS,
    )(x2d, w)


def _bn_matmul_stats(x2d, sc, sh, w):
    m, k = x2d.shape
    cout = w.shape[1]
    tm = _pick_tile(m, _row_target(m))
    nt = m // tm
    return pl.pallas_call(
        _bn_mm_stats_kernel,
        out_shape=(jax.ShapeDtypeStruct((m, cout), jnp.bfloat16),
                   jax.ShapeDtypeStruct((nt, 2, cout), jnp.float32)),
        grid=(nt,),
        in_specs=[pl.BlockSpec((tm, k), lambda i: (i, 0)),
                  pl.BlockSpec((1, k), lambda i: (0, 0)),
                  pl.BlockSpec((1, k), lambda i: (0, 0)),
                  pl.BlockSpec((k, cout), lambda i: (0, 0))],
        out_specs=(pl.BlockSpec((tm, cout), lambda i: (i, 0)),
                   pl.BlockSpec((1, 2, cout), lambda i: (i, 0, 0))),
        compiler_params=_COMPILER_PARAMS,
    )(x2d, sc, sh, w)


def _conv3_downsample(y2_2d, sc2, sh2, w3, xs2d, wd):
    m, k = y2_2d.shape
    c4 = w3.shape[1]
    kd = xs2d.shape[1]
    tm = _pick_tile(m, _row_target(m))
    nt = m // tm
    return pl.pallas_call(
        _bn_mm_ds_stats_kernel,
        out_shape=(jax.ShapeDtypeStruct((m, c4), jnp.bfloat16),
                   jax.ShapeDtypeStruct((m, c4), jnp.bfloat16),
                   jax.ShapeDtypeStruct((nt, 2, c4), jnp.float32),
                   jax.ShapeDtypeStruct((nt, 2, c4), jnp.float32)),
        grid=(nt,),
        in_specs=[pl.BlockSpec((tm, k), lambda i: (i, 0)),
                  pl.BlockSpec((1, k), lambda i: (0, 0)),
                  pl.BlockSpec((1, k), lambda i: (0, 0)),
                  pl.BlockSpec((k, c4), lambda i: (0, 0)),
                  pl.BlockSpec((tm, kd), lambda i: (i, 0)),
                  pl.BlockSpec((kd, c4), lambda i: (0, 0))],
        out_specs=(pl.BlockSpec((tm, c4), lambda i: (i, 0)),
                   pl.BlockSpec((tm, c4), lambda i: (i, 0)),
                   pl.BlockSpec((1, 2, c4), lambda i: (i, 0, 0)),
                   pl.BlockSpec((1, 2, c4), lambda i: (i, 0, 0))),
        compiler_params=_COMPILER_PARAMS,
    )(y2_2d, sc2, sh2, w3, xs2d, wd)


def _conv3x3(y1_4d, sc, sh, w2_packed, *, H, W, stride):
    n, _, _, cp = y1_4d.shape
    ho = (H - 1) // stride + 1
    wo = (W - 1) // stride + 1
    rb = _pick_row_block(ho, wo)
    nrb = ho // rb
    kern = functools.partial(_conv3x3_kernel, H=H, W=W, stride=stride, rb=rb)
    return pl.pallas_call(
        kern,
        out_shape=(jax.ShapeDtypeStruct((n, ho, wo, cp), jnp.bfloat16),
                   jax.ShapeDtypeStruct((n, nrb, 2, cp), jnp.float32)),
        grid=(n, nrb),
        in_specs=[pl.BlockSpec((1, H, W, cp), lambda i, b: (i, 0, 0, 0)),
                  pl.BlockSpec((1, cp), lambda i, b: (0, 0)),
                  pl.BlockSpec((1, cp), lambda i, b: (0, 0)),
                  pl.BlockSpec((3, 3 * cp, cp), lambda i, b: (0, 0, 0))],
        out_specs=(pl.BlockSpec((1, rb, wo, cp), lambda i, b: (i, b, 0, 0)),
                   pl.BlockSpec((1, 1, 2, cp), lambda i, b: (i, b, 0, 0))),
        scratch_shapes=[pltpu.VMEM((H + 2, W + 2, cp), jnp.bfloat16)],
        compiler_params=_COMPILER_PARAMS_CONV2,
    )(y1_4d, sc, sh, w2_packed)


def _bn_add_relu(y3, res, sc3, sh3, scd, shd):
    m, c4 = y3.shape
    tm = _pick_tile(m, _row_target(m))
    nt = m // tm
    vec = pl.BlockSpec((1, c4), lambda i: (0, 0))
    return pl.pallas_call(
        _bn_add_relu_kernel,
        out_shape=jax.ShapeDtypeStruct((m, c4), jnp.bfloat16),
        grid=(nt,),
        in_specs=[pl.BlockSpec((tm, c4), lambda i: (i, 0)),
                  pl.BlockSpec((tm, c4), lambda i: (i, 0)),
                  vec, vec, vec, vec],
        out_specs=pl.BlockSpec((tm, c4), lambda i: (i, 0)),
        compiler_params=_COMPILER_PARAMS,
    )(y3, res, sc3, sh3, scd, shd)


def _bn_add_relu_identity(y3, res, sc3, sh3):
    m, c4 = y3.shape
    tm = _pick_tile(m, _row_target(m))
    nt = m // tm
    vec = pl.BlockSpec((1, c4), lambda i: (0, 0))
    return pl.pallas_call(
        _bn_add_relu_id_kernel,
        out_shape=jax.ShapeDtypeStruct((m, c4), jnp.bfloat16),
        grid=(nt,),
        in_specs=[pl.BlockSpec((tm, c4), lambda i: (i, 0)),
                  pl.BlockSpec((tm, c4), lambda i: (i, 0)),
                  vec, vec],
        out_specs=pl.BlockSpec((tm, c4), lambda i: (i, 0)),
        compiler_params=_COMPILER_PARAMS,
    )(y3, res, sc3, sh3)


# ------------------------------ glue (JAX side) --------------------------------

def _fold_bn(st_partial, count, gamma_p, beta_p):
    """Reduce per-tile (sum, sumsq) partials -> per-channel (scale, shift)."""
    # TODO(synk): E[x^2]-E[x]^2 can cancel catastrophically for |mean| >> std;
    # a Welford-style merge over the tiny partials table would be cheap here.
    tot = jnp.sum(st_partial.reshape(-1, 2, st_partial.shape[-1]), axis=0)
    mean = tot[0] / count
    var = jnp.maximum(tot[1] / count - mean * mean, 0.0)    # biased var, like torch BN
    scale = gamma_p * lax.rsqrt(var + EPS)
    shift = beta_p - mean * scale
    return scale[None, :], shift[None, :]                   # (1, Cp) f32


def _pad_mat(w, rows, cols):
    return jnp.pad(w.astype(jnp.float32), ((0, rows - w.shape[0]), (0, cols - w.shape[1])))


def _pad_vec(v, cols):
    v = v.reshape(-1).astype(jnp.float32)
    return jnp.pad(v, (0, cols - v.size))


def bottleneck_forward(x_nchw, params, *, stride=1, downsample=True):
    n, cin, h, w = x_nchw.shape
    c = params["w1"].shape[1]
    c4 = params["w3"].shape[1]                              # expansion * c
    if not downsample:
        assert stride == 1 and cin == c4, "identity residual needs stride=1, Cin==4*C"

    cin_p = _ceil_to(cin, LANE)
    cp = _ceil_to(c, LANE)
    c4_p = _ceil_to(c4, LANE)
    ho = (h - 1) // stride + 1
    wo = (w - 1) // stride + 1
    m0 = n * h * w
    m1 = n * ho * wo

    # layout glue: NCHW -> NHWC, lane-pad channels, bf16 for the MXU
    # TODO(synk): keep activations NHWC/channel-padded across chained bottlenecks to
    # drop this entry transpose and the exit transpose.
    x_p = jnp.pad(jnp.transpose(x_nchw, (0, 2, 3, 1)).astype(jnp.bfloat16),
                  ((0, 0), (0, 0), (0, 0), (0, cin_p - cin)))
    x2d = x_p.reshape(m0, cin_p)

    w1 = _pad_mat(params["w1"], cin_p, cp).astype(jnp.bfloat16)
    w2 = jnp.pad(params["w2"].astype(jnp.float32),
                 ((0, 0), (0, 0), (0, cp - c), (0, cp - c)))
    # pack as (kh, kw*cp + cin, cout): the 3 kw taps form one wide-K contraction
    w2 = w2.reshape(3, 3 * cp, cp).astype(jnp.bfloat16)
    w3 = _pad_mat(params["w3"], cp, c4_p).astype(jnp.bfloat16)

    g1, b1 = _pad_vec(params["g1"], cp), _pad_vec(params["b1"], cp)
    g2, b2 = _pad_vec(params["g2"], cp), _pad_vec(params["b2"], cp)
    g3, b3 = _pad_vec(params["g3"], c4_p), _pad_vec(params["b3"], c4_p)

    # conv1 (1x1): tiled matmul + partial BN1 stats
    y1, st1 = _matmul_stats(x2d, w1)
    sc1, sh1 = _fold_bn(st1, m0, g1, b1)

    # conv2 (3x3, pad=1, stride): padding + BN1+ReLU built in VMEM, per-row-block acc
    y1_4d = y1.reshape(n, h, w, cp)                         # free reshape (metadata)
    y2, st2 = _conv3x3(y1_4d, sc1, sh1, w2, H=h, W=w, stride=stride)
    sc2, sh2 = _fold_bn(st2, m1, g2, b2)
    y2_2d = y2.reshape(m1, cp)

    # conv3 (1x1) + residual branch
    if downsample:
        wd = _pad_mat(params["wd"], cin_p, c4_p).astype(jnp.bfloat16)
        gd, bd = _pad_vec(params["gd"], c4_p), _pad_vec(params["bd"], c4_p)
        if stride == 1:
            xs2d = x2d
        else:
            # TODO(synk): fold this stride-2 subsample into the downsample kernel
            # via a 4-D halo BlockSpec instead of an extra HBM strided slice.
            xs2d = x_p[:, ::stride, ::stride, :].reshape(m1, cin_p)
        y3, res, st3, std = _conv3_downsample(y2_2d, sc2, sh2, w3, xs2d, wd)
        sc3, sh3 = _fold_bn(st3, m1, g3, b3)
        scd, shd = _fold_bn(std, m1, gd, bd)
        out = _bn_add_relu(y3, res, sc3, sh3, scd, shd)
    else:
        y3, st3 = _bn_matmul_stats(y2_2d, sc2, sh2, w3)
        sc3, sh3 = _fold_bn(st3, m1, g3, b3)
        out = _bn_add_relu_identity(y3, x2d, sc3, sh3)      # identity residual

    out = out.reshape(n, ho, wo, c4_p)[..., :c4]
    return jnp.transpose(out, (0, 3, 1, 2)).astype(jnp.float32)   # NHWC -> NCHW


# ------------------------------ references -------------------------------------

def ref_forward_f32(x_nchw, p, *, stride=1, downsample=True):
    """Module-faithful full-f32 reference (lax convs, training-mode BN)."""
    x = jnp.transpose(x_nchw, (0, 2, 3, 1)).astype(jnp.float32)

    def bn(y, g, b):
        m = jnp.mean(y, axis=(0, 1, 2), keepdims=True)
        v = jnp.mean((y - m) ** 2, axis=(0, 1, 2), keepdims=True)
        return (y - m) * lax.rsqrt(v + EPS) * g.reshape(1, 1, 1, -1) + b.reshape(1, 1, 1, -1)

    def conv(y, wt, s, pad):
        return lax.conv_general_dilated(y, wt, (s, s), pad,
                                        dimension_numbers=("NHWC", "HWIO", "NHWC"))

    y = jnp.maximum(bn(conv(x, p["w1"][None, None], 1, "VALID"), p["g1"], p["b1"]), 0.0)
    y = jnp.maximum(bn(conv(y, p["w2"], stride, ((1, 1), (1, 1))), p["g2"], p["b2"]), 0.0)
    y = bn(conv(y, p["w3"][None, None], 1, "VALID"), p["g3"], p["b3"])
    r = bn(conv(x, p["wd"][None, None], stride, "VALID"), p["gd"], p["bd"]) if downsample else x
    return jnp.transpose(jnp.maximum(y + r, 0.0), (0, 3, 1, 2))


def ref_forward_bf16(x_nchw, p, *, stride=1, downsample=True):
    """Pure-JAX reference using the same dtype strategy as the Pallas pipeline
    (bf16 MXU inputs, bf16-stored raw intermediates + final, f32 accumulation)."""
    f32, bf16 = jnp.float32, jnp.bfloat16
    x = jnp.transpose(x_nchw, (0, 2, 3, 1)).astype(f32)
    n, h, w, cin = x.shape
    c = p["w1"].shape[1]
    c4 = p["w3"].shape[1]
    ho = (h - 1) // stride + 1
    wo = (w - 1) // stride + 1

    def mm(a, wt):
        return jnp.dot(a.astype(bf16), wt.astype(bf16), preferred_element_type=f32)

    def fold(y, g, b):
        mean = jnp.mean(y, axis=0)
        var = jnp.maximum(jnp.mean(y * y, axis=0) - mean * mean, 0.0)
        s = g.reshape(-1) * lax.rsqrt(var + EPS)
        return s, b.reshape(-1) - mean * s

    x2d = x.reshape(-1, cin)
    y1 = mm(x2d, p["w1"])
    s1, h1 = fold(y1, p["g1"], p["b1"])
    t = jnp.maximum(y1.astype(bf16).astype(f32) * s1 + h1, 0.0).reshape(n, h, w, c)
    tp = jnp.pad(t, ((0, 0), (1, 1), (1, 1), (0, 0))).astype(bf16)
    acc = jnp.zeros((n * ho * wo, c), f32)
    for kh in range(3):
        for kw in range(3):
            patch = tp[:, kh:kh + (ho - 1) * stride + 1:stride,
                       kw:kw + (wo - 1) * stride + 1:stride, :].reshape(-1, c)
            acc = acc + jnp.dot(patch, p["w2"][kh, kw].astype(bf16),
                                preferred_element_type=f32)
    s2, h2 = fold(acc, p["g2"], p["b2"])
    u = jnp.maximum(acc.astype(bf16).astype(f32) * s2 + h2, 0.0)
    y3 = mm(u, p["w3"])
    s3, h3 = fold(y3, p["g3"], p["b3"])
    if downsample:
        xs = x[:, ::stride, ::stride, :].reshape(-1, cin)
        r = mm(xs, p["wd"])
        sd, hd = fold(r, p["gd"], p["bd"])
    else:
        r = x2d
        sd = jnp.ones((c4,), f32)
        hd = jnp.zeros((c4,), f32)
    out = jnp.maximum(y3.astype(bf16).astype(f32) * s3 + h3
                      + r.astype(bf16).astype(f32) * sd + hd, 0.0)
    out = out.astype(bf16).astype(f32)                       # kernel emits bf16
    return jnp.transpose(out.reshape(n, ho, wo, c4), (0, 3, 1, 2))


# --------------------------------- main ----------------------------------------

if __name__ == "__main__":
    key = jax.random.PRNGKey(0)
    kx, k1, k2, k3, kd = jax.random.split(key, 5)

    N, Cin, H, W = 2, 4, 16, 16
    C = 4                       # bottleneck width; output channels = 4*C = 16
    stride = 1

    params = {
        "w1": jax.random.normal(k1, (Cin, C), jnp.float32) * 0.2,
        "g1": jnp.ones((1, C), jnp.float32), "b1": jnp.zeros((1, C), jnp.float32),
        "w2": jax.random.normal(k2, (3, 3, C, C), jnp.float32) * 0.2,
        "g2": jnp.ones((1, C), jnp.float32), "b2": jnp.zeros((1, C), jnp.float32),
        "w3": jax.random.normal(k3, (C, 4 * C), jnp.float32) * 0.2,
        "g3": jnp.ones((1, 4 * C), jnp.float32), "b3": jnp.zeros((1, 4 * C), jnp.float32),
        "wd": jax.random.normal(kd, (Cin, 4 * C), jnp.float32) * 0.2,
        "gd": jnp.ones((1, 4 * C), jnp.float32), "bd": jnp.zeros((1, 4 * C), jnp.float32),
    }
    x = jax.random.normal(kx, (N, Cin, H, W), jnp.float32)

    # downsample path
    fwd = jax.jit(functools.partial(bottleneck_forward, stride=stride, downsample=True))
    out = jax.block_until_ready(fwd(x, params))
    assert out.shape == (N, 4 * C, (H - 1) // stride + 1, (W - 1) // stride + 1), out.shape

    ref_b = jax.block_until_ready(ref_forward_bf16(x, params, stride=stride))
    err_b = float(jnp.max(jnp.abs(out - ref_b)))
    assert jnp.allclose(out, ref_b, atol=5e-2, rtol=5e-2), err_b

    # coarse sanity check against the full-f32 module semantics (bf16 MXU inputs
    # and bf16-stored intermediates / output cost ~1% relative error)
    ref_f = jax.block_until_ready(ref_forward_f32(x, params, stride=stride))
    err_f = float(jnp.max(jnp.abs(out - ref_f)))
    assert err_f < 0.25, err_f

    # identity-residual path (no downsample): Cin must equal 4*C
    params_id = dict(params)
    params_id["w1"] = jax.random.normal(k1, (4 * C, C), jnp.float32) * 0.2
    x_id = jax.random.normal(kx, (N, 4 * C, H, W), jnp.float32)
    fwd_id = jax.jit(functools.partial(bottleneck_forward, stride=1, downsample=False))
    out_id = jax.block_until_ready(fwd_id(x_id, params_id))
    ref_id = jax.block_until_ready(
        ref_forward_bf16(x_id, params_id, stride=1, downsample=False))
    err_id = float(jnp.max(jnp.abs(out_id - ref_id)))
    assert jnp.allclose(out_id, ref_id, atol=5e-2, rtol=5e-2), err_id

    print("KERNEL_OK")
</pallas_src>

<mosaic_0001>
module attributes {stable_mosaic.version = 11 : i64} {
  func.func @_mm_stats_kernel(%arg0: i32, %arg1: memref<256x128xbf16, #tpu.memory_space<vmem>>, %arg2: memref<128x128xbf16, #tpu.memory_space<vmem>>, %arg3: memref<256x128xbf16, #tpu.memory_space<vmem>>, %arg4: memref<1x2x128xf32, #tpu.memory_space<vmem>>) attributes {dimension_semantics = [#tpu.dimension_semantics<parallel>], iteration_bounds = array<i64: 2>, scalar_prefetch = 0 : i64, scratch_operands = 0 : i64, tpu.core_type = #tpu.core_type<tc>, window_params = [{transform_indices = @transform_0, window_bounds = array<i64: 256, 128>}, {pipeline_mode = #tpu.pipeline_mode<synchronous>, transform_indices = @transform_1, window_bounds = array<i64: 128, 128>}, {transform_indices = @transform_2, window_bounds = array<i64: 256, 128>}, {transform_indices = @transform_3, window_bounds = array<i64: 1, 2, 128>}]} {
    %c0 = arith.constant 0 : index
    %c0_0 = arith.constant 0 : index
    %0 = vector.load %arg1[%c0, %c0_0] : memref<256x128xbf16, #tpu.memory_space<vmem>>, vector<256x128xbf16>
    %c0_1 = arith.constant 0 : index
    %c0_2 = arith.constant 0 : index
    %1 = vector.load %arg2[%c0_1, %c0_2] : memref<128x128xbf16, #tpu.memory_space<vmem>>, vector<128x128xbf16>
    %cst = arith.constant dense<0.000000e+00> : vector<256x128xf32>
    %2 = tpu.matmul %0, %1, %cst {dimension_numbers = #tpu.dot_dimension_numbers<[1], [0], [0], [1], [0, 0, 1, 1], [], []>} : vector<256x128xbf16>, vector<128x128xbf16>, vector<256x128xf32> -> vector<256x128xf32>
    %3 = arith.truncf %2 : vector<256x128xf32> to vector<256x128xbf16>
    %c0_3 = arith.constant 0 : index
    %c0_4 = arith.constant 0 : index
    %4 = vector.load %arg3[%c0_3, %c0_4] : memref<256x128xbf16, #tpu.memory_space<vmem>>, vector<256x128xbf16>
    tpu.vector_store %arg3[%c0_3, %c0_4], %3 {strides = array<i32>} : memref<256x128xbf16, #tpu.memory_space<vmem>>, vector<256x128xbf16>,
    %cst_5 = arith.constant dense<0.000000e+00> : vector<128xf32>
    %5 = vector.multi_reduction <add>, %2, %cst_5 [0] : vector<256x128xf32> to vector<128xf32>
    %6 = vector.shape_cast %5 : vector<128xf32> to vector<1x128xf32>
    %c0_i32 = arith.constant 0 : i32
    %c0_i32_6 = arith.constant 0 : i32
    %c0_i32_7 = arith.constant 0 : i32
    %7 = tpu.memref_slice %arg4[%c0_i32, %c0_i32_6, %c0_i32_7] : memref<1x2x128xf32, #tpu.memory_space<vmem>> -> memref<1x2x128xf32, #tpu.memory_space<vmem>>
    %8 = tpu.memref_squeeze %7 : memref<1x2x128xf32, #tpu.memory_space<vmem>> -> memref<2x128xf32, #tpu.memory_space<vmem>>
    %c0_8 = arith.constant 0 : index
    %c0_9 = arith.constant 0 : index
    %9 = vector.load %8[%c0_8, %c0_9] : memref<2x128xf32, #tpu.memory_space<vmem>>, vector<1x128xf32>
    tpu.vector_store %8[%c0_8, %c0_9], %6 {strides = array<i32>} : memref<2x128xf32, #tpu.memory_space<vmem>>, vector<1x128xf32>,
    %10 = arith.mulf %2, %2 : vector<256x128xf32>
    %cst_10 = arith.constant dense<0.000000e+00> : vector<128xf32>
    %11 = vector.multi_reduction <add>, %10, %cst_10 [0] : vector<256x128xf32> to vector<128xf32>
    %12 = vector.shape_cast %11 : vector<128xf32> to vector<1x128xf32>
    %c0_i32_11 = arith.constant 0 : i32
    %c0_i32_12 = arith.constant 0 : i32
    %c0_i32_13 = arith.constant 0 : i32
    %13 = tpu.memref_slice %arg4[%c0_i32_11, %c0_i32_12, %c0_i32_13] : memref<1x2x128xf32, #tpu.memory_space<vmem>> -> memref<1x2x128xf32, #tpu.memory_space<vmem>>
    %14 = tpu.memref_squeeze %13 : memref<1x2x128xf32, #tpu.memory_space<vmem>> -> memref<2x128xf32, #tpu.memory_space<vmem>>
    %c1 = arith.constant 1 : index
    %c0_14 = arith.constant 0 : index
    %15 = vector.load %14[%c1, %c0_14] : memref<2x128xf32, #tpu.memory_space<vmem>>, vector<1x128xf32>
    tpu.vector_store %14[%c1, %c0_14], %12 {strides = array<i32>} : memref<2x128xf32, #tpu.memory_space<vmem>>, vector<1x128xf32>,
    return
  }
  func.func @transform_0(%arg0: i32) -> (i32, i32) {
    %c0_i32 = arith.constant 0 : i32
    %c0_i32_0 = arith.constant 0 : i32
    return %arg0, %c0_i32 : i32, i32
  }
  func.func @transform_1(%arg0: i32) -> (i32, i32) {
    %c0_i32 = arith.constant 0 : i32
    %c0_i32_0 = arith.constant 0 : i32
    %c0_i32_1 = arith.constant 0 : i32
    return %c0_i32, %c0_i32_0 : i32, i32
  }
  func.func @transform_2(%arg0: i32) -> (i32, i32) {
    %c0_i32 = arith.constant 0 : i32
    %c0_i32_0 = arith.constant 0 : i32
    return %arg0, %c0_i32 : i32, i32
  }
  func.func @transform_3(%arg0: i32) -> (i32, i32, i32) {
    %c0_i32 = arith.constant 0 : i32
    %c0_i32_0 = arith.constant 0 : i32
    %c0_i32_1 = arith.constant 0 : i32
    return %arg0, %c0_i32, %c0_i32_0 : i32, i32, i32
  }
}

module attributes {stable_mosaic.version = 11 : i64} {
  func.func @_conv3x3_kernel(%arg0: i32, %arg1: i32, %arg2: memref<1x16x16x128xbf16, #tpu.memory_space<vmem>>, %arg3: memref<1x128xf32, #tpu.memory_space<vmem>>, %arg4: memref<1x128xf32, #tpu.memory_space<vmem>>, %arg5: memref<3x384x128xbf16, #tpu.memory_space<vmem>>, %arg6: memref<1x8x16x128xbf16, #tpu.memory_space<vmem>>, %arg7: memref<1x1x2x128xf32, #tpu.memory_space<vmem>>, %arg8: memref<18x18x128xbf16, #tpu.memory_space<vmem>>) attributes {dimension_semantics = [#tpu.dimension_semantics<parallel>, #tpu.dimension_semantics<arbitrary>], iteration_bounds = array<i64: 2, 2>, scalar_prefetch = 0 : i64, scratch_operands = 1 : i64, tpu.core_type = #tpu.core_type<tc>, window_params = [{transform_indices = @transform_0, window_bounds = array<i64: 1, 16, 16, 128>}, {pipeline_mode = #tpu.pipeline_mode<synchronous>, transform_indices = @transform_1, window_bounds = array<i64: 1, 128>}, {pipeline_mode = #tpu.pipeline_mode<synchronous>, transform_indices = @transform_2, window_bounds = array<i64: 1, 128>}, {pipeline_mode = #tpu.pipeline_mode<synchronous>, transform_indices = @transform_3, window_bounds = array<i64: 3, 384, 128>}, {transform_indices = @transform_4, window_bounds = array<i64: 1, 8, 16, 128>}, {transform_indices = @transform_5, window_bounds = array<i64: 1, 1, 2, 128>}]} {
    %c0_i32 = arith.constant 0 : i32
    %0 = arith.cmpi eq, %arg1, %c0_i32 : i32
    %1 = arith.extui %0 : i1 to i32
    %c0_i32_0 = arith.constant 0 : i32
    %2 = arith.cmpi ne, %1, %c0_i32_0 : i32
    scf.if %2 {
      %cst_35 = arith.constant 0.000000e+00 : bf16
      %58 = vector.broadcast %cst_35 : bf16 to vector<1x18x128xbf16>
      %c0_36 = arith.constant 0 : index
      %c0_37 = arith.constant 0 : index
      %c0_38 = arith.constant 0 : index
      %59 = vector.load %arg8[%c0_36, %c0_37, %c0_38] : memref<18x18x128xbf16, #tpu.memory_space<vmem>>, vector<1x18x128xbf16>
      tpu.vector_store %arg8[%c0_36, %c0_37, %c0_38], %58 {strides = array<i32>} : memref<18x18x128xbf16, #tpu.memory_space<vmem>>, vector<1x18x128xbf16>,
      %c17 = arith.constant 17 : index
      %c0_39 = arith.constant 0 : index
      %c0_40 = arith.constant 0 : index
      %60 = vector.load %arg8[%c17, %c0_39, %c0_40] : memref<18x18x128xbf16, #tpu.memory_space<vmem>>, vector<1x18x128xbf16>
      tpu.vector_store %arg8[%c17, %c0_39, %c0_40], %58 {strides = array<i32>} : memref<18x18x128xbf16, #tpu.memory_space<vmem>>, vector<1x18x128xbf16>,
      %cst_41 = arith.constant 0.000000e+00 : bf16
      %61 = vector.broadcast %cst_41 : bf16 to vector<16x1x128xbf16>
      %c1_42 = arith.constant 1 : index
      %c0_43 = arith.constant 0 : index
      %c0_44 = arith.constant 0 : index
      %62 = vector.load %arg8[%c1_42, %c0_43, %c0_44] : memref<18x18x128xbf16, #tpu.memory_space<vmem>>, vector<16x1x128xbf16>
      tpu.vector_store %arg8[%c1_42, %c0_43, %c0_44], %61 {strides = array<i32>} : memref<18x18x128xbf16, #tpu.memory_space<vmem>>, vector<16x1x128xbf16>,
      %c1_45 = arith.constant 1 : index
      %c17_46 = arith.constant 17 : index
      %c0_47 = arith.constant 0 : index
      %63 = vector.load %arg8[%c1_45, %c17_46, %c0_47] : memref<18x18x128xbf16, #tpu.memory_space<vmem>>, vector<16x1x128xbf16>
      tpu.vector_store %arg8[%c1_45, %c17_46, %c0_47], %61 {strides = array<i32>} : memref<18x18x128xbf16, #tpu.memory_space<vmem>>, vector<16x1x128xbf16>,
      %c0_48 = arith.constant 0 : index
      %c0_49 = arith.constant 0 : index
      %c0_50 = arith.constant 0 : index
      %c0_51 = arith.constant 0 : index
      %64 = vector.load %arg2[%c0_48, %c0_49, %c0_50, %c0_51] : memref<1x16x16x128xbf16, #tpu.memory_space<vmem>>, vector<1x8x16x128xbf16>
      %65 = vector.shape_cast %64 : vector<1x8x16x128xbf16> to vector<8x16x128xbf16>
      %66 = arith.extf %65 : vector<8x16x128xbf16> to vector<8x16x128xf32>
      %c0_52 = arith.constant 0 : index
      %c0_53 = arith.constant 0 : index
      %67 = vector.load %arg3[%c0_52, %c0_53] : memref<1x128xf32, #tpu.memory_space<vmem>>, vector<1x128xf32>
      %68 = vector.shape_cast %67 : vector<1x128xf32> to vector<1x1x128xf32>
      %69 = vector.broadcast %68 : vector<1x1x128xf32> to vector<8x16x128xf32>
      %70 = arith.mulf %66, %69 : vector<8x16x128xf32>
      %c0_54 = arith.constant 0 : index
      %c0_55 = arith.constant 0 : index
      %71 = vector.load %arg4[%c0_54, %c0_55] : memref<1x128xf32, #tpu.memory_space<vmem>>, vector<1x128xf32>
      %72 = vector.shape_cast %71 : vector<1x128xf32> to vector<1x1x128xf32>
      %73 = vector.broadcast %72 : vector<1x1x128xf32> to vector<8x16x128xf32>
      %74 = arith.addf %70, %73 : vector<8x16x128xf32>
      %cst_56 = arith.constant 0.000000e+00 : f32
      %75 = vector.broadcast %cst_56 : f32 to vector<8x16x128xf32>
      %76 = arith.maximumf %74, %75 : vector<8x16x128xf32>
      %77 = arith.truncf %76 : vector<8x16x128xf32> to vector<8x16x128xbf16>
      %c1_57 = arith.constant 1 : index
      %c1_58 = arith.constant 1 : index
      %c0_59 = arith.constant 0 : index
      %78 = vector.load %arg8[%c1_57, %c1_58, %c0_59] : memref<18x18x128xbf16, #tpu.memory_space<vmem>>, vector<8x16x128xbf16>
      tpu.vector_store %arg8[%c1_57, %c1_58, %c0_59], %77 {strides = array<i32>} : memref<18x18x128xbf16, #tpu.memory_space<vmem>>, vector<8x16x128xbf16>,
      %c0_60 = arith.constant 0 : index
      %c8 = arith.constant 8 : index
      %c0_61 = arith.constant 0 : index
      %c0_62 = arith.constant 0 : index
      %79 = vector.load %arg2[%c0_60, %c8, %c0_61, %c0_62] : memref<1x16x16x128xbf16, #tpu.memory_space<vmem>>, vector<1x8x16x128xbf16>
      %80 = vector.shape_cast %79 : vector<1x8x16x128xbf16> to vector<8x16x128xbf16>
      %81 = arith.extf %80 : vector<8x16x128xbf16> to vector<8x16x128xf32>
      %c0_63 = arith.constant 0 : index
      %c0_64 = arith.constant 0 : index
      %82 = vector.load %arg3[%c0_63, %c0_64] : memref<1x128xf32, #tpu.memory_space<vmem>>, vector<1x128xf32>
      %83 = vector.shape_cast %82 : vector<1x128xf32> to vector<1x1x128xf32>
      %84 = vector.broadcast %83 : vector<1x1x128xf32> to vector<8x16x128xf32>
      %85 = arith.mulf %81, %84 : vector<8x16x128xf32>
      %c0_65 = arith.constant 0 : index
      %c0_66 = arith.constant 0 : index
      %86 = vector.load %arg4[%c0_65, %c0_66] : memref<1x128xf32, #tpu.memory_space<vmem>>, vector<1x128xf32>
      %87 = vector.shape_cast %86 : vector<1x128xf32> to vector<1x1x128xf32>
      %88 = vector.broadcast %87 : vector<1x1x128xf32> to vector<8x16x128xf32>
      %89 = arith.addf %85, %88 : vector<8x16x128xf32>
      %cst_67 = arith.constant 0.000000e+00 : f32
      %90 = vector.broadcast %cst_67 : f32 to vector<8x16x128xf32>
      %91 = arith.maximumf %89, %90 : vector<8x16x128xf32>
      %92 = arith.truncf %91 : vector<8x16x128xf32> to vector<8x16x128xbf16>
      %c9 = arith.constant 9 : index
      %c1_68 = arith.constant 1 : index
      %c0_69 = arith.constant 0 : index
      %93 = vector.load %arg8[%c9, %c1_68, %c0_69] : memref<18x18x128xbf16, #tpu.memory_space<vmem>>, vector<8x16x128xbf16>
      tpu.vector_store %arg8[%c9, %c1_68, %c0_69], %92 {strides = array<i32>} : memref<18x18x128xbf16, #tpu.memory_space<vmem>>, vector<8x16x128xbf16>,
    } else {
    }
    %c8_i32 = arith.constant 8 : i32
    %3 = arith.muli %arg1, %c8_i32 : i32
    %4 = tpu.assume_multiple %3, 8 : i32
    %cst = arith.constant 0.000000e+00 : f32
    %5 = vector.broadcast %cst : f32 to vector<128x128xf32>
    %c0_i32_1 = arith.constant 0 : i32
    %6 = arith.addi %4, %c0_i32_1 : i32
    %7 = arith.index_cast %6 : i32 to index
    %c0 = arith.constant 0 : index
    %c0_2 = arith.constant 0 : index
    %8 = vector.load %arg8[%7, %c0, %c0_2] : memref<18x18x128xbf16, #tpu.memory_space<vmem>>, vector<8x18x128xbf16>
    %9 = vector.extract_strided_slice %8 {offsets = [0, 0, 0], sizes = [8, 16, 128], strides = [1, 1, 1]} : vector<8x18x128xbf16> to vector<8x16x128xbf16>
    %10 = vector.extract_strided_slice %8 {offsets = [0, 1, 0], sizes = [8, 16, 128], strides = [1, 1, 1]} : vector<8x18x128xbf16> to vector<8x16x128xbf16>
    %11 = vector.extract_strided_slice %8 {offsets = [0, 2, 0], sizes = [8, 16, 128], strides = [1, 1, 1]} : vector<8x18x128xbf16> to vector<8x16x128xbf16>
    %12 = tpu.concatenate %9, %10, %11 in 2 : vector<8x16x128xbf16>, vector<8x16x128xbf16>, vector<8x16x128xbf16> -> vector<8x16x384xbf16>
    %13 = vector.shape_cast %12 : vector<8x16x384xbf16> to vector<128x384xbf16>
    %c0_3 = arith.constant 0 : index
    %c0_4 = arith.constant 0 : index
    %c0_5 = arith.constant 0 : index
    %14 = vector.load %arg5[%c0_3, %c0_4, %c0_5] : memref<3x384x128xbf16, #tpu.memory_space<vmem>>, vector<1x384x128xbf16>
    %15 = vector.shape_cast %14 : vector<1x384x128xbf16> to vector<384x128xbf16>
    %cst_6 = arith.constant dense<0.000000e+00> : vector<128x128xf32>
    %16 = tpu.matmul %13, %15, %cst_6 {dimension_numbers = #tpu.dot_dimension_numbers<[1], [0], [0], [1], [0, 0, 1, 1], [], []>} : vector<128x384xbf16>, vector<384x128xbf16>, vector<128x128xf32> -> vector<128x128xf32>
    %17 = arith.addf %5, %16 : vector<128x128xf32>
    %c1_i32 = arith.constant 1 : i32
    %18 = arith.addi %4, %c1_i32 : i32
    %19 = arith.index_cast %18 : i32 to index
    %c0_7 = arith.constant 0 : index
    %c0_8 = arith.constant 0 : index
    %20 = vector.load %arg8[%19, %c0_7, %c0_8] : memref<18x18x128xbf16, #tpu.memory_space<vmem>>, vector<8x18x128xbf16>
    %21 = vector.extract_strided_slice %20 {offsets = [0, 0, 0], sizes = [8, 16, 128], strides = [1, 1, 1]} : vector<8x18x128xbf16> to vector<8x16x128xbf16>
    %22 = vector.extract_strided_slice %20 {offsets = [0, 1, 0], sizes = [8, 16, 128], strides = [1, 1, 1]} : vector<8x18x128xbf16> to vector<8x16x128xbf16>
    %23 = vector.extract_strided_slice %20 {offsets = [0, 2, 0], sizes = [8, 16, 128], strides = [1, 1, 1]} : vector<8x18x128xbf16> to vector<8x16x128xbf16>
    %24 = tpu.concatenate %21, %22, %23 in 2 : vector<8x16x128xbf16>, vector<8x16x128xbf16>, vector<8x16x128xbf16> -> vector<8x16x384xbf16>
    %25 = vector.shape_cast %24 : vector<8x16x384xbf16> to vector<128x384xbf16>
    %c1 = arith.constant 1 : index
    %c0_9 = arith.constant 0 : index
    %c0_10 = arith.constant 0 : index
    %26 = vector.load %arg5[%c1, %c0_9, %c0_10] : memref<3x384x128xbf16, #tpu.memory_space<vmem>>, vector<1x384x128xbf16>
    %27 = vector.shape_cast %26 : vector<1x384x128xbf16> to vector<384x128xbf16>
    %cst_11 = arith.constant dense<0.000000e+00> : vector<128x128xf32>
    %28 = tpu.matmul %25, %27, %cst_11 {dimension_numbers = #tpu.dot_dimension_numbers<[1], [0], [0], [1], [0, 0, 1, 1], [], []>} : vector<128x384xbf16>, vector<384x128xbf16>, vector<128x128xf32> -> vector<128x128xf32>
    %29 = arith.addf %17, %28 : vector<128x128xf32>
    %c2_i32 = arith.constant 2 : i32
    %30 = arith.addi %4, %c2_i32 : i32
    %31 = arith.index_cast %30 : i32 to index
    %c0_12 = arith.constant 0 : index
    %c0_13 = arith.constant 0 : index
    %32 = vector.load %arg8[%31, %c0_12, %c0_13] : memref<18x18x128xbf16, #tpu.memory_space<vmem>>, vector<8x18x128xbf16>
    %33 = vector.extract_strided_slice %32 {offsets = [0, 0, 0], sizes = [8, 16, 128], strides = [1, 1, 1]} : vector<8x18x128xbf16> to vector<8x16x128xbf16>
    %34 = vector.extract_strided_slice %32 {offsets = [0, 1, 0], sizes = [8, 16, 128], strides = [1, 1, 1]} : vector<8x18x128xbf16> to vector<8x16x128xbf16>
    %35 = vector.extract_strided_slice %32 {offsets = [0, 2, 0], sizes = [8, 16, 128], strides = [1, 1, 1]} : vector<8x18x128xbf16> to vector<8x16x128xbf16>
    %36 = tpu.concatenate %33, %34, %35 in 2 : vector<8x16x128xbf16>, vector<8x16x128xbf16>, vector<8x16x128xbf16> -> vector<8x16x384xbf16>
    %37 = vector.shape_cast %36 : vector<8x16x384xbf16> to vector<128x384xbf16>
    %c2 = arith.constant 2 : index
    %c0_14 = arith.constant 0 : index
    %c0_15 = arith.constant 0 : index
    %38 = vector.load %arg5[%c2, %c0_14, %c0_15] : memref<3x384x128xbf16, #tpu.memory_space<vmem>>, vector<1x384x128xbf16>
    %39 = vector.shape_cast %38 : vector<1x384x128xbf16> to vector<384x128xbf16>
    %cst_16 = arith.constant dense<0.000000e+00> : vector<128x128xf32>
    %40 = tpu.matmul %37, %39, %cst_16 {dimension_numbers = #tpu.dot_dimension_numbers<[1], [0], [0], [1], [0, 0, 1, 1], [], []>} : vector<128x384xbf16>, vector<384x128xbf16>, vector<128x128xf32> -> vector<128x128xf32>
    %41 = arith.addf %29, %40 : vector<128x128xf32>
    %42 = vector.shape_cast %41 : vector<128x128xf32> to vector<8x16x128xf32>
    %43 = arith.truncf %42 : vector<8x16x128xf32> to vector<8x16x128xbf16>
    %c0_17 = arith.constant 0 : index
    %c0_18 = arith.constant 0 : index
    %c0_19 = arith.constant 0 : index
    %c0_20 = arith.constant 0 : index
    %44 = vector.load %arg6[%c0_17, %c0_18, %c0_19, %c0_20] : memref<1x8x16x128xbf16, #tpu.memory_space<vmem>>, vector<1x8x16x128xbf16>
    %45 = vector.shape_cast %44 : vector<1x8x16x128xbf16> to vector<8x16x128xbf16>
    %46 = vector.shape_cast %43 : vector<8x16x128xbf16> to vector<1x8x16x128xbf16>
    tpu.vector_store %arg6[%c0_17, %c0_18, %c0_19, %c0_20], %46 {strides = array<i32>} : memref<1x8x16x128xbf16, #tpu.memory_space<vmem>>, vector<1x8x16x128xbf16>,
    %cst_21 = arith.constant dense<0.000000e+00> : vector<128xf32>
    %47 = vector.multi_reduction <add>, %41, %cst_21 [0] : vector<128x128xf32> to vector<128xf32>
    %48 = vector.shape_cast %47 : vector<128xf32> to vector<1x128xf32>
    %c0_i32_22 = arith.constant 0 : i32
    %c0_i32_23 = arith.constant 0 : i32
    %c0_i32_24 = arith.constant 0 : i32
    %c0_i32_25 = arith.constant 0 : i32
    %49 = tpu.memref_slice %arg7[%c0_i32_22, %c0_i32_23, %c0_i32_24, %c0_i32_25] : memref<1x1x2x128xf32, #tpu.memory_space<vmem>> -> memref<1x1x2x128xf32, #tpu.memory_space<vmem>>
    %50 = tpu.memref_squeeze %49 : memref<1x1x2x128xf32, #tpu.memory_space<vmem>> -> memref<2x128xf32, #tpu.memory_space<vmem>>
    %c0_26 = arith.constant 0 : index
    %c0_27 = arith.constant 0 : index
    %51 = vector.load %50[%c0_26, %c0_27] : memref<2x128xf32, #tpu.memory_space<vmem>>, vector<1x128xf32>
    tpu.vector_store %50[%c0_26, %c0_27], %48 {strides = array<i32>} : memref<2x128xf32, #tpu.memory_space<vmem>>, vector<1x128xf32>,
    %52 = arith.mulf %41, %41 : vector<128x128xf32>
    %cst_28 = arith.constant dense<0.000000e+00> : vector<128xf32>
    %53 = vector.multi_reduction <add>, %52, %cst_28 [0] : vector<128x128xf32> to vector<128xf32>
    %54 = vector.shape_cast %53 : vector<128xf32> to vector<1x128xf32>
    %c0_i32_29 = arith.constant 0 : i32
    %c0_i32_30 = arith.constant 0 : i32
    %c0_i32_31 = arith.constant 0 : i32
    %c0_i32_32 = arith.constant 0 : i32
    %55 = tpu.memref_slice %arg7[%c0_i32_29, %c0_i32_30, %c0_i32_31, %c0_i32_32] : memref<1x1x2x128xf32, #tpu.memory_space<vmem>> -> memref<1x1x2x128xf32, #tpu.memory_space<vmem>>
    %56 = tpu.memref_squeeze %55 : memref<1x1x2x128xf32, #tpu.memory_space<vmem>> -> memref<2x128xf32, #tpu.memory_space<vmem>>
    %c1_33 = arith.constant 1 : index
    %c0_34 = arith.constant 0 : index
    %57 = vector.load %56[%c1_33, %c0_34] : memref<2x128xf32, #tpu.memory_space<vmem>>, vector<1x128xf32>
    tpu.vector_store %56[%c1_33, %c0_34], %54 {strides = array<i32>} : memref<2x128xf32, #tpu.memory_space<vmem>>, vector<1x128xf32>,
    return
  }
  func.func @transform_0(%arg0: i32, %arg1: i32) -> (i32, i32, i32, i32) {
    %c0_i32 = arith.constant 0 : i32
    %c0_i32_0 = arith.constant 0 : i32
    %c0_i32_1 = arith.constant 0 : i32
    %c0_i32_2 = arith.constant 0 : i32
    return %arg0, %c0_i32, %c0_i32_0, %c0_i32_1 : i32, i32, i32, i32
  }
  func.func @transform_1(%arg0: i32, %arg1: i32) -> (i32, i32) {
    %c0_i32 = arith.constant 0 : i32
    %c0_i32_0 = arith.constant 0 : i32
    %c0_i32_1 = arith.constant 0 : i32
    return %c0_i32, %c0_i32_0 : i32, i32
  }
  func.func @transform_2(%arg0: i32, %arg1: i32) -> (i32, i32) {
    %c0_i32 = arith.constant 0 : i32
    %c0_i32_0 = arith.constant 0 : i32
    %c0_i32_1 = arith.constant 0 : i32
    return %c0_i32, %c0_i32_0 : i32, i32
  }
  func.func @transform_3(%arg0: i32, %arg1: i32) -> (i32, i32, i32) {
    %c0_i32 = arith.constant 0 : i32
    %c0_i32_0 = arith.constant 0 : i32
    %c0_i32_1 = arith.constant 0 : i32
    %c0_i32_2 = arith.constant 0 : i32
    return %c0_i32, %c0_i32_0, %c0_i32_1 : i32, i32, i32
  }
  func.func @transform_4(%arg0: i32, %arg1: i32) -> (i32, i32, i32, i32) {
    %c0_i32 = arith.constant 0 : i32
    %c0_i32_0 = arith.constant 0 : i32
    %c0_i32_1 = arith.constant 0 : i32
    return %arg0, %arg1, %c0_i32, %c0_i32_0 : i32, i32, i32, i32
  }
  func.func @transform_5(%arg0: i32, %arg1: i32) -> (i32, i32, i32, i32) {
    %c0_i32 = arith.constant 0 : i32
    %c0_i32_0 = arith.constant 0 : i32
    %c0_i32_1 = arith.constant 0 : i32
    return %arg0, %arg1, %c0_i32, %c0_i32_0 : i32, i32, i32, i32
  }
}

module attributes {stable_mosaic.version = 11 : i64} {
  func.func @_bn_mm_ds_stats_kernel(%arg0: i32, %arg1: memref<256x128xbf16, #tpu.memory_space<vmem>>, %arg2: memref<1x128xf32, #tpu.memory_space<vmem>>, %arg3: memref<1x128xf32, #tpu.memory_space<vmem>>, %arg4: memref<128x128xbf16, #tpu.memory_space<vmem>>, %arg5: memref<256x128xbf16, #tpu.memory_space<vmem>>, %arg6: memref<128x128xbf16, #tpu.memory_space<vmem>>, %arg7: memref<256x128xbf16, #tpu.memory_space<vmem>>, %arg8: memref<256x128xbf16, #tpu.memory_space<vmem>>, %arg9: memref<1x2x128xf32, #tpu.memory_space<vmem>>, %arg10: memref<1x2x128xf32, #tpu.memory_space<vmem>>) attributes {dimension_semantics = [#tpu.dimension_semantics<parallel>], iteration_bounds = array<i64: 2>, scalar_prefetch = 0 : i64, scratch_operands = 0 : i64, tpu.core_type = #tpu.core_type<tc>, window_params = [{transform_indices = @transform_0, window_bounds = array<i64: 256, 128>}, {pipeline_mode = #tpu.pipeline_mode<synchronous>, transform_indices = @transform_1, window_bounds = array<i64: 1, 128>}, {pipeline_mode = #tpu.pipeline_mode<synchronous>, transform_indices = @transform_2, window_bounds = array<i64: 1, 128>}, {pipeline_mode = #tpu.pipeline_mode<synchronous>, transform_indices = @transform_3, window_bounds = array<i64: 128, 128>}, {transform_indices = @transform_4, window_bounds = array<i64: 256, 128>}, {pipeline_mode = #tpu.pipeline_mode<synchronous>, transform_indices = @transform_5, window_bounds = array<i64: 128, 128>}, {transform_indices = @transform_6, window_bounds = array<i64: 256, 128>}, {transform_indices = @transform_7, window_bounds = array<i64: 256, 128>}, {transform_indices = @transform_8, window_bounds = array<i64: 1, 2, 128>}, {transform_indices = @transform_9, window_bounds = array<i64: 1, 2, 128>}]} {
    %c0 = arith.constant 0 : index
    %c0_0 = arith.constant 0 : index
    %0 = vector.load %arg1[%c0, %c0_0] : memref<256x128xbf16, #tpu.memory_space<vmem>>, vector<256x128xbf16>
    %1 = arith.extf %0 : vector<256x128xbf16> to vector<256x128xf32>
    %c0_1 = arith.constant 0 : index
    %c0_2 = arith.constant 0 : index
    %2 = vector.load %arg2[%c0_1, %c0_2] : memref<1x128xf32, #tpu.memory_space<vmem>>, vector<1x128xf32>
    %3 = vector.broadcast %2 : vector<1x128xf32> to vector<256x128xf32>
    %4 = arith.mulf %1, %3 : vector<256x128xf32>
    %c0_3 = arith.constant 0 : index
    %c0_4 = arith.constant 0 : index
    %5 = vector.load %arg3[%c0_3, %c0_4] : memref<1x128xf32, #tpu.memory_space<vmem>>, vector<1x128xf32>
    %6 = vector.broadcast %5 : vector<1x128xf32> to vector<256x128xf32>
    %7 = arith.addf %4, %6 : vector<256x128xf32>
    %cst = arith.constant 0.000000e+00 : f32
    %8 = vector.broadcast %cst : f32 to vector<256x128xf32>
    %9 = arith.maximumf %7, %8 : vector<256x128xf32>
    %10 = arith.truncf %9 : vector<256x128xf32> to vector<256x128xbf16>
    %c0_5 = arith.constant 0 : index
    %c0_6 = arith.constant 0 : index
    %11 = vector.load %arg4[%c0_5, %c0_6] : memref<128x128xbf16, #tpu.memory_space<vmem>>, vector<128x128xbf16>
    %cst_7 = arith.constant dense<0.000000e+00> : vector<256x128xf32>
    %12 = tpu.matmul %10, %11, %cst_7 {dimension_numbers = #tpu.dot_dimension_numbers<[1], [0], [0], [1], [0, 0, 1, 1], [], []>} : vector<256x128xbf16>, vector<128x128xbf16>, vector<256x128xf32> -> vector<256x128xf32>
    %13 = arith.truncf %12 : vector<256x128xf32> to vector<256x128xbf16>
    %c0_8 = arith.constant 0 : index
    %c0_9 = arith.constant 0 : index
    %14 = vector.load %arg7[%c0_8, %c0_9] : memref<256x128xbf16, #tpu.memory_space<vmem>>, vector<256x128xbf16>
    tpu.vector_store %arg7[%c0_8, %c0_9], %13 {strides = array<i32>} : memref<256x128xbf16, #tpu.memory_space<vmem>>, vector<256x128xbf16>,
    %cst_10 = arith.constant dense<0.000000e+00> : vector<128xf32>
    %15 = vector.multi_reduction <add>, %12, %cst_10 [0] : vector<256x128xf32> to vector<128xf32>
    %16 = vector.shape_cast %15 : vector<128xf32> to vector<1x128xf32>
    %c0_i32 = arith.constant 0 : i32
    %c0_i32_11 = arith.constant 0 : i32
    %c0_i32_12 = arith.constant 0 : i32
    %17 = tpu.memref_slice %arg9[%c0_i32, %c0_i32_11, %c0_i32_12] : memref<1x2x128xf32, #tpu.memory_space<vmem>> -> memref<1x2x128xf32, #tpu.memory_space<vmem>>
    %18 = tpu.memref_squeeze %17 : memref<1x2x128xf32, #tpu.memory_space<vmem>> -> memref<2x128xf32, #tpu.memory_space<vmem>>
    %c0_13 = arith.constant 0 : index
    %c0_14 = arith.constant 0 : index
    %19 = vector.load %18[%c0_13, %c0_14] : memref<2x128xf32, #tpu.memory_space<vmem>>, vector<1x128xf32>
    tpu.vector_store %18[%c0_13, %c0_14], %16 {strides = array<i32>} : memref<2x128xf32, #tpu.memory_space<vmem>>, vector<1x128xf32>,
    %20 = arith.mulf %12, %12 : vector<256x128xf32>
    %cst_15 = arith.constant dense<0.000000e+00> : vector<128xf32>
    %21 = vector.multi_reduction <add>, %20, %cst_15 [0] : vector<256x128xf32> to vector<128xf32>
    %22 = vector.shape_cast %21 : vector<128xf32> to vector<1x128xf32>
    %c0_i32_16 = arith.constant 0 : i32
    %c0_i32_17 = arith.constant 0 : i32
    %c0_i32_18 = arith.constant 0 : i32
    %23 = tpu.memref_slice %arg9[%c0_i32_16, %c0_i32_17, %c0_i32_18] : memref<1x2x128xf32, #tpu.memory_space<vmem>> -> memref<1x2x128xf32, #tpu.memory_space<vmem>>
    %24 = tpu.memref_squeeze %23 : memref<1x2x128xf32, #tpu.memory_space<vmem>> -> memref<2x128xf32, #tpu.memory_space<vmem>>
    %c1 = arith.constant 1 : index
    %c0_19 = arith.constant 0 : index
    %25 = vector.load %24[%c1, %c0_19] : memref<2x128xf32, #tpu.memory_space<vmem>>, vector<1x128xf32>
    tpu.vector_store %24[%c1, %c0_19], %22 {strides = array<i32>} : memref<2x128xf32, #tpu.memory_space<vmem>>, vector<1x128xf32>,
    %c0_20 = arith.constant 0 : index
    %c0_21 = arith.constant 0 : index
    %26 = vector.load %arg5[%c0_20, %c0_21] : memref<256x128xbf16, #tpu.memory_space<vmem>>, vector<256x128xbf16>
    %c0_22 = arith.constant 0 : index
    %c0_23 = arith.constant 0 : index
    %27 = vector.load %arg6[%c0_22, %c0_23] : memref<128x128xbf16, #tpu.memory_space<vmem>>, vector<128x128xbf16>
    %cst_24 = arith.constant dense<0.000000e+00> : vector<256x128xf32>
    %28 = tpu.matmul %26, %27, %cst_24 {dimension_numbers = #tpu.dot_dimension_numbers<[1], [0], [0], [1], [0, 0, 1, 1], [], []>} : vector<256x128xbf16>, vector<128x128xbf16>, vector<256x128xf32> -> vector<256x128xf32>
    %29 = arith.truncf %28 : vector<256x128xf32> to vector<256x128xbf16>
    %c0_25 = arith.constant 0 : index
    %c0_26 = arith.constant 0 : index
    %30 = vector.load %arg8[%c0_25, %c0_26] : memref<256x128xbf16, #tpu.memory_space<vmem>>, vector<256x128xbf16>
    tpu.vector_store %arg8[%c0_25, %c0_26], %29 {strides = array<i32>} : memref<256x128xbf16, #tpu.memory_space<vmem>>, vector<256x128xbf16>,
    %cst_27 = arith.constant dense<0.000000e+00> : vector<128xf32>
    %31 = vector.multi_reduction <add>, %28, %cst_27 [0] : vector<256x128xf32> to vector<128xf32>
    %32 = vector.shape_cast %31 : vector<128xf32> to vector<1x128xf32>
    %c0_i32_28 = arith.constant 0 : i32
    %c0_i32_29 = arith.constant 0 : i32
    %c0_i32_30 = arith.constant 0 : i32
    %33 = tpu.memref_slice %arg10[%c0_i32_28, %c0_i32_29, %c0_i32_30] : memref<1x2x128xf32, #tpu.memory_space<vmem>> -> memref<1x2x128xf32, #tpu.memory_space<vmem>>
    %34 = tpu.memref_squeeze %33 : memref<1x2x128xf32, #tpu.memory_space<vmem>> -> memref<2x128xf32, #tpu.memory_space<vmem>>
    %c0_31 = arith.constant 0 : index
    %c0_32 = arith.constant 0 : index
    %35 = vector.load %34[%c0_31, %c0_32] : memref<2x128xf32, #tpu.memory_space<vmem>>, vector<1x128xf32>
    tpu.vector_store %34[%c0_31, %c0_32], %32 {strides = array<i32>} : memref<2x128xf32, #tpu.memory_space<vmem>>, vector<1x128xf32>,
    %36 = arith.mulf %28, %28 : vector<256x128xf32>
    %cst_33 = arith.constant dense<0.000000e+00> : vector<128xf32>
    %37 = vector.multi_reduction <add>, %36, %cst_33 [0] : vector<256x128xf32> to vector<128xf32>
    %38 = vector.shape_cast %37 : vector<128xf32> to vector<1x128xf32>
    %c0_i32_34 = arith.constant 0 : i32
    %c0_i32_35 = arith.constant 0 : i32
    %c0_i32_36 = arith.constant 0 : i32
    %39 = tpu.memref_slice %arg10[%c0_i32_34, %c0_i32_35, %c0_i32_36] : memref<1x2x128xf32, #tpu.memory_space<vmem>> -> memref<1x2x128xf32, #tpu.memory_space<vmem>>
    %40 = tpu.memref_squeeze %39 : memref<1x2x128xf32, #tpu.memory_space<vmem>> -> memref<2x128xf32, #tpu.memory_space<vmem>>
    %c1_37 = arith.constant 1 : index
    %c0_38 = arith.constant 0 : index
    %41 = vector.load %40[%c1_37, %c0_38] : memref<2x128xf32, #tpu.memory_space<vmem>>, vector<1x128xf32>
    tpu.vector_store %40[%c1_37, %c0_38], %38 {strides = array<i32>} : memref<2x128xf32, #tpu.memory_space<vmem>>, vector<1x128xf32>,
    return
  }
  func.func @transform_0(%arg0: i32) -> (i32, i32) {
    %c0_i32 = arith.constant 0 : i32
    %c0_i32_0 = arith.constant 0 : i32
    return %arg0, %c0_i32 : i32, i32
  }
  func.func @transform_1(%arg0: i32) -> (i32, i32) {
    %c0_i32 = arith.constant 0 : i32
    %c0_i32_0 = arith.constant 0 : i32
    %c0_i32_1 = arith.constant 0 : i32
    return %c0_i32, %c0_i32_0 : i32, i32
  }
  func.func @transform_2(%arg0: i32) -> (i32, i32) {
    %c0_i32 = arith.constant 0 : i32
    %c0_i32_0 = arith.constant 0 : i32
    %c0_i32_1 = arith.constant 0 : i32
    return %c0_i32, %c0_i32_0 : i32, i32
  }
  func.func @transform_3(%arg0: i32) -> (i32, i32) {
    %c0_i32 = arith.constant 0 : i32
    %c0_i32_0 = arith.constant 0 : i32
    %c0_i32_1 = arith.constant 0 : i32
    return %c0_i32, %c0_i32_0 : i32, i32
  }
  func.func @transform_4(%arg0: i32) -> (i32, i32) {
    %c0_i32 = arith.constant 0 : i32
    %c0_i32_0 = arith.constant 0 : i32
    return %arg0, %c0_i32 : i32, i32
  }
  func.func @transform_5(%arg0: i32) -> (i32, i32) {
    %c0_i32 = arith.constant 0 : i32
    %c0_i32_0 = arith.constant 0 : i32
    %c0_i32_1 = arith.constant 0 : i32
    return %c0_i32, %c0_i32_0 : i32, i32
  }
  func.func @transform_6(%arg0: i32) -> (i32, i32) {
    %c0_i32 = arith.constant 0 : i32
    %c0_i32_0 = arith.constant 0 : i32
    return %arg0, %c0_i32 : i32, i32
  }
  func.func @transform_7(%arg0: i32) -> (i32, i32) {
    %c0_i32 = arith.constant 0 : i32
    %c0_i32_0 = arith.constant 0 : i32
    return %arg0, %c0_i32 : i32, i32
  }
  func.func @transform_8(%arg0: i32) -> (i32, i32, i32) {
    %c0_i32 = arith.constant 0 : i32
    %c0_i32_0 = arith.constant 0 : i32
    %c0_i32_1 = arith.constant 0 : i32
    return %arg0, %c0_i32, %c0_i32_0 : i32, i32, i32
  }
  func.func @transform_9(%arg0: i32) -> (i32, i32, i32) {
    %c0_i32 = arith.constant 0 : i32
    %c0_i32_0 = arith.constant 0 : i32
    %c0_i32_1 = arith.constant 0 : i32
    return %arg0, %c0_i32, %c0_i32_0 : i32, i32, i32
  }
}

module attributes {stable_mosaic.version = 11 : i64} {
  func.func @_bn_add_relu_kernel(%arg0: i32, %arg1: memref<256x128xbf16, #tpu.memory_space<vmem>>, %arg2: memref<256x128xbf16, #tpu.memory_space<vmem>>, %arg3: memref<1x128xf32, #tpu.memory_space<vmem>>, %arg4: memref<1x128xf32, #tpu.memory_space<vmem>>, %arg5: memref<1x128xf32, #tpu.memory_space<vmem>>, %arg6: memref<1x128xf32, #tpu.memory_space<vmem>>, %arg7: memref<256x128xbf16, #tpu.memory_space<vmem>>) attributes {dimension_semantics = [#tpu.dimension_semantics<parallel>], iteration_bounds = array<i64: 2>, scalar_prefetch = 0 : i64, scratch_operands = 0 : i64, tpu.core_type = #tpu.core_type<tc>, window_params = [{transform_indices = @transform_0, window_bounds = array<i64: 256, 128>}, {transform_indices = @transform_1, window_bounds = array<i64: 256, 128>}, {pipeline_mode = #tpu.pipeline_mode<synchronous>, transform_indices = @transform_2, window_bounds = array<i64: 1, 128>}, {pipeline_mode = #tpu.pipeline_mode<synchronous>, transform_indices = @transform_3, window_bounds = array<i64: 1, 128>}, {pipeline_mode = #tpu.pipeline_mode<synchronous>, transform_indices = @transform_4, window_bounds = array<i64: 1, 128>}, {pipeline_mode = #tpu.pipeline_mode<synchronous>, transform_indices = @transform_5, window_bounds = array<i64: 1, 128>}, {transform_indices = @transform_6, window_bounds = array<i64: 256, 128>}]} {
    %c0 = arith.constant 0 : index
    %c0_0 = arith.constant 0 : index
    %0 = vector.load %arg1[%c0, %c0_0] : memref<256x128xbf16, #tpu.memory_space<vmem>>, vector<256x128xbf16>
    %1 = arith.extf %0 : vector<256x128xbf16> to vector<256x128xf32>
    %c0_1 = arith.constant 0 : index
    %c0_2 = arith.constant 0 : index
    %2 = vector.load %arg3[%c0_1, %c0_2] : memref<1x128xf32, #tpu.memory_space<vmem>>, vector<1x128xf32>
    %3 = vector.broadcast %2 : vector<1x128xf32> to vector<256x128xf32>
    %4 = arith.mulf %1, %3 : vector<256x128xf32>
    %c0_3 = arith.constant 0 : index
    %c0_4 = arith.constant 0 : index
    %5 = vector.load %arg4[%c0_3, %c0_4] : memref<1x128xf32, #tpu.memory_space<vmem>>, vector<1x128xf32>
    %6 = vector.broadcast %5 : vector<1x128xf32> to vector<256x128xf32>
    %7 = arith.addf %4, %6 : vector<256x128xf32>
    %c0_5 = arith.constant 0 : index
    %c0_6 = arith.constant 0 : index
    %8 = vector.load %arg2[%c0_5, %c0_6] : memref<256x128xbf16, #tpu.memory_space<vmem>>, vector<256x128xbf16>
    %9 = arith.extf %8 : vector<256x128xbf16> to vector<256x128xf32>
    %c0_7 = arith.constant 0 : index
    %c0_8 = arith.constant 0 : index
    %10 = vector.load %arg5[%c0_7, %c0_8] : memref<1x128xf32, #tpu.memory_space<vmem>>, vector<1x128xf32>
    %11 = vector.broadcast %10 : vector<1x128xf32> to vector<256x128xf32>
    %12 = arith.mulf %9, %11 : vector<256x128xf32>
    %c0_9 = arith.constant 0 : index
    %c0_10 = arith.constant 0 : index
    %13 = vector.load %arg6[%c0_9, %c0_10] : memref<1x128xf32, #tpu.memory_space<vmem>>, vector<1x128xf32>
    %14 = vector.broadcast %13 : vector<1x128xf32> to vector<256x128xf32>
    %15 = arith.addf %12, %14 : vector<256x128xf32>
    %16 = arith.addf %7, %15 : vector<256x128xf32>
    %cst = arith.constant 0.000000e+00 : f32
    %17 = vector.broadcast %cst : f32 to vector<256x128xf32>
    %18 = arith.maximumf %16, %17 : vector<256x128xf32>
    %19 = arith.truncf %18 : vector<256x128xf32> to vector<256x128xbf16>
    %c0_11 = arith.constant 0 : index
    %c0_12 = arith.constant 0 : index
    %20 = vector.load %arg7[%c0_11, %c0_12] : memref<256x128xbf16, #tpu.memory_space<vmem>>, vector<256x128xbf16>
    tpu.vector_store %arg7[%c0_11, %c0_12], %19 {strides = array<i32>} : memref<256x128xbf16, #tpu.memory_space<vmem>>, vector<256x128xbf16>,
    return
  }
  func.func @transform_0(%arg0: i32) -> (i32, i32) {
    %c0_i32 = arith.constant 0 : i32
    %c0_i32_0 = arith.constant 0 : i32
    return %arg0, %c0_i32 : i32, i32
  }
  func.func @transform_1(%arg0: i32) -> (i32, i32) {
    %c0_i32 = arith.constant 0 : i32
    %c0_i32_0 = arith.constant 0 : i32
    return %arg0, %c0_i32 : i32, i32
  }
  func.func @transform_2(%arg0: i32) -> (i32, i32) {
    %c0_i32 = arith.constant 0 : i32
    %c0_i32_0 = arith.constant 0 : i32
    %c0_i32_1 = arith.constant 0 : i32
    return %c0_i32, %c0_i32_0 : i32, i32
  }
  func.func @transform_3(%arg0: i32) -> (i32, i32) {
    %c0_i32 = arith.constant 0 : i32
    %c0_i32_0 = arith.constant 0 : i32
    %c0_i32_1 = arith.constant 0 : i32
    return %c0_i32, %c0_i32_0 : i32, i32
  }
  func.func @transform_4(%arg0: i32) -> (i32, i32) {
    %c0_i32 = arith.constant 0 : i32
    %c0_i32_0 = arith.constant 0 : i32
    %c0_i32_1 = arith.constant 0 : i32
    return %c0_i32, %c0_i32_0 : i32, i32
  }
  func.func @transform_5(%arg0: i32) -> (i32, i32) {
    %c0_i32 = arith.constant 0 : i32
    %c0_i32_0 = arith.constant 0 : i32
    %c0_i32_1 = arith.constant 0 : i32
    return %c0_i32, %c0_i32_0 : i32, i32
  }
  func.func @transform_6(%arg0: i32) -> (i32, i32) {
    %c0_i32 = arith.constant 0 : i32
    %c0_i32_0 = arith.constant 0 : i32
    return %arg0, %c0_i32 : i32, i32
  }
}

</mosaic_0001>

<llo_original>
// kernel: bottleneck_forward.7
$region0: #{bottleneck_forward.7}
  #allocation0 [shape = 'u32[]', space=smem, size = 0x4, offset = 0x4, fixed_abs, tag = 'smem constant byte address 0x4 - core index']
  #allocation1 [shape = 'u32[144,128]{1,0:T(1,128)}', space=vmem, size = 0x12000, scoped, tag = 'internal scratch']
  %s0 = inlined_call_operand.vmem [shape: bf16[512,128], index: 0, kind: input, shape index: {}]
  %s1 = inlined_call_operand.vmem [shape: bf16[512,128], index: 1, kind: input, shape index: {}]
  %s2 = inlined_call_operand.vmem [shape: f32[1,128], index: 2, kind: input, shape index: {}]
  %s3 = inlined_call_operand.vmem [shape: f32[1,128], index: 3, kind: input, shape index: {}]
  %s4 = inlined_call_operand.vmem [shape: f32[1,128], index: 4, kind: input, shape index: {}]
  %s5 = inlined_call_operand.vmem [shape: f32[1,128], index: 5, kind: input, shape index: {}]
  %s6 = inlined_call_operand.vmem [shape: bf16[512,128], index: 6, kind: output, shape index: {}]
  %s7 = sld [smem:[#allocation0]]
  $region57: #{bottleneck_forward.7} parent=0
    _
  %s9 = ssub.s32 1, %s7
  %s10 = scalar_select 0, %s9, %s7
  loop: start=0, step=1, limit=4
  $region2: #{bottleneck_forward.7} parent=0 // loop_pre_header
    _
  $region3: #{bottleneck_forward.7} parent=0 // loop_header
    %s12 = sphi 0, %s16
    %p13 = scmp.ge.s32.totalorder %s12, 4
    %s22 = sphi 0, %s24
    %s25 = sphi 0, %s22
    %s26 = sphi 0, %s25
    %s42 = sphi 0, %s26
    %s48 = sphi 0, %s50
    %s51 = sphi 0, %s48
    %s52 = sphi 0, %s51
    %s68 = sphi 0, %s52
    %s72 = sphi 0, %s72
    %s74 = sphi 0, %s72
    %s75 = sphi 0, %s74
    %s89 = sphi 0, %s75
    %s93 = sphi 0, %s93
    %s95 = sphi 0, %s93
    %s96 = sphi 0, %s95
    %s110 = sphi 0, %s96
    %s114 = sphi 0, %s114
    %s116 = sphi 0, %s114
    %s117 = sphi 0, %s116
    %s131 = sphi 0, %s117
    %s135 = sphi 0, %s135
    %s137 = sphi 0, %s135
    %s138 = sphi 0, %s137
    %s152 = sphi 0, %s138
    %s158 = sphi 0, %s160
    %s161 = sphi 0, %s158
    %s162 = sphi 0, %s161
    %s178 = sphi 0, %s162
  $region4: #{bottleneck_forward.7} parent=0 // loop_header_branch
    %15 = sbr.rel (%p13) target = $region8
  $region5: #{bottleneck_forward.7} parent=0 // loop_body
    %s17 = ssub.s32 %s12, 1
    %s18 = ssub.s32 %s12, 2
    %s19 = sadd.s32 %s12, 1
    %s20 = ssub.s32 %s12, %s19
    %p21 = scmp.eq.s32.totalorder %s20, 0
    %s23 = sadd.s32 %s22, 1
    %s24 = scalar_select %p21, %s22, %s23
    %p27 = pneg %p21
    %p28 = scmp.eq.s32.totalorder %s12, 1
    %p29 = por %p27, %p28
    %p30 = scmp.ne.s32.totalorder %s22, %s25
    %p31 = scmp.eq.s32.totalorder %s12, 0
    %p32 = por %p30, %p31
    %p33 = scmp.ne.s32.totalorder %s22, %s25
    %p34 = scmp.eq.s32.totalorder %s17, 1
    %p35 = por %p33, %p34
    %p36 = scmp.ne.s32.totalorder %s25, %s26
    %p37 = scmp.eq.s32.totalorder %s17, 0
    %p38 = por %p36, %p37
    %p39 = scmp.ne.s32.totalorder %s25, %s26
    %p40 = scmp.eq.s32.totalorder %s18, 1
    %p41 = por %p39, %p40
    %p43 = scmp.ne.s32.totalorder %s26, %s42
    %p44 = scmp.eq.s32.totalorder %s18, 0
    %p45 = por %p43, %p44
    %s46 = ssub.s32 %s12, %s19
    %p47 = scmp.eq.s32.totalorder %s46, 0
    %s49 = sadd.s32 %s48, 1
    %s50 = scalar_select %p47, %s48, %s49
    %p53 = pneg %p47
    %p54 = scmp.eq.s32.totalorder %s12, 1
    %p55 = por %p53, %p54
    %p56 = scmp.ne.s32.totalorder %s48, %s51
    %p57 = scmp.eq.s32.totalorder %s12, 0
    %p58 = por %p56, %p57
    %p59 = scmp.ne.s32.totalorder %s48, %s51
    %p60 = scmp.eq.s32.totalorder %s17, 1
    %p61 = por %p59, %p60
    %p62 = scmp.ne.s32.totalorder %s51, %s52
    %p63 = scmp.eq.s32.totalorder %s17, 0
    %p64 = por %p62, %p63
    %p65 = scmp.ne.s32.totalorder %s51, %s52
    %p66 = scmp.eq.s32.totalorder %s18, 1
    %p67 = por %p65, %p66
    %p69 = scmp.ne.s32.totalorder %s52, %s68
    %p70 = scmp.eq.s32.totalorder %s18, 0
    %p71 = por %p69, %p70
    %s73 = sadd.s32 %s72, 1
    %p76 = scmp.eq.s32.totalorder %s12, 1
    %p77 = scmp.ne.s32.totalorder %s72, %s74
    %p78 = scmp.eq.s32.totalorder %s12, 0
    %p79 = por %p77, %p78
    %p80 = scmp.ne.s32.totalorder %s72, %s74
    %p81 = scmp.eq.s32.totalorder %s17, 1
    %p82 = por %p80, %p81
    %p83 = scmp.ne.s32.totalorder %s74, %s75
    %p84 = scmp.eq.s32.totalorder %s17, 0
    %p85 = por %p83, %p84
    %p86 = scmp.ne.s32.totalorder %s74, %s75
    %p87 = scmp.eq.s32.totalorder %s18, 1
    %p88 = por %p86, %p87
    %p90 = scmp.ne.s32.totalorder %s75, %s89
    %p91 = scmp.eq.s32.totalorder %s18, 0
    %p92 = por %p90, %p91
    %s94 = sadd.s32 %s93, 1
    %p97 = scmp.eq.s32.totalorder %s12, 1
    %p98 = scmp.ne.s32.totalorder %s93, %s95
    %p99 = scmp.eq.s32.totalorder %s12, 0
    %p100 = por %p98, %p99
    %p101 = scmp.ne.s32.totalorder %s93, %s95
    %p102 = scmp.eq.s32.totalorder %s17, 1
    %p103 = por %p101, %p102
    %p104 = scmp.ne.s32.totalorder %s95, %s96
    %p105 = scmp.eq.s32.totalorder %s17, 0
    %p106 = por %p104, %p105
    %p107 = scmp.ne.s32.totalorder %s95, %s96
    %p108 = scmp.eq.s32.totalorder %s18, 1
    %p109 = por %p107, %p108
    %p111 = scmp.ne.s32.totalorder %s96, %s110
    %p112 = scmp.eq.s32.totalorder %s18, 0
    %p113 = por %p111, %p112
    %s115 = sadd.s32 %s114, 1
    %p118 = scmp.eq.s32.totalorder %s12, 1
    %p119 = scmp.ne.s32.totalorder %s114, %s116
    %p120 = scmp.eq.s32.totalorder %s12, 0
    %p121 = por %p119, %p120
    %p122 = scmp.ne.s32.totalorder %s114, %s116
    %p123 = scmp.eq.s32.totalorder %s17, 1
    %p124 = por %p122, %p123
    %p125 = scmp.ne.s32.totalorder %s116, %s117
    %p126 = scmp.eq.s32.totalorder %s17, 0
    %p127 = por %p125, %p126
    %p128 = scmp.ne.s32.totalorder %s116, %s117
    %p129 = scmp.eq.s32.totalorder %s18, 1
    %p130 = por %p128, %p129
    %p132 = scmp.ne.s32.totalorder %s117, %s131
    %p133 = scmp.eq.s32.totalorder %s18, 0
    %p134 = por %p132, %p133
    %s136 = sadd.s32 %s135, 1
    %p139 = scmp.eq.s32.totalorder %s12, 1
    %p140 = scmp.ne.s32.totalorder %s135, %s137
    %p141 = scmp.eq.s32.totalorder %s12, 0
    %p142 = por %p140, %p141
    %p143 = scmp.ne.s32.totalorder %s135, %s137
    %p144 = scmp.eq.s32.totalorder %s17, 1
    %p145 = por %p143, %p144
    %p146 = scmp.ne.s32.totalorder %s137, %s138
    %p147 = scmp.eq.s32.totalorder %s17, 0
    %p148 = por %p146, %p147
    %p149 = scmp.ne.s32.totalorder %s137, %s138
    %p150 = scmp.eq.s32.totalorder %s18, 1
    %p151 = por %p149, %p150
    %p153 = scmp.ne.s32.totalorder %s138, %s152
    %p154 = scmp.eq.s32.totalorder %s18, 0
    %p155 = por %p153, %p154
    %s156 = ssub.s32 %s12, %s19
    %p157 = scmp.eq.s32.totalorder %s156, 0
    %s159 = sadd.s32 %s158, 1
    %s160 = scalar_select %p157, %s158, %s159
    %p163 = pneg %p157
    %p164 = scmp.eq.s32.totalorder %s12, 1
    %p165 = por %p163, %p164
    %p166 = scmp.ne.s32.totalorder %s158, %s161
    %p167 = scmp.eq.s32.totalorder %s12, 0
    %p168 = por %p166, %p167
    %p169 = scmp.ne.s32.totalorder %s158, %s161
    %p170 = scmp.eq.s32.totalorder %s17, 1
    %p171 = por %p169, %p170
    %p172 = scmp.ne.s32.totalorder %s161, %s162
    %p173 = scmp.eq.s32.totalorder %s17, 0
    %p174 = por %p172, %p173
    %p175 = scmp.ne.s32.totalorder %s161, %s162
    %p176 = scmp.eq.s32.totalorder %s18, 1
    %p177 = por %p175, %p176
    %p179 = scmp.ne.s32.totalorder %s162, %s178
    %p180 = scmp.eq.s32.totalorder %s18, 0
    %p181 = por %p179, %p180
    %p182 = scmp.le.s32.totalorder 1, %s12
    %p183 = scmp.lt.s32.totalorder %s12, 3
    %p184 = pnand %p182, %p183
    %p185 = pneg %p184
    // Predicated region
    $region9: #{bottleneck_forward.7} parent=5 // pred_check
      _
    $region10: #{bottleneck_forward.7} parent=5 // pred_check_branch
      %187 = sbr.rel (%p184) target = $region12
    $region11: #{bottleneck_forward.7} parent=5 // pred_region
      %s188 = ssub.s32 %s12, 1
      // Predicated region
      $region13: #{bottleneck_forward.7} parent=11 // pred_check
        %p189 = pneg %p85
      $region14: #{bottleneck_forward.7} parent=11 // pred_check_branch
        %191 = sbr.rel (%p189) target = $region16
      $region15: #{bottleneck_forward.7} parent=11 // pred_region
        _
      $region16: #{bottleneck_forward.7} parent=11 // pred_fallthru
        _
      // Predicated region
      $region17: #{bottleneck_forward.7} parent=11 // pred_check
        %p192 = pneg %p106
      $region18: #{bottleneck_forward.7} parent=11 // pred_check_branch
        %194 = sbr.rel (%p192) target = $region20
      $region19: #{bottleneck_forward.7} parent=11 // pred_region
        _
      $region20: #{bottleneck_forward.7} parent=11 // pred_fallthru
        _
      // Predicated region
      $region21: #{bottleneck_forward.7} parent=11 // pred_check
        %p195 = pneg %p127
      $region22: #{bottleneck_forward.7} parent=11 // pred_check_branch
        %197 = sbr.rel (%p195) target = $region24
      $region23: #{bottleneck_forward.7} parent=11 // pred_region
        _
      $region24: #{bottleneck_forward.7} parent=11 // pred_fallthru
        _
      // Predicated region
      $region25: #{bottleneck_forward.7} parent=11 // pred_check
        %p198 = pneg %p148
      $region26: #{bottleneck_forward.7} parent=11 // pred_check_branch
        %200 = sbr.rel (%p198) target = $region28
      $region27: #{bottleneck_forward.7} parent=11 // pred_region
        _
      $region28: #{bottleneck_forward.7} parent=11 // pred_fallthru
        _
    $region12: #{bottleneck_forward.7} parent=5 // pred_fallthru
      _
    %p201 = scmp.lt.s32.totalorder %s12, 2
    // Predicated region
    $region29: #{bottleneck_forward.7} parent=5 // pred_check
      %p202 = pneg %p201
    $region30: #{bottleneck_forward.7} parent=5 // pred_check_branch
      %204 = sbr.rel (%p202) target = $region32
    $region31: #{bottleneck_forward.7} parent=5 // pred_region
      // Predicated region
      $region33: #{bottleneck_forward.7} parent=31 // pred_check
        %p205 = pneg %p32
      $region34: #{bottleneck_forward.7} parent=31 // pred_check_branch
        %207 = sbr.rel (%p205) target = $region36
      $region35: #{bottleneck_forward.7} parent=31 // pred_region
        %s208 = smul.u32 32, %s12
        %p209 = scmp.lt.s32.totalorder %s208, 63
        %s210 = scalar_select %p209, %s208, 63
        %s211 = smul.addr %s210, 4
        %s212 = scalar_lea.vmem %s0, %s211
        %s213 = smul.u32 32, %s12
      $region36: #{bottleneck_forward.7} parent=31 // pred_fallthru
        _
      // Predicated region
      $region37: #{bottleneck_forward.7} parent=31 // pred_check
        %p214 = pneg %p58
      $region38: #{bottleneck_forward.7} parent=31 // pred_check_branch
        %216 = sbr.rel (%p214) target = $region40
      $region39: #{bottleneck_forward.7} parent=31 // pred_region
        %s217 = smul.u32 32, %s12
        %p218 = scmp.lt.s32.totalorder %s217, 63
        %s219 = scalar_select %p218, %s217, 63
        %s220 = smul.addr %s219, 4
        %s221 = scalar_lea.vmem %s1, %s220
        %s222 = smul.u32 32, %s12
      $region40: #{bottleneck_forward.7} parent=31 // pred_fallthru
        _
    $region32: #{bottleneck_forward.7} parent=5 // pred_fallthru
      _
    %p223 = scmp.le.s32.totalorder 1, %s12
    %p224 = scmp.lt.s32.totalorder %s12, 3
    %p225 = pnand %p223, %p224
    %p226 = pneg %p225
    // Predicated region
    $region41: #{bottleneck_forward.7} parent=5 // pred_check
      _
    $region42: #{bottleneck_forward.7} parent=5 // pred_check_branch
      %228 = sbr.rel (%p225) target = $region44
    $region43: #{bottleneck_forward.7} parent=5 // pred_region
      %s229 = ssub.s32 %s12, 1
      %s230 = smul.u32 32, %s17
      %p231 = scmp.lt.s32.totalorder %s230, 63
      %s232 = scalar_select %p231, %s230, 63
      %s233 = smul.addr %s232, 4
      %s234 = scalar_lea.vmem %s0, %s233
      %p235 = pneg %p38
      %p236 = pneg %p35
      %s237 = smul.u32 32, %s17
      %p238 = scmp.lt.s32.totalorder %s237, 63
      %s239 = scalar_select %p238, %s237, 63
      %s240 = smul.addr %s239, 4
      %s241 = scalar_lea.vmem %s1, %s240
      %p242 = pneg %p64
      %p243 = pneg %p61
      %p244 = pneg %p85
      %p245 = pneg %p82
      %p246 = pneg %p106
      %p247 = pneg %p103
      %p248 = pneg %p127
      %p249 = pneg %p124
      %p250 = pneg %p148
      %p251 = pneg %p145
      %p252 = pneg %p174
      %p253 = pneg %p171
      %s254 = smul.u32 32, %s17
      %p255 = scmp.lt.s32.totalorder %s254, 63
      %s256 = scalar_select %p255, %s254, 63
      %s257 = smul.addr %s256, 4
      %s258 = scalar_lea.vmem %s6, %s257
      %s259 = smul.u32 32, %s17
      %p260 = scmp.lt.s32.totalorder %s259, 63
      %s261 = scalar_select %p260, %s259, 63
      %s262 = smul.addr %s261, 4
      %s263 = scalar_lea.vmem %s0, %s262
      %s264 = smul.u32 32, %s17
      %s265 = smul.u32 32, %s17
      %p266 = scmp.lt.s32.totalorder %s265, 63
      %s267 = scalar_select %p266, %s265, 63
      %s268 = smul.addr %s267, 4
      %s269 = scalar_lea.vmem %s1, %s268
      %s270 = smul.u32 32, %s17
      %s271 = smul.u32 32, %s17
      %p272 = scmp.lt.s32.totalorder %s271, 63
      %s273 = scalar_select %p272, %s271, 63
      %s274 = smul.addr %s273, 4
      %s275 = scalar_lea.vmem %s6, %s274
      %s276 = smul.u32 32, %s17
      %v277 = vld [vmem:[%s263] sm:$0xf]
      %v278 = vld [vmem:[%s263 + $0x4] sm:$0xf]
      %v279 = vld [vmem:[%s263 + $0x8] sm:$0xf]
      %v280 = vld [vmem:[%s263 + $0xc] sm:$0xf]
      %v281 = vld [vmem:[%s263 + $0x10] sm:$0xf]
      %v282 = vld [vmem:[%s263 + $0x14] sm:$0xf]
      %v283 = vld [vmem:[%s263 + $0x18] sm:$0xf]
      %v284 = vld [vmem:[%s263 + $0x1c] sm:$0xf]
      %v285 = vld [vmem:[%s263 + $0x20] sm:$0xf]
      %v286 = vld [vmem:[%s263 + $0x24] sm:$0xf]
      %v287 = vld [vmem:[%s263 + $0x28] sm:$0xf]
      %v288 = vld [vmem:[%s263 + $0x2c] sm:$0xf]
      %v289 = vld [vmem:[%s263 + $0x30] sm:$0xf]
      %v290 = vld [vmem:[%s263 + $0x34] sm:$0xf]
      %v291 = vld [vmem:[%s263 + $0x38] sm:$0xf]
      %v292 = vld [vmem:[%s263 + $0x3c] sm:$0xf]
      %v293 = vld [vmem:[%s263 + $0x40] sm:$0xf]
      %v294 = vld [vmem:[%s263 + $0x44] sm:$0xf]
      %v295 = vld [vmem:[%s263 + $0x48] sm:$0xf]
      %v296 = vld [vmem:[%s263 + $0x4c] sm:$0xf]
      %v297 = vld [vmem:[%s263 + $0x50] sm:$0xf]
      %v298 = vld [vmem:[%s263 + $0x54] sm:$0xf]
      %v299 = vld [vmem:[%s263 + $0x58] sm:$0xf]
      %v300 = vld [vmem:[%s263 + $0x5c] sm:$0xf]
      %v301 = vld [vmem:[%s263 + $0x60] sm:$0xf]
      %v302 = vld [vmem:[%s263 + $0x64] sm:$0xf]
      %v303 = vld [vmem:[%s263 + $0x68] sm:$0xf]
      %v304 = vld [vmem:[%s263 + $0x6c] sm:$0xf]
      %v305 = vld [vmem:[%s263 + $0x70] sm:$0xf]
      %v306 = vld [vmem:[%s263 + $0x74] sm:$0xf]
      %v307 = vld [vmem:[%s263 + $0x78] sm:$0xf]
      %v308 = vld [vmem:[%s263 + $0x7c] sm:$0xf]
      %v309 = vunpack.c.l.bf16 %v277
      %v310 = vunpack.c.l.bf16 %v278
      %v311 = vunpack.c.l.bf16 %v279
      %v312 = vunpack.c.l.bf16 %v280
      %v313 = vunpack.c.l.bf16 %v281
      %v314 = vunpack.c.l.bf16 %v282
      %v315 = vunpack.c.l.bf16 %v283
      %v316 = vunpack.c.l.bf16 %v284
      %v317 = vunpack.c.l.bf16 %v285
      %v318 = vunpack.c.l.bf16 %v286
      %v319 = vunpack.c.l.bf16 %v287
      %v320 = vunpack.c.l.bf16 %v288
      %v321 = vunpack.c.l.bf16 %v289
      %v322 = vunpack.c.l.bf16 %v290
      %v323 = vunpack.c.l.bf16 %v291
      %v324 = vunpack.c.l.bf16 %v292
      %v325 = vunpack.c.l.bf16 %v293
      %v326 = vunpack.c.l.bf16 %v294
      %v327 = vunpack.c.l.bf16 %v295
      %v328 = vunpack.c.l.bf16 %v296
      %v329 = vunpack.c.l.bf16 %v297
      %v330 = vunpack.c.l.bf16 %v298
      %v331 = vunpack.c.l.bf16 %v299
      %v332 = vunpack.c.l.bf16 %v300
      %v333 = vunpack.c.l.bf16 %v301
      %v334 = vunpack.c.l.bf16 %v302
      %v335 = vunpack.c.l.bf16 %v303
      %v336 = vunpack.c.l.bf16 %v304
      %v337 = vunpack.c.l.bf16 %v305
      %v338 = vunpack.c.l.bf16 %v306
      %v339 = vunpack.c.l.bf16 %v307
      %v340 = vunpack.c.l.bf16 %v308
      %v341 = vld [vmem:[%s2] sm:$0x1]
      %v343 = vlaneseq
      %v344 = vshrl.u32 %v343, 7
      %v345 = vsub.s32 0, %v344
      %v346 = vrot.slane %v341, %v345
      %v348 = vmul.f32 %v309, %v346
      %v349 = vmul.f32 %v310, %v346
      %v350 = vmul.f32 %v311, %v346
      %v351 = vmul.f32 %v312, %v346
      %v352 = vmul.f32 %v313, %v346
      %v353 = vmul.f32 %v314, %v346
      %v354 = vmul.f32 %v315, %v346
      %v355 = vmul.f32 %v316, %v346
      %v356 = vmul.f32 %v317, %v346
      %v357 = vmul.f32 %v318, %v346
      %v358 = vmul.f32 %v319, %v346
      %v359 = vmul.f32 %v320, %v346
      %v360 = vmul.f32 %v321, %v346
      %v361 = vmul.f32 %v322, %v346
      %v362 = vmul.f32 %v323, %v346
      %v363 = vmul.f32 %v324, %v346
      %v364 = vmul.f32 %v325, %v346
      %v365 = vmul.f32 %v326, %v346
      %v366 = vmul.f32 %v327, %v346
      %v367 = vmul.f32 %v328, %v346
      %v368 = vmul.f32 %v329, %v346
      %v369 = vmul.f32 %v330, %v346
      %v370 = vmul.f32 %v331, %v346
      %v371 = vmul.f32 %v332, %v346
      %v372 = vmul.f32 %v333, %v346
      %v373 = vmul.f32 %v334, %v346
      %v374 = vmul.f32 %v335, %v346
      %v375 = vmul.f32 %v336, %v346
      %v376 = vmul.f32 %v337, %v346
      %v377 = vmul.f32 %v338, %v346
      %v378 = vmul.f32 %v339, %v346
      %v379 = vmul.f32 %v340, %v346
      %v380 = vld [vmem:[%s3] sm:$0x1]
      %v382 = vlaneseq
      %v383 = vshrl.u32 %v382, 7
      %v384 = vsub.s32 0, %v383
      %v385 = vrot.slane %v380, %v384
      %v387 = vadd.f32 %v348, %v385
      %v388 = vadd.f32 %v349, %v385
      %v389 = vadd.f32 %v350, %v385
      %v390 = vadd.f32 %v351, %v385
      %v391 = vadd.f32 %v352, %v385
      %v392 = vadd.f32 %v353, %v385
      %v393 = vadd.f32 %v354, %v385
      %v394 = vadd.f32 %v355, %v385
      %v395 = vadd.f32 %v356, %v385
      %v396 = vadd.f32 %v357, %v385
      %v397 = vadd.f32 %v358, %v385
      %v398 = vadd.f32 %v359, %v385
      %v399 = vadd.f32 %v360, %v385
      %v400 = vadd.f32 %v361, %v385
      %v401 = vadd.f32 %v362, %v385
      %v402 = vadd.f32 %v363, %v385
      %v403 = vadd.f32 %v364, %v385
      %v404 = vadd.f32 %v365, %v385
      %v405 = vadd.f32 %v366, %v385
      %v406 = vadd.f32 %v367, %v385
      %v407 = vadd.f32 %v368, %v385
      %v408 = vadd.f32 %v369, %v385
      %v409 = vadd.f32 %v370, %v385
      %v410 = vadd.f32 %v371, %v385
      %v411 = vadd.f32 %v372, %v385
      %v412 = vadd.f32 %v373, %v385
      %v413 = vadd.f32 %v374, %v385
      %v414 = vadd.f32 %v375, %v385
      %v415 = vadd.f32 %v376, %v385
      %v416 = vadd.f32 %v377, %v385
      %v417 = vadd.f32 %v378, %v385
      %v418 = vadd.f32 %v379, %v385
      %v419 = vld [vmem:[%s269] sm:$0xf]
      %v420 = vld [vmem:[%s269 + $0x4] sm:$0xf]
      %v421 = vld [vmem:[%s269 + $0x8] sm:$0xf]
      %v422 = vld [vmem:[%s269 + $0xc] sm:$0xf]
      %v423 = vld [vmem:[%s269 + $0x10] sm:$0xf]
      %v424 = vld [vmem:[%s269 + $0x14] sm:$0xf]
      %v425 = vld [vmem:[%s269 + $0x18] sm:$0xf]
      %v426 = vld [vmem:[%s269 + $0x1c] sm:$0xf]
      %v427 = vld [vmem:[%s269 + $0x20] sm:$0xf]
      %v428 = vld [vmem:[%s269 + $0x24] sm:$0xf]
      %v429 = vld [vmem:[%s269 + $0x28] sm:$0xf]
      %v430 = vld [vmem:[%s269 + $0x2c] sm:$0xf]
      %v431 = vld [vmem:[%s269 + $0x30] sm:$0xf]
      %v432 = vld [vmem:[%s269 + $0x34] sm:$0xf]
      %v433 = vld [vmem:[%s269 + $0x38] sm:$0xf]
      %v434 = vld [vmem:[%s269 + $0x3c] sm:$0xf]
      %v435 = vld [vmem:[%s269 + $0x40] sm:$0xf]
      %v436 = vld [vmem:[%s269 + $0x44] sm:$0xf]
      %v437 = vld [vmem:[%s269 + $0x48] sm:$0xf]
      %v438 = vld [vmem:[%s269 + $0x4c] sm:$0xf]
      %v439 = vld [vmem:[%s269 + $0x50] sm:$0xf]
      %v440 = vld [vmem:[%s269 + $0x54] sm:$0xf]
      %v441 = vld [vmem:[%s269 + $0x58] sm:$0xf]
      %v442 = vld [vmem:[%s269 + $0x5c] sm:$0xf]
      %v443 = vld [vmem:[%s269 + $0x60] sm:$0xf]
      %v444 = vld [vmem:[%s269 + $0x64] sm:$0xf]
      %v445 = vld [vmem:[%s269 + $0x68] sm:$0xf]
      %v446 = vld [vmem:[%s269 + $0x6c] sm:$0xf]
      %v447 = vld [vmem:[%s269 + $0x70] sm:$0xf]
      %v448 = vld [vmem:[%s269 + $0x74] sm:$0xf]
      %v449 = vld [vmem:[%s269 + $0x78] sm:$0xf]
      %v450 = vld [vmem:[%s269 + $0x7c] sm:$0xf]
      %v451 = vunpack.c.l.bf16 %v419
      %v452 = vunpack.c.l.bf16 %v420
      %v453 = vunpack.c.l.bf16 %v421
      %v454 = vunpack.c.l.bf16 %v422
      %v455 = vunpack.c.l.bf16 %v423
      %v456 = vunpack.c.l.bf16 %v424
      %v457 = vunpack.c.l.bf16 %v425
      %v458 = vunpack.c.l.bf16 %v426
      %v459 = vunpack.c.l.bf16 %v427
      %v460 = vunpack.c.l.bf16 %v428
      %v461 = vunpack.c.l.bf16 %v429
      %v462 = vunpack.c.l.bf16 %v430
      %v463 = vunpack.c.l.bf16 %v431
      %v464 = vunpack.c.l.bf16 %v432
      %v465 = vunpack.c.l.bf16 %v433
      %v466 = vunpack.c.l.bf16 %v434
      %v467 = vunpack.c.l.bf16 %v435
      %v468 = vunpack.c.l.bf16 %v436
      %v469 = vunpack.c.l.bf16 %v437
      %v470 = vunpack.c.l.bf16 %v438
      %v471 = vunpack.c.l.bf16 %v439
      %v472 = vunpack.c.l.bf16 %v440
      %v473 = vunpack.c.l.bf16 %v441
      %v474 = vunpack.c.l.bf16 %v442
      %v475 = vunpack.c.l.bf16 %v443
      %v476 = vunpack.c.l.bf16 %v444
      %v477 = vunpack.c.l.bf16 %v445
      %v478 = vunpack.c.l.bf16 %v446
      %v479 = vunpack.c.l.bf16 %v447
      %v480 = vunpack.c.l.bf16 %v448
      %v481 = vunpack.c.l.bf16 %v449
      %v482 = vunpack.c.l.bf16 %v450
      %v483 = vld [vmem:[%s4] sm:$0x1]
      %v485 = vlaneseq
      %v486 = vshrl.u32 %v485, 7
      %v487 = vsub.s32 0, %v486
      %v488 = vrot.slane %v483, %v487
      %v490 = vmul.f32 %v451, %v488
      %v491 = vmul.f32 %v452, %v488
      %v492 = vmul.f32 %v453, %v488
      %v493 = vmul.f32 %v454, %v488
      %v494 = vmul.f32 %v455, %v488
      %v495 = vmul.f32 %v456, %v488
      %v496 = vmul.f32 %v457, %v488
      %v497 = vmul.f32 %v458, %v488
      %v498 = vmul.f32 %v459, %v488
      %v499 = vmul.f32 %v460, %v488
      %v500 = vmul.f32 %v461, %v488
      %v501 = vmul.f32 %v462, %v488
      %v502 = vmul.f32 %v463, %v488
      %v503 = vmul.f32 %v464, %v488
      %v504 = vmul.f32 %v465, %v488
      %v505 = vmul.f32 %v466, %v488
      %v506 = vmul.f32 %v467, %v488
      %v507 = vmul.f32 %v468, %v488
      %v508 = vmul.f32 %v469, %v488
      %v509 = vmul.f32 %v470, %v488
      %v510 = vmul.f32 %v471, %v488
      %v511 = vmul.f32 %v472, %v488
      %v512 = vmul.f32 %v473, %v488
      %v513 = vmul.f32 %v474, %v488
      %v514 = vmul.f32 %v475, %v488
      %v515 = vmul.f32 %v476, %v488
      %v516 = vmul.f32 %v477, %v488
      %v517 = vmul.f32 %v478, %v488
      %v518 = vmul.f32 %v479, %v488
      %v519 = vmul.f32 %v480, %v488
      %v520 = vmul.f32 %v481, %v488
      %v521 = vmul.f32 %v482, %v488
      %v522 = vld [vmem:[%s5] sm:$0x1]
      %v524 = vlaneseq
      %v525 = vshrl.u32 %v524, 7
      %v526 = vsub.s32 0, %v525
      %v527 = vrot.slane %v522, %v526
      %v529 = vadd.f32 %v490, %v527
      %v530 = vadd.f32 %v491, %v527
      %v531 = vadd.f32 %v492, %v527
      %v532 = vadd.f32 %v493, %v527
      %v533 = vadd.f32 %v494, %v527
      %v534 = vadd.f32 %v495, %v527
      %v535 = vadd.f32 %v496, %v527
      %v536 = vadd.f32 %v497, %v527
      %v537 = vadd.f32 %v498, %v527
      %v538 = vadd.f32 %v499, %v527
      %v539 = vadd.f32 %v500, %v527
      %v540 = vadd.f32 %v501, %v527
      %v541 = vadd.f32 %v502, %v527
      %v542 = vadd.f32 %v503, %v527
      %v543 = vadd.f32 %v504, %v527
      %v544 = vadd.f32 %v505, %v527
      %v545 = vadd.f32 %v506, %v527
      %v546 = vadd.f32 %v507, %v527
      %v547 = vadd.f32 %v508, %v527
      %v548 = vadd.f32 %v509, %v527
      %v549 = vadd.f32 %v510, %v527
      %v550 = vadd.f32 %v511, %v527
      %v551 = vadd.f32 %v512, %v527
      %v552 = vadd.f32 %v513, %v527
      %v553 = vadd.f32 %v514, %v527
      %v554 = vadd.f32 %v515, %v527
      %v555 = vadd.f32 %v516, %v527
      %v556 = vadd.f32 %v517, %v527
      %v557 = vadd.f32 %v518, %v527
      %v558 = vadd.f32 %v519, %v527
      %v559 = vadd.f32 %v520, %v527
      %v560 = vadd.f32 %v521, %v527
      %v561 = vadd.f32 %v387, %v529
      %v562 = vadd.f32 %v388, %v530
      %v563 = vadd.f32 %v389, %v531
      %v564 = vadd.f32 %v390, %v532
      %v565 = vadd.f32 %v391, %v533
      %v566 = vadd.f32 %v392, %v534
      %v567 = vadd.f32 %v393, %v535
      %v568 = vadd.f32 %v394, %v536
      %v569 = vadd.f32 %v395, %v537
      %v570 = vadd.f32 %v396, %v538
      %v571 = vadd.f32 %v397, %v539
      %v572 = vadd.f32 %v398, %v540
      %v573 = vadd.f32 %v399, %v541
      %v574 = vadd.f32 %v400, %v542
      %v575 = vadd.f32 %v401, %v543
      %v576 = vadd.f32 %v402, %v544
      %v577 = vadd.f32 %v403, %v545
      %v578 = vadd.f32 %v404, %v546
      %v579 = vadd.f32 %v405, %v547
      %v580 = vadd.f32 %v406, %v548
      %v581 = vadd.f32 %v407, %v549
      %v582 = vadd.f32 %v408, %v550
      %v583 = vadd.f32 %v409, %v551
      %v584 = vadd.f32 %v410, %v552
      %v585 = vadd.f32 %v411, %v553
      %v586 = vadd.f32 %v412, %v554
      %v587 = vadd.f32 %v413, %v555
      %v588 = vadd.f32 %v414, %v556
      %v589 = vadd.f32 %v415, %v557
      %v590 = vadd.f32 %v416, %v558
      %v591 = vadd.f32 %v417, %v559
      %v592 = vadd.f32 %v418, %v560
      %v593 = vmax.f32 %v561, 0.0
      %v594 = vmax.f32 %v562, 0.0
      %v595 = vmax.f32 %v563, 0.0
      %v596 = vmax.f32 %v564, 0.0
      %v597 = vmax.f32 %v565, 0.0
      %v598 = vmax.f32 %v566, 0.0
      %v599 = vmax.f32 %v567, 0.0
      %v600 = vmax.f32 %v568, 0.0
      %v601 = vmax.f32 %v569, 0.0
      %v602 = vmax.f32 %v570, 0.0
      %v603 = vmax.f32 %v571, 0.0
      %v604 = vmax.f32 %v572, 0.0
      %v605 = vmax.f32 %v573, 0.0
      %v606 = vmax.f32 %v574, 0.0
      %v607 = vmax.f32 %v575, 0.0
      %v608 = vmax.f32 %v576, 0.0
      %v609 = vmax.f32 %v577, 0.0
      %v610 = vmax.f32 %v578, 0.0
      %v611 = vmax.f32 %v579, 0.0
      %v612 = vmax.f32 %v580, 0.0
      %v613 = vmax.f32 %v581, 0.0
      %v614 = vmax.f32 %v582, 0.0
      %v615 = vmax.f32 %v583, 0.0
      %v616 = vmax.f32 %v584, 0.0
      %v617 = vmax.f32 %v585, 0.0
      %v618 = vmax.f32 %v586, 0.0
      %v619 = vmax.f32 %v587, 0.0
      %v620 = vmax.f32 %v588, 0.0
      %v621 = vmax.f32 %v589, 0.0
      %v622 = vmax.f32 %v590, 0.0
      %v623 = vmax.f32 %v591, 0.0
      %v624 = vmax.f32 %v592, 0.0
      %v625 = vpack.c.bf16 %v594, %v593
      %v626 = vpack.c.bf16 %v596, %v595
      %v627 = vpack.c.bf16 %v598, %v597
      %v628 = vpack.c.bf16 %v600, %v599
      %v629 = vpack.c.bf16 %v602, %v601
      %v630 = vpack.c.bf16 %v604, %v603
      %v631 = vpack.c.bf16 %v606, %v605
      %v632 = vpack.c.bf16 %v608, %v607
      %v633 = vpack.c.bf16 %v610, %v609
      %v634 = vpack.c.bf16 %v612, %v611
      %v635 = vpack.c.bf16 %v614, %v613
      %v636 = vpack.c.bf16 %v616, %v615
      %v637 = vpack.c.bf16 %v618, %v617
      %v638 = vpack.c.bf16 %v620, %v619
      %v639 = vpack.c.bf16 %v622, %v621
      %v640 = vpack.c.bf16 %v624, %v623
      %v657 = vunpack.c.l.b16 %v625
      %v658 = vunpack.c.h.b16 %v625
      %v659 = vunpack.c.l.b16 %v626
      %v660 = vunpack.c.h.b16 %v626
      %v661 = vunpack.c.l.b16 %v627
      %v662 = vunpack.c.h.b16 %v627
      %v663 = vunpack.c.l.b16 %v628
      %v664 = vunpack.c.h.b16 %v628
      %v665 = vunpack.c.l.b16 %v629
      %v666 = vunpack.c.h.b16 %v629
      %v667 = vunpack.c.l.b16 %v630
      %v668 = vunpack.c.h.b16 %v630
      %v669 = vunpack.c.l.b16 %v631
      %v670 = vunpack.c.h.b16 %v631
      %v671 = vunpack.c.l.b16 %v632
      %v672 = vunpack.c.h.b16 %v632
      %v673 = vunpack.c.l.b16 %v633
      %v674 = vunpack.c.h.b16 %v633
      %v675 = vunpack.c.l.b16 %v634
      %v676 = vunpack.c.h.b16 %v634
      %v677 = vunpack.c.l.b16 %v635
      %v678 = vunpack.c.h.b16 %v635
      %v679 = vunpack.c.l.b16 %v636
      %v680 = vunpack.c.h.b16 %v636
      %v681 = vunpack.c.l.b16 %v637
      %v682 = vunpack.c.h.b16 %v637
      %v683 = vunpack.c.l.b16 %v638
      %v684 = vunpack.c.h.b16 %v638
      %v685 = vunpack.c.l.b16 %v639
      %v686 = vunpack.c.h.b16 %v639
      %v687 = vunpack.c.l.b16 %v640
      %v688 = vunpack.c.h.b16 %v640
      %v689 = vpack.c.b16 %v657, %v657
      %v690 = vpack.c.b16 %v658, %v658
      %v691 = vpack.c.b16 %v659, %v659
      %v692 = vpack.c.b16 %v660, %v660
      %v693 = vpack.c.b16 %v661, %v661
      %v694 = vpack.c.b16 %v662, %v662
      %v695 = vpack.c.b16 %v663, %v663
      %v696 = vpack.c.b16 %v664, %v664
      %v697 = vpack.c.b16 %v665, %v665
      %v698 = vpack.c.b16 %v666, %v666
      %v699 = vpack.c.b16 %v667, %v667
      %v700 = vpack.c.b16 %v668, %v668
      %v701 = vpack.c.b16 %v669, %v669
      %v702 = vpack.c.b16 %v670, %v670
      %v703 = vpack.c.b16 %v671, %v671
      %v704 = vpack.c.b16 %v672, %v672
      %v705 = vpack.c.b16 %v673, %v673
      %v706 = vpack.c.b16 %v674, %v674
      %v707 = vpack.c.b16 %v675, %v675
      %v708 = vpack.c.b16 %v676, %v676
      %v709 = vpack.c.b16 %v677, %v677
      %v710 = vpack.c.b16 %v678, %v678
      %v711 = vpack.c.b16 %v679, %v679
      %v712 = vpack.c.b16 %v680, %v680
      %v713 = vpack.c.b16 %v681, %v681
      %v714 = vpack.c.b16 %v682, %v682
      %v715 = vpack.c.b16 %v683, %v683
      %v716 = vpack.c.b16 %v684, %v684
      %v717 = vpack.c.b16 %v685, %v685
      %v718 = vpack.c.b16 %v686, %v686
      %v719 = vpack.c.b16 %v687, %v687
      %v720 = vpack.c.b16 %v688, %v688
      %753 = vst [vmem:[%s275] sm:$0xf] %v689
      %754 = vst [vmem:[%s275 + $0x4] sm:$0xf] %v690
      %755 = vst [vmem:[%s275 + $0x8] sm:$0xf] %v691
      %756 = vst [vmem:[%s275 + $0xc] sm:$0xf] %v692
      %757 = vst [vmem:[%s275 + $0x10] sm:$0xf] %v693
      %758 = vst [vmem:[%s275 + $0x14] sm:$0xf] %v694
      %759 = vst [vmem:[%s275 + $0x18] sm:$0xf] %v695
      %760 = vst [vmem:[%s275 + $0x1c] sm:$0xf] %v696
      %761 = vst [vmem:[%s275 + $0x20] sm:$0xf] %v697
      %762 = vst [vmem:[%s275 + $0x24] sm:$0xf] %v698
      %763 = vst [vmem:[%s275 + $0x28] sm:$0xf] %v699
      %764 = vst [vmem:[%s275 + $0x2c] sm:$0xf] %v700
      %765 = vst [vmem:[%s275 + $0x30] sm:$0xf] %v701
      %766 = vst [vmem:[%s275 + $0x34] sm:$0xf] %v702
      %767 = vst [vmem:[%s275 + $0x38] sm:$0xf] %v703
      %768 = vst [vmem:[%s275 + $0x3c] sm:$0xf] %v704
      %769 = vst [vmem:[%s275 + $0x40] sm:$0xf] %v705
      %770 = vst [vmem:[%s275 + $0x44] sm:$0xf] %v706
      %771 = vst [vmem:[%s275 + $0x48] sm:$0xf] %v707
      %772 = vst [vmem:[%s275 + $0x4c] sm:$0xf] %v708
      %773 = vst [vmem:[%s275 + $0x50] sm:$0xf] %v709
      %774 = vst [vmem:[%s275 + $0x54] sm:$0xf] %v710
      %775 = vst [vmem:[%s275 + $0x58] sm:$0xf] %v711
      %776 = vst [vmem:[%s275 + $0x5c] sm:$0xf] %v712
      %777 = vst [vmem:[%s275 + $0x60] sm:$0xf] %v713
      %778 = vst [vmem:[%s275 + $0x64] sm:$0xf] %v714
      %779 = vst [vmem:[%s275 + $0x68] sm:$0xf] %v715
      %780 = vst [vmem:[%s275 + $0x6c] sm:$0xf] %v716
      %781 = vst [vmem:[%s275 + $0x70] sm:$0xf] %v717
      %782 = vst [vmem:[%s275 + $0x74] sm:$0xf] %v718
      %783 = vst [vmem:[%s275 + $0x78] sm:$0xf] %v719
      %784 = vst [vmem:[%s275 + $0x7c] sm:$0xf] %v720
      %s785 = smul.u32 32, %s17
      %p786 = scmp.lt.s32.totalorder %s785, 63
      %s787 = scalar_select %p786, %s785, 63
      %s788 = smul.addr %s787, 4
      %s789 = scalar_lea.vmem %s6, %s788
      // Predicated region
      $region45: #{bottleneck_forward.7} parent=43 // pred_check
        %p790 = pneg %p171
      $region46: #{bottleneck_forward.7} parent=43 // pred_check_branch
        %792 = sbr.rel (%p790) target = $region48
      $region47: #{bottleneck_forward.7} parent=43 // pred_region
        %s793 = smul.u32 32, %s17
      $region48: #{bottleneck_forward.7} parent=43 // pred_fallthru
        _
    $region44: #{bottleneck_forward.7} parent=5 // pred_fallthru
      _
    %p794 = scmp.le.s32.totalorder 2, %s12
    // Predicated region
    $region49: #{bottleneck_forward.7} parent=5 // pred_check
      %p795 = pneg %p794
    $region50: #{bottleneck_forward.7} parent=5 // pred_check_branch
      %797 = sbr.rel (%p795) target = $region52
    $region51: #{bottleneck_forward.7} parent=5 // pred_region
      %s798 = ssub.s32 %s12, 2
      // Predicated region
      $region53: #{bottleneck_forward.7} parent=51 // pred_check
        %p799 = pneg %p177
      $region54: #{bottleneck_forward.7} parent=51 // pred_check_branch
        %801 = sbr.rel (%p799) target = $region56
      $region55: #{bottleneck_forward.7} parent=51 // pred_region
        %s802 = smul.u32 32, %s18
        %p803 = scmp.lt.s32.totalorder %s802, 63
        %s804 = scalar_select %p803, %s802, 63
        %s805 = smul.addr %s804, 4
        %s806 = scalar_lea.vmem %s6, %s805
      $region56: #{bottleneck_forward.7} parent=51 // pred_fallthru
        _
    $region52: #{bottleneck_forward.7} parent=5 // pred_fallthru
      _
  $region6: #{bottleneck_forward.7} parent=0 // loop_footer
    %s16 = sadd.s32 1, %s12
  $region7: #{bottleneck_forward.7} parent=0 // loop_footer_branch
    %11 = sbr.rel target = $region3
  $region8: #{bottleneck_forward.7} parent=0 // loop_exit
    _

// kernel: bottleneck_forward.4
$region0: #{bottleneck_forward.4}
  #allocation0 [shape = 'u32[]', space=smem, size = 0x4, offset = 0x4, fixed_abs, tag = 'smem constant byte address 0x4 - core index']
  #allocation1 [shape = 'u32[144,128]{1,0:T(1,128)}', space=vmem, size = 0x12000, scoped, tag = 'internal scratch']
  %s0 = inlined_call_operand.vmem [shape: bf16[512,128], index: 0, kind: input, shape index: {}]
  %s1 = inlined_call_operand.vmem [shape: bf16[128,128], index: 1, kind: input, shape index: {}]
  %s2 = inlined_call_operand.vmem [shape: bf16[512,128], index: 2, kind: output, shape index: {0}]
  %s3 = inlined_call_operand.vmem [shape: f32[2,2,128], index: 3, kind: output, shape index: {1}]
  %4 = xla_tuple %s2, %s3
  %s5 = sld [smem:[#allocation0]]
  $region49: #{bottleneck_forward.4} parent=0
    _
  %s7 = ssub.s32 1, %s5
  %s8 = scalar_select 0, %s7, %s5
  loop: start=0, step=1, limit=4
  $region2: #{bottleneck_forward.4} parent=0 // loop_pre_header
    _
  $region3: #{bottleneck_forward.4} parent=0 // loop_header
    %s10 = sphi 0, %s14
    %p11 = scmp.ge.s32.totalorder %s10, 4
    %s20 = sphi 0, %s22
    %s23 = sphi 0, %s20
    %s24 = sphi 0, %s23
    %s40 = sphi 0, %s24
    %s44 = sphi 0, %s44
    %s46 = sphi 0, %s44
    %s47 = sphi 0, %s46
    %s61 = sphi 0, %s47
    %s67 = sphi 0, %s69
    %s70 = sphi 0, %s67
    %s71 = sphi 0, %s70
    %s87 = sphi 0, %s71
    %s93 = sphi 0, %s95
    %s96 = sphi 0, %s93
    %s97 = sphi 0, %s96
    %s113 = sphi 0, %s97
  $region4: #{bottleneck_forward.4} parent=0 // loop_header_branch
    %13 = sbr.rel (%p11) target = $region8
  $region5: #{bottleneck_forward.4} parent=0 // loop_body
    %s15 = ssub.s32 %s10, 1
    %s16 = ssub.s32 %s10, 2
    %s17 = sadd.s32 %s10, 1
    %s18 = ssub.s32 %s10, %s17
    %p19 = scmp.eq.s32.totalorder %s18, 0
    %s21 = sadd.s32 %s20, 1
    %s22 = scalar_select %p19, %s20, %s21
    %p25 = pneg %p19
    %p26 = scmp.eq.s32.totalorder %s10, 1
    %p27 = por %p25, %p26
    %p28 = scmp.ne.s32.totalorder %s20, %s23
    %p29 = scmp.eq.s32.totalorder %s10, 0
    %p30 = por %p28, %p29
    %p31 = scmp.ne.s32.totalorder %s20, %s23
    %p32 = scmp.eq.s32.totalorder %s15, 1
    %p33 = por %p31, %p32
    %p34 = scmp.ne.s32.totalorder %s23, %s24
    %p35 = scmp.eq.s32.totalorder %s15, 0
    %p36 = por %p34, %p35
    %p37 = scmp.ne.s32.totalorder %s23, %s24
    %p38 = scmp.eq.s32.totalorder %s16, 1
    %p39 = por %p37, %p38
    %p41 = scmp.ne.s32.totalorder %s24, %s40
    %p42 = scmp.eq.s32.totalorder %s16, 0
    %p43 = por %p41, %p42
    %s45 = sadd.s32 %s44, 1
    %p48 = scmp.eq.s32.totalorder %s10, 1
    %p49 = scmp.ne.s32.totalorder %s44, %s46
    %p50 = scmp.eq.s32.totalorder %s10, 0
    %p51 = por %p49, %p50
    %p52 = scmp.ne.s32.totalorder %s44, %s46
    %p53 = scmp.eq.s32.totalorder %s15, 1
    %p54 = por %p52, %p53
    %p55 = scmp.ne.s32.totalorder %s46, %s47
    %p56 = scmp.eq.s32.totalorder %s15, 0
    %p57 = por %p55, %p56
    %p58 = scmp.ne.s32.totalorder %s46, %s47
    %p59 = scmp.eq.s32.totalorder %s16, 1
    %p60 = por %p58, %p59
    %p62 = scmp.ne.s32.totalorder %s47, %s61
    %p63 = scmp.eq.s32.totalorder %s16, 0
    %p64 = por %p62, %p63
    %s65 = ssub.s32 %s10, %s17
    %p66 = scmp.eq.s32.totalorder %s65, 0
    %s68 = sadd.s32 %s67, 1
    %s69 = scalar_select %p66, %s67, %s68
    %p72 = pneg %p66
    %p73 = scmp.eq.s32.totalorder %s10, 1
    %p74 = por %p72, %p73
    %p75 = scmp.ne.s32.totalorder %s67, %s70
    %p76 = scmp.eq.s32.totalorder %s10, 0
    %p77 = por %p75, %p76
    %p78 = scmp.ne.s32.totalorder %s67, %s70
    %p79 = scmp.eq.s32.totalorder %s15, 1
    %p80 = por %p78, %p79
    %p81 = scmp.ne.s32.totalorder %s70, %s71
    %p82 = scmp.eq.s32.totalorder %s15, 0
    %p83 = por %p81, %p82
    %p84 = scmp.ne.s32.totalorder %s70, %s71
    %p85 = scmp.eq.s32.totalorder %s16, 1
    %p86 = por %p84, %p85
    %p88 = scmp.ne.s32.totalorder %s71, %s87
    %p89 = scmp.eq.s32.totalorder %s16, 0
    %p90 = por %p88, %p89
    %s91 = ssub.s32 %s10, %s17
    %p92 = scmp.eq.s32.totalorder %s91, 0
    %s94 = sadd.s32 %s93, 1
    %s95 = scalar_select %p92, %s93, %s94
    %p98 = pneg %p92
    %p99 = scmp.eq.s32.totalorder %s10, 1
    %p100 = por %p98, %p99
    %p101 = scmp.ne.s32.totalorder %s93, %s96
    %p102 = scmp.eq.s32.totalorder %s10, 0
    %p103 = por %p101, %p102
    %p104 = scmp.ne.s32.totalorder %s93, %s96
    %p105 = scmp.eq.s32.totalorder %s15, 1
    %p106 = por %p104, %p105
    %p107 = scmp.ne.s32.totalorder %s96, %s97
    %p108 = scmp.eq.s32.totalorder %s15, 0
    %p109 = por %p107, %p108
    %p110 = scmp.ne.s32.totalorder %s96, %s97
    %p111 = scmp.eq.s32.totalorder %s16, 1
    %p112 = por %p110, %p111
    %p114 = scmp.ne.s32.totalorder %s97, %s113
    %p115 = scmp.eq.s32.totalorder %s16, 0
    %p116 = por %p114, %p115
    %p117 = scmp.le.s32.totalorder 1, %s10
    %p118 = scmp.lt.s32.totalorder %s10, 3
    %p119 = pnand %p117, %p118
    %p120 = pneg %p119
    // Predicated region
    $region9: #{bottleneck_forward.4} parent=5 // pred_check
      _
    $region10: #{bottleneck_forward.4} parent=5 // pred_check_branch
      %122 = sbr.rel (%p119) target = $region12
    $region11: #{bottleneck_forward.4} parent=5 // pred_region
      %s123 = ssub.s32 %s10, 1
      // Predicated region
      $region13: #{bottleneck_forward.4} parent=11 // pred_check
        %p124 = pneg %p57
      $region14: #{bottleneck_forward.4} parent=11 // pred_check_branch
        %126 = sbr.rel (%p124) target = $region16
      $region15: #{bottleneck_forward.4} parent=11 // pred_region
        _
      $region16: #{bottleneck_forward.4} parent=11 // pred_fallthru
        _
    $region12: #{bottleneck_forward.4} parent=5 // pred_fallthru
      _
    %p127 = scmp.lt.s32.totalorder %s10, 2
    // Predicated region
    $region17: #{bottleneck_forward.4} parent=5 // pred_check
      %p128 = pneg %p127
    $region18: #{bottleneck_forward.4} parent=5 // pred_check_branch
      %130 = sbr.rel (%p128) target = $region20
    $region19: #{bottleneck_forward.4} parent=5 // pred_region
      // Predicated region
      $region21: #{bottleneck_forward.4} parent=19 // pred_check
        %p131 = pneg %p30
      $region22: #{bottleneck_forward.4} parent=19 // pred_check_branch
        %133 = sbr.rel (%p131) target = $region24
      $region23: #{bottleneck_forward.4} parent=19 // pred_region
        %s134 = smul.u32 32, %s10
        %p135 = scmp.lt.s32.totalorder %s134, 63
        %s136 = scalar_select %p135, %s134, 63
        %s137 = smul.addr %s136, 4
        %s138 = scalar_lea.vmem %s0, %s137
        %s139 = smul.u32 32, %s10
      $region24: #{bottleneck_forward.4} parent=19 // pred_fallthru
        _
    $region20: #{bottleneck_forward.4} parent=5 // pred_fallthru
      _
    %p140 = scmp.le.s32.totalorder 1, %s10
    %p141 = scmp.lt.s32.totalorder %s10, 3
    %p142 = pnand %p140, %p141
    %p143 = pneg %p142
    // Predicated region
    $region25: #{bottleneck_forward.4} parent=5 // pred_check
      _
    $region26: #{bottleneck_forward.4} parent=5 // pred_check_branch
      %145 = sbr.rel (%p142) target = $region28
    $region27: #{bottleneck_forward.4} parent=5 // pred_region
      %s146 = ssub.s32 %s10, 1
      %s147 = smul.u32 32, %s15
      %p148 = scmp.lt.s32.totalorder %s147, 63
      %s149 = scalar_select %p148, %s147, 63
      %s150 = smul.addr %s149, 4
      %s151 = scalar_lea.vmem %s0, %s150
      %p152 = pneg %p36
      %p153 = pneg %p33
      %p154 = pneg %p57
      %p155 = pneg %p54
      %p156 = pneg %p83
      %p157 = pneg %p80
      %s158 = smul.u32 32, %s15
      %p159 = scmp.lt.s32.totalorder %s158, 63
      %s160 = scalar_select %p159, %s158, 63
      %s161 = smul.addr %s160, 4
      %s162 = scalar_lea.vmem %s2, %s161
      %p163 = pneg %p109
      %p164 = pneg %p106
      %p165 = scmp.lt.s32.totalorder %s15, 1
      %s166 = scalar_select %p165, %s15, 1
      %s167 = smul.addr %s166, 2
      %s168 = scalar_lea.vmem %s3, %s167
      %s169 = smul.u32 32, %s15
      %p170 = scmp.lt.s32.totalorder %s169, 63
      %s171 = scalar_select %p170, %s169, 63
      %s172 = smul.addr %s171, 4
      %s173 = scalar_lea.vmem %s0, %s172
      %s174 = smul.u32 32, %s15
      %s175 = smul.u32 32, %s15
      %p176 = scmp.lt.s32.totalorder %s175, 63
      %s177 = scalar_select %p176, %s175, 63
      %s178 = smul.addr %s177, 4
      %s179 = scalar_lea.vmem %s2, %s178
      %s180 = smul.u32 32, %s15
      %p181 = scmp.lt.s32.totalorder %s15, 1
      %s182 = scalar_select %p181, %s15, 1
      %s183 = smul.addr %s182, 2
      %s184 = scalar_lea.vmem %s3, %s183
      %v186 = vld [vmem:[%s173] sm:$0xf]
      %v187 = vld [vmem:[%s173 + $0x4] sm:$0xf]
      %v188 = vld [vmem:[%s173 + $0x8] sm:$0xf]
      %v189 = vld [vmem:[%s173 + $0xc] sm:$0xf]
      %v190 = vld [vmem:[%s173 + $0x10] sm:$0xf]
      %v191 = vld [vmem:[%s173 + $0x14] sm:$0xf]
      %v192 = vld [vmem:[%s173 + $0x18] sm:$0xf]
      %v193 = vld [vmem:[%s173 + $0x1c] sm:$0xf]
      %v194 = vld [vmem:[%s173 + $0x20] sm:$0xf]
      %v195 = vld [vmem:[%s173 + $0x24] sm:$0xf]
      %v196 = vld [vmem:[%s173 + $0x28] sm:$0xf]
      %v197 = vld [vmem:[%s173 + $0x2c] sm:$0xf]
      %v198 = vld [vmem:[%s173 + $0x30] sm:$0xf]
      %v199 = vld [vmem:[%s173 + $0x34] sm:$0xf]
      %v200 = vld [vmem:[%s173 + $0x38] sm:$0xf]
      %v201 = vld [vmem:[%s173 + $0x3c] sm:$0xf]
      %v202 = vld [vmem:[%s173 + $0x40] sm:$0xf]
      %v203 = vld [vmem:[%s173 + $0x44] sm:$0xf]
      %v204 = vld [vmem:[%s173 + $0x48] sm:$0xf]
      %v205 = vld [vmem:[%s173 + $0x4c] sm:$0xf]
      %v206 = vld [vmem:[%s173 + $0x50] sm:$0xf]
      %v207 = vld [vmem:[%s173 + $0x54] sm:$0xf]
      %v208 = vld [vmem:[%s173 + $0x58] sm:$0xf]
      %v209 = vld [vmem:[%s173 + $0x5c] sm:$0xf]
      %v210 = vld [vmem:[%s173 + $0x60] sm:$0xf]
      %v211 = vld [vmem:[%s173 + $0x64] sm:$0xf]
      %v212 = vld [vmem:[%s173 + $0x68] sm:$0xf]
      %v213 = vld [vmem:[%s173 + $0x6c] sm:$0xf]
      %v214 = vld [vmem:[%s173 + $0x70] sm:$0xf]
      %v215 = vld [vmem:[%s173 + $0x74] sm:$0xf]
      %v216 = vld [vmem:[%s173 + $0x78] sm:$0xf]
      %v217 = vld [vmem:[%s173 + $0x7c] sm:$0xf]
      %v218 = vld [vmem:[%s1] sm:$0xf]
      %v219 = vld [vmem:[%s1 + $0x4] sm:$0xf]
      %v220 = vld [vmem:[%s1 + $0x8] sm:$0xf]
      %v221 = vld [vmem:[%s1 + $0xc] sm:$0xf]
      %v222 = vld [vmem:[%s1 + $0x10] sm:$0xf]
      %v223 = vld [vmem:[%s1 + $0x14] sm:$0xf]
      %v224 = vld [vmem:[%s1 + $0x18] sm:$0xf]
      %v225 = vld [vmem:[%s1 + $0x1c] sm:$0xf]
      %v226 = vld [vmem:[%s1 + $0x20] sm:$0xf]
      %v227 = vld [vmem:[%s1 + $0x24] sm:$0xf]
      %v228 = vld [vmem:[%s1 + $0x28] sm:$0xf]
      %v229 = vld [vmem:[%s1 + $0x2c] sm:$0xf]
      %v230 = vld [vmem:[%s1 + $0x30] sm:$0xf]
      %v231 = vld [vmem:[%s1 + $0x34] sm:$0xf]
      %v232 = vld [vmem:[%s1 + $0x38] sm:$0xf]
      %v233 = vld [vmem:[%s1 + $0x3c] sm:$0xf]
      %v266 = vunpack.c.l.b16 %v186
      %v267 = vunpack.c.l.b16 %v187
      %v268 = vunpack.c.l.b16 %v188
      %v269 = vunpack.c.l.b16 %v189
      %v270 = vunpack.c.l.b16 %v190
      %v271 = vunpack.c.l.b16 %v191
      %v272 = vunpack.c.l.b16 %v192
      %v273 = vunpack.c.l.b16 %v193
      %v274 = vunpack.c.l.b16 %v194
      %v275 = vunpack.c.l.b16 %v195
      %v276 = vunpack.c.l.b16 %v196
      %v277 = vunpack.c.l.b16 %v197
      %v278 = vunpack.c.l.b16 %v198
      %v279 = vunpack.c.l.b16 %v199
      %v280 = vunpack.c.l.b16 %v200
      %v281 = vunpack.c.l.b16 %v201
      %v282 = vunpack.c.l.b16 %v202
      %v283 = vunpack.c.l.b16 %v203
      %v284 = vunpack.c.l.b16 %v204
      %v285 = vunpack.c.l.b16 %v205
      %v286 = vunpack.c.l.b16 %v206
      %v287 = vunpack.c.l.b16 %v207
      %v288 = vunpack.c.l.b16 %v208
      %v289 = vunpack.c.l.b16 %v209
      %v290 = vunpack.c.l.b16 %v210
      %v291 = vunpack.c.l.b16 %v211
      %v292 = vunpack.c.l.b16 %v212
      %v293 = vunpack.c.l.b16 %v213
      %v294 = vunpack.c.l.b16 %v214
      %v295 = vunpack.c.l.b16 %v215
      %v296 = vunpack.c.l.b16 %v216
      %v297 = vunpack.c.l.b16 %v217
      %v298 = vpack.c.b16 %v267, %v266
      %v299 = vpack.c.b16 %v269, %v268
      %v300 = vpack.c.b16 %v271, %v270
      %v301 = vpack.c.b16 %v273, %v272
      %v302 = vpack.c.b16 %v275, %v274
      %v303 = vpack.c.b16 %v277, %v276
      %v304 = vpack.c.b16 %v279, %v278
      %v305 = vpack.c.b16 %v281, %v280
      %v306 = vpack.c.b16 %v283, %v282
      %v307 = vpack.c.b16 %v285, %v284
      %v308 = vpack.c.b16 %v287, %v286
      %v309 = vpack.c.b16 %v289, %v288
      %v310 = vpack.c.b16 %v291, %v290
      %v311 = vpack.c.b16 %v293, %v292
      %v312 = vpack.c.b16 %v295, %v294
      %v313 = vpack.c.b16 %v297, %v296
      %v346 = vunpack.c.l.b16 %v218
      %v347 = vunpack.c.l.b16 %v219
      %v348 = vunpack.c.l.b16 %v220
      %v349 = vunpack.c.l.b16 %v221
      %v350 = vunpack.c.l.b16 %v222
      %v351 = vunpack.c.l.b16 %v223
      %v352 = vunpack.c.l.b16 %v224
      %v353 = vunpack.c.l.b16 %v225
      %v354 = vunpack.c.l.b16 %v226
      %v355 = vunpack.c.l.b16 %v227
      %v356 = vunpack.c.l.b16 %v228
      %v357 = vunpack.c.l.b16 %v229
      %v358 = vunpack.c.l.b16 %v230
      %v359 = vunpack.c.l.b16 %v231
      %v360 = vunpack.c.l.b16 %v232
      %v361 = vunpack.c.l.b16 %v233
      %v362 = vpack.c.b16 %v347, %v346
      %v363 = vpack.c.b16 %v349, %v348
      %v364 = vpack.c.b16 %v351, %v350
      %v365 = vpack.c.b16 %v353, %v352
      %v366 = vpack.c.b16 %v355, %v354
      %v367 = vpack.c.b16 %v357, %v356
      %v368 = vpack.c.b16 %v359, %v358
      %v369 = vpack.c.b16 %v361, %v360
      %378 = vmatprep.subr.bf16.mxu0 0
      %379 = vmatpush1.bf16.msra.mxu0 %v362
      %380 = vmatprep.subr.bf16.mxu0 0
      %381 = vmatpush1.bf16.msra.mxu0 %v363
      %382 = vmatprep.subr.bf16.mxu0 0
      %383 = vmatpush1.bf16.msra.mxu0 %v364
      %384 = vmatprep.subr.bf16.mxu0 0
      %385 = vmatpush1.bf16.msra.mxu0 %v365
      %386 = vmatprep.subr.bf16.mxu0 0
      %387 = vmatpush1.bf16.msra.mxu0 %v366
      %388 = vmatprep.subr.bf16.mxu0 0
      %389 = vmatpush1.bf16.msra.mxu0 %v367
      %390 = vmatprep.subr.bf16.mxu0 0
      %391 = vmatpush1.bf16.msra.mxu0 %v368
      %392 = vmatprep.subr.bf16.mxu0 0
      %393 = vmatpush1.bf16.msra.mxu0 %v369
      %394 = vmatprep.subr.bf16.mxu0 0
      %395 = vmatpush1.bf16.msra.mxu0 0
      %396 = vmatprep.subr.bf16.mxu0 0
      %397 = vmatpush1.bf16.msra.mxu0 0
      %398 = vmatprep.subr.bf16.mxu0 0
      %399 = vmatpush1.bf16.msra.mxu0 0
      %400 = vmatprep.subr.bf16.mxu0 0
      %401 = vmatpush1.bf16.msra.mxu0 0
      %402 = vmatprep.subr.bf16.mxu0 0
      %403 = vmatpush1.bf16.msra.mxu0 0
      %404 = vmatprep.subr.bf16.mxu0 0
      %405 = vmatpush1.bf16.msra.mxu0 0
      %406 = vmatprep.subr.bf16.mxu0 0
      %407 = vmatpush1.bf16.msra.mxu0 0
      %408 = vmatprep.subr.bf16.mxu0 0
      %409 = vmatpush1.bf16.msra.mxu0 0
      %410 = vmatprep.mubr.bf16.mxu0 0
      %411 = vmatmul.mubr.bf16.gmra.mrb[0].mxu0 %v298
      %v412 = vpop.f32.mrb[0].mxu0
      %v413 = vadd.f32 0.0, %v412
      %v414 = vpop.f32.mrb[0].mxu0
      %v415 = vpop.f32.mrb[0].mxu0
      %v416 = vadd.f32 0.0, %v415
      %v417 = vpop.f32.mrb[0].mxu0
      %418 = vmatprep.mubr.bf16.mxu0 0
      %419 = vmatmul.mubr.bf16.gmra.mrb[0].mxu0 %v299
      %v420 = vpop.f32.mrb[0].mxu0
      %v421 = vadd.f32 0.0, %v420
      %v422 = vpop.f32.mrb[0].mxu0
      %v423 = vpop.f32.mrb[0].mxu0
      %v424 = vadd.f32 0.0, %v423
      %v425 = vpop.f32.mrb[0].mxu0
      %426 = vmatprep.mubr.bf16.mxu0 0
      %427 = vmatmul.mubr.bf16.gmra.mrb[0].mxu0 %v300
      %v428 = vpop.f32.mrb[0].mxu0
      %v429 = vadd.f32 0.0, %v428
      %v430 = vpop.f32.mrb[0].mxu0
      %v431 = vpop.f32.mrb[0].mxu0
      %v432 = vadd.f32 0.0, %v431
      %v433 = vpop.f32.mrb[0].mxu0
      %434 = vmatprep.mubr.bf16.mxu0 0
      %435 = vmatmul.mubr.bf16.gmra.mrb[0].mxu0 %v301
      %v436 = vpop.f32.mrb[0].mxu0
      %v437 = vadd.f32 0.0, %v436
      %v438 = vpop.f32.mrb[0].mxu0
      %v439 = vpop.f32.mrb[0].mxu0
      %v440 = vadd.f32 0.0, %v439
      %v441 = vpop.f32.mrb[0].mxu0
      %442 = vmatprep.mubr.bf16.mxu0 0
      %443 = vmatmul.mubr.bf16.gmra.mrb[0].mxu0 %v302
      %v444 = vpop.f32.mrb[0].mxu0
      %v445 = vadd.f32 0.0, %v444
      %v446 = vpop.f32.mrb[0].mxu0
      %v447 = vpop.f32.mrb[0].mxu0
      %v448 = vadd.f32 0.0, %v447
      %v449 = vpop.f32.mrb[0].mxu0
      %450 = vmatprep.mubr.bf16.mxu0 0
      %451 = vmatmul.mubr.bf16.gmra.mrb[0].mxu0 %v303
      %v452 = vpop.f32.mrb[0].mxu0
      %v453 = vadd.f32 0.0, %v452
      %v454 = vpop.f32.mrb[0].mxu0
      %v455 = vpop.f32.mrb[0].mxu0
      %v456 = vadd.f32 0.0, %v455
      %v457 = vpop.f32.mrb[0].mxu0
      %458 = vmatprep.mubr.bf16.mxu0 0
      %459 = vmatmul.mubr.bf16.gmra.mrb[0].mxu0 %v304
      %v460 = vpop.f32.mrb[0].mxu0
      %v461 = vadd.f32 0.0, %v460
      %v462 = vpop.f32.mrb[0].mxu0
      %v463 = vpop.f32.mrb[0].mxu0
      %v464 = vadd.f32 0.0, %v463
      %v465 = vpop.f32.mrb[0].mxu0
      %466 = vmatprep.mubr.bf16.mxu0 0
      %467 = vmatmul.mubr.bf16.gmra.mrb[0].mxu0 %v305
      %v468 = vpop.f32.mrb[0].mxu0
      %v469 = vadd.f32 0.0, %v468
      %v470 = vpop.f32.mrb[0].mxu0
      %v471 = vpop.f32.mrb[0].mxu0
      %v472 = vadd.f32 0.0, %v471
      %v473 = vpop.f32.mrb[0].mxu0
      %474 = vmatprep.mubr.bf16.mxu0 0
      %475 = vmatmul.mubr.bf16.gmra.mrb[0].mxu0 %v306
      %v476 = vpop.f32.mrb[0].mxu0
      %v477 = vadd.f32 0.0, %v476
      %v478 = vpop.f32.mrb[0].mxu0
      %v479 = vpop.f32.mrb[0].mxu0
      %v480 = vadd.f32 0.0, %v479
      %v481 = vpop.f32.mrb[0].mxu0
      %482 = vmatprep.mubr.bf16.mxu0 0
      %483 = vmatmul.mubr.bf16.gmra.mrb[0].mxu0 %v307
      %v484 = vpop.f32.mrb[0].mxu0
      %v485 = vadd.f32 0.0, %v484
      %v486 = vpop.f32.mrb[0].mxu0
      %v487 = vpop.f32.mrb[0].mxu0
      %v488 = vadd.f32 0.0, %v487
      %v489 = vpop.f32.mrb[0].mxu0
      %490 = vmatprep.mubr.bf16.mxu0 0
      %491 = vmatmul.mubr.bf16.gmra.mrb[0].mxu0 %v308
      %v492 = vpop.f32.mrb[0].mxu0
      %v493 = vadd.f32 0.0, %v492
      %v494 = vpop.f32.mrb[0].mxu0
      %v495 = vpop.f32.mrb[0].mxu0
      %v496 = vadd.f32 0.0, %v495
      %v497 = vpop.f32.mrb[0].mxu0
      %498 = vmatprep.mubr.bf16.mxu0 0
      %499 = vmatmul.mubr.bf16.gmra.mrb[0].mxu0 %v309
      %v500 = vpop.f32.mrb[0].mxu0
      %v501 = vadd.f32 0.0, %v500
      %v502 = vpop.f32.mrb[0].mxu0
      %v503 = vpop.f32.mrb[0].mxu0
      %v504 = vadd.f32 0.0, %v503
      %v505 = vpop.f32.mrb[0].mxu0
      %506 = vmatprep.mubr.bf16.mxu0 0
      %507 = vmatmul.mubr.bf16.gmra.mrb[0].mxu0 %v310
      %v508 = vpop.f32.mrb[0].mxu0
      %v509 = vadd.f32 0.0, %v508
      %v510 = vpop.f32.mrb[0].mxu0
      %v511 = vpop.f32.mrb[0].mxu0
      %v512 = vadd.f32 0.0, %v511
      %v513 = vpop.f32.mrb[0].mxu0
      %514 = vmatprep.mubr.bf16.mxu0 0
      %515 = vmatmul.mubr.bf16.gmra.mrb[0].mxu0 %v311
      %v516 = vpop.f32.mrb[0].mxu0
      %v517 = vadd.f32 0.0, %v516
      %v518 = vpop.f32.mrb[0].mxu0
      %v519 = vpop.f32.mrb[0].mxu0
      %v520 = vadd.f32 0.0, %v519
      %v521 = vpop.f32.mrb[0].mxu0
      %522 = vmatprep.mubr.bf16.mxu0 0
      %523 = vmatmul.mubr.bf16.gmra.mrb[0].mxu0 %v312
      %v524 = vpop.f32.mrb[0].mxu0
      %v525 = vadd.f32 0.0, %v524
      %v526 = vpop.f32.mrb[0].mxu0
      %v527 = vpop.f32.mrb[0].mxu0
      %v528 = vadd.f32 0.0, %v527
      %v529 = vpop.f32.mrb[0].mxu0
      %530 = vmatprep.mubr.bf16.mxu0 0
      %531 = vmatmul.mubr.bf16.gmra.mrb[0].mxu0 %v313
      %v532 = vpop.f32.mrb[0].mxu0
      %v533 = vadd.f32 0.0, %v532
      %v534 = vpop.f32.mrb[0].mxu0
      %v535 = vpop.f32.mrb[0].mxu0
      %v536 = vadd.f32 0.0, %v535
      %v537 = vpop.f32.mrb[0].mxu0
      %538 = vdwg.mxu0
      %v539 = vpack.c.bf16 %v416, %v413
      %v540 = vpack.c.bf16 %v424, %v421
      %v541 = vpack.c.bf16 %v432, %v429
      %v542 = vpack.c.bf16 %v440, %v437
      %v543 = vpack.c.bf16 %v448, %v445
      %v544 = vpack.c.bf16 %v456, %v453
      %v545 = vpack.c.bf16 %v464, %v461
      %v546 = vpack.c.bf16 %v472, %v469
      %v547 = vpack.c.bf16 %v480, %v477
      %v548 = vpack.c.bf16 %v488, %v485
      %v549 = vpack.c.bf16 %v496, %v493
      %v550 = vpack.c.bf16 %v504, %v501
      %v551 = vpack.c.bf16 %v512, %v509
      %v552 = vpack.c.bf16 %v520, %v517
      %v553 = vpack.c.bf16 %v528, %v525
      %v554 = vpack.c.bf16 %v536, %v533
      %v571 = vunpack.c.l.b16 %v539
      %v572 = vunpack.c.h.b16 %v539
      %v573 = vunpack.c.l.b16 %v540
      %v574 = vunpack.c.h.b16 %v540
      %v575 = vunpack.c.l.b16 %v541
      %v576 = vunpack.c.h.b16 %v541
      %v577 = vunpack.c.l.b16 %v542
      %v578 = vunpack.c.h.b16 %v542
      %v579 = vunpack.c.l.b16 %v543
      %v580 = vunpack.c.h.b16 %v543
      %v581 = vunpack.c.l.b16 %v544
      %v582 = vunpack.c.h.b16 %v544
      %v583 = vunpack.c.l.b16 %v545
      %v584 = vunpack.c.h.b16 %v545
      %v585 = vunpack.c.l.b16 %v546
      %v586 = vunpack.c.h.b16 %v546
      %v587 = vunpack.c.l.b16 %v547
      %v588 = vunpack.c.h.b16 %v547
      %v589 = vunpack.c.l.b16 %v548
      %v590 = vunpack.c.h.b16 %v548
      %v591 = vunpack.c.l.b16 %v549
      %v592 = vunpack.c.h.b16 %v549
      %v593 = vunpack.c.l.b16 %v550
      %v594 = vunpack.c.h.b16 %v550
      %v595 = vunpack.c.l.b16 %v551
      %v596 = vunpack.c.h.b16 %v551
      %v597 = vunpack.c.l.b16 %v552
      %v598 = vunpack.c.h.b16 %v552
      %v599 = vunpack.c.l.b16 %v553
      %v600 = vunpack.c.h.b16 %v553
      %v601 = vunpack.c.l.b16 %v554
      %v602 = vunpack.c.h.b16 %v554
      %v603 = vpack.c.b16 %v571, %v571
      %v604 = vpack.c.b16 %v572, %v572
      %v605 = vpack.c.b16 %v573, %v573
      %v606 = vpack.c.b16 %v574, %v574
      %v607 = vpack.c.b16 %v575, %v575
      %v608 = vpack.c.b16 %v576, %v576
      %v609 = vpack.c.b16 %v577, %v577
      %v610 = vpack.c.b16 %v578, %v578
      %v611 = vpack.c.b16 %v579, %v579
      %v612 = vpack.c.b16 %v580, %v580
      %v613 = vpack.c.b16 %v581, %v581
      %v614 = vpack.c.b16 %v582, %v582
      %v615 = vpack.c.b16 %v583, %v583
      %v616 = vpack.c.b16 %v584, %v584
      %v617 = vpack.c.b16 %v585, %v585
      %v618 = vpack.c.b16 %v586, %v586
      %v619 = vpack.c.b16 %v587, %v587
      %v620 = vpack.c.b16 %v588, %v588
      %v621 = vpack.c.b16 %v589, %v589
      %v622 = vpack.c.b16 %v590, %v590
      %v623 = vpack.c.b16 %v591, %v591
      %v624 = vpack.c.b16 %v592, %v592
      %v625 = vpack.c.b16 %v593, %v593
      %v626 = vpack.c.b16 %v594, %v594
      %v627 = vpack.c.b16 %v595, %v595
      %v628 = vpack.c.b16 %v596, %v596
      %v629 = vpack.c.b16 %v597, %v597
      %v630 = vpack.c.b16 %v598, %v598
      %v631 = vpack.c.b16 %v599, %v599
      %v632 = vpack.c.b16 %v600, %v600
      %v633 = vpack.c.b16 %v601, %v601
      %v634 = vpack.c.b16 %v602, %v602
      %667 = vst [vmem:[%s179] sm:$0xf] %v603
      %668 = vst [vmem:[%s179 + $0x4] sm:$0xf] %v604
      %669 = vst [vmem:[%s179 + $0x8] sm:$0xf] %v605
      %670 = vst [vmem:[%s179 + $0xc] sm:$0xf] %v606
      %671 = vst [vmem:[%s179 + $0x10] sm:$0xf] %v607
      %672 = vst [vmem:[%s179 + $0x14] sm:$0xf] %v608
      %673 = vst [vmem:[%s179 + $0x18] sm:$0xf] %v609
      %674 = vst [vmem:[%s179 + $0x1c] sm:$0xf] %v610
      %675 = vst [vmem:[%s179 + $0x20] sm:$0xf] %v611
      %676 = vst [vmem:[%s179 + $0x24] sm:$0xf] %v612
      %677 = vst [vmem:[%s179 + $0x28] sm:$0xf] %v613
      %678 = vst [vmem:[%s179 + $0x2c] sm:$0xf] %v614
      %679 = vst [vmem:[%s179 + $0x30] sm:$0xf] %v615
      %680 = vst [vmem:[%s179 + $0x34] sm:$0xf] %v616
      %681 = vst [vmem:[%s179 + $0x38] sm:$0xf] %v617
      %682 = vst [vmem:[%s179 + $0x3c] sm:$0xf] %v618
      %683 = vst [vmem:[%s179 + $0x40] sm:$0xf] %v619
      %684 = vst [vmem:[%s179 + $0x44] sm:$0xf] %v620
      %685 = vst [vmem:[%s179 + $0x48] sm:$0xf] %v621
      %686 = vst [vmem:[%s179 + $0x4c] sm:$0xf] %v622
      %687 = vst [vmem:[%s179 + $0x50] sm:$0xf] %v623
      %688 = vst [vmem:[%s179 + $0x54] sm:$0xf] %v624
      %689 = vst [vmem:[%s179 + $0x58] sm:$0xf] %v625
      %690 = vst [vmem:[%s179 + $0x5c] sm:$0xf] %v626
      %691 = vst [vmem:[%s179 + $0x60] sm:$0xf] %v627
      %692 = vst [vmem:[%s179 + $0x64] sm:$0xf] %v628
      %693 = vst [vmem:[%s179 + $0x68] sm:$0xf] %v629
      %694 = vst [vmem:[%s179 + $0x6c] sm:$0xf] %v630
      %695 = vst [vmem:[%s179 + $0x70] sm:$0xf] %v631
      %696 = vst [vmem:[%s179 + $0x74] sm:$0xf] %v632
      %697 = vst [vmem:[%s179 + $0x78] sm:$0xf] %v633
      %698 = vst [vmem:[%s179 + $0x7c] sm:$0xf] %v634
      %v699 = vadd.f32 %v413, %v416
      %v700 = vadd.f32 %v699, %v421
      %v701 = vadd.f32 %v700, %v424
      %v702 = vadd.f32 %v701, %v429
      %v703 = vadd.f32 %v702, %v432
      %v704 = vadd.f32 %v703, %v437
      %v705 = vadd.f32 %v704, %v440
      %v706 = vadd.f32 %v705, %v445
      %v707 = vadd.f32 %v706, %v448
      %v708 = vadd.f32 %v707, %v453
      %v709 = vadd.f32 %v708, %v456
      %v710 = vadd.f32 %v709, %v461
      %v711 = vadd.f32 %v710, %v464
      %v712 = vadd.f32 %v711, %v469
      %v713 = vadd.f32 %v712, %v472
      %v714 = vadd.f32 %v713, %v477
      %v715 = vadd.f32 %v714, %v480
      %v716 = vadd.f32 %v715, %v485
      %v717 = vadd.f32 %v716, %v488
      %v718 = vadd.f32 %v717, %v493
      %v719 = vadd.f32 %v718, %v496
      %v720 = vadd.f32 %v719, %v501
      %v721 = vadd.f32 %v720, %v504
      %v722 = vadd.f32 %v721, %v509
      %v723 = vadd.f32 %v722, %v512
      %v724 = vadd.f32 %v723, %v517
      %v725 = vadd.f32 %v724, %v520
      %v726 = vadd.f32 %v725, %v525
      %v727 = vadd.f32 %v726, %v528
      %v728 = vadd.f32 %v727, %v533
      %v729 = vadd.f32 %v728, %v536
      %v730 = vrot.slane %v729, 4
      %v731 = vadd.f32 %v729, %v730
      %v732 = vrot.slane %v731, 2
      %v733 = vadd.f32 %v731, %v732
      %v734 = vrot.slane %v733, 1
      %v735 = vadd.f32 %v733, %v734
      %736 = vst [vmem:[%s184] sm:$0x1] %v735
      %v737 = vmul.f32 %v413, %v413
      %v738 = vmul.f32 %v416, %v416
      %v739 = vmul.f32 %v421, %v421
      %v740 = vmul.f32 %v424, %v424
      %v741 = vmul.f32 %v429, %v429
      %v742 = vmul.f32 %v432, %v432
      %v743 = vmul.f32 %v437, %v437
      %v744 = vmul.f32 %v440, %v440
      %v745 = vmul.f32 %v445, %v445
      %v746 = vmul.f32 %v448, %v448
      %v747 = vmul.f32 %v453, %v453
      %v748 = vmul.f32 %v456, %v456
      %v749 = vmul.f32 %v461, %v461
      %v750 = vmul.f32 %v464, %v464
      %v751 = vmul.f32 %v469, %v469
      %v752 = vmul.f32 %v472, %v472
      %v753 = vmul.f32 %v477, %v477
      %v754 = vmul.f32 %v480, %v480
      %v755 = vmul.f32 %v485, %v485
      %v756 = vmul.f32 %v488, %v488
      %v757 = vmul.f32 %v493, %v493
      %v758 = vmul.f32 %v496, %v496
      %v759 = vmul.f32 %v501, %v501
      %v760 = vmul.f32 %v504, %v504
      %v761 = vmul.f32 %v509, %v509
      %v762 = vmul.f32 %v512, %v512
      %v763 = vmul.f32 %v517, %v517
      %v764 = vmul.f32 %v520, %v520
      %v765 = vmul.f32 %v525, %v525
      %v766 = vmul.f32 %v528, %v528
      %v767 = vmul.f32 %v533, %v533
      %v768 = vmul.f32 %v536, %v536
      %v769 = vadd.f32 %v737, %v738
      %v770 = vadd.f32 %v769, %v739
      %v771 = vadd.f32 %v770, %v740
      %v772 = vadd.f32 %v771, %v741
      %v773 = vadd.f32 %v772, %v742
      %v774 = vadd.f32 %v773, %v743
      %v775 = vadd.f32 %v774, %v744
      %v776 = vadd.f32 %v775, %v745
      %v777 = vadd.f32 %v776, %v746
      %v778 = vadd.f32 %v777, %v747
      %v779 = vadd.f32 %v778, %v748
      %v780 = vadd.f32 %v779, %v749
      %v781 = vadd.f32 %v780, %v750
      %v782 = vadd.f32 %v781, %v751
      %v783 = vadd.f32 %v782, %v752
      %v784 = vadd.f32 %v783, %v753
      %v785 = vadd.f32 %v784, %v754
      %v786 = vadd.f32 %v785, %v755
      %v787 = vadd.f32 %v786, %v756
      %v788 = vadd.f32 %v787, %v757
      %v789 = vadd.f32 %v788, %v758
      %v790 = vadd.f32 %v789, %v759
      %v791 = vadd.f32 %v790, %v760
      %v792 = vadd.f32 %v791, %v761
      %v793 = vadd.f32 %v792, %v762
      %v794 = vadd.f32 %v793, %v763
      %v795 = vadd.f32 %v794, %v764
      %v796 = vadd.f32 %v795, %v765
      %v797 = vadd.f32 %v796, %v766
      %v798 = vadd.f32 %v797, %v767
      %v799 = vadd.f32 %v798, %v768
      %v800 = vrot.slane %v799, 4
      %v801 = vadd.f32 %v799, %v800
      %v802 = vrot.slane %v801, 2
      %v803 = vadd.f32 %v801, %v802
      %v804 = vrot.slane %v803, 1
      %v805 = vadd.f32 %v803, %v804
      %806 = vst [vmem:[%s184 + $0x1] sm:$0x1] %v805
      %s807 = smul.u32 32, %s15
      %p808 = scmp.lt.s32.totalorder %s807, 63
      %s809 = scalar_select %p808, %s807, 63
      %s810 = smul.addr %s809, 4
      %s811 = scalar_lea.vmem %s2, %s810
      %p812 = scmp.lt.s32.totalorder %s15, 1
      %s813 = scalar_select %p812, %s15, 1
      %s814 = smul.addr %s813, 2
      %s815 = scalar_lea.vmem %s3, %s814
      // Predicated region
      $region29: #{bottleneck_forward.4} parent=27 // pred_check
        %p816 = pneg %p80
      $region30: #{bottleneck_forward.4} parent=27 // pred_check_branch
        %818 = sbr.rel (%p816) target = $region32
      $region31: #{bottleneck_forward.4} parent=27 // pred_region
        %s819 = smul.u32 32, %s15
      $region32: #{bottleneck_forward.4} parent=27 // pred_fallthru
        _
      // Predicated region
      $region33: #{bottleneck_forward.4} parent=27 // pred_check
        %p820 = pneg %p106
      $region34: #{bottleneck_forward.4} parent=27 // pred_check_branch
        %822 = sbr.rel (%p820) target = $region36
      $region35: #{bottleneck_forward.4} parent=27 // pred_region
        _
      $region36: #{bottleneck_forward.4} parent=27 // pred_fallthru
        _
    $region28: #{bottleneck_forward.4} parent=5 // pred_fallthru
      _
    %p823 = scmp.le.s32.totalorder 2, %s10
    // Predicated region
    $region37: #{bottleneck_forward.4} parent=5 // pred_check
      %p824 = pneg %p823
    $region38: #{bottleneck_forward.4} parent=5 // pred_check_branch
      %826 = sbr.rel (%p824) target = $region40
    $region39: #{bottleneck_forward.4} parent=5 // pred_region
      %s827 = ssub.s32 %s10, 2
      // Predicated region
      $region41: #{bottleneck_forward.4} parent=39 // pred_check
        %p828 = pneg %p86
      $region42: #{bottleneck_forward.4} parent=39 // pred_check_branch
        %830 = sbr.rel (%p828) target = $region44
      $region43: #{bottleneck_forward.4} parent=39 // pred_region
        %s831 = smul.u32 32, %s16
        %p832 = scmp.lt.s32.totalorder %s831, 63
        %s833 = scalar_select %p832, %s831, 63
        %s834 = smul.addr %s833, 4
        %s835 = scalar_lea.vmem %s2, %s834
      $region44: #{bottleneck_forward.4} parent=39 // pred_fallthru
        _
      // Predicated region
      $region45: #{bottleneck_forward.4} parent=39 // pred_check
        %p836 = pneg %p112
      $region46: #{bottleneck_forward.4} parent=39 // pred_check_branch
        %838 = sbr.rel (%p836) target = $region48
      $region47: #{bottleneck_forward.4} parent=39 // pred_region
        %p839 = scmp.lt.s32.totalorder %s16, 1
        %s840 = scalar_select %p839, %s16, 1
        %s841 = smul.addr %s840, 2
        %s842 = scalar_lea.vmem %s3, %s841
      $region48: #{bottleneck_forward.4} parent=39 // pred_fallthru
        _
    $region40: #{bottleneck_forward.4} parent=5 // pred_fallthru
      _
  $region6: #{bottleneck_forward.4} parent=0 // loop_footer
    %s14 = sadd.s32 1, %s10
  $region7: #{bottleneck_forward.4} parent=0 // loop_footer_branch
    %9 = sbr.rel target = $region3
  $region8: #{bottleneck_forward.4} parent=0 // loop_exit
    _

// kernel: bottleneck_forward.6
$region0: #{bottleneck_forward.6}
  #allocation0 [shape = 'u32[]', space=smem, size = 0x4, offset = 0x4, fixed_abs, tag = 'smem constant byte address 0x4 - core index']
  #allocation1 [shape = 'u32[144,128]{1,0:T(1,128)}', space=vmem, size = 0x12000, scoped, tag = 'internal scratch']
  %s0 = inlined_call_operand.vmem [shape: bf16[512,128], index: 0, kind: input, shape index: {}]
  %s1 = inlined_call_operand.vmem [shape: f32[1,128], index: 1, kind: input, shape index: {}]
  %s2 = inlined_call_operand.vmem [shape: f32[1,128], index: 2, kind: input, shape index: {}]
  %s3 = inlined_call_operand.vmem [shape: bf16[128,128], index: 3, kind: input, shape index: {}]
  %s4 = inlined_call_operand.vmem [shape: bf16[512,128], index: 4, kind: input, shape index: {}]
  %s5 = inlined_call_operand.vmem [shape: bf16[128,128], index: 5, kind: input, shape index: {}]
  %s6 = inlined_call_operand.vmem [shape: bf16[512,128], index: 6, kind: output, shape index: {0}]
  %s7 = inlined_call_operand.vmem [shape: bf16[512,128], index: 7, kind: output, shape index: {1}]
  %s8 = inlined_call_operand.vmem [shape: f32[2,2,128], index: 8, kind: output, shape index: {2}]
  %s9 = inlined_call_operand.vmem [shape: f32[2,2,128], index: 9, kind: output, shape index: {3}]
  %10 = xla_tuple %s6, %s7, %s8, %s9
  %s11 = sld [smem:[#allocation0]]
  $region81: #{bottleneck_forward.6} parent=0
    _
  %s13 = ssub.s32 1, %s11
  %s14 = scalar_select 0, %s13, %s11
  loop: start=0, step=1, limit=4
  $region2: #{bottleneck_forward.6} parent=0 // loop_pre_header
    _
  $region3: #{bottleneck_forward.6} parent=0 // loop_header
    %s16 = sphi 0, %s20
    %p17 = scmp.ge.s32.totalorder %s16, 4
    %s26 = sphi 0, %s28
    %s29 = sphi 0, %s26
    %s30 = sphi 0, %s29
    %s46 = sphi 0, %s30
    %s50 = sphi 0, %s50
    %s52 = sphi 0, %s50
    %s53 = sphi 0, %s52
    %s67 = sphi 0, %s53
    %s71 = sphi 0, %s71
    %s73 = sphi 0, %s71
    %s74 = sphi 0, %s73
    %s88 = sphi 0, %s74
    %s92 = sphi 0, %s92
    %s94 = sphi 0, %s92
    %s95 = sphi 0, %s94
    %s109 = sphi 0, %s95
    %s115 = sphi 0, %s117
    %s118 = sphi 0, %s115
    %s119 = sphi 0, %s118
    %s135 = sphi 0, %s119
    %s139 = sphi 0, %s139
    %s141 = sphi 0, %s139
    %s142 = sphi 0, %s141
    %s156 = sphi 0, %s142
    %s162 = sphi 0, %s164
    %s165 = sphi 0, %s162
    %s166 = sphi 0, %s165
    %s182 = sphi 0, %s166
    %s188 = sphi 0, %s190
    %s191 = sphi 0, %s188
    %s192 = sphi 0, %s191
    %s208 = sphi 0, %s192
    %s214 = sphi 0, %s216
    %s217 = sphi 0, %s214
    %s218 = sphi 0, %s217
    %s234 = sphi 0, %s218
    %s240 = sphi 0, %s242
    %s243 = sphi 0, %s240
    %s244 = sphi 0, %s243
    %s260 = sphi 0, %s244
  $region4: #{bottleneck_forward.6} parent=0 // loop_header_branch
    %19 = sbr.rel (%p17) target = $region8
  $region5: #{bottleneck_forward.6} parent=0 // loop_body
    %s21 = ssub.s32 %s16, 1
    %s22 = ssub.s32 %s16, 2
    %s23 = sadd.s32 %s16, 1
    %s24 = ssub.s32 %s16, %s23
    %p25 = scmp.eq.s32.totalorder %s24, 0
    %s27 = sadd.s32 %s26, 1
    %s28 = scalar_select %p25, %s26, %s27
    %p31 = pneg %p25
    %p32 = scmp.eq.s32.totalorder %s16, 1
    %p33 = por %p31, %p32
    %p34 = scmp.ne.s32.totalorder %s26, %s29
    %p35 = scmp.eq.s32.totalorder %s16, 0
    %p36 = por %p34, %p35
    %p37 = scmp.ne.s32.totalorder %s26, %s29
    %p38 = scmp.eq.s32.totalorder %s21, 1
    %p39 = por %p37, %p38
    %p40 = scmp.ne.s32.totalorder %s29, %s30
    %p41 = scmp.eq.s32.totalorder %s21, 0
    %p42 = por %p40, %p41
    %p43 = scmp.ne.s32.totalorder %s29, %s30
    %p44 = scmp.eq.s32.totalorder %s22, 1
    %p45 = por %p43, %p44
    %p47 = scmp.ne.s32.totalorder %s30, %s46
    %p48 = scmp.eq.s32.totalorder %s22, 0
    %p49 = por %p47, %p48
    %s51 = sadd.s32 %s50, 1
    %p54 = scmp.eq.s32.totalorder %s16, 1
    %p55 = scmp.ne.s32.totalorder %s50, %s52
    %p56 = scmp.eq.s32.totalorder %s16, 0
    %p57 = por %p55, %p56
    %p58 = scmp.ne.s32.totalorder %s50, %s52
    %p59 = scmp.eq.s32.totalorder %s21, 1
    %p60 = por %p58, %p59
    %p61 = scmp.ne.s32.totalorder %s52, %s53
    %p62 = scmp.eq.s32.totalorder %s21, 0
    %p63 = por %p61, %p62
    %p64 = scmp.ne.s32.totalorder %s52, %s53
    %p65 = scmp.eq.s32.totalorder %s22, 1
    %p66 = por %p64, %p65
    %p68 = scmp.ne.s32.totalorder %s53, %s67
    %p69 = scmp.eq.s32.totalorder %s22, 0
    %p70 = por %p68, %p69
    %s72 = sadd.s32 %s71, 1
    %p75 = scmp.eq.s32.totalorder %s16, 1
    %p76 = scmp.ne.s32.totalorder %s71, %s73
    %p77 = scmp.eq.s32.totalorder %s16, 0
    %p78 = por %p76, %p77
    %p79 = scmp.ne.s32.totalorder %s71, %s73
    %p80 = scmp.eq.s32.totalorder %s21, 1
    %p81 = por %p79, %p80
    %p82 = scmp.ne.s32.totalorder %s73, %s74
    %p83 = scmp.eq.s32.totalorder %s21, 0
    %p84 = por %p82, %p83
    %p85 = scmp.ne.s32.totalorder %s73, %s74
    %p86 = scmp.eq.s32.totalorder %s22, 1
    %p87 = por %p85, %p86
    %p89 = scmp.ne.s32.totalorder %s74, %s88
    %p90 = scmp.eq.s32.totalorder %s22, 0
    %p91 = por %p89, %p90
    %s93 = sadd.s32 %s92, 1
    %p96 = scmp.eq.s32.totalorder %s16, 1
    %p97 = scmp.ne.s32.totalorder %s92, %s94
    %p98 = scmp.eq.s32.totalorder %s16, 0
    %p99 = por %p97, %p98
    %p100 = scmp.ne.s32.totalorder %s92, %s94
    %p101 = scmp.eq.s32.totalorder %s21, 1
    %p102 = por %p100, %p101
    %p103 = scmp.ne.s32.totalorder %s94, %s95
    %p104 = scmp.eq.s32.totalorder %s21, 0
    %p105 = por %p103, %p104
    %p106 = scmp.ne.s32.totalorder %s94, %s95
    %p107 = scmp.eq.s32.totalorder %s22, 1
    %p108 = por %p106, %p107
    %p110 = scmp.ne.s32.totalorder %s95, %s109
    %p111 = scmp.eq.s32.totalorder %s22, 0
    %p112 = por %p110, %p111
    %s113 = ssub.s32 %s16, %s23
    %p114 = scmp.eq.s32.totalorder %s113, 0
    %s116 = sadd.s32 %s115, 1
    %s117 = scalar_select %p114, %s115, %s116
    %p120 = pneg %p114
    %p121 = scmp.eq.s32.totalorder %s16, 1
    %p122 = por %p120, %p121
    %p123 = scmp.ne.s32.totalorder %s115, %s118
    %p124 = scmp.eq.s32.totalorder %s16, 0
    %p125 = por %p123, %p124
    %p126 = scmp.ne.s32.totalorder %s115, %s118
    %p127 = scmp.eq.s32.totalorder %s21, 1
    %p128 = por %p126, %p127
    %p129 = scmp.ne.s32.totalorder %s118, %s119
    %p130 = scmp.eq.s32.totalorder %s21, 0
    %p131 = por %p129, %p130
    %p132 = scmp.ne.s32.totalorder %s118, %s119
    %p133 = scmp.eq.s32.totalorder %s22, 1
    %p134 = por %p132, %p133
    %p136 = scmp.ne.s32.totalorder %s119, %s135
    %p137 = scmp.eq.s32.totalorder %s22, 0
    %p138 = por %p136, %p137
    %s140 = sadd.s32 %s139, 1
    %p143 = scmp.eq.s32.totalorder %s16, 1
    %p144 = scmp.ne.s32.totalorder %s139, %s141
    %p145 = scmp.eq.s32.totalorder %s16, 0
    %p146 = por %p144, %p145
    %p147 = scmp.ne.s32.totalorder %s139, %s141
    %p148 = scmp.eq.s32.totalorder %s21, 1
    %p149 = por %p147, %p148
    %p150 = scmp.ne.s32.totalorder %s141, %s142
    %p151 = scmp.eq.s32.totalorder %s21, 0
    %p152 = por %p150, %p151
    %p153 = scmp.ne.s32.totalorder %s141, %s142
    %p154 = scmp.eq.s32.totalorder %s22, 1
    %p155 = por %p153, %p154
    %p157 = scmp.ne.s32.totalorder %s142, %s156
    %p158 = scmp.eq.s32.totalorder %s22, 0
    %p159 = por %p157, %p158
    %s160 = ssub.s32 %s16, %s23
    %p161 = scmp.eq.s32.totalorder %s160, 0
    %s163 = sadd.s32 %s162, 1
    %s164 = scalar_select %p161, %s162, %s163
    %p167 = pneg %p161
    %p168 = scmp.eq.s32.totalorder %s16, 1
    %p169 = por %p167, %p168
    %p170 = scmp.ne.s32.totalorder %s162, %s165
    %p171 = scmp.eq.s32.totalorder %s16, 0
    %p172 = por %p170, %p171
    %p173 = scmp.ne.s32.totalorder %s162, %s165
    %p174 = scmp.eq.s32.totalorder %s21, 1
    %p175 = por %p173, %p174
    %p176 = scmp.ne.s32.totalorder %s165, %s166
    %p177 = scmp.eq.s32.totalorder %s21, 0
    %p178 = por %p176, %p177
    %p179 = scmp.ne.s32.totalorder %s165, %s166
    %p180 = scmp.eq.s32.totalorder %s22, 1
    %p181 = por %p179, %p180
    %p183 = scmp.ne.s32.totalorder %s166, %s182
    %p184 = scmp.eq.s32.totalorder %s22, 0
    %p185 = por %p183, %p184
    %s186 = ssub.s32 %s16, %s23
    %p187 = scmp.eq.s32.totalorder %s186, 0
    %s189 = sadd.s32 %s188, 1
    %s190 = scalar_select %p187, %s188, %s189
    %p193 = pneg %p187
    %p194 = scmp.eq.s32.totalorder %s16, 1
    %p195 = por %p193, %p194
    %p196 = scmp.ne.s32.totalorder %s188, %s191
    %p197 = scmp.eq.s32.totalorder %s16, 0
    %p198 = por %p196, %p197
    %p199 = scmp.ne.s32.totalorder %s188, %s191
    %p200 = scmp.eq.s32.totalorder %s21, 1
    %p201 = por %p199, %p200
    %p202 = scmp.ne.s32.totalorder %s191, %s192
    %p203 = scmp.eq.s32.totalorder %s21, 0
    %p204 = por %p202, %p203
    %p205 = scmp.ne.s32.totalorder %s191, %s192
    %p206 = scmp.eq.s32.totalorder %s22, 1
    %p207 = por %p205, %p206
    %p209 = scmp.ne.s32.totalorder %s192, %s208
    %p210 = scmp.eq.s32.totalorder %s22, 0
    %p211 = por %p209, %p210
    %s212 = ssub.s32 %s16, %s23
    %p213 = scmp.eq.s32.totalorder %s212, 0
    %s215 = sadd.s32 %s214, 1
    %s216 = scalar_select %p213, %s214, %s215
    %p219 = pneg %p213
    %p220 = scmp.eq.s32.totalorder %s16, 1
    %p221 = por %p219, %p220
    %p222 = scmp.ne.s32.totalorder %s214, %s217
    %p223 = scmp.eq.s32.totalorder %s16, 0
    %p224 = por %p222, %p223
    %p225 = scmp.ne.s32.totalorder %s214, %s217
    %p226 = scmp.eq.s32.totalorder %s21, 1
    %p227 = por %p225, %p226
    %p228 = scmp.ne.s32.totalorder %s217, %s218
    %p229 = scmp.eq.s32.totalorder %s21, 0
    %p230 = por %p228, %p229
    %p231 = scmp.ne.s32.totalorder %s217, %s218
    %p232 = scmp.eq.s32.totalorder %s22, 1
    %p233 = por %p231, %p232
    %p235 = scmp.ne.s32.totalorder %s218, %s234
    %p236 = scmp.eq.s32.totalorder %s22, 0
    %p237 = por %p235, %p236
    %s238 = ssub.s32 %s16, %s23
    %p239 = scmp.eq.s32.totalorder %s238, 0
    %s241 = sadd.s32 %s240, 1
    %s242 = scalar_select %p239, %s240, %s241
    %p245 = pneg %p239
    %p246 = scmp.eq.s32.totalorder %s16, 1
    %p247 = por %p245, %p246
    %p248 = scmp.ne.s32.totalorder %s240, %s243
    %p249 = scmp.eq.s32.totalorder %s16, 0
    %p250 = por %p248, %p249
    %p251 = scmp.ne.s32.totalorder %s240, %s243
    %p252 = scmp.eq.s32.totalorder %s21, 1
    %p253 = por %p251, %p252
    %p254 = scmp.ne.s32.totalorder %s243, %s244
    %p255 = scmp.eq.s32.totalorder %s21, 0
    %p256 = por %p254, %p255
    %p257 = scmp.ne.s32.totalorder %s243, %s244
    %p258 = scmp.eq.s32.totalorder %s22, 1
    %p259 = por %p257, %p258
    %p261 = scmp.ne.s32.totalorder %s244, %s260
    %p262 = scmp.eq.s32.totalorder %s22, 0
    %p263 = por %p261, %p262
    %p264 = scmp.le.s32.totalorder 1, %s16
    %p265 = scmp.lt.s32.totalorder %s16, 3
    %p266 = pnand %p264, %p265
    %p267 = pneg %p266
    // Predicated region
    $region9: #{bottleneck_forward.6} parent=5 // pred_check
      _
    $region10: #{bottleneck_forward.6} parent=5 // pred_check_branch
      %269 = sbr.rel (%p266) target = $region12
    $region11: #{bottleneck_forward.6} parent=5 // pred_region
      %s270 = ssub.s32 %s16, 1
      // Predicated region
      $region13: #{bottleneck_forward.6} parent=11 // pred_check
        %p271 = pneg %p63
      $region14: #{bottleneck_forward.6} parent=11 // pred_check_branch
        %273 = sbr.rel (%p271) target = $region16
      $region15: #{bottleneck_forward.6} parent=11 // pred_region
        _
      $region16: #{bottleneck_forward.6} parent=11 // pred_fallthru
        _
      // Predicated region
      $region17: #{bottleneck_forward.6} parent=11 // pred_check
        %p274 = pneg %p84
      $region18: #{bottleneck_forward.6} parent=11 // pred_check_branch
        %276 = sbr.rel (%p274) target = $region20
      $region19: #{bottleneck_forward.6} parent=11 // pred_region
        _
      $region20: #{bottleneck_forward.6} parent=11 // pred_fallthru
        _
      // Predicated region
      $region21: #{bottleneck_forward.6} parent=11 // pred_check
        %p277 = pneg %p105
      $region22: #{bottleneck_forward.6} parent=11 // pred_check_branch
        %279 = sbr.rel (%p277) target = $region24
      $region23: #{bottleneck_forward.6} parent=11 // pred_region
        _
      $region24: #{bottleneck_forward.6} parent=11 // pred_fallthru
        _
      // Predicated region
      $region25: #{bottleneck_forward.6} parent=11 // pred_check
        %p280 = pneg %p152
      $region26: #{bottleneck_forward.6} parent=11 // pred_check_branch
        %282 = sbr.rel (%p280) target = $region28
      $region27: #{bottleneck_forward.6} parent=11 // pred_region
        _
      $region28: #{bottleneck_forward.6} parent=11 // pred_fallthru
        _
    $region12: #{bottleneck_forward.6} parent=5 // pred_fallthru
      _
    %p283 = scmp.lt.s32.totalorder %s16, 2
    // Predicated region
    $region29: #{bottleneck_forward.6} parent=5 // pred_check
      %p284 = pneg %p283
    $region30: #{bottleneck_forward.6} parent=5 // pred_check_branch
      %286 = sbr.rel (%p284) target = $region32
    $region31: #{bottleneck_forward.6} parent=5 // pred_region
      // Predicated region
      $region33: #{bottleneck_forward.6} parent=31 // pred_check
        %p287 = pneg %p36
      $region34: #{bottleneck_forward.6} parent=31 // pred_check_branch
        %289 = sbr.rel (%p287) target = $region36
      $region35: #{bottleneck_forward.6} parent=31 // pred_region
        %s290 = smul.u32 32, %s16
        %p291 = scmp.lt.s32.totalorder %s290, 63
        %s292 = scalar_select %p291, %s290, 63
        %s293 = smul.addr %s292, 4
        %s294 = scalar_lea.vmem %s0, %s293
        %s295 = smul.u32 32, %s16
      $region36: #{bottleneck_forward.6} parent=31 // pred_fallthru
        _
      // Predicated region
      $region37: #{bottleneck_forward.6} parent=31 // pred_check
        %p296 = pneg %p125
      $region38: #{bottleneck_forward.6} parent=31 // pred_check_branch
        %298 = sbr.rel (%p296) target = $region40
      $region39: #{bottleneck_forward.6} parent=31 // pred_region
        %s299 = smul.u32 32, %s16
        %p300 = scmp.lt.s32.totalorder %s299, 63
        %s301 = scalar_select %p300, %s299, 63
        %s302 = smul.addr %s301, 4
        %s303 = scalar_lea.vmem %s4, %s302
        %s304 = smul.u32 32, %s16
      $region40: #{bottleneck_forward.6} parent=31 // pred_fallthru
        _
    $region32: #{bottleneck_forward.6} parent=5 // pred_fallthru
      _
    %p305 = scmp.le.s32.totalorder 1, %s16
    %p306 = scmp.lt.s32.totalorder %s16, 3
    %p307 = pnand %p305, %p306
    %p308 = pneg %p307
    // Predicated region
    $region41: #{bottleneck_forward.6} parent=5 // pred_check
      _
    $region42: #{bottleneck_forward.6} parent=5 // pred_check_branch
      %310 = sbr.rel (%p307) target = $region44
    $region43: #{bottleneck_forward.6} parent=5 // pred_region
      %s311 = ssub.s32 %s16, 1
      %s312 = smul.u32 32, %s21
      %p313 = scmp.lt.s32.totalorder %s312, 63
      %s314 = scalar_select %p313, %s312, 63
      %s315 = smul.addr %s314, 4
      %s316 = scalar_lea.vmem %s0, %s315
      %p317 = pneg %p42
      %p318 = pneg %p39
      %p319 = pneg %p63
      %p320 = pneg %p60
      %p321 = pneg %p84
      %p322 = pneg %p81
      %p323 = pneg %p105
      %p324 = pneg %p102
      %s325 = smul.u32 32, %s21
      %p326 = scmp.lt.s32.totalorder %s325, 63
      %s327 = scalar_select %p326, %s325, 63
      %s328 = smul.addr %s327, 4
      %s329 = scalar_lea.vmem %s4, %s328
      %p330 = pneg %p131
      %p331 = pneg %p128
      %p332 = pneg %p152
      %p333 = pneg %p149
      %p334 = pneg %p178
      %p335 = pneg %p175
      %s336 = smul.u32 32, %s21
      %p337 = scmp.lt.s32.totalorder %s336, 63
      %s338 = scalar_select %p337, %s336, 63
      %s339 = smul.addr %s338, 4
      %s340 = scalar_lea.vmem %s6, %s339
      %p341 = pneg %p204
      %p342 = pneg %p201
      %s343 = smul.u32 32, %s21
      %p344 = scmp.lt.s32.totalorder %s343, 63
      %s345 = scalar_select %p344, %s343, 63
      %s346 = smul.addr %s345, 4
      %s347 = scalar_lea.vmem %s7, %s346
      %p348 = pneg %p230
      %p349 = pneg %p227
      %p350 = scmp.lt.s32.totalorder %s21, 1
      %s351 = scalar_select %p350, %s21, 1
      %s352 = smul.addr %s351, 2
      %s353 = scalar_lea.vmem %s8, %s352
      %p354 = pneg %p256
      %p355 = pneg %p253
      %p356 = scmp.lt.s32.totalorder %s21, 1
      %s357 = scalar_select %p356, %s21, 1
      %s358 = smul.addr %s357, 2
      %s359 = scalar_lea.vmem %s9, %s358
      %s360 = smul.u32 32, %s21
      %p361 = scmp.lt.s32.totalorder %s360, 63
      %s362 = scalar_select %p361, %s360, 63
      %s363 = smul.addr %s362, 4
      %s364 = scalar_lea.vmem %s0, %s363
      %s365 = smul.u32 32, %s21
      %s366 = smul.u32 32, %s21
      %p367 = scmp.lt.s32.totalorder %s366, 63
      %s368 = scalar_select %p367, %s366, 63
      %s369 = smul.addr %s368, 4
      %s370 = scalar_lea.vmem %s4, %s369
      %s371 = smul.u32 32, %s21
      %s372 = smul.u32 32, %s21
      %p373 = scmp.lt.s32.totalorder %s372, 63
      %s374 = scalar_select %p373, %s372, 63
      %s375 = smul.addr %s374, 4
      %s376 = scalar_lea.vmem %s6, %s375
      %s377 = smul.u32 32, %s21
      %s378 = smul.u32 32, %s21
      %p379 = scmp.lt.s32.totalorder %s378, 63
      %s380 = scalar_select %p379, %s378, 63
      %s381 = smul.addr %s380, 4
      %s382 = scalar_lea.vmem %s7, %s381
      %s383 = smul.u32 32, %s21
      %p384 = scmp.lt.s32.totalorder %s21, 1
      %s385 = scalar_select %p384, %s21, 1
      %s386 = smul.addr %s385, 2
      %s387 = scalar_lea.vmem %s8, %s386
      %p388 = scmp.lt.s32.totalorder %s21, 1
      %s389 = scalar_select %p388, %s21, 1
      %s390 = smul.addr %s389, 2
      %s391 = scalar_lea.vmem %s9, %s390
      %v393 = vld [vmem:[%s364] sm:$0xf]
      %v394 = vld [vmem:[%s364 + $0x4] sm:$0xf]
      %v395 = vld [vmem:[%s364 + $0x8] sm:$0xf]
      %v396 = vld [vmem:[%s364 + $0xc] sm:$0xf]
      %v397 = vld [vmem:[%s364 + $0x10] sm:$0xf]
      %v398 = vld [vmem:[%s364 + $0x14] sm:$0xf]
      %v399 = vld [vmem:[%s364 + $0x18] sm:$0xf]
      %v400 = vld [vmem:[%s364 + $0x1c] sm:$0xf]
      %v401 = vld [vmem:[%s364 + $0x20] sm:$0xf]
      %v402 = vld [vmem:[%s364 + $0x24] sm:$0xf]
      %v403 = vld [vmem:[%s364 + $0x28] sm:$0xf]
      %v404 = vld [vmem:[%s364 + $0x2c] sm:$0xf]
      %v405 = vld [vmem:[%s364 + $0x30] sm:$0xf]
      %v406 = vld [vmem:[%s364 + $0x34] sm:$0xf]
      %v407 = vld [vmem:[%s364 + $0x38] sm:$0xf]
      %v408 = vld [vmem:[%s364 + $0x3c] sm:$0xf]
      %v409 = vld [vmem:[%s364 + $0x40] sm:$0xf]
      %v410 = vld [vmem:[%s364 + $0x44] sm:$0xf]
      %v411 = vld [vmem:[%s364 + $0x48] sm:$0xf]
      %v412 = vld [vmem:[%s364 + $0x4c] sm:$0xf]
      %v413 = vld [vmem:[%s364 + $0x50] sm:$0xf]
      %v414 = vld [vmem:[%s364 + $0x54] sm:$0xf]
      %v415 = vld [vmem:[%s364 + $0x58] sm:$0xf]
      %v416 = vld [vmem:[%s364 + $0x5c] sm:$0xf]
      %v417 = vld [vmem:[%s364 + $0x60] sm:$0xf]
      %v418 = vld [vmem:[%s364 + $0x64] sm:$0xf]
      %v419 = vld [vmem:[%s364 + $0x68] sm:$0xf]
      %v420 = vld [vmem:[%s364 + $0x6c] sm:$0xf]
      %v421 = vld [vmem:[%s364 + $0x70] sm:$0xf]
      %v422 = vld [vmem:[%s364 + $0x74] sm:$0xf]
      %v423 = vld [vmem:[%s364 + $0x78] sm:$0xf]
      %v424 = vld [vmem:[%s364 + $0x7c] sm:$0xf]
      %v425 = vunpack.c.l.bf16 %v393
      %v426 = vunpack.c.l.bf16 %v394
      %v427 = vunpack.c.l.bf16 %v395
      %v428 = vunpack.c.l.bf16 %v396
      %v429 = vunpack.c.l.bf16 %v397
      %v430 = vunpack.c.l.bf16 %v398
      %v431 = vunpack.c.l.bf16 %v399
      %v432 = vunpack.c.l.bf16 %v400
      %v433 = vunpack.c.l.bf16 %v401
      %v434 = vunpack.c.l.bf16 %v402
      %v435 = vunpack.c.l.bf16 %v403
      %v436 = vunpack.c.l.bf16 %v404
      %v437 = vunpack.c.l.bf16 %v405
      %v438 = vunpack.c.l.bf16 %v406
      %v439 = vunpack.c.l.bf16 %v407
      %v440 = vunpack.c.l.bf16 %v408
      %v441 = vunpack.c.l.bf16 %v409
      %v442 = vunpack.c.l.bf16 %v410
      %v443 = vunpack.c.l.bf16 %v411
      %v444 = vunpack.c.l.bf16 %v412
      %v445 = vunpack.c.l.bf16 %v413
      %v446 = vunpack.c.l.bf16 %v414
      %v447 = vunpack.c.l.bf16 %v415
      %v448 = vunpack.c.l.bf16 %v416
      %v449 = vunpack.c.l.bf16 %v417
      %v450 = vunpack.c.l.bf16 %v418
      %v451 = vunpack.c.l.bf16 %v419
      %v452 = vunpack.c.l.bf16 %v420
      %v453 = vunpack.c.l.bf16 %v421
      %v454 = vunpack.c.l.bf16 %v422
      %v455 = vunpack.c.l.bf16 %v423
      %v456 = vunpack.c.l.bf16 %v424
      %v457 = vld [vmem:[%s1] sm:$0x1]
      %v459 = vlaneseq
      %v460 = vshrl.u32 %v459, 7
      %v461 = vsub.s32 0, %v460
      %v462 = vrot.slane %v457, %v461
      %v464 = vmul.f32 %v425, %v462
      %v465 = vmul.f32 %v426, %v462
      %v466 = vmul.f32 %v427, %v462
      %v467 = vmul.f32 %v428, %v462
      %v468 = vmul.f32 %v429, %v462
      %v469 = vmul.f32 %v430, %v462
      %v470 = vmul.f32 %v431, %v462
      %v471 = vmul.f32 %v432, %v462
      %v472 = vmul.f32 %v433, %v462
      %v473 = vmul.f32 %v434, %v462
      %v474 = vmul.f32 %v435, %v462
      %v475 = vmul.f32 %v436, %v462
      %v476 = vmul.f32 %v437, %v462
      %v477 = vmul.f32 %v438, %v462
      %v478 = vmul.f32 %v439, %v462
      %v479 = vmul.f32 %v440, %v462
      %v480 = vmul.f32 %v441, %v462
      %v481 = vmul.f32 %v442, %v462
      %v482 = vmul.f32 %v443, %v462
      %v483 = vmul.f32 %v444, %v462
      %v484 = vmul.f32 %v445, %v462
      %v485 = vmul.f32 %v446, %v462
      %v486 = vmul.f32 %v447, %v462
      %v487 = vmul.f32 %v448, %v462
      %v488 = vmul.f32 %v449, %v462
      %v489 = vmul.f32 %v450, %v462
      %v490 = vmul.f32 %v451, %v462
      %v491 = vmul.f32 %v452, %v462
      %v492 = vmul.f32 %v453, %v462
      %v493 = vmul.f32 %v454, %v462
      %v494 = vmul.f32 %v455, %v462
      %v495 = vmul.f32 %v456, %v462
      %v496 = vld [vmem:[%s2] sm:$0x1]
      %v498 = vlaneseq
      %v499 = vshrl.u32 %v498, 7
      %v500 = vsub.s32 0, %v499
      %v501 = vrot.slane %v496, %v500
      %v503 = vadd.f32 %v464, %v501
      %v504 = vadd.f32 %v465, %v501
      %v505 = vadd.f32 %v466, %v501
      %v506 = vadd.f32 %v467, %v501
      %v507 = vadd.f32 %v468, %v501
      %v508 = vadd.f32 %v469, %v501
      %v509 = vadd.f32 %v470, %v501
      %v510 = vadd.f32 %v471, %v501
      %v511 = vadd.f32 %v472, %v501
      %v512 = vadd.f32 %v473, %v501
      %v513 = vadd.f32 %v474, %v501
      %v514 = vadd.f32 %v475, %v501
      %v515 = vadd.f32 %v476, %v501
      %v516 = vadd.f32 %v477, %v501
      %v517 = vadd.f32 %v478, %v501
      %v518 = vadd.f32 %v479, %v501
      %v519 = vadd.f32 %v480, %v501
      %v520 = vadd.f32 %v481, %v501
      %v521 = vadd.f32 %v482, %v501
      %v522 = vadd.f32 %v483, %v501
      %v523 = vadd.f32 %v484, %v501
      %v524 = vadd.f32 %v485, %v501
      %v525 = vadd.f32 %v486, %v501
      %v526 = vadd.f32 %v487, %v501
      %v527 = vadd.f32 %v488, %v501
      %v528 = vadd.f32 %v489, %v501
      %v529 = vadd.f32 %v490, %v501
      %v530 = vadd.f32 %v491, %v501
      %v531 = vadd.f32 %v492, %v501
      %v532 = vadd.f32 %v493, %v501
      %v533 = vadd.f32 %v494, %v501
      %v534 = vadd.f32 %v495, %v501
      %v535 = vmax.f32 %v503, 0.0
      %v536 = vmax.f32 %v504, 0.0
      %v537 = vmax.f32 %v505, 0.0
      %v538 = vmax.f32 %v506, 0.0
      %v539 = vmax.f32 %v507, 0.0
      %v540 = vmax.f32 %v508, 0.0
      %v541 = vmax.f32 %v509, 0.0
      %v542 = vmax.f32 %v510, 0.0
      %v543 = vmax.f32 %v511, 0.0
      %v544 = vmax.f32 %v512, 0.0
      %v545 = vmax.f32 %v513, 0.0
      %v546 = vmax.f32 %v514, 0.0
      %v547 = vmax.f32 %v515, 0.0
      %v548 = vmax.f32 %v516, 0.0
      %v549 = vmax.f32 %v517, 0.0
      %v550 = vmax.f32 %v518, 0.0
      %v551 = vmax.f32 %v519, 0.0
      %v552 = vmax.f32 %v520, 0.0
      %v553 = vmax.f32 %v521, 0.0
      %v554 = vmax.f32 %v522, 0.0
      %v555 = vmax.f32 %v523, 0.0
      %v556 = vmax.f32 %v524, 0.0
      %v557 = vmax.f32 %v525, 0.0
      %v558 = vmax.f32 %v526, 0.0
      %v559 = vmax.f32 %v527, 0.0
      %v560 = vmax.f32 %v528, 0.0
      %v561 = vmax.f32 %v529, 0.0
      %v562 = vmax.f32 %v530, 0.0
      %v563 = vmax.f32 %v531, 0.0
      %v564 = vmax.f32 %v532, 0.0
      %v565 = vmax.f32 %v533, 0.0
      %v566 = vmax.f32 %v534, 0.0
      %v567 = vpack.c.bf16 %v536, %v535
      %v568 = vpack.c.bf16 %v538, %v537
      %v569 = vpack.c.bf16 %v540, %v539
      %v570 = vpack.c.bf16 %v542, %v541
      %v571 = vpack.c.bf16 %v544, %v543
      %v572 = vpack.c.bf16 %v546, %v545
      %v573 = vpack.c.bf16 %v548, %v547
      %v574 = vpack.c.bf16 %v550, %v549
      %v575 = vpack.c.bf16 %v552, %v551
      %v576 = vpack.c.bf16 %v554, %v553
      %v577 = vpack.c.bf16 %v556, %v555
      %v578 = vpack.c.bf16 %v558, %v557
      %v579 = vpack.c.bf16 %v560, %v559
      %v580 = vpack.c.bf16 %v562, %v561
      %v581 = vpack.c.bf16 %v564, %v563
      %v582 = vpack.c.bf16 %v566, %v565
      %v583 = vld [vmem:[%s3] sm:$0xf]
      %v584 = vld [vmem:[%s3 + $0x4] sm:$0xf]
      %v585 = vld [vmem:[%s3 + $0x8] sm:$0xf]
      %v586 = vld [vmem:[%s3 + $0xc] sm:$0xf]
      %v587 = vld [vmem:[%s3 + $0x10] sm:$0xf]
      %v588 = vld [vmem:[%s3 + $0x14] sm:$0xf]
      %v589 = vld [vmem:[%s3 + $0x18] sm:$0xf]
      %v590 = vld [vmem:[%s3 + $0x1c] sm:$0xf]
      %v591 = vld [vmem:[%s3 + $0x20] sm:$0xf]
      %v592 = vld [vmem:[%s3 + $0x24] sm:$0xf]
      %v593 = vld [vmem:[%s3 + $0x28] sm:$0xf]
      %v594 = vld [vmem:[%s3 + $0x2c] sm:$0xf]
      %v595 = vld [vmem:[%s3 + $0x30] sm:$0xf]
      %v596 = vld [vmem:[%s3 + $0x34] sm:$0xf]
      %v597 = vld [vmem:[%s3 + $0x38] sm:$0xf]
      %v598 = vld [vmem:[%s3 + $0x3c] sm:$0xf]
      %v615 = vunpack.c.l.b16 %v583
      %v616 = vunpack.c.l.b16 %v584
      %v617 = vunpack.c.l.b16 %v585
      %v618 = vunpack.c.l.b16 %v586
      %v619 = vunpack.c.l.b16 %v587
      %v620 = vunpack.c.l.b16 %v588
      %v621 = vunpack.c.l.b16 %v589
      %v622 = vunpack.c.l.b16 %v590
      %v623 = vunpack.c.l.b16 %v591
      %v624 = vunpack.c.l.b16 %v592
      %v625 = vunpack.c.l.b16 %v593
      %v626 = vunpack.c.l.b16 %v594
      %v627 = vunpack.c.l.b16 %v595
      %v628 = vunpack.c.l.b16 %v596
      %v629 = vunpack.c.l.b16 %v597
      %v630 = vunpack.c.l.b16 %v598
      %v631 = vpack.c.b16 %v616, %v615
      %v632 = vpack.c.b16 %v618, %v617
      %v633 = vpack.c.b16 %v620, %v619
      %v634 = vpack.c.b16 %v622, %v621
      %v635 = vpack.c.b16 %v624, %v623
      %v636 = vpack.c.b16 %v626, %v625
      %v637 = vpack.c.b16 %v628, %v627
      %v638 = vpack.c.b16 %v630, %v629
      %647 = vmatprep.subr.bf16.mxu0 0
      %648 = vmatpush1.bf16.msra.mxu0 %v631
      %649 = vmatprep.subr.bf16.mxu0 0
      %650 = vmatpush1.bf16.msra.mxu0 %v632
      %651 = vmatprep.subr.bf16.mxu0 0
      %652 = vmatpush1.bf16.msra.mxu0 %v633
      %653 = vmatprep.subr.bf16.mxu0 0
      %654 = vmatpush1.bf16.msra.mxu0 %v634
      %655 = vmatprep.subr.bf16.mxu0 0
      %656 = vmatpush1.bf16.msra.mxu0 %v635
      %657 = vmatprep.subr.bf16.mxu0 0
      %658 = vmatpush1.bf16.msra.mxu0 %v636
      %659 = vmatprep.subr.bf16.mxu0 0
      %660 = vmatpush1.bf16.msra.mxu0 %v637
      %661 = vmatprep.subr.bf16.mxu0 0
      %662 = vmatpush1.bf16.msra.mxu0 %v638
      %663 = vmatprep.subr.bf16.mxu0 0
      %664 = vmatpush1.bf16.msra.mxu0 0
      %665 = vmatprep.subr.bf16.mxu0 0
      %666 = vmatpush1.bf16.msra.mxu0 0
      %667 = vmatprep.subr.bf16.mxu0 0
      %668 = vmatpush1.bf16.msra.mxu0 0
      %669 = vmatprep.subr.bf16.mxu0 0
      %670 = vmatpush1.bf16.msra.mxu0 0
      %671 = vmatprep.subr.bf16.mxu0 0
      %672 = vmatpush1.bf16.msra.mxu0 0
      %673 = vmatprep.subr.bf16.mxu0 0
      %674 = vmatpush1.bf16.msra.mxu0 0
      %675 = vmatprep.subr.bf16.mxu0 0
      %676 = vmatpush1.bf16.msra.mxu0 0
      %677 = vmatprep.subr.bf16.mxu0 0
      %678 = vmatpush1.bf16.msra.mxu0 0
      %679 = vmatprep.mubr.bf16.mxu0 0
      %680 = vmatmul.mubr.bf16.gmra.mrb[0].mxu0 %v567
      %v681 = vpop.f32.mrb[0].mxu0
      %v682 = vadd.f32 0.0, %v681
      %v683 = vpop.f32.mrb[0].mxu0
      %v684 = vpop.f32.mrb[0].mxu0
      %v685 = vadd.f32 0.0, %v684
      %v686 = vpop.f32.mrb[0].mxu0
      %687 = vmatprep.mubr.bf16.mxu0 0
      %688 = vmatmul.mubr.bf16.gmra.mrb[0].mxu0 %v568
      %v689 = vpop.f32.mrb[0].mxu0
      %v690 = vadd.f32 0.0, %v689
      %v691 = vpop.f32.mrb[0].mxu0
      %v692 = vpop.f32.mrb[0].mxu0
      %v693 = vadd.f32 0.0, %v692
      %v694 = vpop.f32.mrb[0].mxu0
      %695 = vmatprep.mubr.bf16.mxu0 0
      %696 = vmatmul.mubr.bf16.gmra.mrb[0].mxu0 %v569
      %v697 = vpop.f32.mrb[0].mxu0
      %v698 = vadd.f32 0.0, %v697
      %v699 = vpop.f32.mrb[0].mxu0
      %v700 = vpop.f32.mrb[0].mxu0
      %v701 = vadd.f32 0.0, %v700
      %v702 = vpop.f32.mrb[0].mxu0
      %703 = vmatprep.mubr.bf16.mxu0 0
      %704 = vmatmul.mubr.bf16.gmra.mrb[0].mxu0 %v570
      %v705 = vpop.f32.mrb[0].mxu0
      %v706 = vadd.f32 0.0, %v705
      %v707 = vpop.f32.mrb[0].mxu0
      %v708 = vpop.f32.mrb[0].mxu0
      %v709 = vadd.f32 0.0, %v708
      %v710 = vpop.f32.mrb[0].mxu0
      %711 = vmatprep.mubr.bf16.mxu0 0
      %712 = vmatmul.mubr.bf16.gmra.mrb[0].mxu0 %v571
      %v713 = vpop.f32.mrb[0].mxu0
      %v714 = vadd.f32 0.0, %v713
      %v715 = vpop.f32.mrb[0].mxu0
      %v716 = vpop.f32.mrb[0].mxu0
      %v717 = vadd.f32 0.0, %v716
      %v718 = vpop.f32.mrb[0].mxu0
      %719 = vmatprep.mubr.bf16.mxu0 0
      %720 = vmatmul.mubr.bf16.gmra.mrb[0].mxu0 %v572
      %v721 = vpop.f32.mrb[0].mxu0
      %v722 = vadd.f32 0.0, %v721
      %v723 = vpop.f32.mrb[0].mxu0
      %v724 = vpop.f32.mrb[0].mxu0
      %v725 = vadd.f32 0.0, %v724
      %v726 = vpop.f32.mrb[0].mxu0
      %727 = vmatprep.mubr.bf16.mxu0 0
      %728 = vmatmul.mubr.bf16.gmra.mrb[0].mxu0 %v573
      %v729 = vpop.f32.mrb[0].mxu0
      %v730 = vadd.f32 0.0, %v729
      %v731 = vpop.f32.mrb[0].mxu0
      %v732 = vpop.f32.mrb[0].mxu0
      %v733 = vadd.f32 0.0, %v732
      %v734 = vpop.f32.mrb[0].mxu0
      %735 = vmatprep.mubr.bf16.mxu0 0
      %736 = vmatmul.mubr.bf16.gmra.mrb[0].mxu0 %v574
      %v737 = vpop.f32.mrb[0].mxu0
      %v738 = vadd.f32 0.0, %v737
      %v739 = vpop.f32.mrb[0].mxu0
      %v740 = vpop.f32.mrb[0].mxu0
      %v741 = vadd.f32 0.0, %v740
      %v742 = vpop.f32.mrb[0].mxu0
      %743 = vmatprep.mubr.bf16.mxu0 0
      %744 = vmatmul.mubr.bf16.gmra.mrb[0].mxu0 %v575
      %v745 = vpop.f32.mrb[0].mxu0
      %v746 = vadd.f32 0.0, %v745
      %v747 = vpop.f32.mrb[0].mxu0
      %v748 = vpop.f32.mrb[0].mxu0
      %v749 = vadd.f32 0.0, %v748
      %v750 = vpop.f32.mrb[0].mxu0
      %751 = vmatprep.mubr.bf16.mxu0 0
      %752 = vmatmul.mubr.bf16.gmra.mrb[0].mxu0 %v576
      %v753 = vpop.f32.mrb[0].mxu0
      %v754 = vadd.f32 0.0, %v753
      %v755 = vpop.f32.mrb[0].mxu0
      %v756 = vpop.f32.mrb[0].mxu0
      %v757 = vadd.f32 0.0, %v756
      %v758 = vpop.f32.mrb[0].mxu0
      %759 = vmatprep.mubr.bf16.mxu0 0
      %760 = vmatmul.mubr.bf16.gmra.mrb[0].mxu0 %v577
      %v761 = vpop.f32.mrb[0].mxu0
      %v762 = vadd.f32 0.0, %v761
      %v763 = vpop.f32.mrb[0].mxu0
      %v764 = vpop.f32.mrb[0].mxu0
      %v765 = vadd.f32 0.0, %v764
      %v766 = vpop.f32.mrb[0].mxu0
      %767 = vmatprep.mubr.bf16.mxu0 0
      %768 = vmatmul.mubr.bf16.gmra.mrb[0].mxu0 %v578
      %v769 = vpop.f32.mrb[0].mxu0
      %v770 = vadd.f32 0.0, %v769
      %v771 = vpop.f32.mrb[0].mxu0
      %v772 = vpop.f32.mrb[0].mxu0
      %v773 = vadd.f32 0.0, %v772
      %v774 = vpop.f32.mrb[0].mxu0
      %775 = vmatprep.mubr.bf16.mxu0 0
      %776 = vmatmul.mubr.bf16.gmra.mrb[0].mxu0 %v579
      %v777 = vpop.f32.mrb[0].mxu0
      %v778 = vadd.f32 0.0, %v777
      %v779 = vpop.f32.mrb[0].mxu0
      %v780 = vpop.f32.mrb[0].mxu0
      %v781 = vadd.f32 0.0, %v780
      %v782 = vpop.f32.mrb[0].mxu0
      %783 = vmatprep.mubr.bf16.mxu0 0
      %784 = vmatmul.mubr.bf16.gmra.mrb[0].mxu0 %v580
      %v785 = vpop.f32.mrb[0].mxu0
      %v786 = vadd.f32 0.0, %v785
      %v787 = vpop.f32.mrb[0].mxu0
      %v788 = vpop.f32.mrb[0].mxu0
      %v789 = vadd.f32 0.0, %v788
      %v790 = vpop.f32.mrb[0].mxu0
      %791 = vmatprep.mubr.bf16.mxu0 0
      %792 = vmatmul.mubr.bf16.gmra.mrb[0].mxu0 %v581
      %v793 = vpop.f32.mrb[0].mxu0
      %v794 = vadd.f32 0.0, %v793
      %v795 = vpop.f32.mrb[0].mxu0
      %v796 = vpop.f32.mrb[0].mxu0
      %v797 = vadd.f32 0.0, %v796
      %v798 = vpop.f32.mrb[0].mxu0
      %799 = vmatprep.mubr.bf16.mxu0 0
      %800 = vmatmul.mubr.bf16.gmra.mrb[0].mxu0 %v582
      %v801 = vpop.f32.mrb[0].mxu0
      %v802 = vadd.f32 0.0, %v801
      %v803 = vpop.f32.mrb[0].mxu0
      %v804 = vpop.f32.mrb[0].mxu0
      %v805 = vadd.f32 0.0, %v804
      %v806 = vpop.f32.mrb[0].mxu0
      %807 = vdwg.mxu0
      %v808 = vpack.c.bf16 %v685, %v682
      %v809 = vpack.c.bf16 %v693, %v690
      %v810 = vpack.c.bf16 %v701, %v698
      %v811 = vpack.c.bf16 %v709, %v706
      %v812 = vpack.c.bf16 %v717, %v714
      %v813 = vpack.c.bf16 %v725, %v722
      %v814 = vpack.c.bf16 %v733, %v730
      %v815 = vpack.c.bf16 %v741, %v738
      %v816 = vpack.c.bf16 %v749, %v746
      %v817 = vpack.c.bf16 %v757, %v754
      %v818 = vpack.c.bf16 %v765, %v762
      %v819 = vpack.c.bf16 %v773, %v770
      %v820 = vpack.c.bf16 %v781, %v778
      %v821 = vpack.c.bf16 %v789, %v786
      %v822 = vpack.c.bf16 %v797, %v794
      %v823 = vpack.c.bf16 %v805, %v802
      %v840 = vunpack.c.l.b16 %v808
      %v841 = vunpack.c.h.b16 %v808
      %v842 = vunpack.c.l.b16 %v809
      %v843 = vunpack.c.h.b16 %v809
      %v844 = vunpack.c.l.b16 %v810
      %v845 = vunpack.c.h.b16 %v810
      %v846 = vunpack.c.l.b16 %v811
      %v847 = vunpack.c.h.b16 %v811
      %v848 = vunpack.c.l.b16 %v812
      %v849 = vunpack.c.h.b16 %v812
      %v850 = vunpack.c.l.b16 %v813
      %v851 = vunpack.c.h.b16 %v813
      %v852 = vunpack.c.l.b16 %v814
      %v853 = vunpack.c.h.b16 %v814
      %v854 = vunpack.c.l.b16 %v815
      %v855 = vunpack.c.h.b16 %v815
      %v856 = vunpack.c.l.b16 %v816
      %v857 = vunpack.c.h.b16 %v816
      %v858 = vunpack.c.l.b16 %v817
      %v859 = vunpack.c.h.b16 %v817
      %v860 = vunpack.c.l.b16 %v818
      %v861 = vunpack.c.h.b16 %v818
      %v862 = vunpack.c.l.b16 %v819
      %v863 = vunpack.c.h.b16 %v819
      %v864 = vunpack.c.l.b16 %v820
      %v865 = vunpack.c.h.b16 %v820
      %v866 = vunpack.c.l.b16 %v821
      %v867 = vunpack.c.h.b16 %v821
      %v868 = vunpack.c.l.b16 %v822
      %v869 = vunpack.c.h.b16 %v822
      %v870 = vunpack.c.l.b16 %v823
      %v871 = vunpack.c.h.b16 %v823
      %v872 = vpack.c.b16 %v840, %v840
      %v873 = vpack.c.b16 %v841, %v841
      %v874 = vpack.c.b16 %v842, %v842
      %v875 = vpack.c.b16 %v843, %v843
      %v876 = vpack.c.b16 %v844, %v844
      %v877 = vpack.c.b16 %v845, %v845
      %v878 = vpack.c.b16 %v846, %v846
      %v879 = vpack.c.b16 %v847, %v847
      %v880 = vpack.c.b16 %v848, %v848
      %v881 = vpack.c.b16 %v849, %v849
      %v882 = vpack.c.b16 %v850, %v850
      %v883 = vpack.c.b16 %v851, %v851
      %v884 = vpack.c.b16 %v852, %v852
      %v885 = vpack.c.b16 %v853, %v853
      %v886 = vpack.c.b16 %v854, %v854
      %v887 = vpack.c.b16 %v855, %v855
      %v888 = vpack.c.b16 %v856, %v856
      %v889 = vpack.c.b16 %v857, %v857
      %v890 = vpack.c.b16 %v858, %v858
      %v891 = vpack.c.b16 %v859, %v859
      %v892 = vpack.c.b16 %v860, %v860
      %v893 = vpack.c.b16 %v861, %v861
      %v894 = vpack.c.b16 %v862, %v862
      %v895 = vpack.c.b16 %v863, %v863
      %v896 = vpack.c.b16 %v864, %v864
      %v897 = vpack.c.b16 %v865, %v865
      %v898 = vpack.c.b16 %v866, %v866
      %v899 = vpack.c.b16 %v867, %v867
      %v900 = vpack.c.b16 %v868, %v868
      %v901 = vpack.c.b16 %v869, %v869
      %v902 = vpack.c.b16 %v870, %v870
      %v903 = vpack.c.b16 %v871, %v871
      %936 = vst [vmem:[%s376] sm:$0xf] %v872
      %937 = vst [vmem:[%s376 + $0x4] sm:$0xf] %v873
      %938 = vst [vmem:[%s376 + $0x8] sm:$0xf] %v874
      %939 = vst [vmem:[%s376 + $0xc] sm:$0xf] %v875
      %940 = vst [vmem:[%s376 + $0x10] sm:$0xf] %v876
      %941 = vst [vmem:[%s376 + $0x14] sm:$0xf] %v877
      %942 = vst [vmem:[%s376 + $0x18] sm:$0xf] %v878
      %943 = vst [vmem:[%s376 + $0x1c] sm:$0xf] %v879
      %944 = vst [vmem:[%s376 + $0x20] sm:$0xf] %v880
      %945 = vst [vmem:[%s376 + $0x24] sm:$0xf] %v881
      %946 = vst [vmem:[%s376 + $0x28] sm:$0xf] %v882
      %947 = vst [vmem:[%s376 + $0x2c] sm:$0xf] %v883
      %948 = vst [vmem:[%s376 + $0x30] sm:$0xf] %v884
      %949 = vst [vmem:[%s376 + $0x34] sm:$0xf] %v885
      %950 = vst [vmem:[%s376 + $0x38] sm:$0xf] %v886
      %951 = vst [vmem:[%s376 + $0x3c] sm:$0xf] %v887
      %952 = vst [vmem:[%s376 + $0x40] sm:$0xf] %v888
      %953 = vst [vmem:[%s376 + $0x44] sm:$0xf] %v889
      %954 = vst [vmem:[%s376 + $0x48] sm:$0xf] %v890
      %955 = vst [vmem:[%s376 + $0x4c] sm:$0xf] %v891
      %956 = vst [vmem:[%s376 + $0x50] sm:$0xf] %v892
      %957 = vst [vmem:[%s376 + $0x54] sm:$0xf] %v893
      %958 = vst [vmem:[%s376 + $0x58] sm:$0xf] %v894
      %959 = vst [vmem:[%s376 + $0x5c] sm:$0xf] %v895
      %960 = vst [vmem:[%s376 + $0x60] sm:$0xf] %v896
      %961 = vst [vmem:[%s376 + $0x64] sm:$0xf] %v897
      %962 = vst [vmem:[%s376 + $0x68] sm:$0xf] %v898
      %963 = vst [vmem:[%s376 + $0x6c] sm:$0xf] %v899
      %964 = vst [vmem:[%s376 + $0x70] sm:$0xf] %v900
      %965 = vst [vmem:[%s376 + $0x74] sm:$0xf] %v901
      %966 = vst [vmem:[%s376 + $0x78] sm:$0xf] %v902
      %967 = vst [vmem:[%s376 + $0x7c] sm:$0xf] %v903
      %v968 = vadd.f32 %v682, %v685
      %v969 = vadd.f32 %v968, %v690
      %v970 = vadd.f32 %v969, %v693
      %v971 = vadd.f32 %v970, %v698
      %v972 = vadd.f32 %v971, %v701
      %v973 = vadd.f32 %v972, %v706
      %v974 = vadd.f32 %v973, %v709
      %v975 = vadd.f32 %v974, %v714
      %v976 = vadd.f32 %v975, %v717
      %v977 = vadd.f32 %v976, %v722
      %v978 = vadd.f32 %v977, %v725
      %v979 = vadd.f32 %v978, %v730
      %v980 = vadd.f32 %v979, %v733
      %v981 = vadd.f32 %v980, %v738
      %v982 = vadd.f32 %v981, %v741
      %v983 = vadd.f32 %v982, %v746
      %v984 = vadd.f32 %v983, %v749
      %v985 = vadd.f32 %v984, %v754
      %v986 = vadd.f32 %v985, %v757
      %v987 = vadd.f32 %v986, %v762
      %v988 = vadd.f32 %v987, %v765
      %v989 = vadd.f32 %v988, %v770
      %v990 = vadd.f32 %v989, %v773
      %v991 = vadd.f32 %v990, %v778
      %v992 = vadd.f32 %v991, %v781
      %v993 = vadd.f32 %v992, %v786
      %v994 = vadd.f32 %v993, %v789
      %v995 = vadd.f32 %v994, %v794
      %v996 = vadd.f32 %v995, %v797
      %v997 = vadd.f32 %v996, %v802
      %v998 = vadd.f32 %v997, %v805
      %v999 = vrot.slane %v998, 4
      %v1000 = vadd.f32 %v998, %v999
      %v1001 = vrot.slane %v1000, 2
      %v1002 = vadd.f32 %v1000, %v1001
      %v1003 = vrot.slane %v1002, 1
      %v1004 = vadd.f32 %v1002, %v1003
      %1005 = vst [vmem:[%s387] sm:$0x1] %v1004
      %v1006 = vmul.f32 %v682, %v682
      %v1007 = vmul.f32 %v685, %v685
      %v1008 = vmul.f32 %v690, %v690
      %v1009 = vmul.f32 %v693, %v693
      %v1010 = vmul.f32 %v698, %v698
      %v1011 = vmul.f32 %v701, %v701
      %v1012 = vmul.f32 %v706, %v706
      %v1013 = vmul.f32 %v709, %v709
      %v1014 = vmul.f32 %v714, %v714
      %v1015 = vmul.f32 %v717, %v717
      %v1016 = vmul.f32 %v722, %v722
      %v1017 = vmul.f32 %v725, %v725
      %v1018 = vmul.f32 %v730, %v730
      %v1019 = vmul.f32 %v733, %v733
      %v1020 = vmul.f32 %v738, %v738
      %v1021 = vmul.f32 %v741, %v741
      %v1022 = vmul.f32 %v746, %v746
      %v1023 = vmul.f32 %v749, %v749
      %v1024 = vmul.f32 %v754, %v754
      %v1025 = vmul.f32 %v757, %v757
      %v1026 = vmul.f32 %v762, %v762
      %v1027 = vmul.f32 %v765, %v765
      %v1028 = vmul.f32 %v770, %v770
      %v1029 = vmul.f32 %v773, %v773
      %v1030 = vmul.f32 %v778, %v778
      %v1031 = vmul.f32 %v781, %v781
      %v1032 = vmul.f32 %v786, %v786
      %v1033 = vmul.f32 %v789, %v789
      %v1034 = vmul.f32 %v794, %v794
      %v1035 = vmul.f32 %v797, %v797
      %v1036 = vmul.f32 %v802, %v802
      %v1037 = vmul.f32 %v805, %v805
      %v1038 = vadd.f32 %v1006, %v1007
      %v1039 = vadd.f32 %v1038, %v1008
      %v1040 = vadd.f32 %v1039, %v1009
      %v1041 = vadd.f32 %v1040, %v1010
      %v1042 = vadd.f32 %v1041, %v1011
      %v1043 = vadd.f32 %v1042, %v1012
      %v1044 = vadd.f32 %v1043, %v1013
      %v1045 = vadd.f32 %v1044, %v1014
      %v1046 = vadd.f32 %v1045, %v1015
      %v1047 = vadd.f32 %v1046, %v1016
      %v1048 = vadd.f32 %v1047, %v1017
      %v1049 = vadd.f32 %v1048, %v1018
      %v1050 = vadd.f32 %v1049, %v1019
      %v1051 = vadd.f32 %v1050, %v1020
      %v1052 = vadd.f32 %v1051, %v1021
      %v1053 = vadd.f32 %v1052, %v1022
      %v1054 = vadd.f32 %v1053, %v1023
      %v1055 = vadd.f32 %v1054, %v1024
      %v1056 = vadd.f32 %v1055, %v1025
      %v1057 = vadd.f32 %v1056, %v1026
      %v1058 = vadd.f32 %v1057, %v1027
      %v1059 = vadd.f32 %v1058, %v1028
      %v1060 = vadd.f32 %v1059, %v1029
      %v1061 = vadd.f32 %v1060, %v1030
      %v1062 = vadd.f32 %v1061, %v1031
      %v1063 = vadd.f32 %v1062, %v1032
      %v1064 = vadd.f32 %v1063, %v1033
      %v1065 = vadd.f32 %v1064, %v1034
      %v1066 = vadd.f32 %v1065, %v1035
      %v1067 = vadd.f32 %v1066, %v1036
      %v1068 = vadd.f32 %v1067, %v1037
      %v1069 = vrot.slane %v1068, 4
      %v1070 = vadd.f32 %v1068, %v1069
      %v1071 = vrot.slane %v1070, 2
      %v1072 = vadd.f32 %v1070, %v1071
      %v1073 = vrot.slane %v1072, 1
      %v1074 = vadd.f32 %v1072, %v1073
      %1075 = vst [vmem:[%s387 + $0x1] sm:$0x1] %v1074
      %v1076 = vld [vmem:[%s370] sm:$0xf]
      %v1077 = vld [vmem:[%s370 + $0x4] sm:$0xf]
      %v1078 = vld [vmem:[%s370 + $0x8] sm:$0xf]
      %v1079 = vld [vmem:[%s370 + $0xc] sm:$0xf]
      %v1080 = vld [vmem:[%s370 + $0x10] sm:$0xf]
      %v1081 = vld [vmem:[%s370 + $0x14] sm:$0xf]
      %v1082 = vld [vmem:[%s370 + $0x18] sm:$0xf]
      %v1083 = vld [vmem:[%s370 + $0x1c] sm:$0xf]
      %v1084 = vld [vmem:[%s370 + $0x20] sm:$0xf]
      %v1085 = vld [vmem:[%s370 + $0x24] sm:$0xf]
      %v1086 = vld [vmem:[%s370 + $0x28] sm:$0xf]
      %v1087 = vld [vmem:[%s370 + $0x2c] sm:$0xf]
      %v1088 = vld [vmem:[%s370 + $0x30] sm:$0xf]
      %v1089 = vld [vmem:[%s370 + $0x34] sm:$0xf]
      %v1090 = vld [vmem:[%s370 + $0x38] sm:$0xf]
      %v1091 = vld [vmem:[%s370 + $0x3c] sm:$0xf]
      %v1092 = vld [vmem:[%s370 + $0x40] sm:$0xf]
      %v1093 = vld [vmem:[%s370 + $0x44] sm:$0xf]
      %v1094 = vld [vmem:[%s370 + $0x48] sm:$0xf]
      %v1095 = vld [vmem:[%s370 + $0x4c] sm:$0xf]
      %v1096 = vld [vmem:[%s370 + $0x50] sm:$0xf]
      %v1097 = vld [vmem:[%s370 + $0x54] sm:$0xf]
      %v1098 = vld [vmem:[%s370 + $0x58] sm:$0xf]
      %v1099 = vld [vmem:[%s370 + $0x5c] sm:$0xf]
      %v1100 = vld [vmem:[%s370 + $0x60] sm:$0xf]
      %v1101 = vld [vmem:[%s370 + $0x64] sm:$0xf]
      %v1102 = vld [vmem:[%s370 + $0x68] sm:$0xf]
      %v1103 = vld [vmem:[%s370 + $0x6c] sm:$0xf]
      %v1104 = vld [vmem:[%s370 + $0x70] sm:$0xf]
      %v1105 = vld [vmem:[%s370 + $0x74] sm:$0xf]
      %v1106 = vld [vmem:[%s370 + $0x78] sm:$0xf]
      %v1107 = vld [vmem:[%s370 + $0x7c] sm:$0xf]
      %v1108 = vld [vmem:[%s5] sm:$0xf]
      %v1109 = vld [vmem:[%s5 + $0x4] sm:$0xf]
      %v1110 = vld [vmem:[%s5 + $0x8] sm:$0xf]
      %v1111 = vld [vmem:[%s5 + $0xc] sm:$0xf]
      %v1112 = vld [vmem:[%s5 + $0x10] sm:$0xf]
      %v1113 = vld [vmem:[%s5 + $0x14] sm:$0xf]
      %v1114 = vld [vmem:[%s5 + $0x18] sm:$0xf]
      %v1115 = vld [vmem:[%s5 + $0x1c] sm:$0xf]
      %v1116 = vld [vmem:[%s5 + $0x20] sm:$0xf]
      %v1117 = vld [vmem:[%s5 + $0x24] sm:$0xf]
      %v1118 = vld [vmem:[%s5 + $0x28] sm:$0xf]
      %v1119 = vld [vmem:[%s5 + $0x2c] sm:$0xf]
      %v1120 = vld [vmem:[%s5 + $0x30] sm:$0xf]
      %v1121 = vld [vmem:[%s5 + $0x34] sm:$0xf]
      %v1122 = vld [vmem:[%s5 + $0x38] sm:$0xf]
      %v1123 = vld [vmem:[%s5 + $0x3c] sm:$0xf]
      %v1156 = vunpack.c.l.b16 %v1076
      %v1157 = vunpack.c.l.b16 %v1077
      %v1158 = vunpack.c.l.b16 %v1078
      %v1159 = vunpack.c.l.b16 %v1079
      %v1160 = vunpack.c.l.b16 %v1080
      %v1161 = vunpack.c.l.b16 %v1081
      %v1162 = vunpack.c.l.b16 %v1082
      %v1163 = vunpack.c.l.b16 %v1083
      %v1164 = vunpack.c.l.b16 %v1084
      %v1165 = vunpack.c.l.b16 %v1085
      %v1166 = vunpack.c.l.b16 %v1086
      %v1167 = vunpack.c.l.b16 %v1087
      %v1168 = vunpack.c.l.b16 %v1088
      %v1169 = vunpack.c.l.b16 %v1089
      %v1170 = vunpack.c.l.b16 %v1090
      %v1171 = vunpack.c.l.b16 %v1091
      %v1172 = vunpack.c.l.b16 %v1092
      %v1173 = vunpack.c.l.b16 %v1093
      %v1174 = vunpack.c.l.b16 %v1094
      %v1175 = vunpack.c.l.b16 %v1095
      %v1176 = vunpack.c.l.b16 %v1096
      %v1177 = vunpack.c.l.b16 %v1097
      %v1178 = vunpack.c.l.b16 %v1098
      %v1179 = vunpack.c.l.b16 %v1099
      %v1180 = vunpack.c.l.b16 %v1100
      %v1181 = vunpack.c.l.b16 %v1101
      %v1182 = vunpack.c.l.b16 %v1102
      %v1183 = vunpack.c.l.b16 %v1103
      %v1184 = vunpack.c.l.b16 %v1104
      %v1185 = vunpack.c.l.b16 %v1105
      %v1186 = vunpack.c.l.b16 %v1106
      %v1187 = vunpack.c.l.b16 %v1107
      %v1188 = vpack.c.b16 %v1157, %v1156
      %v1189 = vpack.c.b16 %v1159, %v1158
      %v1190 = vpack.c.b16 %v1161, %v1160
      %v1191 = vpack.c.b16 %v1163, %v1162
      %v1192 = vpack.c.b16 %v1165, %v1164
      %v1193 = vpack.c.b16 %v1167, %v1166
      %v1194 = vpack.c.b16 %v1169, %v1168
      %v1195 = vpack.c.b16 %v1171, %v1170
      %v1196 = vpack.c.b16 %v1173, %v1172
      %v1197 = vpack.c.b16 %v1175, %v1174
      %v1198 = vpack.c.b16 %v1177, %v1176
      %v1199 = vpack.c.b16 %v1179, %v1178
      %v1200 = vpack.c.b16 %v1181, %v1180
      %v1201 = vpack.c.b16 %v1183, %v1182
      %v1202 = vpack.c.b16 %v1185, %v1184
      %v1203 = vpack.c.b16 %v1187, %v1186
      %v1236 = vunpack.c.l.b16 %v1108
      %v1237 = vunpack.c.l.b16 %v1109
      %v1238 = vunpack.c.l.b16 %v1110
      %v1239 = vunpack.c.l.b16 %v1111
      %v1240 = vunpack.c.l.b16 %v1112
      %v1241 = vunpack.c.l.b16 %v1113
      %v1242 = vunpack.c.l.b16 %v1114
      %v1243 = vunpack.c.l.b16 %v1115
      %v1244 = vunpack.c.l.b16 %v1116
      %v1245 = vunpack.c.l.b16 %v1117
      %v1246 = vunpack.c.l.b16 %v1118
      %v1247 = vunpack.c.l.b16 %v1119
      %v1248 = vunpack.c.l.b16 %v1120
      %v1249 = vunpack.c.l.b16 %v1121
      %v1250 = vunpack.c.l.b16 %v1122
      %v1251 = vunpack.c.l.b16 %v1123
      %v1252 = vpack.c.b16 %v1237, %v1236
      %v1253 = vpack.c.b16 %v1239, %v1238
      %v1254 = vpack.c.b16 %v1241, %v1240
      %v1255 = vpack.c.b16 %v1243, %v1242
      %v1256 = vpack.c.b16 %v1245, %v1244
      %v1257 = vpack.c.b16 %v1247, %v1246
      %v1258 = vpack.c.b16 %v1249, %v1248
      %v1259 = vpack.c.b16 %v1251, %v1250
      %1268 = vmatprep.subr.bf16.mxu0 0
      %1269 = vmatpush1.bf16.msra.mxu0 %v1252
      %1270 = vmatprep.subr.bf16.mxu0 0
      %1271 = vmatpush1.bf16.msra.mxu0 %v1253
      %1272 = vmatprep.subr.bf16.mxu0 0
      %1273 = vmatpush1.bf16.msra.mxu0 %v1254
      %1274 = vmatprep.subr.bf16.mxu0 0
      %1275 = vmatpush1.bf16.msra.mxu0 %v1255
      %1276 = vmatprep.subr.bf16.mxu0 0
      %1277 = vmatpush1.bf16.msra.mxu0 %v1256
      %1278 = vmatprep.subr.bf16.mxu0 0
      %1279 = vmatpush1.bf16.msra.mxu0 %v1257
      %1280 = vmatprep.subr.bf16.mxu0 0
      %1281 = vmatpush1.bf16.msra.mxu0 %v1258
      %1282 = vmatprep.subr.bf16.mxu0 0
      %1283 = vmatpush1.bf16.msra.mxu0 %v1259
      %1284 = vmatprep.subr.bf16.mxu0 0
      %1285 = vmatpush1.bf16.msra.mxu0 0
      %1286 = vmatprep.subr.bf16.mxu0 0
      %1287 = vmatpush1.bf16.msra.mxu0 0
      %1288 = vmatprep.subr.bf16.mxu0 0
      %1289 = vmatpush1.bf16.msra.mxu0 0
      %1290 = vmatprep.subr.bf16.mxu0 0
      %1291 = vmatpush1.bf16.msra.mxu0 0
      %1292 = vmatprep.subr.bf16.mxu0 0
      %1293 = vmatpush1.bf16.msra.mxu0 0
      %1294 = vmatprep.subr.bf16.mxu0 0
      %1295 = vmatpush1.bf16.msra.mxu0 0
      %1296 = vmatprep.subr.bf16.mxu0 0
      %1297 = vmatpush1.bf16.msra.mxu0 0
      %1298 = vmatprep.subr.bf16.mxu0 0
      %1299 = vmatpush1.bf16.msra.mxu0 0
      %1300 = vmatprep.mubr.bf16.mxu0 0
      %1301 = vmatmul.mubr.bf16.gmra.mrb[0].mxu0 %v1188
      %v1302 = vpop.f32.mrb[0].mxu0
      %v1303 = vadd.f32 0.0, %v1302
      %v1304 = vpop.f32.mrb[0].mxu0
      %v1305 = vpop.f32.mrb[0].mxu0
      %v1306 = vadd.f32 0.0, %v1305
      %v1307 = vpop.f32.mrb[0].mxu0
      %1308 = vmatprep.mubr.bf16.mxu0 0
      %1309 = vmatmul.mubr.bf16.gmra.mrb[0].mxu0 %v1189
      %v1310 = vpop.f32.mrb[0].mxu0
      %v1311 = vadd.f32 0.0, %v1310
      %v1312 = vpop.f32.mrb[0].mxu0
      %v1313 = vpop.f32.mrb[0].mxu0
      %v1314 = vadd.f32 0.0, %v1313
      %v1315 = vpop.f32.mrb[0].mxu0
      %1316 = vmatprep.mubr.bf16.mxu0 0
      %1317 = vmatmul.mubr.bf16.gmra.mrb[0].mxu0 %v1190
      %v1318 = vpop.f32.mrb[0].mxu0
      %v1319 = vadd.f32 0.0, %v1318
      %v1320 = vpop.f32.mrb[0].mxu0
      %v1321 = vpop.f32.mrb[0].mxu0
      %v1322 = vadd.f32 0.0, %v1321
      %v1323 = vpop.f32.mrb[0].mxu0
      %1324 = vmatprep.mubr.bf16.mxu0 0
      %1325 = vmatmul.mubr.bf16.gmra.mrb[0].mxu0 %v1191
      %v1326 = vpop.f32.mrb[0].mxu0
      %v1327 = vadd.f32 0.0, %v1326
      %v1328 = vpop.f32.mrb[0].mxu0
      %v1329 = vpop.f32.mrb[0].mxu0
      %v1330 = vadd.f32 0.0, %v1329
      %v1331 = vpop.f32.mrb[0].mxu0
      %1332 = vmatprep.mubr.bf16.mxu0 0
      %1333 = vmatmul.mubr.bf16.gmra.mrb[0].mxu0 %v1192
      %v1334 = vpop.f32.mrb[0].mxu0
      %v1335 = vadd.f32 0.0, %v1334
      %v1336 = vpop.f32.mrb[0].mxu0
      %v1337 = vpop.f32.mrb[0].mxu0
      %v1338 = vadd.f32 0.0, %v1337
      %v1339 = vpop.f32.mrb[0].mxu0
      %1340 = vmatprep.mubr.bf16.mxu0 0
      %1341 = vmatmul.mubr.bf16.gmra.mrb[0].mxu0 %v1193
      %v1342 = vpop.f32.mrb[0].mxu0
      %v1343 = vadd.f32 0.0, %v1342
      %v1344 = vpop.f32.mrb[0].mxu0
      %v1345 = vpop.f32.mrb[0].mxu0
      %v1346 = vadd.f32 0.0, %v1345
      %v1347 = vpop.f32.mrb[0].mxu0
      %1348 = vmatprep.mubr.bf16.mxu0 0
      %1349 = vmatmul.mubr.bf16.gmra.mrb[0].mxu0 %v1194
      %v1350 = vpop.f32.mrb[0].mxu0
      %v1351 = vadd.f32 0.0, %v1350
      %v1352 = vpop.f32.mrb[0].mxu0
      %v1353 = vpop.f32.mrb[0].mxu0
      %v1354 = vadd.f32 0.0, %v1353
      %v1355 = vpop.f32.mrb[0].mxu0
      %1356 = vmatprep.mubr.bf16.mxu0 0
      %1357 = vmatmul.mubr.bf16.gmra.mrb[0].mxu0 %v1195
      %v1358 = vpop.f32.mrb[0].mxu0
      %v1359 = vadd.f32 0.0, %v1358
      %v1360 = vpop.f32.mrb[0].mxu0
      %v1361 = vpop.f32.mrb[0].mxu0
      %v1362 = vadd.f32 0.0, %v1361
      %v1363 = vpop.f32.mrb[0].mxu0
      %1364 = vmatprep.mubr.bf16.mxu0 0
      %1365 = vmatmul.mubr.bf16.gmra.mrb[0].mxu0 %v1196
      %v1366 = vpop.f32.mrb[0].mxu0
      %v1367 = vadd.f32 0.0, %v1366
      %v1368 = vpop.f32.mrb[0].mxu0
      %v1369 = vpop.f32.mrb[0].mxu0
      %v1370 = vadd.f32 0.0, %v1369
      %v1371 = vpop.f32.mrb[0].mxu0
      %1372 = vmatprep.mubr.bf16.mxu0 0
      %1373 = vmatmul.mubr.bf16.gmra.mrb[0].mxu0 %v1197
      %v1374 = vpop.f32.mrb[0].mxu0
      %v1375 = vadd.f32 0.0, %v1374
      %v1376 = vpop.f32.mrb[0].mxu0
      %v1377 = vpop.f32.mrb[0].mxu0
      %v1378 = vadd.f32 0.0, %v1377
      %v1379 = vpop.f32.mrb[0].mxu0
      %1380 = vmatprep.mubr.bf16.mxu0 0
      %1381 = vmatmul.mubr.bf16.gmra.mrb[0].mxu0 %v1198
      %v1382 = vpop.f32.mrb[0].mxu0
      %v1383 = vadd.f32 0.0, %v1382
      %v1384 = vpop.f32.mrb[0].mxu0
      %v1385 = vpop.f32.mrb[0].mxu0
      %v1386 = vadd.f32 0.0, %v1385
      %v1387 = vpop.f32.mrb[0].mxu0
      %1388 = vmatprep.mubr.bf16.mxu0 0
      %1389 = vmatmul.mubr.bf16.gmra.mrb[0].mxu0 %v1199
      %v1390 = vpop.f32.mrb[0].mxu0
      %v1391 = vadd.f32 0.0, %v1390
      %v1392 = vpop.f32.mrb[0].mxu0
      %v1393 = vpop.f32.mrb[0].mxu0
      %v1394 = vadd.f32 0.0, %v1393
      %v1395 = vpop.f32.mrb[0].mxu0
      %1396 = vmatprep.mubr.bf16.mxu0 0
      %1397 = vmatmul.mubr.bf16.gmra.mrb[0].mxu0 %v1200
      %v1398 = vpop.f32.mrb[0].mxu0
      %v1399 = vadd.f32 0.0, %v1398
      %v1400 = vpop.f32.mrb[0].mxu0
      %v1401 = vpop.f32.mrb[0].mxu0
      %v1402 = vadd.f32 0.0, %v1401
      %v1403 = vpop.f32.mrb[0].mxu0
      %1404 = vmatprep.mubr.bf16.mxu0 0
      %1405 = vmatmul.mubr.bf16.gmra.mrb[0].mxu0 %v1201
      %v1406 = vpop.f32.mrb[0].mxu0
      %v1407 = vadd.f32 0.0, %v1406
      %v1408 = vpop.f32.mrb[0].mxu0
      %v1409 = vpop.f32.mrb[0].mxu0
      %v1410 = vadd.f32 0.0, %v1409
      %v1411 = vpop.f32.mrb[0].mxu0
      %1412 = vmatprep.mubr.bf16.mxu0 0
      %1413 = vmatmul.mubr.bf16.gmra.mrb[0].mxu0 %v1202
      %v1414 = vpop.f32.mrb[0].mxu0
      %v1415 = vadd.f32 0.0, %v1414
      %v1416 = vpop.f32.mrb[0].mxu0
      %v1417 = vpop.f32.mrb[0].mxu0
      %v1418 = vadd.f32 0.0, %v1417
      %v1419 = vpop.f32.mrb[0].mxu0
      %1420 = vmatprep.mubr.bf16.mxu0 0
      %1421 = vmatmul.mubr.bf16.gmra.mrb[0].mxu0 %v1203
      %v1422 = vpop.f32.mrb[0].mxu0
      %v1423 = vadd.f32 0.0, %v1422
      %v1424 = vpop.f32.mrb[0].mxu0
      %v1425 = vpop.f32.mrb[0].mxu0
      %v1426 = vadd.f32 0.0, %v1425
      %v1427 = vpop.f32.mrb[0].mxu0
      %1428 = vdwg.mxu0
      %v1429 = vpack.c.bf16 %v1306, %v1303
      %v1430 = vpack.c.bf16 %v1314, %v1311
      %v1431 = vpack.c.bf16 %v1322, %v1319
      %v1432 = vpack.c.bf16 %v1330, %v1327
      %v1433 = vpack.c.bf16 %v1338, %v1335
      %v1434 = vpack.c.bf16 %v1346, %v1343
      %v1435 = vpack.c.bf16 %v1354, %v1351
      %v1436 = vpack.c.bf16 %v1362, %v1359
      %v1437 = vpack.c.bf16 %v1370, %v1367
      %v1438 = vpack.c.bf16 %v1378, %v1375
      %v1439 = vpack.c.bf16 %v1386, %v1383
      %v1440 = vpack.c.bf16 %v1394, %v1391
      %v1441 = vpack.c.bf16 %v1402, %v1399
      %v1442 = vpack.c.bf16 %v1410, %v1407
      %v1443 = vpack.c.bf16 %v1418, %v1415
      %v1444 = vpack.c.bf16 %v1426, %v1423
      %v1461 = vunpack.c.l.b16 %v1429
      %v1462 = vunpack.c.h.b16 %v1429
      %v1463 = vunpack.c.l.b16 %v1430
      %v1464 = vunpack.c.h.b16 %v1430
      %v1465 = vunpack.c.l.b16 %v1431
      %v1466 = vunpack.c.h.b16 %v1431
      %v1467 = vunpack.c.l.b16 %v1432
      %v1468 = vunpack.c.h.b16 %v1432
      %v1469 = vunpack.c.l.b16 %v1433
      %v1470 = vunpack.c.h.b16 %v1433
      %v1471 = vunpack.c.l.b16 %v1434
      %v1472 = vunpack.c.h.b16 %v1434
      %v1473 = vunpack.c.l.b16 %v1435
      %v1474 = vunpack.c.h.b16 %v1435
      %v1475 = vunpack.c.l.b16 %v1436
      %v1476 = vunpack.c.h.b16 %v1436
      %v1477 = vunpack.c.l.b16 %v1437
      %v1478 = vunpack.c.h.b16 %v1437
      %v1479 = vunpack.c.l.b16 %v1438
      %v1480 = vunpack.c.h.b16 %v1438
      %v1481 = vunpack.c.l.b16 %v1439
      %v1482 = vunpack.c.h.b16 %v1439
      %v1483 = vunpack.c.l.b16 %v1440
      %v1484 = vunpack.c.h.b16 %v1440
      %v1485 = vunpack.c.l.b16 %v1441
      %v1486 = vunpack.c.h.b16 %v1441
      %v1487 = vunpack.c.l.b16 %v1442
      %v1488 = vunpack.c.h.b16 %v1442
      %v1489 = vunpack.c.l.b16 %v1443
      %v1490 = vunpack.c.h.b16 %v1443
      %v1491 = vunpack.c.l.b16 %v1444
      %v1492 = vunpack.c.h.b16 %v1444
      %v1493 = vpack.c.b16 %v1461, %v1461
      %v1494 = vpack.c.b16 %v1462, %v1462
      %v1495 = vpack.c.b16 %v1463, %v1463
      %v1496 = vpack.c.b16 %v1464, %v1464
      %v1497 = vpack.c.b16 %v1465, %v1465
      %v1498 = vpack.c.b16 %v1466, %v1466
      %v1499 = vpack.c.b16 %v1467, %v1467
      %v1500 = vpack.c.b16 %v1468, %v1468
      %v1501 = vpack.c.b16 %v1469, %v1469
      %v1502 = vpack.c.b16 %v1470, %v1470
      %v1503 = vpack.c.b16 %v1471, %v1471
      %v1504 = vpack.c.b16 %v1472, %v1472
      %v1505 = vpack.c.b16 %v1473, %v1473
      %v1506 = vpack.c.b16 %v1474, %v1474
      %v1507 = vpack.c.b16 %v1475, %v1475
      %v1508 = vpack.c.b16 %v1476, %v1476
      %v1509 = vpack.c.b16 %v1477, %v1477
      %v1510 = vpack.c.b16 %v1478, %v1478
      %v1511 = vpack.c.b16 %v1479, %v1479
      %v1512 = vpack.c.b16 %v1480, %v1480
      %v1513 = vpack.c.b16 %v1481, %v1481
      %v1514 = vpack.c.b16 %v1482, %v1482
      %v1515 = vpack.c.b16 %v1483, %v1483
      %v1516 = vpack.c.b16 %v1484, %v1484
      %v1517 = vpack.c.b16 %v1485, %v1485
      %v1518 = vpack.c.b16 %v1486, %v1486
      %v1519 = vpack.c.b16 %v1487, %v1487
      %v1520 = vpack.c.b16 %v1488, %v1488
      %v1521 = vpack.c.b16 %v1489, %v1489
      %v1522 = vpack.c.b16 %v1490, %v1490
      %v1523 = vpack.c.b16 %v1491, %v1491
      %v1524 = vpack.c.b16 %v1492, %v1492
      %1557 = vst [vmem:[%s382] sm:$0xf] %v1493
      %1558 = vst [vmem:[%s382 + $0x4] sm:$0xf] %v1494
      %1559 = vst [vmem:[%s382 + $0x8] sm:$0xf] %v1495
      %1560 = vst [vmem:[%s382 + $0xc] sm:$0xf] %v1496
      %1561 = vst [vmem:[%s382 + $0x10] sm:$0xf] %v1497
      %1562 = vst [vmem:[%s382 + $0x14] sm:$0xf] %v1498
      %1563 = vst [vmem:[%s382 + $0x18] sm:$0xf] %v1499
      %1564 = vst [vmem:[%s382 + $0x1c] sm:$0xf] %v1500
      %1565 = vst [vmem:[%s382 + $0x20] sm:$0xf] %v1501
      %1566 = vst [vmem:[%s382 + $0x24] sm:$0xf] %v1502
      %1567 = vst [vmem:[%s382 + $0x28] sm:$0xf] %v1503
      %1568 = vst [vmem:[%s382 + $0x2c] sm:$0xf] %v1504
      %1569 = vst [vmem:[%s382 + $0x30] sm:$0xf] %v1505
      %1570 = vst [vmem:[%s382 + $0x34] sm:$0xf] %v1506
      %1571 = vst [vmem:[%s382 + $0x38] sm:$0xf] %v1507
      %1572 = vst [vmem:[%s382 + $0x3c] sm:$0xf] %v1508
      %1573 = vst [vmem:[%s382 + $0x40] sm:$0xf] %v1509
      %1574 = vst [vmem:[%s382 + $0x44] sm:$0xf] %v1510
      %1575 = vst [vmem:[%s382 + $0x48] sm:$0xf] %v1511
      %1576 = vst [vmem:[%s382 + $0x4c] sm:$0xf] %v1512
      %1577 = vst [vmem:[%s382 + $0x50] sm:$0xf] %v1513
      %1578 = vst [vmem:[%s382 + $0x54] sm:$0xf] %v1514
      %1579 = vst [vmem:[%s382 + $0x58] sm:$0xf] %v1515
      %1580 = vst [vmem:[%s382 + $0x5c] sm:$0xf] %v1516
      %1581 = vst [vmem:[%s382 + $0x60] sm:$0xf] %v1517
      %1582 = vst [vmem:[%s382 + $0x64] sm:$0xf] %v1518
      %1583 = vst [vmem:[%s382 + $0x68] sm:$0xf] %v1519
      %1584 = vst [vmem:[%s382 + $0x6c] sm:$0xf] %v1520
      %1585 = vst [vmem:[%s382 + $0x70] sm:$0xf] %v1521
      %1586 = vst [vmem:[%s382 + $0x74] sm:$0xf] %v1522
      %1587 = vst [vmem:[%s382 + $0x78] sm:$0xf] %v1523
      %1588 = vst [vmem:[%s382 + $0x7c] sm:$0xf] %v1524
      %v1589 = vadd.f32 %v1303, %v1306
      %v1590 = vadd.f32 %v1589, %v1311
      %v1591 = vadd.f32 %v1590, %v1314
      %v1592 = vadd.f32 %v1591, %v1319
      %v1593 = vadd.f32 %v1592, %v1322
      %v1594 = vadd.f32 %v1593, %v1327
      %v1595 = vadd.f32 %v1594, %v1330
      %v1596 = vadd.f32 %v1595, %v1335
      %v1597 = vadd.f32 %v1596, %v1338
      %v1598 = vadd.f32 %v1597, %v1343
      %v1599 = vadd.f32 %v1598, %v1346
      %v1600 = vadd.f32 %v1599, %v1351
      %v1601 = vadd.f32 %v1600, %v1354
      %v1602 = vadd.f32 %v1601, %v1359
      %v1603 = vadd.f32 %v1602, %v1362
      %v1604 = vadd.f32 %v1603, %v1367
      %v1605 = vadd.f32 %v1604, %v1370
      %v1606 = vadd.f32 %v1605, %v1375
      %v1607 = vadd.f32 %v1606, %v1378
      %v1608 = vadd.f32 %v1607, %v1383
      %v1609 = vadd.f32 %v1608, %v1386
      %v1610 = vadd.f32 %v1609, %v1391
      %v1611 = vadd.f32 %v1610, %v1394
      %v1612 = vadd.f32 %v1611, %v1399
      %v1613 = vadd.f32 %v1612, %v1402
      %v1614 = vadd.f32 %v1613, %v1407
      %v1615 = vadd.f32 %v1614, %v1410
      %v1616 = vadd.f32 %v1615, %v1415
      %v1617 = vadd.f32 %v1616, %v1418
      %v1618 = vadd.f32 %v1617, %v1423
      %v1619 = vadd.f32 %v1618, %v1426
      %v1620 = vrot.slane %v1619, 4
      %v1621 = vadd.f32 %v1619, %v1620
      %v1622 = vrot.slane %v1621, 2
      %v1623 = vadd.f32 %v1621, %v1622
      %v1624 = vrot.slane %v1623, 1
      %v1625 = vadd.f32 %v1623, %v1624
      %1626 = vst [vmem:[%s391] sm:$0x1] %v1625
      %v1627 = vmul.f32 %v1303, %v1303
      %v1628 = vmul.f32 %v1306, %v1306
      %v1629 = vmul.f32 %v1311, %v1311
      %v1630 = vmul.f32 %v1314, %v1314
      %v1631 = vmul.f32 %v1319, %v1319
      %v1632 = vmul.f32 %v1322, %v1322
      %v1633 = vmul.f32 %v1327, %v1327
      %v1634 = vmul.f32 %v1330, %v1330
      %v1635 = vmul.f32 %v1335, %v1335
      %v1636 = vmul.f32 %v1338, %v1338
      %v1637 = vmul.f32 %v1343, %v1343
      %v1638 = vmul.f32 %v1346, %v1346
      %v1639 = vmul.f32 %v1351, %v1351
      %v1640 = vmul.f32 %v1354, %v1354
      %v1641 = vmul.f32 %v1359, %v1359
      %v1642 = vmul.f32 %v1362, %v1362
      %v1643 = vmul.f32 %v1367, %v1367
      %v1644 = vmul.f32 %v1370, %v1370
      %v1645 = vmul.f32 %v1375, %v1375
      %v1646 = vmul.f32 %v1378, %v1378
      %v1647 = vmul.f32 %v1383, %v1383
      %v1648 = vmul.f32 %v1386, %v1386
      %v1649 = vmul.f32 %v1391, %v1391
      %v1650 = vmul.f32 %v1394, %v1394
      %v1651 = vmul.f32 %v1399, %v1399
      %v1652 = vmul.f32 %v1402, %v1402
      %v1653 = vmul.f32 %v1407, %v1407
      %v1654 = vmul.f32 %v1410, %v1410
      %v1655 = vmul.f32 %v1415, %v1415
      %v1656 = vmul.f32 %v1418, %v1418
      %v1657 = vmul.f32 %v1423, %v1423
      %v1658 = vmul.f32 %v1426, %v1426
      %v1659 = vadd.f32 %v1627, %v1628
      %v1660 = vadd.f32 %v1659, %v1629
      %v1661 = vadd.f32 %v1660, %v1630
      %v1662 = vadd.f32 %v1661, %v1631
      %v1663 = vadd.f32 %v1662, %v1632
      %v1664 = vadd.f32 %v1663, %v1633
      %v1665 = vadd.f32 %v1664, %v1634
      %v1666 = vadd.f32 %v1665, %v1635
      %v1667 = vadd.f32 %v1666, %v1636
      %v1668 = vadd.f32 %v1667, %v1637
      %v1669 = vadd.f32 %v1668, %v1638
      %v1670 = vadd.f32 %v1669, %v1639
      %v1671 = vadd.f32 %v1670, %v1640
      %v1672 = vadd.f32 %v1671, %v1641
      %v1673 = vadd.f32 %v1672, %v1642
      %v1674 = vadd.f32 %v1673, %v1643
      %v1675 = vadd.f32 %v1674, %v1644
      %v1676 = vadd.f32 %v1675, %v1645
      %v1677 = vadd.f32 %v1676, %v1646
      %v1678 = vadd.f32 %v1677, %v1647
      %v1679 = vadd.f32 %v1678, %v1648
      %v1680 = vadd.f32 %v1679, %v1649
      %v1681 = vadd.f32 %v1680, %v1650
      %v1682 = vadd.f32 %v1681, %v1651
      %v1683 = vadd.f32 %v1682, %v1652
      %v1684 = vadd.f32 %v1683, %v1653
      %v1685 = vadd.f32 %v1684, %v1654
      %v1686 = vadd.f32 %v1685, %v1655
      %v1687 = vadd.f32 %v1686, %v1656
      %v1688 = vadd.f32 %v1687, %v1657
      %v1689 = vadd.f32 %v1688, %v1658
      %v1690 = vrot.slane %v1689, 4
      %v1691 = vadd.f32 %v1689, %v1690
      %v1692 = vrot.slane %v1691, 2
      %v1693 = vadd.f32 %v1691, %v1692
      %v1694 = vrot.slane %v1693, 1
      %v1695 = vadd.f32 %v1693, %v1694
      %1696 = vst [vmem:[%s391 + $0x1] sm:$0x1] %v1695
      %s1697 = smul.u32 32, %s21
      %p1698 = scmp.lt.s32.totalorder %s1697, 63
      %s1699 = scalar_select %p1698, %s1697, 63
      %s1700 = smul.addr %s1699, 4
      %s1701 = scalar_lea.vmem %s6, %s1700
      %s1702 = smul.u32 32, %s21
      %p1703 = scmp.lt.s32.totalorder %s1702, 63
      %s1704 = scalar_select %p1703, %s1702, 63
      %s1705 = smul.addr %s1704, 4
      %s1706 = scalar_lea.vmem %s7, %s1705
      %p1707 = scmp.lt.s32.totalorder %s21, 1
      %s1708 = scalar_select %p1707, %s21, 1
      %s1709 = smul.addr %s1708, 2
      %s1710 = scalar_lea.vmem %s8, %s1709
      %p1711 = scmp.lt.s32.totalorder %s21, 1
      %s1712 = scalar_select %p1711, %s21, 1
      %s1713 = smul.addr %s1712, 2
      %s1714 = scalar_lea.vmem %s9, %s1713
      // Predicated region
      $region45: #{bottleneck_forward.6} parent=43 // pred_check
        %p1715 = pneg %p175
      $region46: #{bottleneck_forward.6} parent=43 // pred_check_branch
        %1717 = sbr.rel (%p1715) target = $region48
      $region47: #{bottleneck_forward.6} parent=43 // pred_region
        %s1718 = smul.u32 32, %s21
      $region48: #{bottleneck_forward.6} parent=43 // pred_fallthru
        _
      // Predicated region
      $region49: #{bottleneck_forward.6} parent=43 // pred_check
        %p1719 = pneg %p201
      $region50: #{bottleneck_forward.6} parent=43 // pred_check_branch
        %1721 = sbr.rel (%p1719) target = $region52
      $region51: #{bottleneck_forward.6} parent=43 // pred_region
        %s1722 = smul.u32 32, %s21
      $region52: #{bottleneck_forward.6} parent=43 // pred_fallthru
        _
      // Predicated region
      $region53: #{bottleneck_forward.6} parent=43 // pred_check
        %p1723 = pneg %p227
      $region54: #{bottleneck_forward.6} parent=43 // pred_check_branch
        %1725 = sbr.rel (%p1723) target = $region56
      $region55: #{bottleneck_forward.6} parent=43 // pred_region
        _
      $region56: #{bottleneck_forward.6} parent=43 // pred_fallthru
        _
      // Predicated region
      $region57: #{bottleneck_forward.6} parent=43 // pred_check
        %p1726 = pneg %p253
      $region58: #{bottleneck_forward.6} parent=43 // pred_check_branch
        %1728 = sbr.rel (%p1726) target = $region60
      $region59: #{bottleneck_forward.6} parent=43 // pred_region
        _
      $region60: #{bottleneck_forward.6} parent=43 // pred_fallthru
        _
    $region44: #{bottleneck_forward.6} parent=5 // pred_fallthru
      _
    %p1729 = scmp.le.s32.totalorder 2, %s16
    // Predicated region
    $region61: #{bottleneck_forward.6} parent=5 // pred_check
      %p1730 = pneg %p1729
    $region62: #{bottleneck_forward.6} parent=5 // pred_check_branch
      %1732 = sbr.rel (%p1730) target = $region64
    $region63: #{bottleneck_forward.6} parent=5 // pred_region
      %s1733 = ssub.s32 %s16, 2
      // Predicated region
      $region65: #{bottleneck_forward.6} parent=63 // pred_check
        %p1734 = pneg %p181
      $region66: #{bottleneck_forward.6} parent=63 // pred_check_branch
        %1736 = sbr.rel (%p1734) target = $region68
      $region67: #{bottleneck_forward.6} parent=63 // pred_region
        %s1737 = smul.u32 32, %s22
        %p1738 = scmp.lt.s32.totalorder %s1737, 63
        %s1739 = scalar_select %p1738, %s1737, 63
        %s1740 = smul.addr %s1739, 4
        %s1741 = scalar_lea.vmem %s6, %s1740
      $region68: #{bottleneck_forward.6} parent=63 // pred_fallthru
        _
      // Predicated region
      $region69: #{bottleneck_forward.6} parent=63 // pred_check
        %p1742 = pneg %p207
      $region70: #{bottleneck_forward.6} parent=63 // pred_check_branch
        %1744 = sbr.rel (%p1742) target = $region72
      $region71: #{bottleneck_forward.6} parent=63 // pred_region
        %s1745 = smul.u32 32, %s22
        %p1746 = scmp.lt.s32.totalorder %s1745, 63
        %s1747 = scalar_select %p1746, %s1745, 63
        %s1748 = smul.addr %s1747, 4
        %s1749 = scalar_lea.vmem %s7, %s1748
      $region72: #{bottleneck_forward.6} parent=63 // pred_fallthru
        _
      // Predicated region
      $region73: #{bottleneck_forward.6} parent=63 // pred_check
        %p1750 = pneg %p233
      $region74: #{bottleneck_forward.6} parent=63 // pred_check_branch
        %1752 = sbr.rel (%p1750) target = $region76
      $region75: #{bottleneck_forward.6} parent=63 // pred_region
        %p1753 = scmp.lt.s32.totalorder %s22, 1
        %s1754 = scalar_select %p1753, %s22, 1
        %s1755 = smul.addr %s1754, 2
        %s1756 = scalar_lea.vmem %s8, %s1755
      $region76: #{bottleneck_forward.6} parent=63 // pred_fallthru
        _
      // Predicated region
      $region77: #{bottleneck_forward.6} parent=63 // pred_check
        %p1757 = pneg %p259
      $region78: #{bottleneck_forward.6} parent=63 // pred_check_branch
        %1759 = sbr.rel (%p1757) target = $region80
      $region79: #{bottleneck_forward.6} parent=63 // pred_region
        %p1760 = scmp.lt.s32.totalorder %s22, 1
        %s1761 = scalar_select %p1760, %s22, 1
        %s1762 = smul.addr %s1761, 2
        %s1763 = scalar_lea.vmem %s9, %s1762
      $region80: #{bottleneck_forward.6} parent=63 // pred_fallthru
        _
    $region64: #{bottleneck_forward.6} parent=5 // pred_fallthru
      _
  $region6: #{bottleneck_forward.6} parent=0 // loop_footer
    %s20 = sadd.s32 1, %s16
  $region7: #{bottleneck_forward.6} parent=0 // loop_footer_branch
    %15 = sbr.rel target = $region3
  $region8: #{bottleneck_forward.6} parent=0 // loop_exit
    _

// kernel: bottleneck_forward.5
$region0: #{bottleneck_forward.5}
  #allocation0 [shape = 'u32[]', space=smem, size = 0x4, offset = 0x4, fixed_abs, tag = 'smem constant byte address 0x4 - core index']
  #allocation1 [shape = 'u32[144,128]{1,0:T(1,128)}', space=vmem, size = 0x12000, scoped, tag = 'internal scratch']
  #allocation2 [shape = 'bf16[18,18,128]{2,1,0:T(8,128)(2,1)}', space=vmem, size = 0x1b000, scoped, tag = 'scratch operand']
  %s0 = inlined_call_operand.vmem [shape: bf16[2,16,16,128], index: 0, kind: input, shape index: {}]
  %s1 = inlined_call_operand.vmem [shape: f32[1,128], index: 1, kind: input, shape index: {}]
  %s2 = inlined_call_operand.vmem [shape: f32[1,128], index: 2, kind: input, shape index: {}]
  %s3 = inlined_call_operand.vmem [shape: bf16[3,384,128], index: 3, kind: input, shape index: {}]
  %s4 = inlined_call_operand.vmem [shape: bf16[2,16,16,128], index: 4, kind: output, shape index: {0}]
  %s5 = inlined_call_operand.vmem [shape: f32[2,2,2,128], index: 5, kind: output, shape index: {1}]
  %6 = xla_tuple %s4, %s5
  %s7 = sld [smem:[#allocation0]]
  $region61: #{bottleneck_forward.5} parent=0
    _
  %s9 = ssub.s32 1, %s7
  %s10 = scalar_select 0, %s9, %s7
  loop: start=0, step=1, limit=6
  $region2: #{bottleneck_forward.5} parent=0 // loop_pre_header
    _
  $region3: #{bottleneck_forward.5} parent=0 // loop_header
    %s12 = sphi 0, %s16
    %p13 = scmp.ge.s32.totalorder %s12, 6
    %s19 = sphi 0, %s31
    %s20 = sphi 0, %s27
    %s21 = sphi 0, %s19
    %s22 = sphi 0, %s20
    %s23 = sphi 0, %s21
    %s24 = sphi 0, %s22
    %s34 = sphi 0, %s36
    %s37 = sphi 0, %s34
    %s38 = sphi 0, %s37
    %s54 = sphi 0, %s38
    %s58 = sphi 0, %s58
    %s60 = sphi 0, %s58
    %s61 = sphi 0, %s60
    %s75 = sphi 0, %s61
    %s79 = sphi 0, %s79
    %s81 = sphi 0, %s79
    %s82 = sphi 0, %s81
    %s96 = sphi 0, %s82
    %s100 = sphi 0, %s100
    %s102 = sphi 0, %s100
    %s103 = sphi 0, %s102
    %s117 = sphi 0, %s103
    %s125 = sphi 0, %s127
    %s128 = sphi 0, %s125
    %s129 = sphi 0, %s128
    %s145 = sphi 0, %s129
    %s153 = sphi 0, %s155
    %s156 = sphi 0, %s153
    %s157 = sphi 0, %s156
    %s173 = sphi 0, %s157
  $region4: #{bottleneck_forward.5} parent=0 // loop_header_branch
    %15 = sbr.rel (%p13) target = $region8
  $region5: #{bottleneck_forward.5} parent=0 // loop_body
    %s17 = ssub.s32 %s12, 1
    %s18 = ssub.s32 %s12, 2
    %s25 = sadd.s32 1, %s20
    %p26 = scmp.ge.s32.totalorder %s25, 2
    %s27 = scalar_select %p26, 0, %s25
    %s28 = sadd.s32 1, %s19
    %s29 = scalar_select %p26, %s28, %s19
    %p30 = scmp.ge.s32.totalorder %s29, 2
    %s31 = scalar_select %p30, 0, %s29
    %s32 = ssub.s32 %s19, %s31
    %p33 = scmp.eq.s32.totalorder %s32, 0
    %s35 = sadd.s32 %s34, 1
    %s36 = scalar_select %p33, %s34, %s35
    %p39 = pneg %p33
    %p40 = scmp.eq.s32.totalorder %s12, 3
    %p41 = por %p39, %p40
    %p42 = scmp.ne.s32.totalorder %s34, %s37
    %p43 = scmp.eq.s32.totalorder %s12, 0
    %p44 = por %p42, %p43
    %p45 = scmp.ne.s32.totalorder %s34, %s37
    %p46 = scmp.eq.s32.totalorder %s17, 3
    %p47 = por %p45, %p46
    %p48 = scmp.ne.s32.totalorder %s37, %s38
    %p49 = scmp.eq.s32.totalorder %s17, 0
    %p50 = por %p48, %p49
    %p51 = scmp.ne.s32.totalorder %s37, %s38
    %p52 = scmp.eq.s32.totalorder %s18, 3
    %p53 = por %p51, %p52
    %p55 = scmp.ne.s32.totalorder %s38, %s54
    %p56 = scmp.eq.s32.totalorder %s18, 0
    %p57 = por %p55, %p56
    %s59 = sadd.s32 %s58, 1
    %p62 = scmp.eq.s32.totalorder %s12, 3
    %p63 = scmp.ne.s32.totalorder %s58, %s60
    %p64 = scmp.eq.s32.totalorder %s12, 0
    %p65 = por %p63, %p64
    %p66 = scmp.ne.s32.totalorder %s58, %s60
    %p67 = scmp.eq.s32.totalorder %s17, 3
    %p68 = por %p66, %p67
    %p69 = scmp.ne.s32.totalorder %s60, %s61
    %p70 = scmp.eq.s32.totalorder %s17, 0
    %p71 = por %p69, %p70
    %p72 = scmp.ne.s32.totalorder %s60, %s61
    %p73 = scmp.eq.s32.totalorder %s18, 3
    %p74 = por %p72, %p73
    %p76 = scmp.ne.s32.totalorder %s61, %s75
    %p77 = scmp.eq.s32.totalorder %s18, 0
    %p78 = por %p76, %p77
    %s80 = sadd.s32 %s79, 1
    %p83 = scmp.eq.s32.totalorder %s12, 3
    %p84 = scmp.ne.s32.totalorder %s79, %s81
    %p85 = scmp.eq.s32.totalorder %s12, 0
    %p86 = por %p84, %p85
    %p87 = scmp.ne.s32.totalorder %s79, %s81
    %p88 = scmp.eq.s32.totalorder %s17, 3
    %p89 = por %p87, %p88
    %p90 = scmp.ne.s32.totalorder %s81, %s82
    %p91 = scmp.eq.s32.totalorder %s17, 0
    %p92 = por %p90, %p91
    %p93 = scmp.ne.s32.totalorder %s81, %s82
    %p94 = scmp.eq.s32.totalorder %s18, 3
    %p95 = por %p93, %p94
    %p97 = scmp.ne.s32.totalorder %s82, %s96
    %p98 = scmp.eq.s32.totalorder %s18, 0
    %p99 = por %p97, %p98
    %s101 = sadd.s32 %s100, 1
    %p104 = scmp.eq.s32.totalorder %s12, 3
    %p105 = scmp.ne.s32.totalorder %s100, %s102
    %p106 = scmp.eq.s32.totalorder %s12, 0
    %p107 = por %p105, %p106
    %p108 = scmp.ne.s32.totalorder %s100, %s102
    %p109 = scmp.eq.s32.totalorder %s17, 3
    %p110 = por %p108, %p109
    %p111 = scmp.ne.s32.totalorder %s102, %s103
    %p112 = scmp.eq.s32.totalorder %s17, 0
    %p113 = por %p111, %p112
    %p114 = scmp.ne.s32.totalorder %s102, %s103
    %p115 = scmp.eq.s32.totalorder %s18, 3
    %p116 = por %p114, %p115
    %p118 = scmp.ne.s32.totalorder %s103, %s117
    %p119 = scmp.eq.s32.totalorder %s18, 0
    %p120 = por %p118, %p119
    %s121 = ssub.s32 %s19, %s31
    %s122 = ssub.s32 %s20, %s27
    %s123 = sor.u32 %s121, %s122
    %p124 = scmp.eq.s32.totalorder %s123, 0
    %s126 = sadd.s32 %s125, 1
    %s127 = scalar_select %p124, %s125, %s126
    %p130 = pneg %p124
    %p131 = scmp.eq.s32.totalorder %s12, 3
    %p132 = por %p130, %p131
    %p133 = scmp.ne.s32.totalorder %s125, %s128
    %p134 = scmp.eq.s32.totalorder %s12, 0
    %p135 = por %p133, %p134
    %p136 = scmp.ne.s32.totalorder %s125, %s128
    %p137 = scmp.eq.s32.totalorder %s17, 3
    %p138 = por %p136, %p137
    %p139 = scmp.ne.s32.totalorder %s128, %s129
    %p140 = scmp.eq.s32.totalorder %s17, 0
    %p141 = por %p139, %p140
    %p142 = scmp.ne.s32.totalorder %s128, %s129
    %p143 = scmp.eq.s32.totalorder %s18, 3
    %p144 = por %p142, %p143
    %p146 = scmp.ne.s32.totalorder %s129, %s145
    %p147 = scmp.eq.s32.totalorder %s18, 0
    %p148 = por %p146, %p147
    %s149 = ssub.s32 %s19, %s31
    %s150 = ssub.s32 %s20, %s27
    %s151 = sor.u32 %s149, %s150
    %p152 = scmp.eq.s32.totalorder %s151, 0
    %s154 = sadd.s32 %s153, 1
    %s155 = scalar_select %p152, %s153, %s154
    %p158 = pneg %p152
    %p159 = scmp.eq.s32.totalorder %s12, 3
    %p160 = por %p158, %p159
    %p161 = scmp.ne.s32.totalorder %s153, %s156
    %p162 = scmp.eq.s32.totalorder %s12, 0
    %p163 = por %p161, %p162
    %p164 = scmp.ne.s32.totalorder %s153, %s156
    %p165 = scmp.eq.s32.totalorder %s17, 3
    %p166 = por %p164, %p165
    %p167 = scmp.ne.s32.totalorder %s156, %s157
    %p168 = scmp.eq.s32.totalorder %s17, 0
    %p169 = por %p167, %p168
    %p170 = scmp.ne.s32.totalorder %s156, %s157
    %p171 = scmp.eq.s32.totalorder %s18, 3
    %p172 = por %p170, %p171
    %p174 = scmp.ne.s32.totalorder %s157, %s173
    %p175 = scmp.eq.s32.totalorder %s18, 0
    %p176 = por %p174, %p175
    %p177 = scmp.le.s32.totalorder 1, %s12
    %p178 = scmp.lt.s32.totalorder %s12, 5
    %p179 = pnand %p177, %p178
    %p180 = pneg %p179
    // Predicated region
    $region9: #{bottleneck_forward.5} parent=5 // pred_check
      _
    $region10: #{bottleneck_forward.5} parent=5 // pred_check_branch
      %182 = sbr.rel (%p179) target = $region12
    $region11: #{bottleneck_forward.5} parent=5 // pred_region
      %s183 = ssub.s32 %s12, 1
      // Predicated region
      $region13: #{bottleneck_forward.5} parent=11 // pred_check
        %p184 = pneg %p71
      $region14: #{bottleneck_forward.5} parent=11 // pred_check_branch
        %186 = sbr.rel (%p184) target = $region16
      $region15: #{bottleneck_forward.5} parent=11 // pred_region
        _
      $region16: #{bottleneck_forward.5} parent=11 // pred_fallthru
        _
      // Predicated region
      $region17: #{bottleneck_forward.5} parent=11 // pred_check
        %p187 = pneg %p92
      $region18: #{bottleneck_forward.5} parent=11 // pred_check_branch
        %189 = sbr.rel (%p187) target = $region20
      $region19: #{bottleneck_forward.5} parent=11 // pred_region
        _
      $region20: #{bottleneck_forward.5} parent=11 // pred_fallthru
        _
      // Predicated region
      $region21: #{bottleneck_forward.5} parent=11 // pred_check
        %p190 = pneg %p113
      $region22: #{bottleneck_forward.5} parent=11 // pred_check_branch
        %192 = sbr.rel (%p190) target = $region24
      $region23: #{bottleneck_forward.5} parent=11 // pred_region
        _
      $region24: #{bottleneck_forward.5} parent=11 // pred_fallthru
        _
    $region12: #{bottleneck_forward.5} parent=5 // pred_fallthru
      _
    %p193 = scmp.lt.s32.totalorder %s12, 4
    // Predicated region
    $region25: #{bottleneck_forward.5} parent=5 // pred_check
      %p194 = pneg %p193
    $region26: #{bottleneck_forward.5} parent=5 // pred_check_branch
      %196 = sbr.rel (%p194) target = $region28
    $region27: #{bottleneck_forward.5} parent=5 // pred_region
      // Predicated region
      $region29: #{bottleneck_forward.5} parent=27 // pred_check
        %p197 = pneg %p44
      $region30: #{bottleneck_forward.5} parent=27 // pred_check_branch
        %199 = sbr.rel (%p197) target = $region32
      $region31: #{bottleneck_forward.5} parent=27 // pred_region
        %p200 = scmp.lt.s32.totalorder %s19, 1
        %s201 = scalar_select %p200, %s19, 1
        %s202 = smul.addr %s201, 32
        %s203 = smul.addr %s202, 4
        %s204 = scalar_lea.vmem %s0, %s203
      $region32: #{bottleneck_forward.5} parent=27 // pred_fallthru
        _
    $region28: #{bottleneck_forward.5} parent=5 // pred_fallthru
      _
    %p205 = scmp.le.s32.totalorder 1, %s12
    %p206 = scmp.lt.s32.totalorder %s12, 5
    %p207 = pnand %p205, %p206
    %p208 = pneg %p207
    // Predicated region
    $region33: #{bottleneck_forward.5} parent=5 // pred_check
      _
    $region34: #{bottleneck_forward.5} parent=5 // pred_check_branch
      %210 = sbr.rel (%p207) target = $region36
    $region35: #{bottleneck_forward.5} parent=5 // pred_region
      %s211 = ssub.s32 %s12, 1
      %p212 = scmp.lt.s32.totalorder %s21, 1
      %s213 = scalar_select %p212, %s21, 1
      %s214 = smul.addr %s213, 32
      %s215 = smul.addr %s214, 4
      %s216 = scalar_lea.vmem %s0, %s215
      %p217 = pneg %p50
      %p218 = pneg %p47
      %p219 = pneg %p71
      %p220 = pneg %p68
      %p221 = pneg %p92
      %p222 = pneg %p89
      %p223 = pneg %p113
      %p224 = pneg %p110
      %p225 = pneg %p141
      %p226 = pneg %p138
      %s227 = smul.u32 8, %s22
      %p228 = scmp.lt.s32.totalorder %s21, 1
      %s229 = scalar_select %p228, %s21, 1
      %p230 = scmp.lt.s32.totalorder %s227, 15
      %s231 = scalar_select %p230, %s227, 15
      %s232 = smul.addr %s231, 2
      %s233 = smul.addr %s229, 32
      %s234 = sadd.s32 %s232, %s233
      %s235 = smul.addr %s234, 4
      %s236 = scalar_lea.vmem %s4, %s235
      %p237 = pneg %p169
      %p238 = pneg %p166
      %p239 = scmp.lt.s32.totalorder %s21, 1
      %s240 = scalar_select %p239, %s21, 1
      %p241 = scmp.lt.s32.totalorder %s22, 1
      %s242 = scalar_select %p241, %s22, 1
      %s243 = smul.addr %s240, 2
      %s244 = sadd.s32 %s242, %s243
      %s245 = smul.addr %s244, 2
      %s246 = scalar_lea.vmem %s5, %s245
      %p247 = scmp.lt.s32.totalorder %s21, 1
      %s248 = scalar_select %p247, %s21, 1
      %s249 = smul.addr %s248, 32
      %s250 = smul.addr %s249, 4
      %s251 = scalar_lea.vmem %s0, %s250
      %s252 = smul.u32 8, %s22
      %p253 = scmp.lt.s32.totalorder %s21, 1
      %s254 = scalar_select %p253, %s21, 1
      %p255 = scmp.lt.s32.totalorder %s252, 15
      %s256 = scalar_select %p255, %s252, 15
      %s257 = smul.addr %s256, 2
      %s258 = smul.addr %s254, 32
      %s259 = sadd.s32 %s257, %s258
      %s260 = smul.addr %s259, 4
      %s261 = scalar_lea.vmem %s4, %s260
      %s262 = smul.u32 8, %s22
      %p263 = scmp.lt.s32.totalorder %s21, 1
      %s264 = scalar_select %p263, %s21, 1
      %p265 = scmp.lt.s32.totalorder %s22, 1
      %s266 = scalar_select %p265, %s22, 1
      %s267 = smul.addr %s264, 2
      %s268 = sadd.s32 %s266, %s267
      %s269 = smul.addr %s268, 2
      %s270 = scalar_lea.vmem %s5, %s269
      %p272 = scmp.eq.s32.totalorder %s22, 0
      // Predicated region
      $region37: #{bottleneck_forward.5} parent=35 // pred_check
        %p273 = pneg %p272
      $region38: #{bottleneck_forward.5} parent=35 // pred_check_branch
        %275 = sbr.rel (%p273) target = $region40
      $region39: #{bottleneck_forward.5} parent=35 // pred_region
        %276 = vst [vmem:[#allocation2] sm:$0xf] 0
        %277 = vst [vmem:[#allocation2 + $0x4] sm:$0xf] 0
        %278 = vst [vmem:[#allocation2 + $0x8] sm:$0x1] 0
        %s279 = scalar_lea.vmem [#allocation2], 204
        %280 = vst [vmem:[%s279] sm:$0xf] 0
        %281 = vst [vmem:[%s279 + $0x4] sm:$0xf] 0
        %282 = vst [vmem:[%s279 + $0x8] sm:$0x1] 0
        %s283 = scalar_lea.vmem [#allocation2], 12
        %vm284 = vcmask 1040384
        %vm285 = vsmask.f32 256
        %vm286 = vmand %vm284, %vm285
        %v287 = vld [vmem:[%s283] sm:$0x1]
        %v288 = vsel %vm286, 0, %v287
        %289 = vst [vmem:[%s283] sm:$0x1] %v288
        %v290 = vld [vmem:[%s283 + $0xc] sm:$0x1]
        %v291 = vsel %vm286, 0, %v290
        %292 = vst [vmem:[%s283 + $0xc] sm:$0x1] %v291
        %v293 = vld [vmem:[%s283 + $0x18] sm:$0x1]
        %v294 = vsel %vm286, 0, %v293
        %295 = vst [vmem:[%s283 + $0x18] sm:$0x1] %v294
        %v296 = vld [vmem:[%s283 + $0x24] sm:$0x1]
        %v297 = vsel %vm286, 0, %v296
        %298 = vst [vmem:[%s283 + $0x24] sm:$0x1] %v297
        %v299 = vld [vmem:[%s283 + $0x30] sm:$0x1]
        %v300 = vsel %vm286, 0, %v299
        %301 = vst [vmem:[%s283 + $0x30] sm:$0x1] %v300
        %v302 = vld [vmem:[%s283 + $0x3c] sm:$0x1]
        %v303 = vsel %vm286, 0, %v302
        %304 = vst [vmem:[%s283 + $0x3c] sm:$0x1] %v303
        %v305 = vld [vmem:[%s283 + $0x48] sm:$0x1]
        %v306 = vsel %vm286, 0, %v305
        %307 = vst [vmem:[%s283 + $0x48] sm:$0x1] %v306
        %v308 = vld [vmem:[%s283 + $0x54] sm:$0x1]
        %v309 = vsel %vm286, 0, %v308
        %310 = vst [vmem:[%s283 + $0x54] sm:$0x1] %v309
        %v311 = vld [vmem:[%s283 + $0x60] sm:$0x1]
        %v312 = vsel %vm286, 0, %v311
        %313 = vst [vmem:[%s283 + $0x60] sm:$0x1] %v312
        %v314 = vld [vmem:[%s283 + $0x6c] sm:$0x1]
        %v315 = vsel %vm286, 0, %v314
        %316 = vst [vmem:[%s283 + $0x6c] sm:$0x1] %v315
        %v317 = vld [vmem:[%s283 + $0x78] sm:$0x1]
        %v318 = vsel %vm286, 0, %v317
        %319 = vst [vmem:[%s283 + $0x78] sm:$0x1] %v318
        %v320 = vld [vmem:[%s283 + $0x84] sm:$0x1]
        %v321 = vsel %vm286, 0, %v320
        %322 = vst [vmem:[%s283 + $0x84] sm:$0x1] %v321
        %v323 = vld [vmem:[%s283 + $0x90] sm:$0x1]
        %v324 = vsel %vm286, 0, %v323
        %325 = vst [vmem:[%s283 + $0x90] sm:$0x1] %v324
        %v326 = vld [vmem:[%s283 + $0x9c] sm:$0x1]
        %v327 = vsel %vm286, 0, %v326
        %328 = vst [vmem:[%s283 + $0x9c] sm:$0x1] %v327
        %v329 = vld [vmem:[%s283 + $0xa8] sm:$0x1]
        %v330 = vsel %vm286, 0, %v329
        %331 = vst [vmem:[%s283 + $0xa8] sm:$0x1] %v330
        %v332 = vld [vmem:[%s283 + $0xb4] sm:$0x1]
        %v333 = vsel %vm286, 0, %v332
        %334 = vst [vmem:[%s283 + $0xb4] sm:$0x1] %v333
        %vm335 = vsmask.f32 7938
        %vm336 = vmand %vm284, %vm335
        %v337 = vld [vmem:[%s283 + $0x8] sm:$0x1]
        %v338 = vsel %vm336, 0, %v337
        %339 = vst [vmem:[%s283 + $0x8] sm:$0x1] %v338
        %v340 = vld [vmem:[%s283 + $0x14] sm:$0x1]
        %v341 = vsel %vm336, 0, %v340
        %342 = vst [vmem:[%s283 + $0x14] sm:$0x1] %v341
        %v343 = vld [vmem:[%s283 + $0x20] sm:$0x1]
        %v344 = vsel %vm336, 0, %v343
        %345 = vst [vmem:[%s283 + $0x20] sm:$0x1] %v344
        %v346 = vld [vmem:[%s283 + $0x2c] sm:$0x1]
        %v347 = vsel %vm336, 0, %v346
        %348 = vst [vmem:[%s283 + $0x2c] sm:$0x1] %v347
        %v349 = vld [vmem:[%s283 + $0x38] sm:$0x1]
        %v350 = vsel %vm336, 0, %v349
        %351 = vst [vmem:[%s283 + $0x38] sm:$0x1] %v350
        %v352 = vld [vmem:[%s283 + $0x44] sm:$0x1]
        %v353 = vsel %vm336, 0, %v352
        %354 = vst [vmem:[%s283 + $0x44] sm:$0x1] %v353
        %v355 = vld [vmem:[%s283 + $0x50] sm:$0x1]
        %v356 = vsel %vm336, 0, %v355
        %357 = vst [vmem:[%s283 + $0x50] sm:$0x1] %v356
        %v358 = vld [vmem:[%s283 + $0x5c] sm:$0x1]
        %v359 = vsel %vm336, 0, %v358
        %360 = vst [vmem:[%s283 + $0x5c] sm:$0x1] %v359
        %v361 = vld [vmem:[%s283 + $0x68] sm:$0x1]
        %v362 = vsel %vm336, 0, %v361
        %363 = vst [vmem:[%s283 + $0x68] sm:$0x1] %v362
        %v364 = vld [vmem:[%s283 + $0x74] sm:$0x1]
        %v365 = vsel %vm336, 0, %v364
        %366 = vst [vmem:[%s283 + $0x74] sm:$0x1] %v365
        %v367 = vld [vmem:[%s283 + $0x80] sm:$0x1]
        %v368 = vsel %vm336, 0, %v367
        %369 = vst [vmem:[%s283 + $0x80] sm:$0x1] %v368
        %v370 = vld [vmem:[%s283 + $0x8c] sm:$0x1]
        %v371 = vsel %vm336, 0, %v370
        %372 = vst [vmem:[%s283 + $0x8c] sm:$0x1] %v371
        %v373 = vld [vmem:[%s283 + $0x98] sm:$0x1]
        %v374 = vsel %vm336, 0, %v373
        %375 = vst [vmem:[%s283 + $0x98] sm:$0x1] %v374
        %v376 = vld [vmem:[%s283 + $0xa4] sm:$0x1]
        %v377 = vsel %vm336, 0, %v376
        %378 = vst [vmem:[%s283 + $0xa4] sm:$0x1] %v377
        %v379 = vld [vmem:[%s283 + $0xb0] sm:$0x1]
        %v380 = vsel %vm336, 0, %v379
        %381 = vst [vmem:[%s283 + $0xb0] sm:$0x1] %v380
        %v382 = vld [vmem:[%s283 + $0xbc] sm:$0x1]
        %v383 = vsel %vm336, 0, %v382
        %384 = vst [vmem:[%s283 + $0xbc] sm:$0x1] %v383
        %v385 = vld [vmem:[%s251] sm:$0xf]
        %v386 = vld [vmem:[%s251 + $0x4] sm:$0xf]
        %v387 = vld [vmem:[%s251 + $0x8] sm:$0xf]
        %v388 = vld [vmem:[%s251 + $0xc] sm:$0xf]
        %v389 = vld [vmem:[%s251 + $0x10] sm:$0xf]
        %v390 = vld [vmem:[%s251 + $0x14] sm:$0xf]
        %v391 = vld [vmem:[%s251 + $0x18] sm:$0xf]
        %v392 = vld [vmem:[%s251 + $0x1c] sm:$0xf]
        %v393 = vld [vmem:[%s251 + $0x20] sm:$0xf]
        %v394 = vld [vmem:[%s251 + $0x24] sm:$0xf]
        %v395 = vld [vmem:[%s251 + $0x28] sm:$0xf]
        %v396 = vld [vmem:[%s251 + $0x2c] sm:$0xf]
        %v397 = vld [vmem:[%s251 + $0x30] sm:$0xf]
        %v398 = vld [vmem:[%s251 + $0x34] sm:$0xf]
        %v399 = vld [vmem:[%s251 + $0x38] sm:$0xf]
        %v400 = vld [vmem:[%s251 + $0x3c] sm:$0xf]
        %v401 = vunpack.c.l.bf16 %v385
        %v402 = vunpack.c.l.bf16 %v386
        %v403 = vunpack.c.l.bf16 %v387
        %v404 = vunpack.c.l.bf16 %v388
        %v405 = vunpack.c.l.bf16 %v389
        %v406 = vunpack.c.l.bf16 %v390
        %v407 = vunpack.c.l.bf16 %v391
        %v408 = vunpack.c.l.bf16 %v392
        %v409 = vunpack.c.l.bf16 %v393
        %v410 = vunpack.c.l.bf16 %v394
        %v411 = vunpack.c.l.bf16 %v395
        %v412 = vunpack.c.l.bf16 %v396
        %v413 = vunpack.c.l.bf16 %v397
        %v414 = vunpack.c.l.bf16 %v398
        %v415 = vunpack.c.l.bf16 %v399
        %v416 = vunpack.c.l.bf16 %v400
        %v417 = vld [vmem:[%s1] sm:$0x1]
        %v419 = vlaneseq
        %v420 = vshrl.u32 %v419, 7
        %v421 = vsub.s32 0, %v420
        %v422 = vrot.slane %v417, %v421
        %v424 = vmul.f32 %v401, %v422
        %v425 = vmul.f32 %v402, %v422
        %v426 = vmul.f32 %v403, %v422
        %v427 = vmul.f32 %v404, %v422
        %v428 = vmul.f32 %v405, %v422
        %v429 = vmul.f32 %v406, %v422
        %v430 = vmul.f32 %v407, %v422
        %v431 = vmul.f32 %v408, %v422
        %v432 = vmul.f32 %v409, %v422
        %v433 = vmul.f32 %v410, %v422
        %v434 = vmul.f32 %v411, %v422
        %v435 = vmul.f32 %v412, %v422
        %v436 = vmul.f32 %v413, %v422
        %v437 = vmul.f32 %v414, %v422
        %v438 = vmul.f32 %v415, %v422
        %v439 = vmul.f32 %v416, %v422
        %v440 = vld [vmem:[%s2] sm:$0x1]
        %v442 = vlaneseq
        %v443 = vshrl.u32 %v442, 7
        %v444 = vsub.s32 0, %v443
        %v445 = vrot.slane %v440, %v444
        %v447 = vadd.f32 %v424, %v445
        %v448 = vadd.f32 %v425, %v445
        %v449 = vadd.f32 %v426, %v445
        %v450 = vadd.f32 %v427, %v445
        %v451 = vadd.f32 %v428, %v445
        %v452 = vadd.f32 %v429, %v445
        %v453 = vadd.f32 %v430, %v445
        %v454 = vadd.f32 %v431, %v445
        %v455 = vadd.f32 %v432, %v445
        %v456 = vadd.f32 %v433, %v445
        %v457 = vadd.f32 %v434, %v445
        %v458 = vadd.f32 %v435, %v445
        %v459 = vadd.f32 %v436, %v445
        %v460 = vadd.f32 %v437, %v445
        %v461 = vadd.f32 %v438, %v445
        %v462 = vadd.f32 %v439, %v445
        %v463 = vmax.f32 %v447, 0.0
        %v464 = vmax.f32 %v448, 0.0
        %v465 = vmax.f32 %v449, 0.0
        %v466 = vmax.f32 %v450, 0.0
        %v467 = vmax.f32 %v451, 0.0
        %v468 = vmax.f32 %v452, 0.0
        %v469 = vmax.f32 %v453, 0.0
        %v470 = vmax.f32 %v454, 0.0
        %v471 = vmax.f32 %v455, 0.0
        %v472 = vmax.f32 %v456, 0.0
        %v473 = vmax.f32 %v457, 0.0
        %v474 = vmax.f32 %v458, 0.0
        %v475 = vmax.f32 %v459, 0.0
        %v476 = vmax.f32 %v460, 0.0
        %v477 = vmax.f32 %v461, 0.0
        %v478 = vmax.f32 %v462, 0.0
        %v479 = vpack.c.bf16 %v464, %v463
        %v480 = vpack.c.bf16 %v466, %v465
        %v481 = vpack.c.bf16 %v468, %v467
        %v482 = vpack.c.bf16 %v470, %v469
        %v483 = vpack.c.bf16 %v472, %v471
        %v484 = vpack.c.bf16 %v474, %v473
        %v485 = vpack.c.bf16 %v476, %v475
        %v486 = vpack.c.bf16 %v478, %v477
        %v495 = vunpack.c.l.b16 %v479
        %v496 = vunpack.c.h.b16 %v479
        %v497 = vunpack.c.l.b16 %v480
        %v498 = vunpack.c.h.b16 %v480
        %v499 = vunpack.c.l.b16 %v481
        %v500 = vunpack.c.h.b16 %v481
        %v501 = vunpack.c.l.b16 %v482
        %v502 = vunpack.c.h.b16 %v482
        %v503 = vunpack.c.l.b16 %v483
        %v504 = vunpack.c.h.b16 %v483
        %v505 = vunpack.c.l.b16 %v484
        %v506 = vunpack.c.h.b16 %v484
        %v507 = vunpack.c.l.b16 %v485
        %v508 = vunpack.c.h.b16 %v485
        %v509 = vunpack.c.l.b16 %v486
        %v510 = vunpack.c.h.b16 %v486
        %v511 = vpack.c.b16 %v495, %v495
        %v512 = vpack.c.b16 %v496, %v496
        %v513 = vpack.c.b16 %v497, %v497
        %v514 = vpack.c.b16 %v498, %v498
        %v515 = vpack.c.b16 %v499, %v499
        %v516 = vpack.c.b16 %v500, %v500
        %v517 = vpack.c.b16 %v501, %v501
        %v518 = vpack.c.b16 %v502, %v502
        %v519 = vpack.c.b16 %v503, %v503
        %v520 = vpack.c.b16 %v504, %v504
        %v521 = vpack.c.b16 %v505, %v505
        %v522 = vpack.c.b16 %v506, %v506
        %v523 = vpack.c.b16 %v507, %v507
        %v524 = vpack.c.b16 %v508, %v508
        %v525 = vpack.c.b16 %v509, %v509
        %v526 = vpack.c.b16 %v510, %v510
        %vm527 = vsmask.f32 4368
        %vm528 = vmor %vm285, %vm527
        %v530 = vshrl.u32 %v511, 16
        %v532 = vrot.slane %v530, 7
        %v533 = vshll.u32 %v511, 16
        %v535 = vor.u32 %v532, %v533
        %v536 = vrot.slane %v532, 4
        %v538 = vshrl.u32 %v512, 16
        %v540 = vrot.slane %v538, 7
        %v541 = vshll.u32 %v512, 16
        %v543 = vor.u32 %v540, %v541
        %v544 = vsel %vm528, %v536, %v543
        %v545 = vrot.slane %v540, 4
        %v547 = vshrl.u32 %v513, 16
        %v549 = vrot.slane %v547, 7
        %v550 = vshll.u32 %v513, 16
        %v552 = vor.u32 %v549, %v550
        %v553 = vrot.slane %v549, 4
        %v555 = vshrl.u32 %v514, 16
        %v557 = vrot.slane %v555, 7
        %v558 = vshll.u32 %v514, 16
        %v560 = vor.u32 %v557, %v558
        %v561 = vsel %vm528, %v553, %v560
        %v562 = vrot.slane %v557, 4
        %v564 = vshrl.u32 %v515, 16
        %v566 = vrot.slane %v564, 7
        %v567 = vshll.u32 %v515, 16
        %v569 = vor.u32 %v566, %v567
        %v570 = vrot.slane %v566, 4
        %v572 = vshrl.u32 %v516, 16
        %v574 = vrot.slane %v572, 7
        %v575 = vshll.u32 %v516, 16
        %v577 = vor.u32 %v574, %v575
        %v578 = vsel %vm528, %v570, %v577
        %v579 = vrot.slane %v574, 4
        %v581 = vshrl.u32 %v517, 16
        %v583 = vrot.slane %v581, 7
        %v584 = vshll.u32 %v517, 16
        %v586 = vor.u32 %v583, %v584
        %v587 = vrot.slane %v583, 4
        %v589 = vshrl.u32 %v518, 16
        %v591 = vrot.slane %v589, 7
        %v592 = vshll.u32 %v518, 16
        %v594 = vor.u32 %v591, %v592
        %v595 = vsel %vm528, %v587, %v594
        %v596 = vrot.slane %v591, 4
        %v598 = vshrl.u32 %v519, 16
        %v600 = vrot.slane %v598, 7
        %v601 = vshll.u32 %v519, 16
        %v603 = vor.u32 %v600, %v601
        %v604 = vrot.slane %v600, 4
        %v606 = vshrl.u32 %v520, 16
        %v608 = vrot.slane %v606, 7
        %v609 = vshll.u32 %v520, 16
        %v611 = vor.u32 %v608, %v609
        %v612 = vsel %vm528, %v604, %v611
        %v613 = vrot.slane %v608, 4
        %v615 = vshrl.u32 %v521, 16
        %v617 = vrot.slane %v615, 7
        %v618 = vshll.u32 %v521, 16
        %v620 = vor.u32 %v617, %v618
        %v621 = vrot.slane %v617, 4
        %v623 = vshrl.u32 %v522, 16
        %v625 = vrot.slane %v623, 7
        %v626 = vshll.u32 %v522, 16
        %v628 = vor.u32 %v625, %v626
        %v629 = vsel %vm528, %v621, %v628
        %v630 = vrot.slane %v625, 4
        %v632 = vshrl.u32 %v523, 16
        %v634 = vrot.slane %v632, 7
        %v635 = vshll.u32 %v523, 16
        %v637 = vor.u32 %v634, %v635
        %v638 = vrot.slane %v634, 4
        %v640 = vshrl.u32 %v524, 16
        %v642 = vrot.slane %v640, 7
        %v643 = vshll.u32 %v524, 16
        %v645 = vor.u32 %v642, %v643
        %v646 = vsel %vm528, %v638, %v645
        %v647 = vrot.slane %v642, 4
        %v649 = vshrl.u32 %v525, 16
        %v651 = vrot.slane %v649, 7
        %v652 = vshll.u32 %v525, 16
        %v654 = vor.u32 %v651, %v652
        %v655 = vrot.slane %v651, 4
        %v657 = vshrl.u32 %v526, 16
        %v659 = vrot.slane %v657, 7
        %v660 = vshll.u32 %v526, 16
        %v662 = vor.u32 %v659, %v660
        %v663 = vsel %vm528, %v655, %v662
        %v664 = vrot.slane %v659, 4
        %vm689 = vcmask 1043456
        %vm690 = vmand %vm689, %vm335
        %v691 = vld [vmem:[%s283] sm:$0xf]
        %v692 = vsel %vm690, %v535, %v691
        %693 = vst [vmem:[%s283] sm:$0xf] %v692
        %694 = vst [vmem:[%s283 + $0x4] sm:$0xf] %v544
        %v695 = vld [vmem:[%s283 + $0x8] sm:$0x1]
        %v696 = vsel %vm286, %v545, %v695
        %697 = vst [vmem:[%s283 + $0x8] sm:$0x1] %v696
        %v698 = vld [vmem:[%s283 + $0xc] sm:$0xf]
        %v699 = vsel %vm690, %v552, %v698
        %700 = vst [vmem:[%s283 + $0xc] sm:$0xf] %v699
        %701 = vst [vmem:[%s283 + $0x10] sm:$0xf] %v561
        %v702 = vld [vmem:[%s283 + $0x14] sm:$0x1]
        %v703 = vsel %vm286, %v562, %v702
        %704 = vst [vmem:[%s283 + $0x14] sm:$0x1] %v703
        %v705 = vld [vmem:[%s283 + $0x18] sm:$0xf]
        %v706 = vsel %vm690, %v569, %v705
        %707 = vst [vmem:[%s283 + $0x18] sm:$0xf] %v706
        %708 = vst [vmem:[%s283 + $0x1c] sm:$0xf] %v578
        %v709 = vld [vmem:[%s283 + $0x20] sm:$0x1]
        %v710 = vsel %vm286, %v579, %v709
        %711 = vst [vmem:[%s283 + $0x20] sm:$0x1] %v710
        %v712 = vld [vmem:[%s283 + $0x24] sm:$0xf]
        %v713 = vsel %vm690, %v586, %v712
        %714 = vst [vmem:[%s283 + $0x24] sm:$0xf] %v713
        %715 = vst [vmem:[%s283 + $0x28] sm:$0xf] %v595
        %v716 = vld [vmem:[%s283 + $0x2c] sm:$0x1]
        %v717 = vsel %vm286, %v596, %v716
        %718 = vst [vmem:[%s283 + $0x2c] sm:$0x1] %v717
        %v719 = vld [vmem:[%s283 + $0x30] sm:$0xf]
        %v720 = vsel %vm690, %v603, %v719
        %721 = vst [vmem:[%s283 + $0x30] sm:$0xf] %v720
        %722 = vst [vmem:[%s283 + $0x34] sm:$0xf] %v612
        %v723 = vld [vmem:[%s283 + $0x38] sm:$0x1]
        %v724 = vsel %vm286, %v613, %v723
        %725 = vst [vmem:[%s283 + $0x38] sm:$0x1] %v724
        %v726 = vld [vmem:[%s283 + $0x3c] sm:$0xf]
        %v727 = vsel %vm690, %v620, %v726
        %728 = vst [vmem:[%s283 + $0x3c] sm:$0xf] %v727
        %729 = vst [vmem:[%s283 + $0x40] sm:$0xf] %v629
        %v730 = vld [vmem:[%s283 + $0x44] sm:$0x1]
        %v731 = vsel %vm286, %v630, %v730
        %732 = vst [vmem:[%s283 + $0x44] sm:$0x1] %v731
        %v733 = vld [vmem:[%s283 + $0x48] sm:$0xf]
        %v734 = vsel %vm690, %v637, %v733
        %735 = vst [vmem:[%s283 + $0x48] sm:$0xf] %v734
        %736 = vst [vmem:[%s283 + $0x4c] sm:$0xf] %v646
        %v737 = vld [vmem:[%s283 + $0x50] sm:$0x1]
        %v738 = vsel %vm286, %v647, %v737
        %739 = vst [vmem:[%s283 + $0x50] sm:$0x1] %v738
        %v740 = vld [vmem:[%s283 + $0x54] sm:$0xf]
        %v741 = vsel %vm690, %v654, %v740
        %742 = vst [vmem:[%s283 + $0x54] sm:$0xf] %v741
        %743 = vst [vmem:[%s283 + $0x58] sm:$0xf] %v663
        %v744 = vld [vmem:[%s283 + $0x5c] sm:$0x1]
        %v745 = vsel %vm286, %v664, %v744
        %746 = vst [vmem:[%s283 + $0x5c] sm:$0x1] %v745
        %s747 = scalar_lea.vmem %s251, 64
        %v748 = vld [vmem:[%s747] sm:$0xf]
        %v749 = vld [vmem:[%s747 + $0x4] sm:$0xf]
        %v750 = vld [vmem:[%s747 + $0x8] sm:$0xf]
        %v751 = vld [vmem:[%s747 + $0xc] sm:$0xf]
        %v752 = vld [vmem:[%s747 + $0x10] sm:$0xf]
        %v753 = vld [vmem:[%s747 + $0x14] sm:$0xf]
        %v754 = vld [vmem:[%s747 + $0x18] sm:$0xf]
        %v755 = vld [vmem:[%s747 + $0x1c] sm:$0xf]
        %v756 = vld [vmem:[%s747 + $0x20] sm:$0xf]
        %v757 = vld [vmem:[%s747 + $0x24] sm:$0xf]
        %v758 = vld [vmem:[%s747 + $0x28] sm:$0xf]
        %v759 = vld [vmem:[%s747 + $0x2c] sm:$0xf]
        %v760 = vld [vmem:[%s747 + $0x30] sm:$0xf]
        %v761 = vld [vmem:[%s747 + $0x34] sm:$0xf]
        %v762 = vld [vmem:[%s747 + $0x38] sm:$0xf]
        %v763 = vld [vmem:[%s747 + $0x3c] sm:$0xf]
        %v764 = vunpack.c.l.bf16 %v748
        %v765 = vunpack.c.l.bf16 %v749
        %v766 = vunpack.c.l.bf16 %v750
        %v767 = vunpack.c.l.bf16 %v751
        %v768 = vunpack.c.l.bf16 %v752
        %v769 = vunpack.c.l.bf16 %v753
        %v770 = vunpack.c.l.bf16 %v754
        %v771 = vunpack.c.l.bf16 %v755
        %v772 = vunpack.c.l.bf16 %v756
        %v773 = vunpack.c.l.bf16 %v757
        %v774 = vunpack.c.l.bf16 %v758
        %v775 = vunpack.c.l.bf16 %v759
        %v776 = vunpack.c.l.bf16 %v760
        %v777 = vunpack.c.l.bf16 %v761
        %v778 = vunpack.c.l.bf16 %v762
        %v779 = vunpack.c.l.bf16 %v763
        %v780 = vld [vmem:[%s1] sm:$0x1]
        %v782 = vlaneseq
        %v783 = vshrl.u32 %v782, 7
        %v784 = vsub.s32 0, %v783
        %v785 = vrot.slane %v780, %v784
        %v787 = vmul.f32 %v764, %v785
        %v788 = vmul.f32 %v765, %v785
        %v789 = vmul.f32 %v766, %v785
        %v790 = vmul.f32 %v767, %v785
        %v791 = vmul.f32 %v768, %v785
        %v792 = vmul.f32 %v769, %v785
        %v793 = vmul.f32 %v770, %v785
        %v794 = vmul.f32 %v771, %v785
        %v795 = vmul.f32 %v772, %v785
        %v796 = vmul.f32 %v773, %v785
        %v797 = vmul.f32 %v774, %v785
        %v798 = vmul.f32 %v775, %v785
        %v799 = vmul.f32 %v776, %v785
        %v800 = vmul.f32 %v777, %v785
        %v801 = vmul.f32 %v778, %v785
        %v802 = vmul.f32 %v779, %v785
        %v803 = vld [vmem:[%s2] sm:$0x1]
        %v805 = vlaneseq
        %v806 = vshrl.u32 %v805, 7
        %v807 = vsub.s32 0, %v806
        %v808 = vrot.slane %v803, %v807
        %v810 = vadd.f32 %v787, %v808
        %v811 = vadd.f32 %v788, %v808
        %v812 = vadd.f32 %v789, %v808
        %v813 = vadd.f32 %v790, %v808
        %v814 = vadd.f32 %v791, %v808
        %v815 = vadd.f32 %v792, %v808
        %v816 = vadd.f32 %v793, %v808
        %v817 = vadd.f32 %v794, %v808
        %v818 = vadd.f32 %v795, %v808
        %v819 = vadd.f32 %v796, %v808
        %v820 = vadd.f32 %v797, %v808
        %v821 = vadd.f32 %v798, %v808
        %v822 = vadd.f32 %v799, %v808
        %v823 = vadd.f32 %v800, %v808
        %v824 = vadd.f32 %v801, %v808
        %v825 = vadd.f32 %v802, %v808
        %v826 = vmax.f32 %v810, 0.0
        %v827 = vmax.f32 %v811, 0.0
        %v828 = vmax.f32 %v812, 0.0
        %v829 = vmax.f32 %v813, 0.0
        %v830 = vmax.f32 %v814, 0.0
        %v831 = vmax.f32 %v815, 0.0
        %v832 = vmax.f32 %v816, 0.0
        %v833 = vmax.f32 %v817, 0.0
        %v834 = vmax.f32 %v818, 0.0
        %v835 = vmax.f32 %v819, 0.0
        %v836 = vmax.f32 %v820, 0.0
        %v837 = vmax.f32 %v821, 0.0
        %v838 = vmax.f32 %v822, 0.0
        %v839 = vmax.f32 %v823, 0.0
        %v840 = vmax.f32 %v824, 0.0
        %v841 = vmax.f32 %v825, 0.0
        %v842 = vpack.c.bf16 %v827, %v826
        %v843 = vpack.c.bf16 %v829, %v828
        %v844 = vpack.c.bf16 %v831, %v830
        %v845 = vpack.c.bf16 %v833, %v832
        %v846 = vpack.c.bf16 %v835, %v834
        %v847 = vpack.c.bf16 %v837, %v836
        %v848 = vpack.c.bf16 %v839, %v838
        %v849 = vpack.c.bf16 %v841, %v840
        %v858 = vunpack.c.l.b16 %v842
        %v859 = vunpack.c.h.b16 %v842
        %v860 = vunpack.c.l.b16 %v843
        %v861 = vunpack.c.h.b16 %v843
        %v862 = vunpack.c.l.b16 %v844
        %v863 = vunpack.c.h.b16 %v844
        %v864 = vunpack.c.l.b16 %v845
        %v865 = vunpack.c.h.b16 %v845
        %v866 = vunpack.c.l.b16 %v846
        %v867 = vunpack.c.h.b16 %v846
        %v868 = vunpack.c.l.b16 %v847
        %v869 = vunpack.c.h.b16 %v847
        %v870 = vunpack.c.l.b16 %v848
        %v871 = vunpack.c.h.b16 %v848
        %v872 = vunpack.c.l.b16 %v849
        %v873 = vunpack.c.h.b16 %v849
        %v874 = vpack.c.b16 %v858, %v858
        %v875 = vpack.c.b16 %v859, %v859
        %v876 = vpack.c.b16 %v860, %v860
        %v877 = vpack.c.b16 %v861, %v861
        %v878 = vpack.c.b16 %v862, %v862
        %v879 = vpack.c.b16 %v863, %v863
        %v880 = vpack.c.b16 %v864, %v864
        %v881 = vpack.c.b16 %v865, %v865
        %v882 = vpack.c.b16 %v866, %v866
        %v883 = vpack.c.b16 %v867, %v867
        %v884 = vpack.c.b16 %v868, %v868
        %v885 = vpack.c.b16 %v869, %v869
        %v886 = vpack.c.b16 %v870, %v870
        %v887 = vpack.c.b16 %v871, %v871
        %v888 = vpack.c.b16 %v872, %v872
        %v889 = vpack.c.b16 %v873, %v873
        %v891 = vshrl.u32 %v874, 16
        %v893 = vrot.slane %v891, 7
        %v894 = vshll.u32 %v874, 16
        %v896 = vor.u32 %v893, %v894
        %v897 = vrot.slane %v893, 4
        %v899 = vshrl.u32 %v875, 16
        %v901 = vrot.slane %v899, 7
        %v902 = vshll.u32 %v875, 16
        %v904 = vor.u32 %v901, %v902
        %v905 = vsel %vm528, %v897, %v904
        %v906 = vrot.slane %v901, 4
        %v908 = vshrl.u32 %v876, 16
        %v910 = vrot.slane %v908, 7
        %v911 = vshll.u32 %v876, 16
        %v913 = vor.u32 %v910, %v911
        %v914 = vrot.slane %v910, 4
        %v916 = vshrl.u32 %v877, 16
        %v918 = vrot.slane %v916, 7
        %v919 = vshll.u32 %v877, 16
        %v921 = vor.u32 %v918, %v919
        %v922 = vsel %vm528, %v914, %v921
        %v923 = vrot.slane %v918, 4
        %v925 = vshrl.u32 %v878, 16
        %v927 = vrot.slane %v925, 7
        %v928 = vshll.u32 %v878, 16
        %v930 = vor.u32 %v927, %v928
        %v931 = vrot.slane %v927, 4
        %v933 = vshrl.u32 %v879, 16
        %v935 = vrot.slane %v933, 7
        %v936 = vshll.u32 %v879, 16
        %v938 = vor.u32 %v935, %v936
        %v939 = vsel %vm528, %v931, %v938
        %v940 = vrot.slane %v935, 4
        %v942 = vshrl.u32 %v880, 16
        %v944 = vrot.slane %v942, 7
        %v945 = vshll.u32 %v880, 16
        %v947 = vor.u32 %v944, %v945
        %v948 = vrot.slane %v944, 4
        %v950 = vshrl.u32 %v881, 16
        %v952 = vrot.slane %v950, 7
        %v953 = vshll.u32 %v881, 16
        %v955 = vor.u32 %v952, %v953
        %v956 = vsel %vm528, %v948, %v955
        %v957 = vrot.slane %v952, 4
        %v959 = vshrl.u32 %v882, 16
        %v961 = vrot.slane %v959, 7
        %v962 = vshll.u32 %v882, 16
        %v964 = vor.u32 %v961, %v962
        %v965 = vrot.slane %v961, 4
        %v967 = vshrl.u32 %v883, 16
        %v969 = vrot.slane %v967, 7
        %v970 = vshll.u32 %v883, 16
        %v972 = vor.u32 %v969, %v970
        %v973 = vsel %vm528, %v965, %v972
        %v974 = vrot.slane %v969, 4
        %v976 = vshrl.u32 %v884, 16
        %v978 = vrot.slane %v976, 7
        %v979 = vshll.u32 %v884, 16
        %v981 = vor.u32 %v978, %v979
        %v982 = vrot.slane %v978, 4
        %v984 = vshrl.u32 %v885, 16
        %v986 = vrot.slane %v984, 7
        %v987 = vshll.u32 %v885, 16
        %v989 = vor.u32 %v986, %v987
        %v990 = vsel %vm528, %v982, %v989
        %v991 = vrot.slane %v986, 4
        %v993 = vshrl.u32 %v886, 16
        %v995 = vrot.slane %v993, 7
        %v996 = vshll.u32 %v886, 16
        %v998 = vor.u32 %v995, %v996
        %v999 = vrot.slane %v995, 4
        %v1001 = vshrl.u32 %v887, 16
        %v1003 = vrot.slane %v1001, 7
        %v1004 = vshll.u32 %v887, 16
        %v1006 = vor.u32 %v1003, %v1004
        %v1007 = vsel %vm528, %v999, %v1006
        %v1008 = vrot.slane %v1003, 4
        %v1010 = vshrl.u32 %v888, 16
        %v1012 = vrot.slane %v1010, 7
        %v1013 = vshll.u32 %v888, 16
        %v1015 = vor.u32 %v1012, %v1013
        %v1016 = vrot.slane %v1012, 4
        %v1018 = vshrl.u32 %v889, 16
        %v1020 = vrot.slane %v1018, 7
        %v1021 = vshll.u32 %v889, 16
        %v1023 = vor.u32 %v1020, %v1021
        %v1024 = vsel %vm528, %v1016, %v1023
        %v1025 = vrot.slane %v1020, 4
        %s1050 = scalar_lea.vmem [#allocation2], 108
        %v1051 = vld [vmem:[%s1050] sm:$0xf]
        %v1052 = vsel %vm690, %v896, %v1051
        %1053 = vst [vmem:[%s1050] sm:$0xf] %v1052
        %1054 = vst [vmem:[%s1050 + $0x4] sm:$0xf] %v905
        %v1055 = vld [vmem:[%s1050 + $0x8] sm:$0x1]
        %v1056 = vsel %vm286, %v906, %v1055
        %1057 = vst [vmem:[%s1050 + $0x8] sm:$0x1] %v1056
        %v1058 = vld [vmem:[%s1050 + $0xc] sm:$0xf]
        %v1059 = vsel %vm690, %v913, %v1058
        %1060 = vst [vmem:[%s1050 + $0xc] sm:$0xf] %v1059
        %1061 = vst [vmem:[%s1050 + $0x10] sm:$0xf] %v922
        %v1062 = vld [vmem:[%s1050 + $0x14] sm:$0x1]
        %v1063 = vsel %vm286, %v923, %v1062
        %1064 = vst [vmem:[%s1050 + $0x14] sm:$0x1] %v1063
        %v1065 = vld [vmem:[%s1050 + $0x18] sm:$0xf]
        %v1066 = vsel %vm690, %v930, %v1065
        %1067 = vst [vmem:[%s1050 + $0x18] sm:$0xf] %v1066
        %1068 = vst [vmem:[%s1050 + $0x1c] sm:$0xf] %v939
        %v1069 = vld [vmem:[%s1050 + $0x20] sm:$0x1]
        %v1070 = vsel %vm286, %v940, %v1069
        %1071 = vst [vmem:[%s1050 + $0x20] sm:$0x1] %v1070
        %v1072 = vld [vmem:[%s1050 + $0x24] sm:$0xf]
        %v1073 = vsel %vm690, %v947, %v1072
        %1074 = vst [vmem:[%s1050 + $0x24] sm:$0xf] %v1073
        %1075 = vst [vmem:[%s1050 + $0x28] sm:$0xf] %v956
        %v1076 = vld [vmem:[%s1050 + $0x2c] sm:$0x1]
        %v1077 = vsel %vm286, %v957, %v1076
        %1078 = vst [vmem:[%s1050 + $0x2c] sm:$0x1] %v1077
        %v1079 = vld [vmem:[%s1050 + $0x30] sm:$0xf]
        %v1080 = vsel %vm690, %v964, %v1079
        %1081 = vst [vmem:[%s1050 + $0x30] sm:$0xf] %v1080
        %1082 = vst [vmem:[%s1050 + $0x34] sm:$0xf] %v973
        %v1083 = vld [vmem:[%s1050 + $0x38] sm:$0x1]
        %v1084 = vsel %vm286, %v974, %v1083
        %1085 = vst [vmem:[%s1050 + $0x38] sm:$0x1] %v1084
        %v1086 = vld [vmem:[%s1050 + $0x3c] sm:$0xf]
        %v1087 = vsel %vm690, %v981, %v1086
        %1088 = vst [vmem:[%s1050 + $0x3c] sm:$0xf] %v1087
        %1089 = vst [vmem:[%s1050 + $0x40] sm:$0xf] %v990
        %v1090 = vld [vmem:[%s1050 + $0x44] sm:$0x1]
        %v1091 = vsel %vm286, %v991, %v1090
        %1092 = vst [vmem:[%s1050 + $0x44] sm:$0x1] %v1091
        %v1093 = vld [vmem:[%s1050 + $0x48] sm:$0xf]
        %v1094 = vsel %vm690, %v998, %v1093
        %1095 = vst [vmem:[%s1050 + $0x48] sm:$0xf] %v1094
        %1096 = vst [vmem:[%s1050 + $0x4c] sm:$0xf] %v1007
        %v1097 = vld [vmem:[%s1050 + $0x50] sm:$0x1]
        %v1098 = vsel %vm286, %v1008, %v1097
        %1099 = vst [vmem:[%s1050 + $0x50] sm:$0x1] %v1098
        %v1100 = vld [vmem:[%s1050 + $0x54] sm:$0xf]
        %v1101 = vsel %vm690, %v1015, %v1100
        %1102 = vst [vmem:[%s1050 + $0x54] sm:$0xf] %v1101
        %1103 = vst [vmem:[%s1050 + $0x58] sm:$0xf] %v1024
        %v1104 = vld [vmem:[%s1050 + $0x5c] sm:$0x1]
        %v1105 = vsel %vm286, %v1025, %v1104
        %1106 = vst [vmem:[%s1050 + $0x5c] sm:$0x1] %v1105
      $region40: #{bottleneck_forward.5} parent=35 // pred_fallthru
        _
      %s1107 = smul.u32 %s22, 8
      %s1108 = smul.u32 %s1107, 3
      %s1109 = smul.addr %s1108, 4
      %s1110 = scalar_lea.vmem [#allocation2], %s1109
      %v1111 = vld [vmem:[%s1110] sm:$0xf]
      %v1112 = vld [vmem:[%s1110 + $0x4] sm:$0xf]
      %v1113 = vld [vmem:[%s1110 + $0x8] sm:$0x1]
      %v1114 = vld [vmem:[%s1110 + $0xc] sm:$0xf]
      %v1115 = vld [vmem:[%s1110 + $0x10] sm:$0xf]
      %v1116 = vld [vmem:[%s1110 + $0x14] sm:$0x1]
      %v1117 = vld [vmem:[%s1110 + $0x18] sm:$0xf]
      %v1118 = vld [vmem:[%s1110 + $0x1c] sm:$0xf]
      %v1119 = vld [vmem:[%s1110 + $0x20] sm:$0x1]
      %v1120 = vld [vmem:[%s1110 + $0x24] sm:$0xf]
      %v1121 = vld [vmem:[%s1110 + $0x28] sm:$0xf]
      %v1122 = vld [vmem:[%s1110 + $0x2c] sm:$0x1]
      %v1123 = vld [vmem:[%s1110 + $0x30] sm:$0xf]
      %v1124 = vld [vmem:[%s1110 + $0x34] sm:$0xf]
      %v1125 = vld [vmem:[%s1110 + $0x38] sm:$0x1]
      %v1126 = vld [vmem:[%s1110 + $0x3c] sm:$0xf]
      %v1127 = vld [vmem:[%s1110 + $0x40] sm:$0xf]
      %v1128 = vld [vmem:[%s1110 + $0x44] sm:$0x1]
      %v1129 = vld [vmem:[%s1110 + $0x48] sm:$0xf]
      %v1130 = vld [vmem:[%s1110 + $0x4c] sm:$0xf]
      %v1131 = vld [vmem:[%s1110 + $0x50] sm:$0x1]
      %v1132 = vld [vmem:[%s1110 + $0x54] sm:$0xf]
      %v1133 = vld [vmem:[%s1110 + $0x58] sm:$0xf]
      %v1134 = vld [vmem:[%s1110 + $0x5c] sm:$0x1]
      %v1151 = vunpack.c.l.b16 %v1111
      %v1152 = vunpack.c.l.b16 %v1112
      %v1153 = vunpack.c.l.b16 %v1114
      %v1154 = vunpack.c.l.b16 %v1115
      %v1155 = vunpack.c.l.b16 %v1117
      %v1156 = vunpack.c.l.b16 %v1118
      %v1157 = vunpack.c.l.b16 %v1120
      %v1158 = vunpack.c.l.b16 %v1121
      %v1159 = vunpack.c.l.b16 %v1123
      %v1160 = vunpack.c.l.b16 %v1124
      %v1161 = vunpack.c.l.b16 %v1126
      %v1162 = vunpack.c.l.b16 %v1127
      %v1163 = vunpack.c.l.b16 %v1129
      %v1164 = vunpack.c.l.b16 %v1130
      %v1165 = vunpack.c.l.b16 %v1132
      %v1166 = vunpack.c.l.b16 %v1133
      %v1167 = vpack.c.b16 %v1152, %v1151
      %v1168 = vpack.c.b16 %v1154, %v1153
      %v1169 = vpack.c.b16 %v1156, %v1155
      %v1170 = vpack.c.b16 %v1158, %v1157
      %v1171 = vpack.c.b16 %v1160, %v1159
      %v1172 = vpack.c.b16 %v1162, %v1161
      %v1173 = vpack.c.b16 %v1164, %v1163
      %v1174 = vpack.c.b16 %v1166, %v1165
      %v1191 = vunpack.c.l.b16 %v1113
      %v1192 = vunpack.c.l.b16 %v1116
      %v1193 = vunpack.c.l.b16 %v1119
      %v1194 = vunpack.c.l.b16 %v1122
      %v1195 = vunpack.c.l.b16 %v1125
      %v1196 = vunpack.c.l.b16 %v1128
      %v1197 = vunpack.c.l.b16 %v1131
      %v1198 = vunpack.c.l.b16 %v1134
      %v1199 = vpack.c.b16 %v1191, %v1191
      %v1200 = vpack.c.b16 %v1192, %v1192
      %v1201 = vpack.c.b16 %v1193, %v1193
      %v1202 = vpack.c.b16 %v1194, %v1194
      %v1203 = vpack.c.b16 %v1195, %v1195
      %v1204 = vpack.c.b16 %v1196, %v1196
      %v1205 = vpack.c.b16 %v1197, %v1197
      %v1206 = vpack.c.b16 %v1198, %v1198
      %vm1207 = vsmask.f32 7424
      %v1209 = vshrl.u32 %v1167, 16
      %v1211 = vshll.u32 %v1167, 16
      %v1213 = vrot.slane %v1211, 1
      %v1214 = vor.u32 %v1209, %v1213
      %v1216 = vshll.u32 %v1199, 16
      %v1218 = vrot.slane %v1216, 1
      %v1219 = vsel %vm1207, %v1214, %v1218
      %v1221 = vshrl.u32 %v1168, 16
      %v1223 = vshll.u32 %v1168, 16
      %v1225 = vrot.slane %v1223, 1
      %v1226 = vor.u32 %v1221, %v1225
      %v1228 = vshll.u32 %v1200, 16
      %v1230 = vrot.slane %v1228, 1
      %v1231 = vsel %vm1207, %v1226, %v1230
      %v1233 = vshrl.u32 %v1169, 16
      %v1235 = vshll.u32 %v1169, 16
      %v1237 = vrot.slane %v1235, 1
      %v1238 = vor.u32 %v1233, %v1237
      %v1240 = vshll.u32 %v1201, 16
      %v1242 = vrot.slane %v1240, 1
      %v1243 = vsel %vm1207, %v1238, %v1242
      %v1245 = vshrl.u32 %v1170, 16
      %v1247 = vshll.u32 %v1170, 16
      %v1249 = vrot.slane %v1247, 1
      %v1250 = vor.u32 %v1245, %v1249
      %v1252 = vshll.u32 %v1202, 16
      %v1254 = vrot.slane %v1252, 1
      %v1255 = vsel %vm1207, %v1250, %v1254
      %v1257 = vshrl.u32 %v1171, 16
      %v1259 = vshll.u32 %v1171, 16
      %v1261 = vrot.slane %v1259, 1
      %v1262 = vor.u32 %v1257, %v1261
      %v1264 = vshll.u32 %v1203, 16
      %v1266 = vrot.slane %v1264, 1
      %v1267 = vsel %vm1207, %v1262, %v1266
      %v1269 = vshrl.u32 %v1172, 16
      %v1271 = vshll.u32 %v1172, 16
      %v1273 = vrot.slane %v1271, 1
      %v1274 = vor.u32 %v1269, %v1273
      %v1276 = vshll.u32 %v1204, 16
      %v1278 = vrot.slane %v1276, 1
      %v1279 = vsel %vm1207, %v1274, %v1278
      %v1281 = vshrl.u32 %v1173, 16
      %v1283 = vshll.u32 %v1173, 16
      %v1285 = vrot.slane %v1283, 1
      %v1286 = vor.u32 %v1281, %v1285
      %v1288 = vshll.u32 %v1205, 16
      %v1290 = vrot.slane %v1288, 1
      %v1291 = vsel %vm1207, %v1286, %v1290
      %v1293 = vshrl.u32 %v1174, 16
      %v1295 = vshll.u32 %v1174, 16
      %v1297 = vrot.slane %v1295, 1
      %v1298 = vor.u32 %v1293, %v1297
      %v1300 = vshll.u32 %v1206, 16
      %v1302 = vrot.slane %v1300, 1
      %v1303 = vsel %vm1207, %v1298, %v1302
      %vm1312 = vcmask 1046528
      %v1313 = vrot.slane %v1167, 1
      %v1314 = vrot.slane %v1199, 1
      %v1315 = vsel %vm1312, %v1313, %v1314
      %v1316 = vrot.slane %v1168, 1
      %v1317 = vrot.slane %v1200, 1
      %v1318 = vsel %vm1312, %v1316, %v1317
      %v1319 = vrot.slane %v1169, 1
      %v1320 = vrot.slane %v1201, 1
      %v1321 = vsel %vm1312, %v1319, %v1320
      %v1322 = vrot.slane %v1170, 1
      %v1323 = vrot.slane %v1202, 1
      %v1324 = vsel %vm1312, %v1322, %v1323
      %v1325 = vrot.slane %v1171, 1
      %v1326 = vrot.slane %v1203, 1
      %v1327 = vsel %vm1312, %v1325, %v1326
      %v1328 = vrot.slane %v1172, 1
      %v1329 = vrot.slane %v1204, 1
      %v1330 = vsel %vm1312, %v1328, %v1329
      %v1331 = vrot.slane %v1173, 1
      %v1332 = vrot.slane %v1205, 1
      %v1333 = vsel %vm1312, %v1331, %v1332
      %v1334 = vrot.slane %v1174, 1
      %v1335 = vrot.slane %v1206, 1
      %v1336 = vsel %vm1312, %v1334, %v1335
      %v1345 = vld [vmem:[%s3] sm:$0xf]
      %v1346 = vld [vmem:[%s3 + $0x4] sm:$0xf]
      %v1347 = vld [vmem:[%s3 + $0x8] sm:$0xf]
      %v1348 = vld [vmem:[%s3 + $0xc] sm:$0xf]
      %v1349 = vld [vmem:[%s3 + $0x10] sm:$0xf]
      %v1350 = vld [vmem:[%s3 + $0x14] sm:$0xf]
      %v1351 = vld [vmem:[%s3 + $0x18] sm:$0xf]
      %v1352 = vld [vmem:[%s3 + $0x1c] sm:$0xf]
      %v1353 = vld [vmem:[%s3 + $0x20] sm:$0xf]
      %v1354 = vld [vmem:[%s3 + $0x24] sm:$0xf]
      %v1355 = vld [vmem:[%s3 + $0x28] sm:$0xf]
      %v1356 = vld [vmem:[%s3 + $0x2c] sm:$0xf]
      %v1357 = vld [vmem:[%s3 + $0x30] sm:$0xf]
      %v1358 = vld [vmem:[%s3 + $0x34] sm:$0xf]
      %v1359 = vld [vmem:[%s3 + $0x38] sm:$0xf]
      %v1360 = vld [vmem:[%s3 + $0x3c] sm:$0xf]
      %v1361 = vld [vmem:[%s3 + $0x40] sm:$0xf]
      %v1362 = vld [vmem:[%s3 + $0x44] sm:$0xf]
      %v1363 = vld [vmem:[%s3 + $0x48] sm:$0xf]
      %v1364 = vld [vmem:[%s3 + $0x4c] sm:$0xf]
      %v1365 = vld [vmem:[%s3 + $0x50] sm:$0xf]
      %v1366 = vld [vmem:[%s3 + $0x54] sm:$0xf]
      %v1367 = vld [vmem:[%s3 + $0x58] sm:$0xf]
      %v1368 = vld [vmem:[%s3 + $0x5c] sm:$0xf]
      %v1369 = vld [vmem:[%s3 + $0x60] sm:$0xf]
      %v1370 = vld [vmem:[%s3 + $0x64] sm:$0xf]
      %v1371 = vld [vmem:[%s3 + $0x68] sm:$0xf]
      %v1372 = vld [vmem:[%s3 + $0x6c] sm:$0xf]
      %v1373 = vld [vmem:[%s3 + $0x70] sm:$0xf]
      %v1374 = vld [vmem:[%s3 + $0x74] sm:$0xf]
      %v1375 = vld [vmem:[%s3 + $0x78] sm:$0xf]
      %v1376 = vld [vmem:[%s3 + $0x7c] sm:$0xf]
      %v1377 = vld [vmem:[%s3 + $0x80] sm:$0xf]
      %v1378 = vld [vmem:[%s3 + $0x84] sm:$0xf]
      %v1379 = vld [vmem:[%s3 + $0x88] sm:$0xf]
      %v1380 = vld [vmem:[%s3 + $0x8c] sm:$0xf]
      %v1381 = vld [vmem:[%s3 + $0x90] sm:$0xf]
      %v1382 = vld [vmem:[%s3 + $0x94] sm:$0xf]
      %v1383 = vld [vmem:[%s3 + $0x98] sm:$0xf]
      %v1384 = vld [vmem:[%s3 + $0x9c] sm:$0xf]
      %v1385 = vld [vmem:[%s3 + $0xa0] sm:$0xf]
      %v1386 = vld [vmem:[%s3 + $0xa4] sm:$0xf]
      %v1387 = vld [vmem:[%s3 + $0xa8] sm:$0xf]
      %v1388 = vld [vmem:[%s3 + $0xac] sm:$0xf]
      %v1389 = vld [vmem:[%s3 + $0xb0] sm:$0xf]
      %v1390 = vld [vmem:[%s3 + $0xb4] sm:$0xf]
      %v1391 = vld [vmem:[%s3 + $0xb8] sm:$0xf]
      %v1392 = vld [vmem:[%s3 + $0xbc] sm:$0xf]
      %s1393 = sadd.s32 %s1107, 1
      %s1394 = smul.u32 %s1393, 3
      %s1395 = smul.addr %s1394, 4
      %s1396 = scalar_lea.vmem [#allocation2], %s1395
      %v1397 = vld [vmem:[%s1396] sm:$0xf]
      %v1398 = vld [vmem:[%s1396 + $0x4] sm:$0xf]
      %v1399 = vld [vmem:[%s1396 + $0x8] sm:$0x1]
      %v1400 = vld [vmem:[%s1396 + $0xc] sm:$0xf]
      %v1401 = vld [vmem:[%s1396 + $0x10] sm:$0xf]
      %v1402 = vld [vmem:[%s1396 + $0x14] sm:$0x1]
      %v1403 = vld [vmem:[%s1396 + $0x18] sm:$0xf]
      %v1404 = vld [vmem:[%s1396 + $0x1c] sm:$0xf]
      %v1405 = vld [vmem:[%s1396 + $0x20] sm:$0x1]
      %v1406 = vld [vmem:[%s1396 + $0x24] sm:$0xf]
      %v1407 = vld [vmem:[%s1396 + $0x28] sm:$0xf]
      %v1408 = vld [vmem:[%s1396 + $0x2c] sm:$0x1]
      %v1409 = vld [vmem:[%s1396 + $0x30] sm:$0xf]
      %v1410 = vld [vmem:[%s1396 + $0x34] sm:$0xf]
      %v1411 = vld [vmem:[%s1396 + $0x38] sm:$0x1]
      %v1412 = vld [vmem:[%s1396 + $0x3c] sm:$0xf]
      %v1413 = vld [vmem:[%s1396 + $0x40] sm:$0xf]
      %v1414 = vld [vmem:[%s1396 + $0x44] sm:$0x1]
      %v1415 = vld [vmem:[%s1396 + $0x48] sm:$0xf]
      %v1416 = vld [vmem:[%s1396 + $0x4c] sm:$0xf]
      %v1417 = vld [vmem:[%s1396 + $0x50] sm:$0x1]
      %v1418 = vld [vmem:[%s1396 + $0x54] sm:$0xf]
      %v1419 = vld [vmem:[%s1396 + $0x58] sm:$0xf]
      %v1420 = vld [vmem:[%s1396 + $0x5c] sm:$0x1]
      %v1437 = vunpack.c.l.b16 %v1397
      %v1438 = vunpack.c.l.b16 %v1398
      %v1439 = vunpack.c.l.b16 %v1400
      %v1440 = vunpack.c.l.b16 %v1401
      %v1441 = vunpack.c.l.b16 %v1403
      %v1442 = vunpack.c.l.b16 %v1404
      %v1443 = vunpack.c.l.b16 %v1406
      %v1444 = vunpack.c.l.b16 %v1407
      %v1445 = vunpack.c.l.b16 %v1409
      %v1446 = vunpack.c.l.b16 %v1410
      %v1447 = vunpack.c.l.b16 %v1412
      %v1448 = vunpack.c.l.b16 %v1413
      %v1449 = vunpack.c.l.b16 %v1415
      %v1450 = vunpack.c.l.b16 %v1416
      %v1451 = vunpack.c.l.b16 %v1418
      %v1452 = vunpack.c.l.b16 %v1419
      %v1453 = vpack.c.b16 %v1438, %v1437
      %v1454 = vpack.c.b16 %v1440, %v1439
      %v1455 = vpack.c.b16 %v1442, %v1441
      %v1456 = vpack.c.b16 %v1444, %v1443
      %v1457 = vpack.c.b16 %v1446, %v1445
      %v1458 = vpack.c.b16 %v1448, %v1447
      %v1459 = vpack.c.b16 %v1450, %v1449
      %v1460 = vpack.c.b16 %v1452, %v1451
      %v1477 = vunpack.c.l.b16 %v1399
      %v1478 = vunpack.c.l.b16 %v1402
      %v1479 = vunpack.c.l.b16 %v1405
      %v1480 = vunpack.c.l.b16 %v1408
      %v1481 = vunpack.c.l.b16 %v1411
      %v1482 = vunpack.c.l.b16 %v1414
      %v1483 = vunpack.c.l.b16 %v1417
      %v1484 = vunpack.c.l.b16 %v1420
      %v1485 = vpack.c.b16 %v1477, %v1477
      %v1486 = vpack.c.b16 %v1478, %v1478
      %v1487 = vpack.c.b16 %v1479, %v1479
      %v1488 = vpack.c.b16 %v1480, %v1480
      %v1489 = vpack.c.b16 %v1481, %v1481
      %v1490 = vpack.c.b16 %v1482, %v1482
      %v1491 = vpack.c.b16 %v1483, %v1483
      %v1492 = vpack.c.b16 %v1484, %v1484
      %v1494 = vshrl.u32 %v1453, 16
      %v1496 = vshll.u32 %v1453, 16
      %v1498 = vrot.slane %v1496, 1
      %v1499 = vor.u32 %v1494, %v1498
      %v1501 = vshll.u32 %v1485, 16
      %v1503 = vrot.slane %v1501, 1
      %v1504 = vsel %vm1207, %v1499, %v1503
      %v1506 = vshrl.u32 %v1454, 16
      %v1508 = vshll.u32 %v1454, 16
      %v1510 = vrot.slane %v1508, 1
      %v1511 = vor.u32 %v1506, %v1510
      %v1513 = vshll.u32 %v1486, 16
      %v1515 = vrot.slane %v1513, 1
      %v1516 = vsel %vm1207, %v1511, %v1515
      %v1518 = vshrl.u32 %v1455, 16
      %v1520 = vshll.u32 %v1455, 16
      %v1522 = vrot.slane %v1520, 1
      %v1523 = vor.u32 %v1518, %v1522
      %v1525 = vshll.u32 %v1487, 16
      %v1527 = vrot.slane %v1525, 1
      %v1528 = vsel %vm1207, %v1523, %v1527
      %v1530 = vshrl.u32 %v1456, 16
      %v1532 = vshll.u32 %v1456, 16
      %v1534 = vrot.slane %v1532, 1
      %v1535 = vor.u32 %v1530, %v1534
      %v1537 = vshll.u32 %v1488, 16
      %v1539 = vrot.slane %v1537, 1
      %v1540 = vsel %vm1207, %v1535, %v1539
      %v1542 = vshrl.u32 %v1457, 16
      %v1544 = vshll.u32 %v1457, 16
      %v1546 = vrot.slane %v1544, 1
      %v1547 = vor.u32 %v1542, %v1546
      %v1549 = vshll.u32 %v1489, 16
      %v1551 = vrot.slane %v1549, 1
      %v1552 = vsel %vm1207, %v1547, %v1551
      %v1554 = vshrl.u32 %v1458, 16
      %v1556 = vshll.u32 %v1458, 16
      %v1558 = vrot.slane %v1556, 1
      %v1559 = vor.u32 %v1554, %v1558
      %v1561 = vshll.u32 %v1490, 16
      %v1563 = vrot.slane %v1561, 1
      %v1564 = vsel %vm1207, %v1559, %v1563
      %v1566 = vshrl.u32 %v1459, 16
      %v1568 = vshll.u32 %v1459, 16
      %v1570 = vrot.slane %v1568, 1
      %v1571 = vor.u32 %v1566, %v1570
      %v1573 = vshll.u32 %v1491, 16
      %v1575 = vrot.slane %v1573, 1
      %v1576 = vsel %vm1207, %v1571, %v1575
      %v1578 = vshrl.u32 %v1460, 16
      %v1580 = vshll.u32 %v1460, 16
      %v1582 = vrot.slane %v1580, 1
      %v1583 = vor.u32 %v1578, %v1582
      %v1585 = vshll.u32 %v1492, 16
      %v1587 = vrot.slane %v1585, 1
      %v1588 = vsel %vm1207, %v1583, %v1587
      %v1597 = vrot.slane %v1453, 1
      %v1598 = vrot.slane %v1485, 1
      %v1599 = vsel %vm1312, %v1597, %v1598
      %v1600 = vrot.slane %v1454, 1
      %v1601 = vrot.slane %v1486, 1
      %v1602 = vsel %vm1312, %v1600, %v1601
      %v1603 = vrot.slane %v1455, 1
      %v1604 = vrot.slane %v1487, 1
      %v1605 = vsel %vm1312, %v1603, %v1604
      %v1606 = vrot.slane %v1456, 1
      %v1607 = vrot.slane %v1488, 1
      %v1608 = vsel %vm1312, %v1606, %v1607
      %v1609 = vrot.slane %v1457, 1
      %v1610 = vrot.slane %v1489, 1
      %v1611 = vsel %vm1312, %v1609, %v1610
      %v1612 = vrot.slane %v1458, 1
      %v1613 = vrot.slane %v1490, 1
      %v1614 = vsel %vm1312, %v1612, %v1613
      %v1615 = vrot.slane %v1459, 1
      %v1616 = vrot.slane %v1491, 1
      %v1617 = vsel %vm1312, %v1615, %v1616
      %v1618 = vrot.slane %v1460, 1
      %v1619 = vrot.slane %v1492, 1
      %v1620 = vsel %vm1312, %v1618, %v1619
      %s1629 = scalar_lea.vmem %s3, 192
      %v1630 = vld [vmem:[%s1629] sm:$0xf]
      %v1631 = vld [vmem:[%s1629 + $0x4] sm:$0xf]
      %v1632 = vld [vmem:[%s1629 + $0x8] sm:$0xf]
      %v1633 = vld [vmem:[%s1629 + $0xc] sm:$0xf]
      %v1634 = vld [vmem:[%s1629 + $0x10] sm:$0xf]
      %v1635 = vld [vmem:[%s1629 + $0x14] sm:$0xf]
      %v1636 = vld [vmem:[%s1629 + $0x18] sm:$0xf]
      %v1637 = vld [vmem:[%s1629 + $0x1c] sm:$0xf]
      %v1638 = vld [vmem:[%s1629 + $0x20] sm:$0xf]
      %v1639 = vld [vmem:[%s1629 + $0x24] sm:$0xf]
      %v1640 = vld [vmem:[%s1629 + $0x28] sm:$0xf]
      %v1641 = vld [vmem:[%s1629 + $0x2c] sm:$0xf]
      %v1642 = vld [vmem:[%s1629 + $0x30] sm:$0xf]
      %v1643 = vld [vmem:[%s1629 + $0x34] sm:$0xf]
      %v1644 = vld [vmem:[%s1629 + $0x38] sm:$0xf]
      %v1645 = vld [vmem:[%s1629 + $0x3c] sm:$0xf]
      %v1646 = vld [vmem:[%s1629 + $0x40] sm:$0xf]
      %v1647 = vld [vmem:[%s1629 + $0x44] sm:$0xf]
      %v1648 = vld [vmem:[%s1629 + $0x48] sm:$0xf]
      %v1649 = vld [vmem:[%s1629 + $0x4c] sm:$0xf]
      %v1650 = vld [vmem:[%s1629 + $0x50] sm:$0xf]
      %v1651 = vld [vmem:[%s1629 + $0x54] sm:$0xf]
      %v1652 = vld [vmem:[%s1629 + $0x58] sm:$0xf]
      %v1653 = vld [vmem:[%s1629 + $0x5c] sm:$0xf]
      %v1654 = vld [vmem:[%s1629 + $0x60] sm:$0xf]
      %v1655 = vld [vmem:[%s1629 + $0x64] sm:$0xf]
      %v1656 = vld [vmem:[%s1629 + $0x68] sm:$0xf]
      %v1657 = vld [vmem:[%s1629 + $0x6c] sm:$0xf]
      %v1658 = vld [vmem:[%s1629 + $0x70] sm:$0xf]
      %v1659 = vld [vmem:[%s1629 + $0x74] sm:$0xf]
      %v1660 = vld [vmem:[%s1629 + $0x78] sm:$0xf]
      %v1661 = vld [vmem:[%s1629 + $0x7c] sm:$0xf]
      %v1662 = vld [vmem:[%s1629 + $0x80] sm:$0xf]
      %v1663 = vld [vmem:[%s1629 + $0x84] sm:$0xf]
      %v1664 = vld [vmem:[%s1629 + $0x88] sm:$0xf]
      %v1665 = vld [vmem:[%s1629 + $0x8c] sm:$0xf]
      %v1666 = vld [vmem:[%s1629 + $0x90] sm:$0xf]
      %v1667 = vld [vmem:[%s1629 + $0x94] sm:$0xf]
      %v1668 = vld [vmem:[%s1629 + $0x98] sm:$0xf]
      %v1669 = vld [vmem:[%s1629 + $0x9c] sm:$0xf]
      %v1670 = vld [vmem:[%s1629 + $0xa0] sm:$0xf]
      %v1671 = vld [vmem:[%s1629 + $0xa4] sm:$0xf]
      %v1672 = vld [vmem:[%s1629 + $0xa8] sm:$0xf]
      %v1673 = vld [vmem:[%s1629 + $0xac] sm:$0xf]
      %v1674 = vld [vmem:[%s1629 + $0xb0] sm:$0xf]
      %v1675 = vld [vmem:[%s1629 + $0xb4] sm:$0xf]
      %v1676 = vld [vmem:[%s1629 + $0xb8] sm:$0xf]
      %v1677 = vld [vmem:[%s1629 + $0xbc] sm:$0xf]
      %v1726 = vunpack.c.l.b16 %v1630
      %v1727 = vunpack.c.l.b16 %v1631
      %v1728 = vunpack.c.l.b16 %v1632
      %v1729 = vunpack.c.l.b16 %v1633
      %v1730 = vunpack.c.l.b16 %v1634
      %v1731 = vunpack.c.l.b16 %v1635
      %v1732 = vunpack.c.l.b16 %v1636
      %v1733 = vunpack.c.l.b16 %v1637
      %v1734 = vunpack.c.l.b16 %v1638
      %v1735 = vunpack.c.l.b16 %v1639
      %v1736 = vunpack.c.l.b16 %v1640
      %v1737 = vunpack.c.l.b16 %v1641
      %v1738 = vunpack.c.l.b16 %v1642
      %v1739 = vunpack.c.l.b16 %v1643
      %v1740 = vunpack.c.l.b16 %v1644
      %v1741 = vunpack.c.l.b16 %v1645
      %v1742 = vunpack.c.l.b16 %v1646
      %v1743 = vunpack.c.l.b16 %v1647
      %v1744 = vunpack.c.l.b16 %v1648
      %v1745 = vunpack.c.l.b16 %v1649
      %v1746 = vunpack.c.l.b16 %v1650
      %v1747 = vunpack.c.l.b16 %v1651
      %v1748 = vunpack.c.l.b16 %v1652
      %v1749 = vunpack.c.l.b16 %v1653
      %v1750 = vunpack.c.l.b16 %v1654
      %v1751 = vunpack.c.l.b16 %v1655
      %v1752 = vunpack.c.l.b16 %v1656
      %v1753 = vunpack.c.l.b16 %v1657
      %v1754 = vunpack.c.l.b16 %v1658
      %v1755 = vunpack.c.l.b16 %v1659
      %v1756 = vunpack.c.l.b16 %v1660
      %v1757 = vunpack.c.l.b16 %v1661
      %v1758 = vunpack.c.l.b16 %v1662
      %v1759 = vunpack.c.l.b16 %v1663
      %v1760 = vunpack.c.l.b16 %v1664
      %v1761 = vunpack.c.l.b16 %v1665
      %v1762 = vunpack.c.l.b16 %v1666
      %v1763 = vunpack.c.l.b16 %v1667
      %v1764 = vunpack.c.l.b16 %v1668
      %v1765 = vunpack.c.l.b16 %v1669
      %v1766 = vunpack.c.l.b16 %v1670
      %v1767 = vunpack.c.l.b16 %v1671
      %v1768 = vunpack.c.l.b16 %v1672
      %v1769 = vunpack.c.l.b16 %v1673
      %v1770 = vunpack.c.l.b16 %v1674
      %v1771 = vunpack.c.l.b16 %v1675
      %v1772 = vunpack.c.l.b16 %v1676
      %v1773 = vunpack.c.l.b16 %v1677
      %v1774 = vpack.c.b16 %v1727, %v1726
      %v1775 = vpack.c.b16 %v1729, %v1728
      %v1776 = vpack.c.b16 %v1731, %v1730
      %v1777 = vpack.c.b16 %v1733, %v1732
      %v1778 = vpack.c.b16 %v1735, %v1734
      %v1779 = vpack.c.b16 %v1737, %v1736
      %v1780 = vpack.c.b16 %v1739, %v1738
      %v1781 = vpack.c.b16 %v1741, %v1740
      %v1782 = vpack.c.b16 %v1743, %v1742
      %v1783 = vpack.c.b16 %v1745, %v1744
      %v1784 = vpack.c.b16 %v1747, %v1746
      %v1785 = vpack.c.b16 %v1749, %v1748
      %v1786 = vpack.c.b16 %v1751, %v1750
      %v1787 = vpack.c.b16 %v1753, %v1752
      %v1788 = vpack.c.b16 %v1755, %v1754
      %v1789 = vpack.c.b16 %v1757, %v1756
      %v1790 = vpack.c.b16 %v1759, %v1758
      %v1791 = vpack.c.b16 %v1761, %v1760
      %v1792 = vpack.c.b16 %v1763, %v1762
      %v1793 = vpack.c.b16 %v1765, %v1764
      %v1794 = vpack.c.b16 %v1767, %v1766
      %v1795 = vpack.c.b16 %v1769, %v1768
      %v1796 = vpack.c.b16 %v1771, %v1770
      %v1797 = vpack.c.b16 %v1773, %v1772
      %1822 = vmatprep.subr.bf16.mxu0 0
      %1823 = vmatpush1.bf16.msra.mxu0 %v1774
      %1824 = vmatprep.subr.bf16.mxu0 0
      %1825 = vmatpush1.bf16.msra.mxu0 %v1775
      %1826 = vmatprep.subr.bf16.mxu0 0
      %1827 = vmatpush1.bf16.msra.mxu0 %v1776
      %1828 = vmatprep.subr.bf16.mxu0 0
      %1829 = vmatpush1.bf16.msra.mxu0 %v1777
      %1830 = vmatprep.subr.bf16.mxu0 0
      %1831 = vmatpush1.bf16.msra.mxu0 %v1778
      %1832 = vmatprep.subr.bf16.mxu0 0
      %1833 = vmatpush1.bf16.msra.mxu0 %v1779
      %1834 = vmatprep.subr.bf16.mxu0 0
      %1835 = vmatpush1.bf16.msra.mxu0 %v1780
      %1836 = vmatprep.subr.bf16.mxu0 0
      %1837 = vmatpush1.bf16.msra.mxu0 %v1781
      %1838 = vmatprep.subr.bf16.mxu0 0
      %1839 = vmatpush1.bf16.msra.mxu0 %v1782
      %1840 = vmatprep.subr.bf16.mxu0 0
      %1841 = vmatpush1.bf16.msra.mxu0 %v1783
      %1842 = vmatprep.subr.bf16.mxu0 0
      %1843 = vmatpush1.bf16.msra.mxu0 %v1784
      %1844 = vmatprep.subr.bf16.mxu0 0
      %1845 = vmatpush1.bf16.msra.mxu0 %v1785
      %1846 = vmatprep.subr.bf16.mxu0 0
      %1847 = vmatpush1.bf16.msra.mxu0 %v1786
      %1848 = vmatprep.subr.bf16.mxu0 0
      %1849 = vmatpush1.bf16.msra.mxu0 %v1787
      %1850 = vmatprep.subr.bf16.mxu0 0
      %1851 = vmatpush1.bf16.msra.mxu0 %v1788
      %1852 = vmatprep.subr.bf16.mxu0 0
      %1853 = vmatpush1.bf16.msra.mxu0 %v1789
      %1854 = vmatprep.mubr.bf16.mxu0 %v1504
      %1855 = vmatmul.mubr.bf16.gmra.mrb[0].mxu0 %v1453
      %v1856 = vpop.f32.mrb[0].mxu0
      %v1857 = vadd.f32 0.0, %v1856
      %v1858 = vpop.f32.mrb[0].mxu0
      %v1859 = vpop.f32.mrb[0].mxu0
      %v1860 = vadd.f32 0.0, %v1859
      %v1861 = vpop.f32.mrb[0].mxu0
      %1862 = vmatprep.mubr.bf16.mxu0 %v1516
      %1863 = vmatmul.mubr.bf16.gmra.mrb[0].mxu0 %v1454
      %v1864 = vpop.f32.mrb[0].mxu0
      %v1865 = vadd.f32 0.0, %v1864
      %v1866 = vpop.f32.mrb[0].mxu0
      %v1867 = vpop.f32.mrb[0].mxu0
      %v1868 = vadd.f32 0.0, %v1867
      %v1869 = vpop.f32.mrb[0].mxu0
      %1870 = vmatprep.mubr.bf16.mxu0 %v1528
      %1871 = vmatmul.mubr.bf16.gmra.mrb[0].mxu0 %v1455
      %v1872 = vpop.f32.mrb[0].mxu0
      %v1873 = vadd.f32 0.0, %v1872
      %v1874 = vpop.f32.mrb[0].mxu0
      %v1875 = vpop.f32.mrb[0].mxu0
      %v1876 = vadd.f32 0.0, %v1875
      %v1877 = vpop.f32.mrb[0].mxu0
      %1878 = vmatprep.mubr.bf16.mxu0 %v1540
      %1879 = vmatmul.mubr.bf16.gmra.mrb[0].mxu0 %v1456
      %v1880 = vpop.f32.mrb[0].mxu0
      %v1881 = vadd.f32 0.0, %v1880
      %v1882 = vpop.f32.mrb[0].mxu0
      %v1883 = vpop.f32.mrb[0].mxu0
      %v1884 = vadd.f32 0.0, %v1883
      %v1885 = vpop.f32.mrb[0].mxu0
      %1886 = vmatprep.mubr.bf16.mxu0 %v1552
      %1887 = vmatmul.mubr.bf16.gmra.mrb[0].mxu0 %v1457
      %v1888 = vpop.f32.mrb[0].mxu0
      %v1889 = vadd.f32 0.0, %v1888
      %v1890 = vpop.f32.mrb[0].mxu0
      %v1891 = vpop.f32.mrb[0].mxu0
      %v1892 = vadd.f32 0.0, %v1891
      %v1893 = vpop.f32.mrb[0].mxu0
      %1894 = vmatprep.mubr.bf16.mxu0 %v1564
      %1895 = vmatmul.mubr.bf16.gmra.mrb[0].mxu0 %v1458
      %v1896 = vpop.f32.mrb[0].mxu0
      %v1897 = vadd.f32 0.0, %v1896
      %v1898 = vpop.f32.mrb[0].mxu0
      %v1899 = vpop.f32.mrb[0].mxu0
      %v1900 = vadd.f32 0.0, %v1899
      %v1901 = vpop.f32.mrb[0].mxu0
      %1902 = vmatprep.mubr.bf16.mxu0 %v1576
      %1903 = vmatmul.mubr.bf16.gmra.mrb[0].mxu0 %v1459
      %v1904 = vpop.f32.mrb[0].mxu0
      %v1905 = vadd.f32 0.0, %v1904
      %v1906 = vpop.f32.mrb[0].mxu0
      %v1907 = vpop.f32.mrb[0].mxu0
      %v1908 = vadd.f32 0.0, %v1907
      %v1909 = vpop.f32.mrb[0].mxu0
      %1910 = vmatprep.mubr.bf16.mxu0 %v1588
      %1911 = vmatmul.mubr.bf16.gmra.mrb[0].mxu0 %v1460
      %v1912 = vpop.f32.mrb[0].mxu0
      %v1913 = vadd.f32 0.0, %v1912
      %v1914 = vpop.f32.mrb[0].mxu0
      %v1915 = vpop.f32.mrb[0].mxu0
      %v1916 = vadd.f32 0.0, %v1915
      %v1917 = vpop.f32.mrb[0].mxu0
      %1918 = vdwg.mxu0
      %1919 = vmatprep.subr.bf16.mxu0 0
      %1920 = vmatpush1.bf16.msra.mxu0 %v1790
      %1921 = vmatprep.subr.bf16.mxu0 0
      %1922 = vmatpush1.bf16.msra.mxu0 %v1791
      %1923 = vmatprep.subr.bf16.mxu0 0
      %1924 = vmatpush1.bf16.msra.mxu0 %v1792
      %1925 = vmatprep.subr.bf16.mxu0 0
      %1926 = vmatpush1.bf16.msra.mxu0 %v1793
      %1927 = vmatprep.subr.bf16.mxu0 0
      %1928 = vmatpush1.bf16.msra.mxu0 %v1794
      %1929 = vmatprep.subr.bf16.mxu0 0
      %1930 = vmatpush1.bf16.msra.mxu0 %v1795
      %1931 = vmatprep.subr.bf16.mxu0 0
      %1932 = vmatpush1.bf16.msra.mxu0 %v1796
      %1933 = vmatprep.subr.bf16.mxu0 0
      %1934 = vmatpush1.bf16.msra.mxu0 %v1797
      %1935 = vmatprep.subr.bf16.mxu0 0
      %1936 = vmatpush1.bf16.msra.mxu0 0
      %1937 = vmatprep.subr.bf16.mxu0 0
      %1938 = vmatpush1.bf16.msra.mxu0 0
      %1939 = vmatprep.subr.bf16.mxu0 0
      %1940 = vmatpush1.bf16.msra.mxu0 0
      %1941 = vmatprep.subr.bf16.mxu0 0
      %1942 = vmatpush1.bf16.msra.mxu0 0
      %1943 = vmatprep.subr.bf16.mxu0 0
      %1944 = vmatpush1.bf16.msra.mxu0 0
      %1945 = vmatprep.subr.bf16.mxu0 0
      %1946 = vmatpush1.bf16.msra.mxu0 0
      %1947 = vmatprep.subr.bf16.mxu0 0
      %1948 = vmatpush1.bf16.msra.mxu0 0
      %1949 = vmatprep.subr.bf16.mxu0 0
      %1950 = vmatpush1.bf16.msra.mxu0 0
      %1951 = vmatprep.mubr.bf16.mxu0 0
      %1952 = vmatmul.mubr.bf16.gmra.mrb[0].mxu0 %v1599
      %v1953 = vpop.f32.mrb[0].mxu0
      %v1954 = vadd.f32 %v1857, %v1953
      %v1955 = vpop.f32.mrb[0].mxu0
      %v1956 = vpop.f32.mrb[0].mxu0
      %v1957 = vadd.f32 %v1860, %v1956
      %v1958 = vpop.f32.mrb[0].mxu0
      %1959 = vmatprep.mubr.bf16.mxu0 0
      %1960 = vmatmul.mubr.bf16.gmra.mrb[0].mxu0 %v1602
      %v1961 = vpop.f32.mrb[0].mxu0
      %v1962 = vadd.f32 %v1865, %v1961
      %v1963 = vpop.f32.mrb[0].mxu0
      %v1964 = vpop.f32.mrb[0].mxu0
      %v1965 = vadd.f32 %v1868, %v1964
      %v1966 = vpop.f32.mrb[0].mxu0
      %1967 = vmatprep.mubr.bf16.mxu0 0
      %1968 = vmatmul.mubr.bf16.gmra.mrb[0].mxu0 %v1605
      %v1969 = vpop.f32.mrb[0].mxu0
      %v1970 = vadd.f32 %v1873, %v1969
      %v1971 = vpop.f32.mrb[0].mxu0
      %v1972 = vpop.f32.mrb[0].mxu0
      %v1973 = vadd.f32 %v1876, %v1972
      %v1974 = vpop.f32.mrb[0].mxu0
      %1975 = vmatprep.mubr.bf16.mxu0 0
      %1976 = vmatmul.mubr.bf16.gmra.mrb[0].mxu0 %v1608
      %v1977 = vpop.f32.mrb[0].mxu0
      %v1978 = vadd.f32 %v1881, %v1977
      %v1979 = vpop.f32.mrb[0].mxu0
      %v1980 = vpop.f32.mrb[0].mxu0
      %v1981 = vadd.f32 %v1884, %v1980
      %v1982 = vpop.f32.mrb[0].mxu0
      %1983 = vmatprep.mubr.bf16.mxu0 0
      %1984 = vmatmul.mubr.bf16.gmra.mrb[0].mxu0 %v1611
      %v1985 = vpop.f32.mrb[0].mxu0
      %v1986 = vadd.f32 %v1889, %v1985
      %v1987 = vpop.f32.mrb[0].mxu0
      %v1988 = vpop.f32.mrb[0].mxu0
      %v1989 = vadd.f32 %v1892, %v1988
      %v1990 = vpop.f32.mrb[0].mxu0
      %1991 = vmatprep.mubr.bf16.mxu0 0
      %1992 = vmatmul.mubr.bf16.gmra.mrb[0].mxu0 %v1614
      %v1993 = vpop.f32.mrb[0].mxu0
      %v1994 = vadd.f32 %v1897, %v1993
      %v1995 = vpop.f32.mrb[0].mxu0
      %v1996 = vpop.f32.mrb[0].mxu0
      %v1997 = vadd.f32 %v1900, %v1996
      %v1998 = vpop.f32.mrb[0].mxu0
      %1999 = vmatprep.mubr.bf16.mxu0 0
      %2000 = vmatmul.mubr.bf16.gmra.mrb[0].mxu0 %v1617
      %v2001 = vpop.f32.mrb[0].mxu0
      %v2002 = vadd.f32 %v1905, %v2001
      %v2003 = vpop.f32.mrb[0].mxu0
      %v2004 = vpop.f32.mrb[0].mxu0
      %v2005 = vadd.f32 %v1908, %v2004
      %v2006 = vpop.f32.mrb[0].mxu0
      %2007 = vmatprep.mubr.bf16.mxu0 0
      %2008 = vmatmul.mubr.bf16.gmra.mrb[0].mxu0 %v1620
      %v2009 = vpop.f32.mrb[0].mxu0
      %v2010 = vadd.f32 %v1913, %v2009
      %v2011 = vpop.f32.mrb[0].mxu0
      %v2012 = vpop.f32.mrb[0].mxu0
      %v2013 = vadd.f32 %v1916, %v2012
      %v2014 = vpop.f32.mrb[0].mxu0
      %2015 = vdwg.mxu0
      %v2064 = vunpack.c.l.b16 %v1345
      %v2065 = vunpack.c.l.b16 %v1346
      %v2066 = vunpack.c.l.b16 %v1347
      %v2067 = vunpack.c.l.b16 %v1348
      %v2068 = vunpack.c.l.b16 %v1349
      %v2069 = vunpack.c.l.b16 %v1350
      %v2070 = vunpack.c.l.b16 %v1351
      %v2071 = vunpack.c.l.b16 %v1352
      %v2072 = vunpack.c.l.b16 %v1353
      %v2073 = vunpack.c.l.b16 %v1354
      %v2074 = vunpack.c.l.b16 %v1355
      %v2075 = vunpack.c.l.b16 %v1356
      %v2076 = vunpack.c.l.b16 %v1357
      %v2077 = vunpack.c.l.b16 %v1358
      %v2078 = vunpack.c.l.b16 %v1359
      %v2079 = vunpack.c.l.b16 %v1360
      %v2080 = vunpack.c.l.b16 %v1361
      %v2081 = vunpack.c.l.b16 %v1362
      %v2082 = vunpack.c.l.b16 %v1363
      %v2083 = vunpack.c.l.b16 %v1364
      %v2084 = vunpack.c.l.b16 %v1365
      %v2085 = vunpack.c.l.b16 %v1366
      %v2086 = vunpack.c.l.b16 %v1367
      %v2087 = vunpack.c.l.b16 %v1368
      %v2088 = vunpack.c.l.b16 %v1369
      %v2089 = vunpack.c.l.b16 %v1370
      %v2090 = vunpack.c.l.b16 %v1371
      %v2091 = vunpack.c.l.b16 %v1372
      %v2092 = vunpack.c.l.b16 %v1373
      %v2093 = vunpack.c.l.b16 %v1374
      %v2094 = vunpack.c.l.b16 %v1375
      %v2095 = vunpack.c.l.b16 %v1376
      %v2096 = vunpack.c.l.b16 %v1377
      %v2097 = vunpack.c.l.b16 %v1378
      %v2098 = vunpack.c.l.b16 %v1379
      %v2099 = vunpack.c.l.b16 %v1380
      %v2100 = vunpack.c.l.b16 %v1381
      %v2101 = vunpack.c.l.b16 %v1382
      %v2102 = vunpack.c.l.b16 %v1383
      %v2103 = vunpack.c.l.b16 %v1384
      %v2104 = vunpack.c.l.b16 %v1385
      %v2105 = vunpack.c.l.b16 %v1386
      %v2106 = vunpack.c.l.b16 %v1387
      %v2107 = vunpack.c.l.b16 %v1388
      %v2108 = vunpack.c.l.b16 %v1389
      %v2109 = vunpack.c.l.b16 %v1390
      %v2110 = vunpack.c.l.b16 %v1391
      %v2111 = vunpack.c.l.b16 %v1392
      %v2112 = vpack.c.b16 %v2065, %v2064
      %v2113 = vpack.c.b16 %v2067, %v2066
      %v2114 = vpack.c.b16 %v2069, %v2068
      %v2115 = vpack.c.b16 %v2071, %v2070
      %v2116 = vpack.c.b16 %v2073, %v2072
      %v2117 = vpack.c.b16 %v2075, %v2074
      %v2118 = vpack.c.b16 %v2077, %v2076
      %v2119 = vpack.c.b16 %v2079, %v2078
      %v2120 = vpack.c.b16 %v2081, %v2080
      %v2121 = vpack.c.b16 %v2083, %v2082
      %v2122 = vpack.c.b16 %v2085, %v2084
      %v2123 = vpack.c.b16 %v2087, %v2086
      %v2124 = vpack.c.b16 %v2089, %v2088
      %v2125 = vpack.c.b16 %v2091, %v2090
      %v2126 = vpack.c.b16 %v2093, %v2092
      %v2127 = vpack.c.b16 %v2095, %v2094
      %v2128 = vpack.c.b16 %v2097, %v2096
      %v2129 = vpack.c.b16 %v2099, %v2098
      %v2130 = vpack.c.b16 %v2101, %v2100
      %v2131 = vpack.c.b16 %v2103, %v2102
      %v2132 = vpack.c.b16 %v2105, %v2104
      %v2133 = vpack.c.b16 %v2107, %v2106
      %v2134 = vpack.c.b16 %v2109, %v2108
      %v2135 = vpack.c.b16 %v2111, %v2110
      %2160 = vmatprep.subr.bf16.mxu0 0
      %2161 = vmatpush1.bf16.msra.mxu0 %v2112
      %2162 = vmatprep.subr.bf16.mxu0 0
      %2163 = vmatpush1.bf16.msra.mxu0 %v2113
      %2164 = vmatprep.subr.bf16.mxu0 0
      %2165 = vmatpush1.bf16.msra.mxu0 %v2114
      %2166 = vmatprep.subr.bf16.mxu0 0
      %2167 = vmatpush1.bf16.msra.mxu0 %v2115
      %2168 = vmatprep.subr.bf16.mxu0 0
      %2169 = vmatpush1.bf16.msra.mxu0 %v2116
      %2170 = vmatprep.subr.bf16.mxu0 0
      %2171 = vmatpush1.bf16.msra.mxu0 %v2117
      %2172 = vmatprep.subr.bf16.mxu0 0
      %2173 = vmatpush1.bf16.msra.mxu0 %v2118
      %2174 = vmatprep.subr.bf16.mxu0 0
      %2175 = vmatpush1.bf16.msra.mxu0 %v2119
      %2176 = vmatprep.subr.bf16.mxu0 0
      %2177 = vmatpush1.bf16.msra.mxu0 %v2120
      %2178 = vmatprep.subr.bf16.mxu0 0
      %2179 = vmatpush1.bf16.msra.mxu0 %v2121
      %2180 = vmatprep.subr.bf16.mxu0 0
      %2181 = vmatpush1.bf16.msra.mxu0 %v2122
      %2182 = vmatprep.subr.bf16.mxu0 0
      %2183 = vmatpush1.bf16.msra.mxu0 %v2123
      %2184 = vmatprep.subr.bf16.mxu0 0
      %2185 = vmatpush1.bf16.msra.mxu0 %v2124
      %2186 = vmatprep.subr.bf16.mxu0 0
      %2187 = vmatpush1.bf16.msra.mxu0 %v2125
      %2188 = vmatprep.subr.bf16.mxu0 0
      %2189 = vmatpush1.bf16.msra.mxu0 %v2126
      %2190 = vmatprep.subr.bf16.mxu0 0
      %2191 = vmatpush1.bf16.msra.mxu0 %v2127
      %2192 = vmatprep.mubr.bf16.mxu0 %v1219
      %2193 = vmatmul.mubr.bf16.gmra.mrb[0].mxu0 %v1167
      %v2194 = vpop.f32.mrb[0].mxu0
      %v2195 = vadd.f32 %v1954, %v2194
      %v2196 = vpop.f32.mrb[0].mxu0
      %v2197 = vpop.f32.mrb[0].mxu0
      %v2198 = vadd.f32 %v1957, %v2197
      %v2199 = vpop.f32.mrb[0].mxu0
      %2200 = vmatprep.mubr.bf16.mxu0 %v1231
      %2201 = vmatmul.mubr.bf16.gmra.mrb[0].mxu0 %v1168
      %v2202 = vpop.f32.mrb[0].mxu0
      %v2203 = vadd.f32 %v1962, %v2202
      %v2204 = vpop.f32.mrb[0].mxu0
      %v2205 = vpop.f32.mrb[0].mxu0
      %v2206 = vadd.f32 %v1965, %v2205
      %v2207 = vpop.f32.mrb[0].mxu0
      %2208 = vmatprep.mubr.bf16.mxu0 %v1243
      %2209 = vmatmul.mubr.bf16.gmra.mrb[0].mxu0 %v1169
      %v2210 = vpop.f32.mrb[0].mxu0
      %v2211 = vadd.f32 %v1970, %v2210
      %v2212 = vpop.f32.mrb[0].mxu0
      %v2213 = vpop.f32.mrb[0].mxu0
      %v2214 = vadd.f32 %v1973, %v2213
      %v2215 = vpop.f32.mrb[0].mxu0
      %2216 = vmatprep.mubr.bf16.mxu0 %v1255
      %2217 = vmatmul.mubr.bf16.gmra.mrb[0].mxu0 %v1170
      %v2218 = vpop.f32.mrb[0].mxu0
      %v2219 = vadd.f32 %v1978, %v2218
      %v2220 = vpop.f32.mrb[0].mxu0
      %v2221 = vpop.f32.mrb[0].mxu0
      %v2222 = vadd.f32 %v1981, %v2221
      %v2223 = vpop.f32.mrb[0].mxu0
      %2224 = vmatprep.mubr.bf16.mxu0 %v1267
      %2225 = vmatmul.mubr.bf16.gmra.mrb[0].mxu0 %v1171
      %v2226 = vpop.f32.mrb[0].mxu0
      %v2227 = vadd.f32 %v1986, %v2226
      %v2228 = vpop.f32.mrb[0].mxu0
      %v2229 = vpop.f32.mrb[0].mxu0
      %v2230 = vadd.f32 %v1989, %v2229
      %v2231 = vpop.f32.mrb[0].mxu0
      %2232 = vmatprep.mubr.bf16.mxu0 %v1279
      %2233 = vmatmul.mubr.bf16.gmra.mrb[0].mxu0 %v1172
      %v2234 = vpop.f32.mrb[0].mxu0
      %v2235 = vadd.f32 %v1994, %v2234
      %v2236 = vpop.f32.mrb[0].mxu0
      %v2237 = vpop.f32.mrb[0].mxu0
      %v2238 = vadd.f32 %v1997, %v2237
      %v2239 = vpop.f32.mrb[0].mxu0
      %2240 = vmatprep.mubr.bf16.mxu0 %v1291
      %2241 = vmatmul.mubr.bf16.gmra.mrb[0].mxu0 %v1173
      %v2242 = vpop.f32.mrb[0].mxu0
      %v2243 = vadd.f32 %v2002, %v2242
      %v2244 = vpop.f32.mrb[0].mxu0
      %v2245 = vpop.f32.mrb[0].mxu0
      %v2246 = vadd.f32 %v2005, %v2245
      %v2247 = vpop.f32.mrb[0].mxu0
      %2248 = vmatprep.mubr.bf16.mxu0 %v1303
      %2249 = vmatmul.mubr.bf16.gmra.mrb[0].mxu0 %v1174
      %v2250 = vpop.f32.mrb[0].mxu0
      %v2251 = vadd.f32 %v2010, %v2250
      %v2252 = vpop.f32.mrb[0].mxu0
      %v2253 = vpop.f32.mrb[0].mxu0
      %v2254 = vadd.f32 %v2013, %v2253
      %v2255 = vpop.f32.mrb[0].mxu0
      %2256 = vdwg.mxu0
      %2257 = vmatprep.subr.bf16.mxu0 0
      %2258 = vmatpush1.bf16.msra.mxu0 %v2128
      %2259 = vmatprep.subr.bf16.mxu0 0
      %2260 = vmatpush1.bf16.msra.mxu0 %v2129
      %2261 = vmatprep.subr.bf16.mxu0 0
      %2262 = vmatpush1.bf16.msra.mxu0 %v2130
      %2263 = vmatprep.subr.bf16.mxu0 0
      %2264 = vmatpush1.bf16.msra.mxu0 %v2131
      %2265 = vmatprep.subr.bf16.mxu0 0
      %2266 = vmatpush1.bf16.msra.mxu0 %v2132
      %2267 = vmatprep.subr.bf16.mxu0 0
      %2268 = vmatpush1.bf16.msra.mxu0 %v2133
      %2269 = vmatprep.subr.bf16.mxu0 0
      %2270 = vmatpush1.bf16.msra.mxu0 %v2134
      %2271 = vmatprep.subr.bf16.mxu0 0
      %2272 = vmatpush1.bf16.msra.mxu0 %v2135
      %2273 = vmatprep.subr.bf16.mxu0 0
      %2274 = vmatpush1.bf16.msra.mxu0 0
      %2275 = vmatprep.subr.bf16.mxu0 0
      %2276 = vmatpush1.bf16.msra.mxu0 0
      %2277 = vmatprep.subr.bf16.mxu0 0
      %2278 = vmatpush1.bf16.msra.mxu0 0
      %2279 = vmatprep.subr.bf16.mxu0 0
      %2280 = vmatpush1.bf16.msra.mxu0 0
      %2281 = vmatprep.subr.bf16.mxu0 0
      %2282 = vmatpush1.bf16.msra.mxu0 0
      %2283 = vmatprep.subr.bf16.mxu0 0
      %2284 = vmatpush1.bf16.msra.mxu0 0
      %2285 = vmatprep.subr.bf16.mxu0 0
      %2286 = vmatpush1.bf16.msra.mxu0 0
      %2287 = vmatprep.subr.bf16.mxu0 0
      %2288 = vmatpush1.bf16.msra.mxu0 0
      %2289 = vmatprep.mubr.bf16.mxu0 0
      %2290 = vmatmul.mubr.bf16.gmra.mrb[0].mxu0 %v1315
      %v2291 = vpop.f32.mrb[0].mxu0
      %v2292 = vadd.f32 %v2195, %v2291
      %v2293 = vpop.f32.mrb[0].mxu0
      %v2294 = vpop.f32.mrb[0].mxu0
      %v2295 = vadd.f32 %v2198, %v2294
      %v2296 = vpop.f32.mrb[0].mxu0
      %2297 = vmatprep.mubr.bf16.mxu0 0
      %2298 = vmatmul.mubr.bf16.gmra.mrb[0].mxu0 %v1318
      %v2299 = vpop.f32.mrb[0].mxu0
      %v2300 = vadd.f32 %v2203, %v2299
      %v2301 = vpop.f32.mrb[0].mxu0
      %v2302 = vpop.f32.mrb[0].mxu0
      %v2303 = vadd.f32 %v2206, %v2302
      %v2304 = vpop.f32.mrb[0].mxu0
      %2305 = vmatprep.mubr.bf16.mxu0 0
      %2306 = vmatmul.mubr.bf16.gmra.mrb[0].mxu0 %v1321
      %v2307 = vpop.f32.mrb[0].mxu0
      %v2308 = vadd.f32 %v2211, %v2307
      %v2309 = vpop.f32.mrb[0].mxu0
      %v2310 = vpop.f32.mrb[0].mxu0
      %v2311 = vadd.f32 %v2214, %v2310
      %v2312 = vpop.f32.mrb[0].mxu0
      %2313 = vmatprep.mubr.bf16.mxu0 0
      %2314 = vmatmul.mubr.bf16.gmra.mrb[0].mxu0 %v1324
      %v2315 = vpop.f32.mrb[0].mxu0
      %v2316 = vadd.f32 %v2219, %v2315
      %v2317 = vpop.f32.mrb[0].mxu0
      %v2318 = vpop.f32.mrb[0].mxu0
      %v2319 = vadd.f32 %v2222, %v2318
      %v2320 = vpop.f32.mrb[0].mxu0
      %2321 = vmatprep.mubr.bf16.mxu0 0
      %2322 = vmatmul.mubr.bf16.gmra.mrb[0].mxu0 %v1327
      %v2323 = vpop.f32.mrb[0].mxu0
      %v2324 = vadd.f32 %v2227, %v2323
      %v2325 = vpop.f32.mrb[0].mxu0
      %v2326 = vpop.f32.mrb[0].mxu0
      %v2327 = vadd.f32 %v2230, %v2326
      %v2328 = vpop.f32.mrb[0].mxu0
      %2329 = vmatprep.mubr.bf16.mxu0 0
      %2330 = vmatmul.mubr.bf16.gmra.mrb[0].mxu0 %v1330
      %v2331 = vpop.f32.mrb[0].mxu0
      %v2332 = vadd.f32 %v2235, %v2331
      %v2333 = vpop.f32.mrb[0].mxu0
      %v2334 = vpop.f32.mrb[0].mxu0
      %v2335 = vadd.f32 %v2238, %v2334
      %v2336 = vpop.f32.mrb[0].mxu0
      %2337 = vmatprep.mubr.bf16.mxu0 0
      %2338 = vmatmul.mubr.bf16.gmra.mrb[0].mxu0 %v1333
      %v2339 = vpop.f32.mrb[0].mxu0
      %v2340 = vadd.f32 %v2243, %v2339
      %v2341 = vpop.f32.mrb[0].mxu0
      %v2342 = vpop.f32.mrb[0].mxu0
      %v2343 = vadd.f32 %v2246, %v2342
      %v2344 = vpop.f32.mrb[0].mxu0
      %2345 = vmatprep.mubr.bf16.mxu0 0
      %2346 = vmatmul.mubr.bf16.gmra.mrb[0].mxu0 %v1336
      %v2347 = vpop.f32.mrb[0].mxu0
      %v2348 = vadd.f32 %v2251, %v2347
      %v2349 = vpop.f32.mrb[0].mxu0
      %v2350 = vpop.f32.mrb[0].mxu0
      %v2351 = vadd.f32 %v2254, %v2350
      %v2352 = vpop.f32.mrb[0].mxu0
      %2353 = vdwg.mxu0
      %s2354 = sadd.s32 %s1107, 2
      %s2355 = smul.u32 %s2354, 3
      %s2356 = smul.addr %s2355, 4
      %s2357 = scalar_lea.vmem [#allocation2], %s2356
      %v2358 = vld [vmem:[%s2357] sm:$0xf]
      %v2359 = vld [vmem:[%s2357 + $0x4] sm:$0xf]
      %v2360 = vld [vmem:[%s2357 + $0x8] sm:$0x1]
      %v2361 = vld [vmem:[%s2357 + $0xc] sm:$0xf]
      %v2362 = vld [vmem:[%s2357 + $0x10] sm:$0xf]
      %v2363 = vld [vmem:[%s2357 + $0x14] sm:$0x1]
      %v2364 = vld [vmem:[%s2357 + $0x18] sm:$0xf]
      %v2365 = vld [vmem:[%s2357 + $0x1c] sm:$0xf]
      %v2366 = vld [vmem:[%s2357 + $0x20] sm:$0x1]
      %v2367 = vld [vmem:[%s2357 + $0x24] sm:$0xf]
      %v2368 = vld [vmem:[%s2357 + $0x28] sm:$0xf]
      %v2369 = vld [vmem:[%s2357 + $0x2c] sm:$0x1]
      %v2370 = vld [vmem:[%s2357 + $0x30] sm:$0xf]
      %v2371 = vld [vmem:[%s2357 + $0x34] sm:$0xf]
      %v2372 = vld [vmem:[%s2357 + $0x38] sm:$0x1]
      %v2373 = vld [vmem:[%s2357 + $0x3c] sm:$0xf]
      %v2374 = vld [vmem:[%s2357 + $0x40] sm:$0xf]
      %v2375 = vld [vmem:[%s2357 + $0x44] sm:$0x1]
      %v2376 = vld [vmem:[%s2357 + $0x48] sm:$0xf]
      %v2377 = vld [vmem:[%s2357 + $0x4c] sm:$0xf]
      %v2378 = vld [vmem:[%s2357 + $0x50] sm:$0x1]
      %v2379 = vld [vmem:[%s2357 + $0x54] sm:$0xf]
      %v2380 = vld [vmem:[%s2357 + $0x58] sm:$0xf]
      %v2381 = vld [vmem:[%s2357 + $0x5c] sm:$0x1]
      %v2398 = vunpack.c.l.b16 %v2358
      %v2399 = vunpack.c.l.b16 %v2359
      %v2400 = vunpack.c.l.b16 %v2361
      %v2401 = vunpack.c.l.b16 %v2362
      %v2402 = vunpack.c.l.b16 %v2364
      %v2403 = vunpack.c.l.b16 %v2365
      %v2404 = vunpack.c.l.b16 %v2367
      %v2405 = vunpack.c.l.b16 %v2368
      %v2406 = vunpack.c.l.b16 %v2370
      %v2407 = vunpack.c.l.b16 %v2371
      %v2408 = vunpack.c.l.b16 %v2373
      %v2409 = vunpack.c.l.b16 %v2374
      %v2410 = vunpack.c.l.b16 %v2376
      %v2411 = vunpack.c.l.b16 %v2377
      %v2412 = vunpack.c.l.b16 %v2379
      %v2413 = vunpack.c.l.b16 %v2380
      %v2414 = vpack.c.b16 %v2399, %v2398
      %v2415 = vpack.c.b16 %v2401, %v2400
      %v2416 = vpack.c.b16 %v2403, %v2402
      %v2417 = vpack.c.b16 %v2405, %v2404
      %v2418 = vpack.c.b16 %v2407, %v2406
      %v2419 = vpack.c.b16 %v2409, %v2408
      %v2420 = vpack.c.b16 %v2411, %v2410
      %v2421 = vpack.c.b16 %v2413, %v2412
      %v2438 = vunpack.c.l.b16 %v2360
      %v2439 = vunpack.c.l.b16 %v2363
      %v2440 = vunpack.c.l.b16 %v2366
      %v2441 = vunpack.c.l.b16 %v2369
      %v2442 = vunpack.c.l.b16 %v2372
      %v2443 = vunpack.c.l.b16 %v2375
      %v2444 = vunpack.c.l.b16 %v2378
      %v2445 = vunpack.c.l.b16 %v2381
      %v2446 = vpack.c.b16 %v2438, %v2438
      %v2447 = vpack.c.b16 %v2439, %v2439
      %v2448 = vpack.c.b16 %v2440, %v2440
      %v2449 = vpack.c.b16 %v2441, %v2441
      %v2450 = vpack.c.b16 %v2442, %v2442
      %v2451 = vpack.c.b16 %v2443, %v2443
      %v2452 = vpack.c.b16 %v2444, %v2444
      %v2453 = vpack.c.b16 %v2445, %v2445
      %v2455 = vshrl.u32 %v2414, 16
      %v2457 = vshll.u32 %v2414, 16
      %v2459 = vrot.slane %v2457, 1
      %v2460 = vor.u32 %v2455, %v2459
      %v2462 = vshll.u32 %v2446, 16
      %v2464 = vrot.slane %v2462, 1
      %v2465 = vsel %vm1207, %v2460, %v2464
      %v2467 = vshrl.u32 %v2415, 16
      %v2469 = vshll.u32 %v2415, 16
      %v2471 = vrot.slane %v2469, 1
      %v2472 = vor.u32 %v2467, %v2471
      %v2474 = vshll.u32 %v2447, 16
      %v2476 = vrot.slane %v2474, 1
      %v2477 = vsel %vm1207, %v2472, %v2476
      %v2479 = vshrl.u32 %v2416, 16
      %v2481 = vshll.u32 %v2416, 16
      %v2483 = vrot.slane %v2481, 1
      %v2484 = vor.u32 %v2479, %v2483
      %v2486 = vshll.u32 %v2448, 16
      %v2488 = vrot.slane %v2486, 1
      %v2489 = vsel %vm1207, %v2484, %v2488
      %v2491 = vshrl.u32 %v2417, 16
      %v2493 = vshll.u32 %v2417, 16
      %v2495 = vrot.slane %v2493, 1
      %v2496 = vor.u32 %v2491, %v2495
      %v2498 = vshll.u32 %v2449, 16
      %v2500 = vrot.slane %v2498, 1
      %v2501 = vsel %vm1207, %v2496, %v2500
      %v2503 = vshrl.u32 %v2418, 16
      %v2505 = vshll.u32 %v2418, 16
      %v2507 = vrot.slane %v2505, 1
      %v2508 = vor.u32 %v2503, %v2507
      %v2510 = vshll.u32 %v2450, 16
      %v2512 = vrot.slane %v2510, 1
      %v2513 = vsel %vm1207, %v2508, %v2512
      %v2515 = vshrl.u32 %v2419, 16
      %v2517 = vshll.u32 %v2419, 16
      %v2519 = vrot.slane %v2517, 1
      %v2520 = vor.u32 %v2515, %v2519
      %v2522 = vshll.u32 %v2451, 16
      %v2524 = vrot.slane %v2522, 1
      %v2525 = vsel %vm1207, %v2520, %v2524
      %v2527 = vshrl.u32 %v2420, 16
      %v2529 = vshll.u32 %v2420, 16
      %v2531 = vrot.slane %v2529, 1
      %v2532 = vor.u32 %v2527, %v2531
      %v2534 = vshll.u32 %v2452, 16
      %v2536 = vrot.slane %v2534, 1
      %v2537 = vsel %vm1207, %v2532, %v2536
      %v2539 = vshrl.u32 %v2421, 16
      %v2541 = vshll.u32 %v2421, 16
      %v2543 = vrot.slane %v2541, 1
      %v2544 = vor.u32 %v2539, %v2543
      %v2546 = vshll.u32 %v2453, 16
      %v2548 = vrot.slane %v2546, 1
      %v2549 = vsel %vm1207, %v2544, %v2548
      %v2558 = vrot.slane %v2414, 1
      %v2559 = vrot.slane %v2446, 1
      %v2560 = vsel %vm1312, %v2558, %v2559
      %v2561 = vrot.slane %v2415, 1
      %v2562 = vrot.slane %v2447, 1
      %v2563 = vsel %vm1312, %v2561, %v2562
      %v2564 = vrot.slane %v2416, 1
      %v2565 = vrot.slane %v2448, 1
      %v2566 = vsel %vm1312, %v2564, %v2565
      %v2567 = vrot.slane %v2417, 1
      %v2568 = vrot.slane %v2449, 1
      %v2569 = vsel %vm1312, %v2567, %v2568
      %v2570 = vrot.slane %v2418, 1
      %v2571 = vrot.slane %v2450, 1
      %v2572 = vsel %vm1312, %v2570, %v2571
      %v2573 = vrot.slane %v2419, 1
      %v2574 = vrot.slane %v2451, 1
      %v2575 = vsel %vm1312, %v2573, %v2574
      %v2576 = vrot.slane %v2420, 1
      %v2577 = vrot.slane %v2452, 1
      %v2578 = vsel %vm1312, %v2576, %v2577
      %v2579 = vrot.slane %v2421, 1
      %v2580 = vrot.slane %v2453, 1
      %v2581 = vsel %vm1312, %v2579, %v2580
      %s2590 = scalar_lea.vmem %s3, 384
      %v2591 = vld [vmem:[%s2590] sm:$0xf]
      %v2592 = vld [vmem:[%s2590 + $0x4] sm:$0xf]
      %v2593 = vld [vmem:[%s2590 + $0x8] sm:$0xf]
      %v2594 = vld [vmem:[%s2590 + $0xc] sm:$0xf]
      %v2595 = vld [vmem:[%s2590 + $0x10] sm:$0xf]
      %v2596 = vld [vmem:[%s2590 + $0x14] sm:$0xf]
      %v2597 = vld [vmem:[%s2590 + $0x18] sm:$0xf]
      %v2598 = vld [vmem:[%s2590 + $0x1c] sm:$0xf]
      %v2599 = vld [vmem:[%s2590 + $0x20] sm:$0xf]
      %v2600 = vld [vmem:[%s2590 + $0x24] sm:$0xf]
      %v2601 = vld [vmem:[%s2590 + $0x28] sm:$0xf]
      %v2602 = vld [vmem:[%s2590 + $0x2c] sm:$0xf]
      %v2603 = vld [vmem:[%s2590 + $0x30] sm:$0xf]
      %v2604 = vld [vmem:[%s2590 + $0x34] sm:$0xf]
      %v2605 = vld [vmem:[%s2590 + $0x38] sm:$0xf]
      %v2606 = vld [vmem:[%s2590 + $0x3c] sm:$0xf]
      %v2607 = vld [vmem:[%s2590 + $0x40] sm:$0xf]
      %v2608 = vld [vmem:[%s2590 + $0x44] sm:$0xf]
      %v2609 = vld [vmem:[%s2590 + $0x48] sm:$0xf]
      %v2610 = vld [vmem:[%s2590 + $0x4c] sm:$0xf]
      %v2611 = vld [vmem:[%s2590 + $0x50] sm:$0xf]
      %v2612 = vld [vmem:[%s2590 + $0x54] sm:$0xf]
      %v2613 = vld [vmem:[%s2590 + $0x58] sm:$0xf]
      %v2614 = vld [vmem:[%s2590 + $0x5c] sm:$0xf]
      %v2615 = vld [vmem:[%s2590 + $0x60] sm:$0xf]
      %v2616 = vld [vmem:[%s2590 + $0x64] sm:$0xf]
      %v2617 = vld [vmem:[%s2590 + $0x68] sm:$0xf]
      %v2618 = vld [vmem:[%s2590 + $0x6c] sm:$0xf]
      %v2619 = vld [vmem:[%s2590 + $0x70] sm:$0xf]
      %v2620 = vld [vmem:[%s2590 + $0x74] sm:$0xf]
      %v2621 = vld [vmem:[%s2590 + $0x78] sm:$0xf]
      %v2622 = vld [vmem:[%s2590 + $0x7c] sm:$0xf]
      %v2623 = vld [vmem:[%s2590 + $0x80] sm:$0xf]
      %v2624 = vld [vmem:[%s2590 + $0x84] sm:$0xf]
      %v2625 = vld [vmem:[%s2590 + $0x88] sm:$0xf]
      %v2626 = vld [vmem:[%s2590 + $0x8c] sm:$0xf]
      %v2627 = vld [vmem:[%s2590 + $0x90] sm:$0xf]
      %v2628 = vld [vmem:[%s2590 + $0x94] sm:$0xf]
      %v2629 = vld [vmem:[%s2590 + $0x98] sm:$0xf]
      %v2630 = vld [vmem:[%s2590 + $0x9c] sm:$0xf]
      %v2631 = vld [vmem:[%s2590 + $0xa0] sm:$0xf]
      %v2632 = vld [vmem:[%s2590 + $0xa4] sm:$0xf]
      %v2633 = vld [vmem:[%s2590 + $0xa8] sm:$0xf]
      %v2634 = vld [vmem:[%s2590 + $0xac] sm:$0xf]
      %v2635 = vld [vmem:[%s2590 + $0xb0] sm:$0xf]
      %v2636 = vld [vmem:[%s2590 + $0xb4] sm:$0xf]
      %v2637 = vld [vmem:[%s2590 + $0xb8] sm:$0xf]
      %v2638 = vld [vmem:[%s2590 + $0xbc] sm:$0xf]
      %v2687 = vunpack.c.l.b16 %v2591
      %v2688 = vunpack.c.l.b16 %v2592
      %v2689 = vunpack.c.l.b16 %v2593
      %v2690 = vunpack.c.l.b16 %v2594
      %v2691 = vunpack.c.l.b16 %v2595
      %v2692 = vunpack.c.l.b16 %v2596
      %v2693 = vunpack.c.l.b16 %v2597
      %v2694 = vunpack.c.l.b16 %v2598
      %v2695 = vunpack.c.l.b16 %v2599
      %v2696 = vunpack.c.l.b16 %v2600
      %v2697 = vunpack.c.l.b16 %v2601
      %v2698 = vunpack.c.l.b16 %v2602
      %v2699 = vunpack.c.l.b16 %v2603
      %v2700 = vunpack.c.l.b16 %v2604
      %v2701 = vunpack.c.l.b16 %v2605
      %v2702 = vunpack.c.l.b16 %v2606
      %v2703 = vunpack.c.l.b16 %v2607
      %v2704 = vunpack.c.l.b16 %v2608
      %v2705 = vunpack.c.l.b16 %v2609
      %v2706 = vunpack.c.l.b16 %v2610
      %v2707 = vunpack.c.l.b16 %v2611
      %v2708 = vunpack.c.l.b16 %v2612
      %v2709 = vunpack.c.l.b16 %v2613
      %v2710 = vunpack.c.l.b16 %v2614
      %v2711 = vunpack.c.l.b16 %v2615
      %v2712 = vunpack.c.l.b16 %v2616
      %v2713 = vunpack.c.l.b16 %v2617
      %v2714 = vunpack.c.l.b16 %v2618
      %v2715 = vunpack.c.l.b16 %v2619
      %v2716 = vunpack.c.l.b16 %v2620
      %v2717 = vunpack.c.l.b16 %v2621
      %v2718 = vunpack.c.l.b16 %v2622
      %v2719 = vunpack.c.l.b16 %v2623
      %v2720 = vunpack.c.l.b16 %v2624
      %v2721 = vunpack.c.l.b16 %v2625
      %v2722 = vunpack.c.l.b16 %v2626
      %v2723 = vunpack.c.l.b16 %v2627
      %v2724 = vunpack.c.l.b16 %v2628
      %v2725 = vunpack.c.l.b16 %v2629
      %v2726 = vunpack.c.l.b16 %v2630
      %v2727 = vunpack.c.l.b16 %v2631
      %v2728 = vunpack.c.l.b16 %v2632
      %v2729 = vunpack.c.l.b16 %v2633
      %v2730 = vunpack.c.l.b16 %v2634
      %v2731 = vunpack.c.l.b16 %v2635
      %v2732 = vunpack.c.l.b16 %v2636
      %v2733 = vunpack.c.l.b16 %v2637
      %v2734 = vunpack.c.l.b16 %v2638
      %v2735 = vpack.c.b16 %v2688, %v2687
      %v2736 = vpack.c.b16 %v2690, %v2689
      %v2737 = vpack.c.b16 %v2692, %v2691
      %v2738 = vpack.c.b16 %v2694, %v2693
      %v2739 = vpack.c.b16 %v2696, %v2695
      %v2740 = vpack.c.b16 %v2698, %v2697
      %v2741 = vpack.c.b16 %v2700, %v2699
      %v2742 = vpack.c.b16 %v2702, %v2701
      %v2743 = vpack.c.b16 %v2704, %v2703
      %v2744 = vpack.c.b16 %v2706, %v2705
      %v2745 = vpack.c.b16 %v2708, %v2707
      %v2746 = vpack.c.b16 %v2710, %v2709
      %v2747 = vpack.c.b16 %v2712, %v2711
      %v2748 = vpack.c.b16 %v2714, %v2713
      %v2749 = vpack.c.b16 %v2716, %v2715
      %v2750 = vpack.c.b16 %v2718, %v2717
      %v2751 = vpack.c.b16 %v2720, %v2719
      %v2752 = vpack.c.b16 %v2722, %v2721
      %v2753 = vpack.c.b16 %v2724, %v2723
      %v2754 = vpack.c.b16 %v2726, %v2725
      %v2755 = vpack.c.b16 %v2728, %v2727
      %v2756 = vpack.c.b16 %v2730, %v2729
      %v2757 = vpack.c.b16 %v2732, %v2731
      %v2758 = vpack.c.b16 %v2734, %v2733
      %2783 = vmatprep.subr.bf16.mxu0 0
      %2784 = vmatpush1.bf16.msra.mxu0 %v2735
      %2785 = vmatprep.subr.bf16.mxu0 0
      %2786 = vmatpush1.bf16.msra.mxu0 %v2736
      %2787 = vmatprep.subr.bf16.mxu0 0
      %2788 = vmatpush1.bf16.msra.mxu0 %v2737
      %2789 = vmatprep.subr.bf16.mxu0 0
      %2790 = vmatpush1.bf16.msra.mxu0 %v2738
      %2791 = vmatprep.subr.bf16.mxu0 0
      %2792 = vmatpush1.bf16.msra.mxu0 %v2739
      %2793 = vmatprep.subr.bf16.mxu0 0
      %2794 = vmatpush1.bf16.msra.mxu0 %v2740
      %2795 = vmatprep.subr.bf16.mxu0 0
      %2796 = vmatpush1.bf16.msra.mxu0 %v2741
      %2797 = vmatprep.subr.bf16.mxu0 0
      %2798 = vmatpush1.bf16.msra.mxu0 %v2742
      %2799 = vmatprep.subr.bf16.mxu0 0
      %2800 = vmatpush1.bf16.msra.mxu0 %v2743
      %2801 = vmatprep.subr.bf16.mxu0 0
      %2802 = vmatpush1.bf16.msra.mxu0 %v2744
      %2803 = vmatprep.subr.bf16.mxu0 0
      %2804 = vmatpush1.bf16.msra.mxu0 %v2745
      %2805 = vmatprep.subr.bf16.mxu0 0
      %2806 = vmatpush1.bf16.msra.mxu0 %v2746
      %2807 = vmatprep.subr.bf16.mxu0 0
      %2808 = vmatpush1.bf16.msra.mxu0 %v2747
      %2809 = vmatprep.subr.bf16.mxu0 0
      %2810 = vmatpush1.bf16.msra.mxu0 %v2748
      %2811 = vmatprep.subr.bf16.mxu0 0
      %2812 = vmatpush1.bf16.msra.mxu0 %v2749
      %2813 = vmatprep.subr.bf16.mxu0 0
      %2814 = vmatpush1.bf16.msra.mxu0 %v2750
      %2815 = vmatprep.mubr.bf16.mxu0 %v2465
      %2816 = vmatmul.mubr.bf16.gmra.mrb[0].mxu0 %v2414
      %v2817 = vpop.f32.mrb[0].mxu0
      %v2818 = vadd.f32 0.0, %v2817
      %v2819 = vpop.f32.mrb[0].mxu0
      %v2820 = vpop.f32.mrb[0].mxu0
      %v2821 = vadd.f32 0.0, %v2820
      %v2822 = vpop.f32.mrb[0].mxu0
      %2823 = vmatprep.mubr.bf16.mxu0 %v2477
      %2824 = vmatmul.mubr.bf16.gmra.mrb[0].mxu0 %v2415
      %v2825 = vpop.f32.mrb[0].mxu0
      %v2826 = vadd.f32 0.0, %v2825
      %v2827 = vpop.f32.mrb[0].mxu0
      %v2828 = vpop.f32.mrb[0].mxu0
      %v2829 = vadd.f32 0.0, %v2828
      %v2830 = vpop.f32.mrb[0].mxu0
      %2831 = vmatprep.mubr.bf16.mxu0 %v2489
      %2832 = vmatmul.mubr.bf16.gmra.mrb[0].mxu0 %v2416
      %v2833 = vpop.f32.mrb[0].mxu0
      %v2834 = vadd.f32 0.0, %v2833
      %v2835 = vpop.f32.mrb[0].mxu0
      %v2836 = vpop.f32.mrb[0].mxu0
      %v2837 = vadd.f32 0.0, %v2836
      %v2838 = vpop.f32.mrb[0].mxu0
      %2839 = vmatprep.mubr.bf16.mxu0 %v2501
      %2840 = vmatmul.mubr.bf16.gmra.mrb[0].mxu0 %v2417
      %v2841 = vpop.f32.mrb[0].mxu0
      %v2842 = vadd.f32 0.0, %v2841
      %v2843 = vpop.f32.mrb[0].mxu0
      %v2844 = vpop.f32.mrb[0].mxu0
      %v2845 = vadd.f32 0.0, %v2844
      %v2846 = vpop.f32.mrb[0].mxu0
      %2847 = vmatprep.mubr.bf16.mxu0 %v2513
      %2848 = vmatmul.mubr.bf16.gmra.mrb[0].mxu0 %v2418
      %v2849 = vpop.f32.mrb[0].mxu0
      %v2850 = vadd.f32 0.0, %v2849
      %v2851 = vpop.f32.mrb[0].mxu0
      %v2852 = vpop.f32.mrb[0].mxu0
      %v2853 = vadd.f32 0.0, %v2852
      %v2854 = vpop.f32.mrb[0].mxu0
      %2855 = vmatprep.mubr.bf16.mxu0 %v2525
      %2856 = vmatmul.mubr.bf16.gmra.mrb[0].mxu0 %v2419
      %v2857 = vpop.f32.mrb[0].mxu0
      %v2858 = vadd.f32 0.0, %v2857
      %v2859 = vpop.f32.mrb[0].mxu0
      %v2860 = vpop.f32.mrb[0].mxu0
      %v2861 = vadd.f32 0.0, %v2860
      %v2862 = vpop.f32.mrb[0].mxu0
      %2863 = vmatprep.mubr.bf16.mxu0 %v2537
      %2864 = vmatmul.mubr.bf16.gmra.mrb[0].mxu0 %v2420
      %v2865 = vpop.f32.mrb[0].mxu0
      %v2866 = vadd.f32 0.0, %v2865
      %v2867 = vpop.f32.mrb[0].mxu0
      %v2868 = vpop.f32.mrb[0].mxu0
      %v2869 = vadd.f32 0.0, %v2868
      %v2870 = vpop.f32.mrb[0].mxu0
      %2871 = vmatprep.mubr.bf16.mxu0 %v2549
      %2872 = vmatmul.mubr.bf16.gmra.mrb[0].mxu0 %v2421
      %v2873 = vpop.f32.mrb[0].mxu0
      %v2874 = vadd.f32 0.0, %v2873
      %v2875 = vpop.f32.mrb[0].mxu0
      %v2876 = vpop.f32.mrb[0].mxu0
      %v2877 = vadd.f32 0.0, %v2876
      %v2878 = vpop.f32.mrb[0].mxu0
      %2879 = vdwg.mxu0
      %2880 = vmatprep.subr.bf16.mxu0 0
      %2881 = vmatpush1.bf16.msra.mxu0 %v2751
      %2882 = vmatprep.subr.bf16.mxu0 0
      %2883 = vmatpush1.bf16.msra.mxu0 %v2752
      %2884 = vmatprep.subr.bf16.mxu0 0
      %2885 = vmatpush1.bf16.msra.mxu0 %v2753
      %2886 = vmatprep.subr.bf16.mxu0 0
      %2887 = vmatpush1.bf16.msra.mxu0 %v2754
      %2888 = vmatprep.subr.bf16.mxu0 0
      %2889 = vmatpush1.bf16.msra.mxu0 %v2755
      %2890 = vmatprep.subr.bf16.mxu0 0
      %2891 = vmatpush1.bf16.msra.mxu0 %v2756
      %2892 = vmatprep.subr.bf16.mxu0 0
      %2893 = vmatpush1.bf16.msra.mxu0 %v2757
      %2894 = vmatprep.subr.bf16.mxu0 0
      %2895 = vmatpush1.bf16.msra.mxu0 %v2758
      %2896 = vmatprep.subr.bf16.mxu0 0
      %2897 = vmatpush1.bf16.msra.mxu0 0
      %2898 = vmatprep.subr.bf16.mxu0 0
      %2899 = vmatpush1.bf16.msra.mxu0 0
      %2900 = vmatprep.subr.bf16.mxu0 0
      %2901 = vmatpush1.bf16.msra.mxu0 0
      %2902 = vmatprep.subr.bf16.mxu0 0
      %2903 = vmatpush1.bf16.msra.mxu0 0
      %2904 = vmatprep.subr.bf16.mxu0 0
      %2905 = vmatpush1.bf16.msra.mxu0 0
      %2906 = vmatprep.subr.bf16.mxu0 0
      %2907 = vmatpush1.bf16.msra.mxu0 0
      %2908 = vmatprep.subr.bf16.mxu0 0
      %2909 = vmatpush1.bf16.msra.mxu0 0
      %2910 = vmatprep.subr.bf16.mxu0 0
      %2911 = vmatpush1.bf16.msra.mxu0 0
      %2912 = vmatprep.mubr.bf16.mxu0 0
      %2913 = vmatmul.mubr.bf16.gmra.mrb[0].mxu0 %v2560
      %v2914 = vpop.f32.mrb[0].mxu0
      %v2915 = vadd.f32 %v2818, %v2914
      %v2916 = vpop.f32.mrb[0].mxu0
      %v2917 = vpop.f32.mrb[0].mxu0
      %v2918 = vadd.f32 %v2821, %v2917
      %v2919 = vpop.f32.mrb[0].mxu0
      %2920 = vmatprep.mubr.bf16.mxu0 0
      %2921 = vmatmul.mubr.bf16.gmra.mrb[0].mxu0 %v2563
      %v2922 = vpop.f32.mrb[0].mxu0
      %v2923 = vadd.f32 %v2826, %v2922
      %v2924 = vpop.f32.mrb[0].mxu0
      %v2925 = vpop.f32.mrb[0].mxu0
      %v2926 = vadd.f32 %v2829, %v2925
      %v2927 = vpop.f32.mrb[0].mxu0
      %2928 = vmatprep.mubr.bf16.mxu0 0
      %2929 = vmatmul.mubr.bf16.gmra.mrb[0].mxu0 %v2566
      %v2930 = vpop.f32.mrb[0].mxu0
      %v2931 = vadd.f32 %v2834, %v2930
      %v2932 = vpop.f32.mrb[0].mxu0
      %v2933 = vpop.f32.mrb[0].mxu0
      %v2934 = vadd.f32 %v2837, %v2933
      %v2935 = vpop.f32.mrb[0].mxu0
      %2936 = vmatprep.mubr.bf16.mxu0 0
      %2937 = vmatmul.mubr.bf16.gmra.mrb[0].mxu0 %v2569
      %v2938 = vpop.f32.mrb[0].mxu0
      %v2939 = vadd.f32 %v2842, %v2938
      %v2940 = vpop.f32.mrb[0].mxu0
      %v2941 = vpop.f32.mrb[0].mxu0
      %v2942 = vadd.f32 %v2845, %v2941
      %v2943 = vpop.f32.mrb[0].mxu0
      %2944 = vmatprep.mubr.bf16.mxu0 0
      %2945 = vmatmul.mubr.bf16.gmra.mrb[0].mxu0 %v2572
      %v2946 = vpop.f32.mrb[0].mxu0
      %v2947 = vadd.f32 %v2850, %v2946
      %v2948 = vpop.f32.mrb[0].mxu0
      %v2949 = vpop.f32.mrb[0].mxu0
      %v2950 = vadd.f32 %v2853, %v2949
      %v2951 = vpop.f32.mrb[0].mxu0
      %2952 = vmatprep.mubr.bf16.mxu0 0
      %2953 = vmatmul.mubr.bf16.gmra.mrb[0].mxu0 %v2575
      %v2954 = vpop.f32.mrb[0].mxu0
      %v2955 = vadd.f32 %v2858, %v2954
      %v2956 = vpop.f32.mrb[0].mxu0
      %v2957 = vpop.f32.mrb[0].mxu0
      %v2958 = vadd.f32 %v2861, %v2957
      %v2959 = vpop.f32.mrb[0].mxu0
      %2960 = vmatprep.mubr.bf16.mxu0 0
      %2961 = vmatmul.mubr.bf16.gmra.mrb[0].mxu0 %v2578
      %v2962 = vpop.f32.mrb[0].mxu0
      %v2963 = vadd.f32 %v2866, %v2962
      %v2964 = vpop.f32.mrb[0].mxu0
      %v2965 = vpop.f32.mrb[0].mxu0
      %v2966 = vadd.f32 %v2869, %v2965
      %v2967 = vpop.f32.mrb[0].mxu0
      %2968 = vmatprep.mubr.bf16.mxu0 0
      %2969 = vmatmul.mubr.bf16.gmra.mrb[0].mxu0 %v2581
      %v2970 = vpop.f32.mrb[0].mxu0
      %v2971 = vadd.f32 %v2874, %v2970
      %v2972 = vpop.f32.mrb[0].mxu0
      %v2973 = vpop.f32.mrb[0].mxu0
      %v2974 = vadd.f32 %v2877, %v2973
      %v2975 = vpop.f32.mrb[0].mxu0
      %2976 = vdwg.mxu0
      %v2977 = vadd.f32 %v2292, %v2915
      %v2978 = vadd.f32 %v2295, %v2918
      %v2979 = vadd.f32 %v2300, %v2923
      %v2980 = vadd.f32 %v2303, %v2926
      %v2981 = vadd.f32 %v2308, %v2931
      %v2982 = vadd.f32 %v2311, %v2934
      %v2983 = vadd.f32 %v2316, %v2939
      %v2984 = vadd.f32 %v2319, %v2942
      %v2985 = vadd.f32 %v2324, %v2947
      %v2986 = vadd.f32 %v2327, %v2950
      %v2987 = vadd.f32 %v2332, %v2955
      %v2988 = vadd.f32 %v2335, %v2958
      %v2989 = vadd.f32 %v2340, %v2963
      %v2990 = vadd.f32 %v2343, %v2966
      %v2991 = vadd.f32 %v2348, %v2971
      %v2992 = vadd.f32 %v2351, %v2974
      %v2993 = vpack.c.bf16 %v2978, %v2977
      %v2994 = vpack.c.bf16 %v2980, %v2979
      %v2995 = vpack.c.bf16 %v2982, %v2981
      %v2996 = vpack.c.bf16 %v2984, %v2983
      %v2997 = vpack.c.bf16 %v2986, %v2985
      %v2998 = vpack.c.bf16 %v2988, %v2987
      %v2999 = vpack.c.bf16 %v2990, %v2989
      %v3000 = vpack.c.bf16 %v2992, %v2991
      %v3009 = vunpack.c.l.b16 %v2993
      %v3010 = vunpack.c.h.b16 %v2993
      %v3011 = vunpack.c.l.b16 %v2994
      %v3012 = vunpack.c.h.b16 %v2994
      %v3013 = vunpack.c.l.b16 %v2995
      %v3014 = vunpack.c.h.b16 %v2995
      %v3015 = vunpack.c.l.b16 %v2996
      %v3016 = vunpack.c.h.b16 %v2996
      %v3017 = vunpack.c.l.b16 %v2997
      %v3018 = vunpack.c.h.b16 %v2997
      %v3019 = vunpack.c.l.b16 %v2998
      %v3020 = vunpack.c.h.b16 %v2998
      %v3021 = vunpack.c.l.b16 %v2999
      %v3022 = vunpack.c.h.b16 %v2999
      %v3023 = vunpack.c.l.b16 %v3000
      %v3024 = vunpack.c.h.b16 %v3000
      %v3025 = vpack.c.b16 %v3009, %v3009
      %v3026 = vpack.c.b16 %v3010, %v3010
      %v3027 = vpack.c.b16 %v3011, %v3011
      %v3028 = vpack.c.b16 %v3012, %v3012
      %v3029 = vpack.c.b16 %v3013, %v3013
      %v3030 = vpack.c.b16 %v3014, %v3014
      %v3031 = vpack.c.b16 %v3015, %v3015
      %v3032 = vpack.c.b16 %v3016, %v3016
      %v3033 = vpack.c.b16 %v3017, %v3017
      %v3034 = vpack.c.b16 %v3018, %v3018
      %v3035 = vpack.c.b16 %v3019, %v3019
      %v3036 = vpack.c.b16 %v3020, %v3020
      %v3037 = vpack.c.b16 %v3021, %v3021
      %v3038 = vpack.c.b16 %v3022, %v3022
      %v3039 = vpack.c.b16 %v3023, %v3023
      %v3040 = vpack.c.b16 %v3024, %v3024
      %3057 = vst [vmem:[%s261] sm:$0xf] %v3025
      %3058 = vst [vmem:[%s261 + $0x4] sm:$0xf] %v3026
      %3059 = vst [vmem:[%s261 + $0x8] sm:$0xf] %v3027
      %3060 = vst [vmem:[%s261 + $0xc] sm:$0xf] %v3028
      %3061 = vst [vmem:[%s261 + $0x10] sm:$0xf] %v3029
      %3062 = vst [vmem:[%s261 + $0x14] sm:$0xf] %v3030
      %3063 = vst [vmem:[%s261 + $0x18] sm:$0xf] %v3031
      %3064 = vst [vmem:[%s261 + $0x1c] sm:$0xf] %v3032
      %3065 = vst [vmem:[%s261 + $0x20] sm:$0xf] %v3033
      %3066 = vst [vmem:[%s261 + $0x24] sm:$0xf] %v3034
      %3067 = vst [vmem:[%s261 + $0x28] sm:$0xf] %v3035
      %3068 = vst [vmem:[%s261 + $0x2c] sm:$0xf] %v3036
      %3069 = vst [vmem:[%s261 + $0x30] sm:$0xf] %v3037
      %3070 = vst [vmem:[%s261 + $0x34] sm:$0xf] %v3038
      %3071 = vst [vmem:[%s261 + $0x38] sm:$0xf] %v3039
      %3072 = vst [vmem:[%s261 + $0x3c] sm:$0xf] %v3040
      %v3073 = vadd.f32 %v2977, %v2978
      %v3074 = vadd.f32 %v3073, %v2979
      %v3075 = vadd.f32 %v3074, %v2980
      %v3076 = vadd.f32 %v3075, %v2981
      %v3077 = vadd.f32 %v3076, %v2982
      %v3078 = vadd.f32 %v3077, %v2983
      %v3079 = vadd.f32 %v3078, %v2984
      %v3080 = vadd.f32 %v3079, %v2985
      %v3081 = vadd.f32 %v3080, %v2986
      %v3082 = vadd.f32 %v3081, %v2987
      %v3083 = vadd.f32 %v3082, %v2988
      %v3084 = vadd.f32 %v3083, %v2989
      %v3085 = vadd.f32 %v3084, %v2990
      %v3086 = vadd.f32 %v3085, %v2991
      %v3087 = vadd.f32 %v3086, %v2992
      %v3088 = vrot.slane %v3087, 4
      %v3089 = vadd.f32 %v3087, %v3088
      %v3090 = vrot.slane %v3089, 2
      %v3091 = vadd.f32 %v3089, %v3090
      %v3092 = vrot.slane %v3091, 1
      %v3093 = vadd.f32 %v3091, %v3092
      %3094 = vst [vmem:[%s270] sm:$0x1] %v3093
      %v3095 = vmul.f32 %v2977, %v2977
      %v3096 = vmul.f32 %v2978, %v2978
      %v3097 = vmul.f32 %v2979, %v2979
      %v3098 = vmul.f32 %v2980, %v2980
      %v3099 = vmul.f32 %v2981, %v2981
      %v3100 = vmul.f32 %v2982, %v2982
      %v3101 = vmul.f32 %v2983, %v2983
      %v3102 = vmul.f32 %v2984, %v2984
      %v3103 = vmul.f32 %v2985, %v2985
      %v3104 = vmul.f32 %v2986, %v2986
      %v3105 = vmul.f32 %v2987, %v2987
      %v3106 = vmul.f32 %v2988, %v2988
      %v3107 = vmul.f32 %v2989, %v2989
      %v3108 = vmul.f32 %v2990, %v2990
      %v3109 = vmul.f32 %v2991, %v2991
      %v3110 = vmul.f32 %v2992, %v2992
      %v3111 = vadd.f32 %v3095, %v3096
      %v3112 = vadd.f32 %v3111, %v3097
      %v3113 = vadd.f32 %v3112, %v3098
      %v3114 = vadd.f32 %v3113, %v3099
      %v3115 = vadd.f32 %v3114, %v3100
      %v3116 = vadd.f32 %v3115, %v3101
      %v3117 = vadd.f32 %v3116, %v3102
      %v3118 = vadd.f32 %v3117, %v3103
      %v3119 = vadd.f32 %v3118, %v3104
      %v3120 = vadd.f32 %v3119, %v3105
      %v3121 = vadd.f32 %v3120, %v3106
      %v3122 = vadd.f32 %v3121, %v3107
      %v3123 = vadd.f32 %v3122, %v3108
      %v3124 = vadd.f32 %v3123, %v3109
      %v3125 = vadd.f32 %v3124, %v3110
      %v3126 = vrot.slane %v3125, 4
      %v3127 = vadd.f32 %v3125, %v3126
      %v3128 = vrot.slane %v3127, 2
      %v3129 = vadd.f32 %v3127, %v3128
      %v3130 = vrot.slane %v3129, 1
      %v3131 = vadd.f32 %v3129, %v3130
      %3132 = vst [vmem:[%s270 + $0x1] sm:$0x1] %v3131
      %s3133 = smul.u32 8, %s22
      %p3134 = scmp.lt.s32.totalorder %s21, 1
      %s3135 = scalar_select %p3134, %s21, 1
      %p3136 = scmp.lt.s32.totalorder %s3133, 15
      %s3137 = scalar_select %p3136, %s3133, 15
      %s3138 = smul.addr %s3137, 2
      %s3139 = smul.addr %s3135, 32
      %s3140 = sadd.s32 %s3138, %s3139
      %s3141 = smul.addr %s3140, 4
      %s3142 = scalar_lea.vmem %s4, %s3141
      %p3143 = scmp.lt.s32.totalorder %s21, 1
      %s3144 = scalar_select %p3143, %s21, 1
      %p3145 = scmp.lt.s32.totalorder %s22, 1
      %s3146 = scalar_select %p3145, %s22, 1
      %s3147 = smul.addr %s3144, 2
      %s3148 = sadd.s32 %s3146, %s3147
      %s3149 = smul.addr %s3148, 2
      %s3150 = scalar_lea.vmem %s5, %s3149
      // Predicated region
      $region41: #{bottleneck_forward.5} parent=35 // pred_check
        %p3151 = pneg %p138
      $region42: #{bottleneck_forward.5} parent=35 // pred_check_branch
        %3153 = sbr.rel (%p3151) target = $region44
      $region43: #{bottleneck_forward.5} parent=35 // pred_region
        %s3154 = smul.u32 8, %s22
      $region44: #{bottleneck_forward.5} parent=35 // pred_fallthru
        _
      // Predicated region
      $region45: #{bottleneck_forward.5} parent=35 // pred_check
        %p3155 = pneg %p166
      $region46: #{bottleneck_forward.5} parent=35 // pred_check_branch
        %3157 = sbr.rel (%p3155) target = $region48
      $region47: #{bottleneck_forward.5} parent=35 // pred_region
        _
      $region48: #{bottleneck_forward.5} parent=35 // pred_fallthru
        _
    $region36: #{bottleneck_forward.5} parent=5 // pred_fallthru
      _
    %p3158 = scmp.le.s32.totalorder 2, %s12
    // Predicated region
    $region49: #{bottleneck_forward.5} parent=5 // pred_check
      %p3159 = pneg %p3158
    $region50: #{bottleneck_forward.5} parent=5 // pred_check_branch
      %3161 = sbr.rel (%p3159) target = $region52
    $region51: #{bottleneck_forward.5} parent=5 // pred_region
      %s3162 = ssub.s32 %s12, 2
      // Predicated region
      $region53: #{bottleneck_forward.5} parent=51 // pred_check
        %p3163 = pneg %p144
      $region54: #{bottleneck_forward.5} parent=51 // pred_check_branch
        %3165 = sbr.rel (%p3163) target = $region56
      $region55: #{bottleneck_forward.5} parent=51 // pred_region
        %s3166 = smul.u32 8, %s24
        %p3167 = scmp.lt.s32.totalorder %s23, 1
        %s3168 = scalar_select %p3167, %s23, 1
        %p3169 = scmp.lt.s32.totalorder %s3166, 15
        %s3170 = scalar_select %p3169, %s3166, 15
        %s3171 = smul.addr %s3170, 2
        %s3172 = smul.addr %s3168, 32
        %s3173 = sadd.s32 %s3171, %s3172
        %s3174 = smul.addr %s3173, 4
        %s3175 = scalar_lea.vmem %s4, %s3174
      $region56: #{bottleneck_forward.5} parent=51 // pred_fallthru
        _
      // Predicated region
      $region57: #{bottleneck_forward.5} parent=51 // pred_check
        %p3176 = pneg %p172
      $region58: #{bottleneck_forward.5} parent=51 // pred_check_branch
        %3178 = sbr.rel (%p3176) target = $region60
      $region59: #{bottleneck_forward.5} parent=51 // pred_region
        %p3179 = scmp.lt.s32.totalorder %s23, 1
        %s3180 = scalar_select %p3179, %s23, 1
        %p3181 = scmp.lt.s32.totalorder %s24, 1
        %s3182 = scalar_select %p3181, %s24, 1
        %s3183 = smul.addr %s3180, 2
        %s3184 = sadd.s32 %s3182, %s3183
        %s3185 = smul.addr %s3184, 2
        %s3186 = scalar_lea.vmem %s5, %s3185
      $region60: #{bottleneck_forward.5} parent=51 // pred_fallthru
        _
    $region52: #{bottleneck_forward.5} parent=5 // pred_fallthru
      _
  $region6: #{bottleneck_forward.5} parent=0 // loop_footer
    %s16 = sadd.s32 1, %s12
  $region7: #{bottleneck_forward.5} parent=0 // loop_footer_branch
    %11 = sbr.rel target = $region3
  $region8: #{bottleneck_forward.5} parent=0 // loop_exit
    _

</llo_original>
